<compile_context>
chip_gen: v7x
topology: tpu7x:2x2x1
jax: 0.10.0
libtpu: 0.0.40
codegen_flags: <defaults>
</compile_context>

<pallas_src>
import math
from itertools import accumulate

import numpy as np
import jax
import jax.numpy as jnp
from jax.experimental import pallas as pl
from jax.experimental.pallas import tpu as pltpu

BN_EPS = 1e-5


# ----------------------------- Pallas kernel --------------------------------
def _bn_train(h):
    # nn.BatchNorm1d, training mode, default affine init (gamma=1, beta=0).
    # Single-pass statistics: var = E[h^2] - mean^2 (independent reductions).
    inv_n = 1.0 / float(h.shape[0])
    mu = jnp.sum(h, axis=0, keepdims=True) * inv_n
    ex2 = jnp.sum(h * h, axis=0, keepdims=True) * inv_n
    var = ex2 - mu * mu
    return (h - mu) * jax.lax.rsqrt(var + BN_EPS)


def agent_mlp_kernel(y_ref, w1_ref, w2_ref, w3_ref, w4_ref, out_ref):
    # y_ref  : (N, O)        f32   reconstruction target X (== y), shared
    # w1_ref : (AG, O, 64)   bf16  linterp-fused first Linear
    # w2_ref : (AG, 64, 128) bf16
    # w3_ref : (AG, 128, 256) bf16
    # w4_ref : (AG, 256, O)  bf16
    # out_ref: (1, 8, 128)   f32   lanes[0:AG] of every row = ss_res per agent
    AG = w1_ref.shape[0]
    y = y_ref[...]                                   # [N, O] f32
    y_bf = y.astype(jnp.bfloat16)                    # hoisted once

    lane = jax.lax.broadcasted_iota(jnp.int32, (8, 128), 1)
    block = jnp.zeros((8, 128), jnp.float32)

    for a in range(AG):                              # static unroll (ILP)
        # fused linterp + Linear(T,64): y @ (Wint[a] @ W1[a])
        h = jnp.dot(y_bf, w1_ref[a], preferred_element_type=jnp.float32)
        h = jnp.maximum(_bn_train(h), 0.0)           # [N, 64]
        h = jnp.dot(h.astype(jnp.bfloat16), w2_ref[a],
                    preferred_element_type=jnp.float32)
        h = jnp.maximum(_bn_train(h), 0.0)           # [N, 128]
        h = jnp.dot(h.astype(jnp.bfloat16), w3_ref[a],
                    preferred_element_type=jnp.float32)
        h = jnp.maximum(_bn_train(h), 0.0)           # [N, 256]
        h = jnp.dot(h.astype(jnp.bfloat16), w4_ref[a],
                    preferred_element_type=jnp.float32)
        h = _bn_train(h)                             # [N, O]

        # exact sigmoid via a single tanh (EUP) push
        x_hat = 0.5 * (jnp.tanh(0.5 * h) + 1.0)

        diff = x_hat - y
        ss = jnp.sum(diff * diff)                    # scalar ss_res, agent a
        block = jnp.where(lane == a, ss, block)

    out_ref[0] = block                               # one lane-dense store


def run_agents_pallas(y, w1_eff, w2, w3, w4, *, num_steps=1, core_parallel=False):
    """Returns ss_res[A] (sum of squared reconstruction error per agent)."""
    A = w1_eff.shape[0]
    N, O = y.shape
    assert A % num_steps == 0
    AG = A // num_steps

    # bf16 MXU operands (activations are cast in-kernel once).
    w1b = w1_eff.astype(jnp.bfloat16)
    w2b = w2.astype(jnp.bfloat16)
    w3b = w3.astype(jnp.bfloat16)
    w4b = w4.astype(jnp.bfloat16)

    def wspec(shape):
        return pl.BlockSpec((AG,) + shape, lambda g: (g, 0, 0))

    in_specs = [
        pl.BlockSpec((N, O), lambda g: (0, 0)),      # shared target y (f32)
        wspec(w1b.shape[1:]),
        wspec(w2b.shape[1:]),
        wspec(w3b.shape[1:]),
        wspec(w4b.shape[1:]),
    ]
    out_specs = pl.BlockSpec((1, 8, 128), lambda g: (g, 0, 0))
    out_shape = jax.ShapeDtypeStruct((num_steps, 8, 128), jnp.float32)

    # On 1-TC chips (v5e/v6e) one grid step = one DMA wave, no per-step
    # overhead.  On v7x call with num_steps=2, core_parallel=True to split the
    # agents across the two TensorCores.
    sem = pltpu.CORE_PARALLEL if core_parallel else pltpu.ARBITRARY

    out = pl.pallas_call(
        agent_mlp_kernel,
        grid=(num_steps,),
        in_specs=in_specs,
        out_specs=out_specs,
        out_shape=out_shape,
        compiler_params=pltpu.CompilerParams(dimension_semantics=(sem,)),
    )(y, w1b, w2b, w3b, w4b)

    ss_res = out[:, 0, :AG].reshape(A)
    return ss_res


# --------------------------- parameter construction -------------------------
def get_rs(num_agents, target_size):
    r_values = [1.0 / math.pow(1 + 1, 2) for _ in range(num_agents)]
    s = sum(r_values)
    r_values = [r / s for r in r_values]
    r_values = list(accumulate(r_values))
    r_values = [r * math.sqrt(target_size) for r in r_values]
    return r_values


def init_raw_indices(num_agents, target_size, original_size):
    band_unit = 1.0 / original_size
    raws = []
    for a in range(num_agents):
        init_vals = np.linspace(0.001, 0.99, target_size + 2, dtype=np.float64)
        init_vals[1:-1] = init_vals[1:-1] + band_unit * a       # displacement
        init_vals = np.minimum(init_vals, 0.99)                 # clamp(max=0.99)
        v = init_vals[1:-1]
        raws.append(-np.log(1.0 / v - 1.0))                     # inverse sigmoid
    return jnp.asarray(np.stack(raws), dtype=jnp.float32)       # [A, T]


def init_linear_params(key, num_agents, target_size, original_size):
    # PyTorch nn.Linear default init: U(-1/sqrt(fan_in), 1/sqrt(fan_in)).
    # Biases are initialized for parity with the reference but are exactly
    # cancelled by the following training-mode BatchNorm, so they are not
    # passed to the kernel.
    dims = [target_size, 64, 128, 256, original_size]
    ws, bs = [], []
    keys = jax.random.split(key, len(dims) - 1)
    for li, (fi, fo) in enumerate(zip(dims[:-1], dims[1:])):
        bound = 1.0 / math.sqrt(fi)
        kw, kb = jax.random.split(keys[li])
        ws.append(jax.random.uniform(kw, (num_agents, fi, fo), jnp.float32,
                                     minval=-bound, maxval=bound))
        bs.append(jax.random.uniform(kb, (num_agents, 1, fo), jnp.float32,
                                     minval=-bound, maxval=bound))
    return ws, bs


# ------------------------------- ANN forward ---------------------------------
def build_interp_matrix(indices_all, original_size):
    """Linear-interpolation selection matrices: x_interp[a] = y @ Wint[a].
    indices_all: [A, T] in (0, 1).  Returns Wint [A, O, T] (f32)."""
    O = original_size
    pos = indices_all * (O - 1)
    lo = jnp.clip(jnp.floor(pos).astype(jnp.int32), 0, O - 2)
    frac = pos - lo.astype(jnp.float32)                          # [A, T]
    w_lo = jax.nn.one_hot(lo, O, dtype=jnp.float32) * (1.0 - frac)[..., None]
    w_hi = jax.nn.one_hot(lo + 1, O, dtype=jnp.float32) * frac[..., None]
    return jnp.transpose(w_lo + w_hi, (0, 2, 1))                 # [A, O, T]


def ann_forward(y, raw_indices_all, ws, r1s, r2s, original_size):
    A = raw_indices_all.shape[0]
    N, O = y.shape

    # Agent.get_indices()
    indices_all = jax.nn.sigmoid(raw_indices_all)                # [A, T]

    # linterp folded into the first Linear (f32 pre-fusion, then bf16 in-kernel)
    wint = build_interp_matrix(indices_all, original_size)       # [A, O, T]
    w1_eff = jnp.einsum('aot,ath->aoh', wint, ws[0])             # [A, O, 64]

    # per-agent ss_res reduced fully inside one Pallas call
    ss_res = run_agents_pallas(y, w1_eff, ws[1], ws[2], ws[3])   # [A]
    losses = ss_res / float(N * O)                               # MSE per agent

    # radius penalties
    norms = jnp.sqrt(jnp.sum(indices_all * indices_all, axis=1))  # [A]
    r1_loss = jnp.maximum(r1s - norms, 0.0)
    r2_loss = jnp.maximum(norms - r2s, 0.0)
    last_mask = (jnp.arange(A) == A - 1)
    r_losses = r1_loss + jnp.where(last_mask, 0.0, r2_loss)      # [A]

    # successive ordering penalty
    successive = jnp.sum(
        jnp.maximum(raw_indices_all[:, :-1] - raw_indices_all[:, 1:], 0.0), axis=1)

    # best agent by r2 score (self.get_best); ss_res comes from the kernel
    ss_tot = jnp.sum((y - jnp.mean(y)) ** 2)
    r2_scores = 1.0 - ss_res / ss_tot
    best = jnp.argmax(r2_scores)

    # sample_input / sample_output in the reference are debug-only numpy
    # extracts (y[11], best X_hat[11]) with no effect on the loss; X_hat is
    # therefore never materialized in HBM.

    loss = jnp.mean(losses) + 70.0 * jnp.sum(r_losses) + 40.0 * jnp.sum(successive)
    return loss, best


# ---------------------------------- main -------------------------------------
if __name__ == "__main__":
    TARGET_SIZE = 8       # number of selected bands per agent
    CLASS_SIZE = 4        # unused in forward (classification head not used)
    ORIGINAL_SIZE = 32    # full spectrum length
    NUM_AGENTS = 10
    BATCH = 16            # >= 12 (reference forward indexes y[11])

    key = jax.random.PRNGKey(0)
    k_y, k_p = jax.random.split(key)

    # y: full-spectrum samples in (0,1) (Sigmoid reconstruction target), [N, O]
    y = jax.random.uniform(k_y, (BATCH, ORIGINAL_SIZE), jnp.float32)

    raw_indices_all = init_raw_indices(NUM_AGENTS, TARGET_SIZE, ORIGINAL_SIZE)
    ws, bs = init_linear_params(k_p, NUM_AGENTS, TARGET_SIZE, ORIGINAL_SIZE)

    rs = [0.0] + get_rs(NUM_AGENTS, TARGET_SIZE)
    r1s = jnp.asarray(rs[:NUM_AGENTS], dtype=jnp.float32)
    r2s = jnp.asarray(rs[1:NUM_AGENTS + 1], dtype=jnp.float32)

    # TODO(synk): on v7x (2 TensorCores) call run_agents_pallas with
    # num_steps=2, core_parallel=True to split the 10 agents across cores.
    fwd = jax.jit(lambda y_: ann_forward(y_, raw_indices_all, ws,
                                         r1s, r2s, ORIGINAL_SIZE))
    loss, best = fwd(y)
    jax.block_until_ready((loss, best))
    assert jnp.isfinite(loss)
    print("KERNEL_OK")
</pallas_src>

<mosaic_0001>
module attributes {stable_mosaic.version = 11 : i64} {
  func.func @agent_mlp_kernel(%arg0: i32, %arg1: memref<16x32xf32, #tpu.memory_space<vmem>>, %arg2: memref<10x32x64xbf16, #tpu.memory_space<vmem>>, %arg3: memref<10x64x128xbf16, #tpu.memory_space<vmem>>, %arg4: memref<10x128x256xbf16, #tpu.memory_space<vmem>>, %arg5: memref<10x256x32xbf16, #tpu.memory_space<vmem>>, %arg6: memref<1x8x128xf32, #tpu.memory_space<vmem>>) attributes {dimension_semantics = [#tpu.dimension_semantics<arbitrary>], iteration_bounds = array<i64: 1>, scalar_prefetch = 0 : i64, scratch_operands = 0 : i64, tpu.core_type = #tpu.core_type<tc>, window_params = [{pipeline_mode = #tpu.pipeline_mode<synchronous>, transform_indices = @transform_0, window_bounds = array<i64: 16, 32>}, {transform_indices = @transform_1, window_bounds = array<i64: 10, 32, 64>}, {transform_indices = @transform_2, window_bounds = array<i64: 10, 64, 128>}, {transform_indices = @transform_3, window_bounds = array<i64: 10, 128, 256>}, {transform_indices = @transform_4, window_bounds = array<i64: 10, 256, 32>}, {transform_indices = @transform_5, window_bounds = array<i64: 1, 8, 128>}]} {
    %c0 = arith.constant 0 : index
    %c0_0 = arith.constant 0 : index
    %0 = vector.load %arg1[%c0, %c0_0] : memref<16x32xf32, #tpu.memory_space<vmem>>, vector<16x32xf32>
    %1 = arith.truncf %0 : vector<16x32xf32> to vector<16x32xbf16>
    %2 = tpu.iota {dimensions = array<i32: 1>} : vector<8x128xi32>
    %cst = arith.constant 0.000000e+00 : f32
    %3 = vector.broadcast %cst : f32 to vector<8x128xf32>
    %c0_1 = arith.constant 0 : index
    %c0_2 = arith.constant 0 : index
    %c0_3 = arith.constant 0 : index
    %4 = vector.load %arg2[%c0_1, %c0_2, %c0_3] : memref<10x32x64xbf16, #tpu.memory_space<vmem>>, vector<1x32x64xbf16>
    %5 = vector.shape_cast %4 : vector<1x32x64xbf16> to vector<32x64xbf16>
    %cst_4 = arith.constant dense<0.000000e+00> : vector<16x64xf32>
    %6 = tpu.matmul %1, %5, %cst_4 {dimension_numbers = #tpu.dot_dimension_numbers<[1], [0], [0], [1], [0, 0, 1, 1], [], []>} : vector<16x32xbf16>, vector<32x64xbf16>, vector<16x64xf32> -> vector<16x64xf32>
    %cst_5 = arith.constant dense<0.000000e+00> : vector<64xf32>
    %7 = vector.multi_reduction <add>, %6, %cst_5 [0] : vector<16x64xf32> to vector<64xf32>
    %8 = vector.shape_cast %7 : vector<64xf32> to vector<1x64xf32>
    %cst_6 = arith.constant 6.250000e-02 : f32
    %9 = vector.broadcast %cst_6 : f32 to vector<1x64xf32>
    %10 = arith.mulf %8, %9 : vector<1x64xf32>
    %11 = arith.mulf %6, %6 : vector<16x64xf32>
    %cst_7 = arith.constant dense<0.000000e+00> : vector<64xf32>
    %12 = vector.multi_reduction <add>, %11, %cst_7 [0] : vector<16x64xf32> to vector<64xf32>
    %13 = vector.shape_cast %12 : vector<64xf32> to vector<1x64xf32>
    %cst_8 = arith.constant 6.250000e-02 : f32
    %14 = vector.broadcast %cst_8 : f32 to vector<1x64xf32>
    %15 = arith.mulf %13, %14 : vector<1x64xf32>
    %16 = arith.mulf %10, %10 : vector<1x64xf32>
    %17 = arith.subf %15, %16 : vector<1x64xf32>
    %18 = vector.broadcast %10 : vector<1x64xf32> to vector<16x64xf32>
    %19 = arith.subf %6, %18 : vector<16x64xf32>
    %cst_9 = arith.constant 9.99999974E-6 : f32
    %20 = vector.broadcast %cst_9 : f32 to vector<1x64xf32>
    %21 = arith.addf %17, %20 : vector<1x64xf32>
    %22 = math.rsqrt %21 : vector<1x64xf32>
    %23 = vector.broadcast %22 : vector<1x64xf32> to vector<16x64xf32>
    %24 = arith.mulf %19, %23 : vector<16x64xf32>
    %cst_10 = arith.constant 0.000000e+00 : f32
    %25 = vector.broadcast %cst_10 : f32 to vector<16x64xf32>
    %26 = arith.maximumf %24, %25 : vector<16x64xf32>
    %27 = arith.truncf %26 : vector<16x64xf32> to vector<16x64xbf16>
    %c0_11 = arith.constant 0 : index
    %c0_12 = arith.constant 0 : index
    %c0_13 = arith.constant 0 : index
    %28 = vector.load %arg3[%c0_11, %c0_12, %c0_13] : memref<10x64x128xbf16, #tpu.memory_space<vmem>>, vector<1x64x128xbf16>
    %29 = vector.shape_cast %28 : vector<1x64x128xbf16> to vector<64x128xbf16>
    %cst_14 = arith.constant dense<0.000000e+00> : vector<16x128xf32>
    %30 = tpu.matmul %27, %29, %cst_14 {dimension_numbers = #tpu.dot_dimension_numbers<[1], [0], [0], [1], [0, 0, 1, 1], [], []>} : vector<16x64xbf16>, vector<64x128xbf16>, vector<16x128xf32> -> vector<16x128xf32>
    %cst_15 = arith.constant dense<0.000000e+00> : vector<128xf32>
    %31 = vector.multi_reduction <add>, %30, %cst_15 [0] : vector<16x128xf32> to vector<128xf32>
    %32 = vector.shape_cast %31 : vector<128xf32> to vector<1x128xf32>
    %cst_16 = arith.constant 6.250000e-02 : f32
    %33 = vector.broadcast %cst_16 : f32 to vector<1x128xf32>
    %34 = arith.mulf %32, %33 : vector<1x128xf32>
    %35 = arith.mulf %30, %30 : vector<16x128xf32>
    %cst_17 = arith.constant dense<0.000000e+00> : vector<128xf32>
    %36 = vector.multi_reduction <add>, %35, %cst_17 [0] : vector<16x128xf32> to vector<128xf32>
    %37 = vector.shape_cast %36 : vector<128xf32> to vector<1x128xf32>
    %cst_18 = arith.constant 6.250000e-02 : f32
    %38 = vector.broadcast %cst_18 : f32 to vector<1x128xf32>
    %39 = arith.mulf %37, %38 : vector<1x128xf32>
    %40 = arith.mulf %34, %34 : vector<1x128xf32>
    %41 = arith.subf %39, %40 : vector<1x128xf32>
    %42 = vector.broadcast %34 : vector<1x128xf32> to vector<16x128xf32>
    %43 = arith.subf %30, %42 : vector<16x128xf32>
    %cst_19 = arith.constant 9.99999974E-6 : f32
    %44 = vector.broadcast %cst_19 : f32 to vector<1x128xf32>
    %45 = arith.addf %41, %44 : vector<1x128xf32>
    %46 = math.rsqrt %45 : vector<1x128xf32>
    %47 = vector.broadcast %46 : vector<1x128xf32> to vector<16x128xf32>
    %48 = arith.mulf %43, %47 : vector<16x128xf32>
    %cst_20 = arith.constant 0.000000e+00 : f32
    %49 = vector.broadcast %cst_20 : f32 to vector<16x128xf32>
    %50 = arith.maximumf %48, %49 : vector<16x128xf32>
    %51 = arith.truncf %50 : vector<16x128xf32> to vector<16x128xbf16>
    %c0_21 = arith.constant 0 : index
    %c0_22 = arith.constant 0 : index
    %c0_23 = arith.constant 0 : index
    %52 = vector.load %arg4[%c0_21, %c0_22, %c0_23] : memref<10x128x256xbf16, #tpu.memory_space<vmem>>, vector<1x128x256xbf16>
    %53 = vector.shape_cast %52 : vector<1x128x256xbf16> to vector<128x256xbf16>
    %cst_24 = arith.constant dense<0.000000e+00> : vector<16x256xf32>
    %54 = tpu.matmul %51, %53, %cst_24 {dimension_numbers = #tpu.dot_dimension_numbers<[1], [0], [0], [1], [0, 0, 1, 1], [], []>} : vector<16x128xbf16>, vector<128x256xbf16>, vector<16x256xf32> -> vector<16x256xf32>
    %cst_25 = arith.constant dense<0.000000e+00> : vector<256xf32>
    %55 = vector.multi_reduction <add>, %54, %cst_25 [0] : vector<16x256xf32> to vector<256xf32>
    %56 = vector.shape_cast %55 : vector<256xf32> to vector<1x256xf32>
    %cst_26 = arith.constant 6.250000e-02 : f32
    %57 = vector.broadcast %cst_26 : f32 to vector<1x256xf32>
    %58 = arith.mulf %56, %57 : vector<1x256xf32>
    %59 = arith.mulf %54, %54 : vector<16x256xf32>
    %cst_27 = arith.constant dense<0.000000e+00> : vector<256xf32>
    %60 = vector.multi_reduction <add>, %59, %cst_27 [0] : vector<16x256xf32> to vector<256xf32>
    %61 = vector.shape_cast %60 : vector<256xf32> to vector<1x256xf32>
    %cst_28 = arith.constant 6.250000e-02 : f32
    %62 = vector.broadcast %cst_28 : f32 to vector<1x256xf32>
    %63 = arith.mulf %61, %62 : vector<1x256xf32>
    %64 = arith.mulf %58, %58 : vector<1x256xf32>
    %65 = arith.subf %63, %64 : vector<1x256xf32>
    %66 = vector.broadcast %58 : vector<1x256xf32> to vector<16x256xf32>
    %67 = arith.subf %54, %66 : vector<16x256xf32>
    %cst_29 = arith.constant 9.99999974E-6 : f32
    %68 = vector.broadcast %cst_29 : f32 to vector<1x256xf32>
    %69 = arith.addf %65, %68 : vector<1x256xf32>
    %70 = math.rsqrt %69 : vector<1x256xf32>
    %71 = vector.broadcast %70 : vector<1x256xf32> to vector<16x256xf32>
    %72 = arith.mulf %67, %71 : vector<16x256xf32>
    %cst_30 = arith.constant 0.000000e+00 : f32
    %73 = vector.broadcast %cst_30 : f32 to vector<16x256xf32>
    %74 = arith.maximumf %72, %73 : vector<16x256xf32>
    %75 = arith.truncf %74 : vector<16x256xf32> to vector<16x256xbf16>
    %c0_31 = arith.constant 0 : index
    %c0_32 = arith.constant 0 : index
    %c0_33 = arith.constant 0 : index
    %76 = vector.load %arg5[%c0_31, %c0_32, %c0_33] : memref<10x256x32xbf16, #tpu.memory_space<vmem>>, vector<1x256x32xbf16>
    %77 = vector.shape_cast %76 : vector<1x256x32xbf16> to vector<256x32xbf16>
    %cst_34 = arith.constant dense<0.000000e+00> : vector<16x32xf32>
    %78 = tpu.matmul %75, %77, %cst_34 {dimension_numbers = #tpu.dot_dimension_numbers<[1], [0], [0], [1], [0, 0, 1, 1], [], []>} : vector<16x256xbf16>, vector<256x32xbf16>, vector<16x32xf32> -> vector<16x32xf32>
    %cst_35 = arith.constant dense<0.000000e+00> : vector<32xf32>
    %79 = vector.multi_reduction <add>, %78, %cst_35 [0] : vector<16x32xf32> to vector<32xf32>
    %80 = vector.shape_cast %79 : vector<32xf32> to vector<1x32xf32>
    %cst_36 = arith.constant 6.250000e-02 : f32
    %81 = vector.broadcast %cst_36 : f32 to vector<1x32xf32>
    %82 = arith.mulf %80, %81 : vector<1x32xf32>
    %83 = arith.mulf %78, %78 : vector<16x32xf32>
    %cst_37 = arith.constant dense<0.000000e+00> : vector<32xf32>
    %84 = vector.multi_reduction <add>, %83, %cst_37 [0] : vector<16x32xf32> to vector<32xf32>
    %85 = vector.shape_cast %84 : vector<32xf32> to vector<1x32xf32>
    %cst_38 = arith.constant 6.250000e-02 : f32
    %86 = vector.broadcast %cst_38 : f32 to vector<1x32xf32>
    %87 = arith.mulf %85, %86 : vector<1x32xf32>
    %88 = arith.mulf %82, %82 : vector<1x32xf32>
    %89 = arith.subf %87, %88 : vector<1x32xf32>
    %90 = vector.broadcast %82 : vector<1x32xf32> to vector<16x32xf32>
    %91 = arith.subf %78, %90 : vector<16x32xf32>
    %cst_39 = arith.constant 9.99999974E-6 : f32
    %92 = vector.broadcast %cst_39 : f32 to vector<1x32xf32>
    %93 = arith.addf %89, %92 : vector<1x32xf32>
    %94 = math.rsqrt %93 : vector<1x32xf32>
    %95 = vector.broadcast %94 : vector<1x32xf32> to vector<16x32xf32>
    %96 = arith.mulf %91, %95 : vector<16x32xf32>
    %cst_40 = arith.constant 5.000000e-01 : f32
    %97 = vector.broadcast %cst_40 : f32 to vector<16x32xf32>
    %98 = arith.mulf %97, %96 : vector<16x32xf32>
    %99 = math.tanh %98 : vector<16x32xf32>
    %cst_41 = arith.constant 1.000000e+00 : f32
    %100 = vector.broadcast %cst_41 : f32 to vector<16x32xf32>
    %101 = arith.addf %99, %100 : vector<16x32xf32>
    %cst_42 = arith.constant 5.000000e-01 : f32
    %102 = vector.broadcast %cst_42 : f32 to vector<16x32xf32>
    %103 = arith.mulf %102, %101 : vector<16x32xf32>
    %104 = arith.subf %103, %0 : vector<16x32xf32>
    %105 = arith.mulf %104, %104 : vector<16x32xf32>
    %106 = vector.shape_cast %105 : vector<16x32xf32> to vector<1x16x32xf32>
    %cst_43 = arith.constant dense<0.000000e+00> : vector<1xf32>
    %107 = vector.multi_reduction <add>, %106, %cst_43 [1, 2] : vector<1x16x32xf32> to vector<1xf32>
    %108 = vector.shape_cast %107 : vector<1xf32> to vector<1x1x1xf32>
    %109 = vector.extract %108[0, 0, 0] : f32 from vector<1x1x1xf32>
    %c0_i32 = arith.constant 0 : i32
    %110 = vector.broadcast %c0_i32 : i32 to vector<8x128xi32>
    %111 = arith.cmpi eq, %2, %110 : vector<8x128xi32>
    %112 = vector.broadcast %109 : f32 to vector<8x128xf32>
    %113 = arith.select %111, %112, %3 : vector<8x128xi1>, vector<8x128xf32>
    %c1 = arith.constant 1 : index
    %c0_44 = arith.constant 0 : index
    %c0_45 = arith.constant 0 : index
    %114 = vector.load %arg2[%c1, %c0_44, %c0_45] : memref<10x32x64xbf16, #tpu.memory_space<vmem>>, vector<1x32x64xbf16>
    %115 = vector.shape_cast %114 : vector<1x32x64xbf16> to vector<32x64xbf16>
    %cst_46 = arith.constant dense<0.000000e+00> : vector<16x64xf32>
    %116 = tpu.matmul %1, %115, %cst_46 {dimension_numbers = #tpu.dot_dimension_numbers<[1], [0], [0], [1], [0, 0, 1, 1], [], []>} : vector<16x32xbf16>, vector<32x64xbf16>, vector<16x64xf32> -> vector<16x64xf32>
    %cst_47 = arith.constant dense<0.000000e+00> : vector<64xf32>
    %117 = vector.multi_reduction <add>, %116, %cst_47 [0] : vector<16x64xf32> to vector<64xf32>
    %118 = vector.shape_cast %117 : vector<64xf32> to vector<1x64xf32>
    %cst_48 = arith.constant 6.250000e-02 : f32
    %119 = vector.broadcast %cst_48 : f32 to vector<1x64xf32>
    %120 = arith.mulf %118, %119 : vector<1x64xf32>
    %121 = arith.mulf %116, %116 : vector<16x64xf32>
    %cst_49 = arith.constant dense<0.000000e+00> : vector<64xf32>
    %122 = vector.multi_reduction <add>, %121, %cst_49 [0] : vector<16x64xf32> to vector<64xf32>
    %123 = vector.shape_cast %122 : vector<64xf32> to vector<1x64xf32>
    %cst_50 = arith.constant 6.250000e-02 : f32
    %124 = vector.broadcast %cst_50 : f32 to vector<1x64xf32>
    %125 = arith.mulf %123, %124 : vector<1x64xf32>
    %126 = arith.mulf %120, %120 : vector<1x64xf32>
    %127 = arith.subf %125, %126 : vector<1x64xf32>
    %128 = vector.broadcast %120 : vector<1x64xf32> to vector<16x64xf32>
    %129 = arith.subf %116, %128 : vector<16x64xf32>
    %cst_51 = arith.constant 9.99999974E-6 : f32
    %130 = vector.broadcast %cst_51 : f32 to vector<1x64xf32>
    %131 = arith.addf %127, %130 : vector<1x64xf32>
    %132 = math.rsqrt %131 : vector<1x64xf32>
    %133 = vector.broadcast %132 : vector<1x64xf32> to vector<16x64xf32>
    %134 = arith.mulf %129, %133 : vector<16x64xf32>
    %cst_52 = arith.constant 0.000000e+00 : f32
    %135 = vector.broadcast %cst_52 : f32 to vector<16x64xf32>
    %136 = arith.maximumf %134, %135 : vector<16x64xf32>
    %137 = arith.truncf %136 : vector<16x64xf32> to vector<16x64xbf16>
    %c1_53 = arith.constant 1 : index
    %c0_54 = arith.constant 0 : index
    %c0_55 = arith.constant 0 : index
    %138 = vector.load %arg3[%c1_53, %c0_54, %c0_55] : memref<10x64x128xbf16, #tpu.memory_space<vmem>>, vector<1x64x128xbf16>
    %139 = vector.shape_cast %138 : vector<1x64x128xbf16> to vector<64x128xbf16>
    %cst_56 = arith.constant dense<0.000000e+00> : vector<16x128xf32>
    %140 = tpu.matmul %137, %139, %cst_56 {dimension_numbers = #tpu.dot_dimension_numbers<[1], [0], [0], [1], [0, 0, 1, 1], [], []>} : vector<16x64xbf16>, vector<64x128xbf16>, vector<16x128xf32> -> vector<16x128xf32>
    %cst_57 = arith.constant dense<0.000000e+00> : vector<128xf32>
    %141 = vector.multi_reduction <add>, %140, %cst_57 [0] : vector<16x128xf32> to vector<128xf32>
    %142 = vector.shape_cast %141 : vector<128xf32> to vector<1x128xf32>
    %cst_58 = arith.constant 6.250000e-02 : f32
    %143 = vector.broadcast %cst_58 : f32 to vector<1x128xf32>
    %144 = arith.mulf %142, %143 : vector<1x128xf32>
    %145 = arith.mulf %140, %140 : vector<16x128xf32>
    %cst_59 = arith.constant dense<0.000000e+00> : vector<128xf32>
    %146 = vector.multi_reduction <add>, %145, %cst_59 [0] : vector<16x128xf32> to vector<128xf32>
    %147 = vector.shape_cast %146 : vector<128xf32> to vector<1x128xf32>
    %cst_60 = arith.constant 6.250000e-02 : f32
    %148 = vector.broadcast %cst_60 : f32 to vector<1x128xf32>
    %149 = arith.mulf %147, %148 : vector<1x128xf32>
    %150 = arith.mulf %144, %144 : vector<1x128xf32>
    %151 = arith.subf %149, %150 : vector<1x128xf32>
    %152 = vector.broadcast %144 : vector<1x128xf32> to vector<16x128xf32>
    %153 = arith.subf %140, %152 : vector<16x128xf32>
    %cst_61 = arith.constant 9.99999974E-6 : f32
    %154 = vector.broadcast %cst_61 : f32 to vector<1x128xf32>
    %155 = arith.addf %151, %154 : vector<1x128xf32>
    %156 = math.rsqrt %155 : vector<1x128xf32>
    %157 = vector.broadcast %156 : vector<1x128xf32> to vector<16x128xf32>
    %158 = arith.mulf %153, %157 : vector<16x128xf32>
    %cst_62 = arith.constant 0.000000e+00 : f32
    %159 = vector.broadcast %cst_62 : f32 to vector<16x128xf32>
    %160 = arith.maximumf %158, %159 : vector<16x128xf32>
    %161 = arith.truncf %160 : vector<16x128xf32> to vector<16x128xbf16>
    %c1_63 = arith.constant 1 : index
    %c0_64 = arith.constant 0 : index
    %c0_65 = arith.constant 0 : index
    %162 = vector.load %arg4[%c1_63, %c0_64, %c0_65] : memref<10x128x256xbf16, #tpu.memory_space<vmem>>, vector<1x128x256xbf16>
    %163 = vector.shape_cast %162 : vector<1x128x256xbf16> to vector<128x256xbf16>
    %cst_66 = arith.constant dense<0.000000e+00> : vector<16x256xf32>
    %164 = tpu.matmul %161, %163, %cst_66 {dimension_numbers = #tpu.dot_dimension_numbers<[1], [0], [0], [1], [0, 0, 1, 1], [], []>} : vector<16x128xbf16>, vector<128x256xbf16>, vector<16x256xf32> -> vector<16x256xf32>
    %cst_67 = arith.constant dense<0.000000e+00> : vector<256xf32>
    %165 = vector.multi_reduction <add>, %164, %cst_67 [0] : vector<16x256xf32> to vector<256xf32>
    %166 = vector.shape_cast %165 : vector<256xf32> to vector<1x256xf32>
    %cst_68 = arith.constant 6.250000e-02 : f32
    %167 = vector.broadcast %cst_68 : f32 to vector<1x256xf32>
    %168 = arith.mulf %166, %167 : vector<1x256xf32>
    %169 = arith.mulf %164, %164 : vector<16x256xf32>
    %cst_69 = arith.constant dense<0.000000e+00> : vector<256xf32>
    %170 = vector.multi_reduction <add>, %169, %cst_69 [0] : vector<16x256xf32> to vector<256xf32>
    %171 = vector.shape_cast %170 : vector<256xf32> to vector<1x256xf32>
    %cst_70 = arith.constant 6.250000e-02 : f32
    %172 = vector.broadcast %cst_70 : f32 to vector<1x256xf32>
    %173 = arith.mulf %171, %172 : vector<1x256xf32>
    %174 = arith.mulf %168, %168 : vector<1x256xf32>
    %175 = arith.subf %173, %174 : vector<1x256xf32>
    %176 = vector.broadcast %168 : vector<1x256xf32> to vector<16x256xf32>
    %177 = arith.subf %164, %176 : vector<16x256xf32>
    %cst_71 = arith.constant 9.99999974E-6 : f32
    %178 = vector.broadcast %cst_71 : f32 to vector<1x256xf32>
    %179 = arith.addf %175, %178 : vector<1x256xf32>
    %180 = math.rsqrt %179 : vector<1x256xf32>
    %181 = vector.broadcast %180 : vector<1x256xf32> to vector<16x256xf32>
    %182 = arith.mulf %177, %181 : vector<16x256xf32>
    %cst_72 = arith.constant 0.000000e+00 : f32
    %183 = vector.broadcast %cst_72 : f32 to vector<16x256xf32>
    %184 = arith.maximumf %182, %183 : vector<16x256xf32>
    %185 = arith.truncf %184 : vector<16x256xf32> to vector<16x256xbf16>
    %c1_73 = arith.constant 1 : index
    %c0_74 = arith.constant 0 : index
    %c0_75 = arith.constant 0 : index
    %186 = vector.load %arg5[%c1_73, %c0_74, %c0_75] : memref<10x256x32xbf16, #tpu.memory_space<vmem>>, vector<1x256x32xbf16>
    %187 = vector.shape_cast %186 : vector<1x256x32xbf16> to vector<256x32xbf16>
    %cst_76 = arith.constant dense<0.000000e+00> : vector<16x32xf32>
    %188 = tpu.matmul %185, %187, %cst_76 {dimension_numbers = #tpu.dot_dimension_numbers<[1], [0], [0], [1], [0, 0, 1, 1], [], []>} : vector<16x256xbf16>, vector<256x32xbf16>, vector<16x32xf32> -> vector<16x32xf32>
    %cst_77 = arith.constant dense<0.000000e+00> : vector<32xf32>
    %189 = vector.multi_reduction <add>, %188, %cst_77 [0] : vector<16x32xf32> to vector<32xf32>
    %190 = vector.shape_cast %189 : vector<32xf32> to vector<1x32xf32>
    %cst_78 = arith.constant 6.250000e-02 : f32
    %191 = vector.broadcast %cst_78 : f32 to vector<1x32xf32>
    %192 = arith.mulf %190, %191 : vector<1x32xf32>
    %193 = arith.mulf %188, %188 : vector<16x32xf32>
    %cst_79 = arith.constant dense<0.000000e+00> : vector<32xf32>
    %194 = vector.multi_reduction <add>, %193, %cst_79 [0] : vector<16x32xf32> to vector<32xf32>
    %195 = vector.shape_cast %194 : vector<32xf32> to vector<1x32xf32>
    %cst_80 = arith.constant 6.250000e-02 : f32
    %196 = vector.broadcast %cst_80 : f32 to vector<1x32xf32>
    %197 = arith.mulf %195, %196 : vector<1x32xf32>
    %198 = arith.mulf %192, %192 : vector<1x32xf32>
    %199 = arith.subf %197, %198 : vector<1x32xf32>
    %200 = vector.broadcast %192 : vector<1x32xf32> to vector<16x32xf32>
    %201 = arith.subf %188, %200 : vector<16x32xf32>
    %cst_81 = arith.constant 9.99999974E-6 : f32
    %202 = vector.broadcast %cst_81 : f32 to vector<1x32xf32>
    %203 = arith.addf %199, %202 : vector<1x32xf32>
    %204 = math.rsqrt %203 : vector<1x32xf32>
    %205 = vector.broadcast %204 : vector<1x32xf32> to vector<16x32xf32>
    %206 = arith.mulf %201, %205 : vector<16x32xf32>
    %cst_82 = arith.constant 5.000000e-01 : f32
    %207 = vector.broadcast %cst_82 : f32 to vector<16x32xf32>
    %208 = arith.mulf %207, %206 : vector<16x32xf32>
    %209 = math.tanh %208 : vector<16x32xf32>
    %cst_83 = arith.constant 1.000000e+00 : f32
    %210 = vector.broadcast %cst_83 : f32 to vector<16x32xf32>
    %211 = arith.addf %209, %210 : vector<16x32xf32>
    %cst_84 = arith.constant 5.000000e-01 : f32
    %212 = vector.broadcast %cst_84 : f32 to vector<16x32xf32>
    %213 = arith.mulf %212, %211 : vector<16x32xf32>
    %214 = arith.subf %213, %0 : vector<16x32xf32>
    %215 = arith.mulf %214, %214 : vector<16x32xf32>
    %216 = vector.shape_cast %215 : vector<16x32xf32> to vector<1x16x32xf32>
    %cst_85 = arith.constant dense<0.000000e+00> : vector<1xf32>
    %217 = vector.multi_reduction <add>, %216, %cst_85 [1, 2] : vector<1x16x32xf32> to vector<1xf32>
    %218 = vector.shape_cast %217 : vector<1xf32> to vector<1x1x1xf32>
    %219 = vector.extract %218[0, 0, 0] : f32 from vector<1x1x1xf32>
    %c1_i32 = arith.constant 1 : i32
    %220 = vector.broadcast %c1_i32 : i32 to vector<8x128xi32>
    %221 = arith.cmpi eq, %2, %220 : vector<8x128xi32>
    %222 = vector.broadcast %219 : f32 to vector<8x128xf32>
    %223 = arith.select %221, %222, %113 : vector<8x128xi1>, vector<8x128xf32>
    %c2 = arith.constant 2 : index
    %c0_86 = arith.constant 0 : index
    %c0_87 = arith.constant 0 : index
    %224 = vector.load %arg2[%c2, %c0_86, %c0_87] : memref<10x32x64xbf16, #tpu.memory_space<vmem>>, vector<1x32x64xbf16>
    %225 = vector.shape_cast %224 : vector<1x32x64xbf16> to vector<32x64xbf16>
    %cst_88 = arith.constant dense<0.000000e+00> : vector<16x64xf32>
    %226 = tpu.matmul %1, %225, %cst_88 {dimension_numbers = #tpu.dot_dimension_numbers<[1], [0], [0], [1], [0, 0, 1, 1], [], []>} : vector<16x32xbf16>, vector<32x64xbf16>, vector<16x64xf32> -> vector<16x64xf32>
    %cst_89 = arith.constant dense<0.000000e+00> : vector<64xf32>
    %227 = vector.multi_reduction <add>, %226, %cst_89 [0] : vector<16x64xf32> to vector<64xf32>
    %228 = vector.shape_cast %227 : vector<64xf32> to vector<1x64xf32>
    %cst_90 = arith.constant 6.250000e-02 : f32
    %229 = vector.broadcast %cst_90 : f32 to vector<1x64xf32>
    %230 = arith.mulf %228, %229 : vector<1x64xf32>
    %231 = arith.mulf %226, %226 : vector<16x64xf32>
    %cst_91 = arith.constant dense<0.000000e+00> : vector<64xf32>
    %232 = vector.multi_reduction <add>, %231, %cst_91 [0] : vector<16x64xf32> to vector<64xf32>
    %233 = vector.shape_cast %232 : vector<64xf32> to vector<1x64xf32>
    %cst_92 = arith.constant 6.250000e-02 : f32
    %234 = vector.broadcast %cst_92 : f32 to vector<1x64xf32>
    %235 = arith.mulf %233, %234 : vector<1x64xf32>
    %236 = arith.mulf %230, %230 : vector<1x64xf32>
    %237 = arith.subf %235, %236 : vector<1x64xf32>
    %238 = vector.broadcast %230 : vector<1x64xf32> to vector<16x64xf32>
    %239 = arith.subf %226, %238 : vector<16x64xf32>
    %cst_93 = arith.constant 9.99999974E-6 : f32
    %240 = vector.broadcast %cst_93 : f32 to vector<1x64xf32>
    %241 = arith.addf %237, %240 : vector<1x64xf32>
    %242 = math.rsqrt %241 : vector<1x64xf32>
    %243 = vector.broadcast %242 : vector<1x64xf32> to vector<16x64xf32>
    %244 = arith.mulf %239, %243 : vector<16x64xf32>
    %cst_94 = arith.constant 0.000000e+00 : f32
    %245 = vector.broadcast %cst_94 : f32 to vector<16x64xf32>
    %246 = arith.maximumf %244, %245 : vector<16x64xf32>
    %247 = arith.truncf %246 : vector<16x64xf32> to vector<16x64xbf16>
    %c2_95 = arith.constant 2 : index
    %c0_96 = arith.constant 0 : index
    %c0_97 = arith.constant 0 : index
    %248 = vector.load %arg3[%c2_95, %c0_96, %c0_97] : memref<10x64x128xbf16, #tpu.memory_space<vmem>>, vector<1x64x128xbf16>
    %249 = vector.shape_cast %248 : vector<1x64x128xbf16> to vector<64x128xbf16>
    %cst_98 = arith.constant dense<0.000000e+00> : vector<16x128xf32>
    %250 = tpu.matmul %247, %249, %cst_98 {dimension_numbers = #tpu.dot_dimension_numbers<[1], [0], [0], [1], [0, 0, 1, 1], [], []>} : vector<16x64xbf16>, vector<64x128xbf16>, vector<16x128xf32> -> vector<16x128xf32>
    %cst_99 = arith.constant dense<0.000000e+00> : vector<128xf32>
    %251 = vector.multi_reduction <add>, %250, %cst_99 [0] : vector<16x128xf32> to vector<128xf32>
    %252 = vector.shape_cast %251 : vector<128xf32> to vector<1x128xf32>
    %cst_100 = arith.constant 6.250000e-02 : f32
    %253 = vector.broadcast %cst_100 : f32 to vector<1x128xf32>
    %254 = arith.mulf %252, %253 : vector<1x128xf32>
    %255 = arith.mulf %250, %250 : vector<16x128xf32>
    %cst_101 = arith.constant dense<0.000000e+00> : vector<128xf32>
    %256 = vector.multi_reduction <add>, %255, %cst_101 [0] : vector<16x128xf32> to vector<128xf32>
    %257 = vector.shape_cast %256 : vector<128xf32> to vector<1x128xf32>
    %cst_102 = arith.constant 6.250000e-02 : f32
    %258 = vector.broadcast %cst_102 : f32 to vector<1x128xf32>
    %259 = arith.mulf %257, %258 : vector<1x128xf32>
    %260 = arith.mulf %254, %254 : vector<1x128xf32>
    %261 = arith.subf %259, %260 : vector<1x128xf32>
    %262 = vector.broadcast %254 : vector<1x128xf32> to vector<16x128xf32>
    %263 = arith.subf %250, %262 : vector<16x128xf32>
    %cst_103 = arith.constant 9.99999974E-6 : f32
    %264 = vector.broadcast %cst_103 : f32 to vector<1x128xf32>
    %265 = arith.addf %261, %264 : vector<1x128xf32>
    %266 = math.rsqrt %265 : vector<1x128xf32>
    %267 = vector.broadcast %266 : vector<1x128xf32> to vector<16x128xf32>
    %268 = arith.mulf %263, %267 : vector<16x128xf32>
    %cst_104 = arith.constant 0.000000e+00 : f32
    %269 = vector.broadcast %cst_104 : f32 to vector<16x128xf32>
    %270 = arith.maximumf %268, %269 : vector<16x128xf32>
    %271 = arith.truncf %270 : vector<16x128xf32> to vector<16x128xbf16>
    %c2_105 = arith.constant 2 : index
    %c0_106 = arith.constant 0 : index
    %c0_107 = arith.constant 0 : index
    %272 = vector.load %arg4[%c2_105, %c0_106, %c0_107] : memref<10x128x256xbf16, #tpu.memory_space<vmem>>, vector<1x128x256xbf16>
    %273 = vector.shape_cast %272 : vector<1x128x256xbf16> to vector<128x256xbf16>
    %cst_108 = arith.constant dense<0.000000e+00> : vector<16x256xf32>
    %274 = tpu.matmul %271, %273, %cst_108 {dimension_numbers = #tpu.dot_dimension_numbers<[1], [0], [0], [1], [0, 0, 1, 1], [], []>} : vector<16x128xbf16>, vector<128x256xbf16>, vector<16x256xf32> -> vector<16x256xf32>
    %cst_109 = arith.constant dense<0.000000e+00> : vector<256xf32>
    %275 = vector.multi_reduction <add>, %274, %cst_109 [0] : vector<16x256xf32> to vector<256xf32>
    %276 = vector.shape_cast %275 : vector<256xf32> to vector<1x256xf32>
    %cst_110 = arith.constant 6.250000e-02 : f32
    %277 = vector.broadcast %cst_110 : f32 to vector<1x256xf32>
    %278 = arith.mulf %276, %277 : vector<1x256xf32>
    %279 = arith.mulf %274, %274 : vector<16x256xf32>
    %cst_111 = arith.constant dense<0.000000e+00> : vector<256xf32>
    %280 = vector.multi_reduction <add>, %279, %cst_111 [0] : vector<16x256xf32> to vector<256xf32>
    %281 = vector.shape_cast %280 : vector<256xf32> to vector<1x256xf32>
    %cst_112 = arith.constant 6.250000e-02 : f32
    %282 = vector.broadcast %cst_112 : f32 to vector<1x256xf32>
    %283 = arith.mulf %281, %282 : vector<1x256xf32>
    %284 = arith.mulf %278, %278 : vector<1x256xf32>
    %285 = arith.subf %283, %284 : vector<1x256xf32>
    %286 = vector.broadcast %278 : vector<1x256xf32> to vector<16x256xf32>
    %287 = arith.subf %274, %286 : vector<16x256xf32>
    %cst_113 = arith.constant 9.99999974E-6 : f32
    %288 = vector.broadcast %cst_113 : f32 to vector<1x256xf32>
    %289 = arith.addf %285, %288 : vector<1x256xf32>
    %290 = math.rsqrt %289 : vector<1x256xf32>
    %291 = vector.broadcast %290 : vector<1x256xf32> to vector<16x256xf32>
    %292 = arith.mulf %287, %291 : vector<16x256xf32>
    %cst_114 = arith.constant 0.000000e+00 : f32
    %293 = vector.broadcast %cst_114 : f32 to vector<16x256xf32>
    %294 = arith.maximumf %292, %293 : vector<16x256xf32>
    %295 = arith.truncf %294 : vector<16x256xf32> to vector<16x256xbf16>
    %c2_115 = arith.constant 2 : index
    %c0_116 = arith.constant 0 : index
    %c0_117 = arith.constant 0 : index
    %296 = vector.load %arg5[%c2_115, %c0_116, %c0_117] : memref<10x256x32xbf16, #tpu.memory_space<vmem>>, vector<1x256x32xbf16>
    %297 = vector.shape_cast %296 : vector<1x256x32xbf16> to vector<256x32xbf16>
    %cst_118 = arith.constant dense<0.000000e+00> : vector<16x32xf32>
    %298 = tpu.matmul %295, %297, %cst_118 {dimension_numbers = #tpu.dot_dimension_numbers<[1], [0], [0], [1], [0, 0, 1, 1], [], []>} : vector<16x256xbf16>, vector<256x32xbf16>, vector<16x32xf32> -> vector<16x32xf32>
    %cst_119 = arith.constant dense<0.000000e+00> : vector<32xf32>
    %299 = vector.multi_reduction <add>, %298, %cst_119 [0] : vector<16x32xf32> to vector<32xf32>
    %300 = vector.shape_cast %299 : vector<32xf32> to vector<1x32xf32>
    %cst_120 = arith.constant 6.250000e-02 : f32
    %301 = vector.broadcast %cst_120 : f32 to vector<1x32xf32>
    %302 = arith.mulf %300, %301 : vector<1x32xf32>
    %303 = arith.mulf %298, %298 : vector<16x32xf32>
    %cst_121 = arith.constant dense<0.000000e+00> : vector<32xf32>
    %304 = vector.multi_reduction <add>, %303, %cst_121 [0] : vector<16x32xf32> to vector<32xf32>
    %305 = vector.shape_cast %304 : vector<32xf32> to vector<1x32xf32>
    %cst_122 = arith.constant 6.250000e-02 : f32
    %306 = vector.broadcast %cst_122 : f32 to vector<1x32xf32>
    %307 = arith.mulf %305, %306 : vector<1x32xf32>
    %308 = arith.mulf %302, %302 : vector<1x32xf32>
    %309 = arith.subf %307, %308 : vector<1x32xf32>
    %310 = vector.broadcast %302 : vector<1x32xf32> to vector<16x32xf32>
    %311 = arith.subf %298, %310 : vector<16x32xf32>
    %cst_123 = arith.constant 9.99999974E-6 : f32
    %312 = vector.broadcast %cst_123 : f32 to vector<1x32xf32>
    %313 = arith.addf %309, %312 : vector<1x32xf32>
    %314 = math.rsqrt %313 : vector<1x32xf32>
    %315 = vector.broadcast %314 : vector<1x32xf32> to vector<16x32xf32>
    %316 = arith.mulf %311, %315 : vector<16x32xf32>
    %cst_124 = arith.constant 5.000000e-01 : f32
    %317 = vector.broadcast %cst_124 : f32 to vector<16x32xf32>
    %318 = arith.mulf %317, %316 : vector<16x32xf32>
    %319 = math.tanh %318 : vector<16x32xf32>
    %cst_125 = arith.constant 1.000000e+00 : f32
    %320 = vector.broadcast %cst_125 : f32 to vector<16x32xf32>
    %321 = arith.addf %319, %320 : vector<16x32xf32>
    %cst_126 = arith.constant 5.000000e-01 : f32
    %322 = vector.broadcast %cst_126 : f32 to vector<16x32xf32>
    %323 = arith.mulf %322, %321 : vector<16x32xf32>
    %324 = arith.subf %323, %0 : vector<16x32xf32>
    %325 = arith.mulf %324, %324 : vector<16x32xf32>
    %326 = vector.shape_cast %325 : vector<16x32xf32> to vector<1x16x32xf32>
    %cst_127 = arith.constant dense<0.000000e+00> : vector<1xf32>
    %327 = vector.multi_reduction <add>, %326, %cst_127 [1, 2] : vector<1x16x32xf32> to vector<1xf32>
    %328 = vector.shape_cast %327 : vector<1xf32> to vector<1x1x1xf32>
    %329 = vector.extract %328[0, 0, 0] : f32 from vector<1x1x1xf32>
    %c2_i32 = arith.constant 2 : i32
    %330 = vector.broadcast %c2_i32 : i32 to vector<8x128xi32>
    %331 = arith.cmpi eq, %2, %330 : vector<8x128xi32>
    %332 = vector.broadcast %329 : f32 to vector<8x128xf32>
    %333 = arith.select %331, %332, %223 : vector<8x128xi1>, vector<8x128xf32>
    %c3 = arith.constant 3 : index
    %c0_128 = arith.constant 0 : index
    %c0_129 = arith.constant 0 : index
    %334 = vector.load %arg2[%c3, %c0_128, %c0_129] : memref<10x32x64xbf16, #tpu.memory_space<vmem>>, vector<1x32x64xbf16>
    %335 = vector.shape_cast %334 : vector<1x32x64xbf16> to vector<32x64xbf16>
    %cst_130 = arith.constant dense<0.000000e+00> : vector<16x64xf32>
    %336 = tpu.matmul %1, %335, %cst_130 {dimension_numbers = #tpu.dot_dimension_numbers<[1], [0], [0], [1], [0, 0, 1, 1], [], []>} : vector<16x32xbf16>, vector<32x64xbf16>, vector<16x64xf32> -> vector<16x64xf32>
    %cst_131 = arith.constant dense<0.000000e+00> : vector<64xf32>
    %337 = vector.multi_reduction <add>, %336, %cst_131 [0] : vector<16x64xf32> to vector<64xf32>
    %338 = vector.shape_cast %337 : vector<64xf32> to vector<1x64xf32>
    %cst_132 = arith.constant 6.250000e-02 : f32
    %339 = vector.broadcast %cst_132 : f32 to vector<1x64xf32>
    %340 = arith.mulf %338, %339 : vector<1x64xf32>
    %341 = arith.mulf %336, %336 : vector<16x64xf32>
    %cst_133 = arith.constant dense<0.000000e+00> : vector<64xf32>
    %342 = vector.multi_reduction <add>, %341, %cst_133 [0] : vector<16x64xf32> to vector<64xf32>
    %343 = vector.shape_cast %342 : vector<64xf32> to vector<1x64xf32>
    %cst_134 = arith.constant 6.250000e-02 : f32
    %344 = vector.broadcast %cst_134 : f32 to vector<1x64xf32>
    %345 = arith.mulf %343, %344 : vector<1x64xf32>
    %346 = arith.mulf %340, %340 : vector<1x64xf32>
    %347 = arith.subf %345, %346 : vector<1x64xf32>
    %348 = vector.broadcast %340 : vector<1x64xf32> to vector<16x64xf32>
    %349 = arith.subf %336, %348 : vector<16x64xf32>
    %cst_135 = arith.constant 9.99999974E-6 : f32
    %350 = vector.broadcast %cst_135 : f32 to vector<1x64xf32>
    %351 = arith.addf %347, %350 : vector<1x64xf32>
    %352 = math.rsqrt %351 : vector<1x64xf32>
    %353 = vector.broadcast %352 : vector<1x64xf32> to vector<16x64xf32>
    %354 = arith.mulf %349, %353 : vector<16x64xf32>
    %cst_136 = arith.constant 0.000000e+00 : f32
    %355 = vector.broadcast %cst_136 : f32 to vector<16x64xf32>
    %356 = arith.maximumf %354, %355 : vector<16x64xf32>
    %357 = arith.truncf %356 : vector<16x64xf32> to vector<16x64xbf16>
    %c3_137 = arith.constant 3 : index
    %c0_138 = arith.constant 0 : index
    %c0_139 = arith.constant 0 : index
    %358 = vector.load %arg3[%c3_137, %c0_138, %c0_139] : memref<10x64x128xbf16, #tpu.memory_space<vmem>>, vector<1x64x128xbf16>
    %359 = vector.shape_cast %358 : vector<1x64x128xbf16> to vector<64x128xbf16>
    %cst_140 = arith.constant dense<0.000000e+00> : vector<16x128xf32>
    %360 = tpu.matmul %357, %359, %cst_140 {dimension_numbers = #tpu.dot_dimension_numbers<[1], [0], [0], [1], [0, 0, 1, 1], [], []>} : vector<16x64xbf16>, vector<64x128xbf16>, vector<16x128xf32> -> vector<16x128xf32>
    %cst_141 = arith.constant dense<0.000000e+00> : vector<128xf32>
    %361 = vector.multi_reduction <add>, %360, %cst_141 [0] : vector<16x128xf32> to vector<128xf32>
    %362 = vector.shape_cast %361 : vector<128xf32> to vector<1x128xf32>
    %cst_142 = arith.constant 6.250000e-02 : f32
    %363 = vector.broadcast %cst_142 : f32 to vector<1x128xf32>
    %364 = arith.mulf %362, %363 : vector<1x128xf32>
    %365 = arith.mulf %360, %360 : vector<16x128xf32>
    %cst_143 = arith.constant dense<0.000000e+00> : vector<128xf32>
    %366 = vector.multi_reduction <add>, %365, %cst_143 [0] : vector<16x128xf32> to vector<128xf32>
    %367 = vector.shape_cast %366 : vector<128xf32> to vector<1x128xf32>
    %cst_144 = arith.constant 6.250000e-02 : f32
    %368 = vector.broadcast %cst_144 : f32 to vector<1x128xf32>
    %369 = arith.mulf %367, %368 : vector<1x128xf32>
    %370 = arith.mulf %364, %364 : vector<1x128xf32>
    %371 = arith.subf %369, %370 : vector<1x128xf32>
    %372 = vector.broadcast %364 : vector<1x128xf32> to vector<16x128xf32>
    %373 = arith.subf %360, %372 : vector<16x128xf32>
    %cst_145 = arith.constant 9.99999974E-6 : f32
    %374 = vector.broadcast %cst_145 : f32 to vector<1x128xf32>
    %375 = arith.addf %371, %374 : vector<1x128xf32>
    %376 = math.rsqrt %375 : vector<1x128xf32>
    %377 = vector.broadcast %376 : vector<1x128xf32> to vector<16x128xf32>
    %378 = arith.mulf %373, %377 : vector<16x128xf32>
    %cst_146 = arith.constant 0.000000e+00 : f32
    %379 = vector.broadcast %cst_146 : f32 to vector<16x128xf32>
    %380 = arith.maximumf %378, %379 : vector<16x128xf32>
    %381 = arith.truncf %380 : vector<16x128xf32> to vector<16x128xbf16>
    %c3_147 = arith.constant 3 : index
    %c0_148 = arith.constant 0 : index
    %c0_149 = arith.constant 0 : index
    %382 = vector.load %arg4[%c3_147, %c0_148, %c0_149] : memref<10x128x256xbf16, #tpu.memory_space<vmem>>, vector<1x128x256xbf16>
    %383 = vector.shape_cast %382 : vector<1x128x256xbf16> to vector<128x256xbf16>
    %cst_150 = arith.constant dense<0.000000e+00> : vector<16x256xf32>
    %384 = tpu.matmul %381, %383, %cst_150 {dimension_numbers = #tpu.dot_dimension_numbers<[1], [0], [0], [1], [0, 0, 1, 1], [], []>} : vector<16x128xbf16>, vector<128x256xbf16>, vector<16x256xf32> -> vector<16x256xf32>
    %cst_151 = arith.constant dense<0.000000e+00> : vector<256xf32>
    %385 = vector.multi_reduction <add>, %384, %cst_151 [0] : vector<16x256xf32> to vector<256xf32>
    %386 = vector.shape_cast %385 : vector<256xf32> to vector<1x256xf32>
    %cst_152 = arith.constant 6.250000e-02 : f32
    %387 = vector.broadcast %cst_152 : f32 to vector<1x256xf32>
    %388 = arith.mulf %386, %387 : vector<1x256xf32>
    %389 = arith.mulf %384, %384 : vector<16x256xf32>
    %cst_153 = arith.constant dense<0.000000e+00> : vector<256xf32>
    %390 = vector.multi_reduction <add>, %389, %cst_153 [0] : vector<16x256xf32> to vector<256xf32>
    %391 = vector.shape_cast %390 : vector<256xf32> to vector<1x256xf32>
    %cst_154 = arith.constant 6.250000e-02 : f32
    %392 = vector.broadcast %cst_154 : f32 to vector<1x256xf32>
    %393 = arith.mulf %391, %392 : vector<1x256xf32>
    %394 = arith.mulf %388, %388 : vector<1x256xf32>
    %395 = arith.subf %393, %394 : vector<1x256xf32>
    %396 = vector.broadcast %388 : vector<1x256xf32> to vector<16x256xf32>
    %397 = arith.subf %384, %396 : vector<16x256xf32>
    %cst_155 = arith.constant 9.99999974E-6 : f32
    %398 = vector.broadcast %cst_155 : f32 to vector<1x256xf32>
    %399 = arith.addf %395, %398 : vector<1x256xf32>
    %400 = math.rsqrt %399 : vector<1x256xf32>
    %401 = vector.broadcast %400 : vector<1x256xf32> to vector<16x256xf32>
    %402 = arith.mulf %397, %401 : vector<16x256xf32>
    %cst_156 = arith.constant 0.000000e+00 : f32
    %403 = vector.broadcast %cst_156 : f32 to vector<16x256xf32>
    %404 = arith.maximumf %402, %403 : vector<16x256xf32>
    %405 = arith.truncf %404 : vector<16x256xf32> to vector<16x256xbf16>
    %c3_157 = arith.constant 3 : index
    %c0_158 = arith.constant 0 : index
    %c0_159 = arith.constant 0 : index
    %406 = vector.load %arg5[%c3_157, %c0_158, %c0_159] : memref<10x256x32xbf16, #tpu.memory_space<vmem>>, vector<1x256x32xbf16>
    %407 = vector.shape_cast %406 : vector<1x256x32xbf16> to vector<256x32xbf16>
    %cst_160 = arith.constant dense<0.000000e+00> : vector<16x32xf32>
    %408 = tpu.matmul %405, %407, %cst_160 {dimension_numbers = #tpu.dot_dimension_numbers<[1], [0], [0], [1], [0, 0, 1, 1], [], []>} : vector<16x256xbf16>, vector<256x32xbf16>, vector<16x32xf32> -> vector<16x32xf32>
    %cst_161 = arith.constant dense<0.000000e+00> : vector<32xf32>
    %409 = vector.multi_reduction <add>, %408, %cst_161 [0] : vector<16x32xf32> to vector<32xf32>
    %410 = vector.shape_cast %409 : vector<32xf32> to vector<1x32xf32>
    %cst_162 = arith.constant 6.250000e-02 : f32
    %411 = vector.broadcast %cst_162 : f32 to vector<1x32xf32>
    %412 = arith.mulf %410, %411 : vector<1x32xf32>
    %413 = arith.mulf %408, %408 : vector<16x32xf32>
    %cst_163 = arith.constant dense<0.000000e+00> : vector<32xf32>
    %414 = vector.multi_reduction <add>, %413, %cst_163 [0] : vector<16x32xf32> to vector<32xf32>
    %415 = vector.shape_cast %414 : vector<32xf32> to vector<1x32xf32>
    %cst_164 = arith.constant 6.250000e-02 : f32
    %416 = vector.broadcast %cst_164 : f32 to vector<1x32xf32>
    %417 = arith.mulf %415, %416 : vector<1x32xf32>
    %418 = arith.mulf %412, %412 : vector<1x32xf32>
    %419 = arith.subf %417, %418 : vector<1x32xf32>
    %420 = vector.broadcast %412 : vector<1x32xf32> to vector<16x32xf32>
    %421 = arith.subf %408, %420 : vector<16x32xf32>
    %cst_165 = arith.constant 9.99999974E-6 : f32
    %422 = vector.broadcast %cst_165 : f32 to vector<1x32xf32>
    %423 = arith.addf %419, %422 : vector<1x32xf32>
    %424 = math.rsqrt %423 : vector<1x32xf32>
    %425 = vector.broadcast %424 : vector<1x32xf32> to vector<16x32xf32>
    %426 = arith.mulf %421, %425 : vector<16x32xf32>
    %cst_166 = arith.constant 5.000000e-01 : f32
    %427 = vector.broadcast %cst_166 : f32 to vector<16x32xf32>
    %428 = arith.mulf %427, %426 : vector<16x32xf32>
    %429 = math.tanh %428 : vector<16x32xf32>
    %cst_167 = arith.constant 1.000000e+00 : f32
    %430 = vector.broadcast %cst_167 : f32 to vector<16x32xf32>
    %431 = arith.addf %429, %430 : vector<16x32xf32>
    %cst_168 = arith.constant 5.000000e-01 : f32
    %432 = vector.broadcast %cst_168 : f32 to vector<16x32xf32>
    %433 = arith.mulf %432, %431 : vector<16x32xf32>
    %434 = arith.subf %433, %0 : vector<16x32xf32>
    %435 = arith.mulf %434, %434 : vector<16x32xf32>
    %436 = vector.shape_cast %435 : vector<16x32xf32> to vector<1x16x32xf32>
    %cst_169 = arith.constant dense<0.000000e+00> : vector<1xf32>
    %437 = vector.multi_reduction <add>, %436, %cst_169 [1, 2] : vector<1x16x32xf32> to vector<1xf32>
    %438 = vector.shape_cast %437 : vector<1xf32> to vector<1x1x1xf32>
    %439 = vector.extract %438[0, 0, 0] : f32 from vector<1x1x1xf32>
    %c3_i32 = arith.constant 3 : i32
    %440 = vector.broadcast %c3_i32 : i32 to vector<8x128xi32>
    %441 = arith.cmpi eq, %2, %440 : vector<8x128xi32>
    %442 = vector.broadcast %439 : f32 to vector<8x128xf32>
    %443 = arith.select %441, %442, %333 : vector<8x128xi1>, vector<8x128xf32>
    %c4 = arith.constant 4 : index
    %c0_170 = arith.constant 0 : index
    %c0_171 = arith.constant 0 : index
    %444 = vector.load %arg2[%c4, %c0_170, %c0_171] : memref<10x32x64xbf16, #tpu.memory_space<vmem>>, vector<1x32x64xbf16>
    %445 = vector.shape_cast %444 : vector<1x32x64xbf16> to vector<32x64xbf16>
    %cst_172 = arith.constant dense<0.000000e+00> : vector<16x64xf32>
    %446 = tpu.matmul %1, %445, %cst_172 {dimension_numbers = #tpu.dot_dimension_numbers<[1], [0], [0], [1], [0, 0, 1, 1], [], []>} : vector<16x32xbf16>, vector<32x64xbf16>, vector<16x64xf32> -> vector<16x64xf32>
    %cst_173 = arith.constant dense<0.000000e+00> : vector<64xf32>
    %447 = vector.multi_reduction <add>, %446, %cst_173 [0] : vector<16x64xf32> to vector<64xf32>
    %448 = vector.shape_cast %447 : vector<64xf32> to vector<1x64xf32>
    %cst_174 = arith.constant 6.250000e-02 : f32
    %449 = vector.broadcast %cst_174 : f32 to vector<1x64xf32>
    %450 = arith.mulf %448, %449 : vector<1x64xf32>
    %451 = arith.mulf %446, %446 : vector<16x64xf32>
    %cst_175 = arith.constant dense<0.000000e+00> : vector<64xf32>
    %452 = vector.multi_reduction <add>, %451, %cst_175 [0] : vector<16x64xf32> to vector<64xf32>
    %453 = vector.shape_cast %452 : vector<64xf32> to vector<1x64xf32>
    %cst_176 = arith.constant 6.250000e-02 : f32
    %454 = vector.broadcast %cst_176 : f32 to vector<1x64xf32>
    %455 = arith.mulf %453, %454 : vector<1x64xf32>
    %456 = arith.mulf %450, %450 : vector<1x64xf32>
    %457 = arith.subf %455, %456 : vector<1x64xf32>
    %458 = vector.broadcast %450 : vector<1x64xf32> to vector<16x64xf32>
    %459 = arith.subf %446, %458 : vector<16x64xf32>
    %cst_177 = arith.constant 9.99999974E-6 : f32
    %460 = vector.broadcast %cst_177 : f32 to vector<1x64xf32>
    %461 = arith.addf %457, %460 : vector<1x64xf32>
    %462 = math.rsqrt %461 : vector<1x64xf32>
    %463 = vector.broadcast %462 : vector<1x64xf32> to vector<16x64xf32>
    %464 = arith.mulf %459, %463 : vector<16x64xf32>
    %cst_178 = arith.constant 0.000000e+00 : f32
    %465 = vector.broadcast %cst_178 : f32 to vector<16x64xf32>
    %466 = arith.maximumf %464, %465 : vector<16x64xf32>
    %467 = arith.truncf %466 : vector<16x64xf32> to vector<16x64xbf16>
    %c4_179 = arith.constant 4 : index
    %c0_180 = arith.constant 0 : index
    %c0_181 = arith.constant 0 : index
    %468 = vector.load %arg3[%c4_179, %c0_180, %c0_181] : memref<10x64x128xbf16, #tpu.memory_space<vmem>>, vector<1x64x128xbf16>
    %469 = vector.shape_cast %468 : vector<1x64x128xbf16> to vector<64x128xbf16>
    %cst_182 = arith.constant dense<0.000000e+00> : vector<16x128xf32>
    %470 = tpu.matmul %467, %469, %cst_182 {dimension_numbers = #tpu.dot_dimension_numbers<[1], [0], [0], [1], [0, 0, 1, 1], [], []>} : vector<16x64xbf16>, vector<64x128xbf16>, vector<16x128xf32> -> vector<16x128xf32>
    %cst_183 = arith.constant dense<0.000000e+00> : vector<128xf32>
    %471 = vector.multi_reduction <add>, %470, %cst_183 [0] : vector<16x128xf32> to vector<128xf32>
    %472 = vector.shape_cast %471 : vector<128xf32> to vector<1x128xf32>
    %cst_184 = arith.constant 6.250000e-02 : f32
    %473 = vector.broadcast %cst_184 : f32 to vector<1x128xf32>
    %474 = arith.mulf %472, %473 : vector<1x128xf32>
    %475 = arith.mulf %470, %470 : vector<16x128xf32>
    %cst_185 = arith.constant dense<0.000000e+00> : vector<128xf32>
    %476 = vector.multi_reduction <add>, %475, %cst_185 [0] : vector<16x128xf32> to vector<128xf32>
    %477 = vector.shape_cast %476 : vector<128xf32> to vector<1x128xf32>
    %cst_186 = arith.constant 6.250000e-02 : f32
    %478 = vector.broadcast %cst_186 : f32 to vector<1x128xf32>
    %479 = arith.mulf %477, %478 : vector<1x128xf32>
    %480 = arith.mulf %474, %474 : vector<1x128xf32>
    %481 = arith.subf %479, %480 : vector<1x128xf32>
    %482 = vector.broadcast %474 : vector<1x128xf32> to vector<16x128xf32>
    %483 = arith.subf %470, %482 : vector<16x128xf32>
    %cst_187 = arith.constant 9.99999974E-6 : f32
    %484 = vector.broadcast %cst_187 : f32 to vector<1x128xf32>
    %485 = arith.addf %481, %484 : vector<1x128xf32>
    %486 = math.rsqrt %485 : vector<1x128xf32>
    %487 = vector.broadcast %486 : vector<1x128xf32> to vector<16x128xf32>
    %488 = arith.mulf %483, %487 : vector<16x128xf32>
    %cst_188 = arith.constant 0.000000e+00 : f32
    %489 = vector.broadcast %cst_188 : f32 to vector<16x128xf32>
    %490 = arith.maximumf %488, %489 : vector<16x128xf32>
    %491 = arith.truncf %490 : vector<16x128xf32> to vector<16x128xbf16>
    %c4_189 = arith.constant 4 : index
    %c0_190 = arith.constant 0 : index
    %c0_191 = arith.constant 0 : index
    %492 = vector.load %arg4[%c4_189, %c0_190, %c0_191] : memref<10x128x256xbf16, #tpu.memory_space<vmem>>, vector<1x128x256xbf16>
    %493 = vector.shape_cast %492 : vector<1x128x256xbf16> to vector<128x256xbf16>
    %cst_192 = arith.constant dense<0.000000e+00> : vector<16x256xf32>
    %494 = tpu.matmul %491, %493, %cst_192 {dimension_numbers = #tpu.dot_dimension_numbers<[1], [0], [0], [1], [0, 0, 1, 1], [], []>} : vector<16x128xbf16>, vector<128x256xbf16>, vector<16x256xf32> -> vector<16x256xf32>
    %cst_193 = arith.constant dense<0.000000e+00> : vector<256xf32>
    %495 = vector.multi_reduction <add>, %494, %cst_193 [0] : vector<16x256xf32> to vector<256xf32>
    %496 = vector.shape_cast %495 : vector<256xf32> to vector<1x256xf32>
    %cst_194 = arith.constant 6.250000e-02 : f32
    %497 = vector.broadcast %cst_194 : f32 to vector<1x256xf32>
    %498 = arith.mulf %496, %497 : vector<1x256xf32>
    %499 = arith.mulf %494, %494 : vector<16x256xf32>
    %cst_195 = arith.constant dense<0.000000e+00> : vector<256xf32>
    %500 = vector.multi_reduction <add>, %499, %cst_195 [0] : vector<16x256xf32> to vector<256xf32>
    %501 = vector.shape_cast %500 : vector<256xf32> to vector<1x256xf32>
    %cst_196 = arith.constant 6.250000e-02 : f32
    %502 = vector.broadcast %cst_196 : f32 to vector<1x256xf32>
    %503 = arith.mulf %501, %502 : vector<1x256xf32>
    %504 = arith.mulf %498, %498 : vector<1x256xf32>
    %505 = arith.subf %503, %504 : vector<1x256xf32>
    %506 = vector.broadcast %498 : vector<1x256xf32> to vector<16x256xf32>
    %507 = arith.subf %494, %506 : vector<16x256xf32>
    %cst_197 = arith.constant 9.99999974E-6 : f32
    %508 = vector.broadcast %cst_197 : f32 to vector<1x256xf32>
    %509 = arith.addf %505, %508 : vector<1x256xf32>
    %510 = math.rsqrt %509 : vector<1x256xf32>
    %511 = vector.broadcast %510 : vector<1x256xf32> to vector<16x256xf32>
    %512 = arith.mulf %507, %511 : vector<16x256xf32>
    %cst_198 = arith.constant 0.000000e+00 : f32
    %513 = vector.broadcast %cst_198 : f32 to vector<16x256xf32>
    %514 = arith.maximumf %512, %513 : vector<16x256xf32>
    %515 = arith.truncf %514 : vector<16x256xf32> to vector<16x256xbf16>
    %c4_199 = arith.constant 4 : index
    %c0_200 = arith.constant 0 : index
    %c0_201 = arith.constant 0 : index
    %516 = vector.load %arg5[%c4_199, %c0_200, %c0_201] : memref<10x256x32xbf16, #tpu.memory_space<vmem>>, vector<1x256x32xbf16>
    %517 = vector.shape_cast %516 : vector<1x256x32xbf16> to vector<256x32xbf16>
    %cst_202 = arith.constant dense<0.000000e+00> : vector<16x32xf32>
    %518 = tpu.matmul %515, %517, %cst_202 {dimension_numbers = #tpu.dot_dimension_numbers<[1], [0], [0], [1], [0, 0, 1, 1], [], []>} : vector<16x256xbf16>, vector<256x32xbf16>, vector<16x32xf32> -> vector<16x32xf32>
    %cst_203 = arith.constant dense<0.000000e+00> : vector<32xf32>
    %519 = vector.multi_reduction <add>, %518, %cst_203 [0] : vector<16x32xf32> to vector<32xf32>
    %520 = vector.shape_cast %519 : vector<32xf32> to vector<1x32xf32>
    %cst_204 = arith.constant 6.250000e-02 : f32
    %521 = vector.broadcast %cst_204 : f32 to vector<1x32xf32>
    %522 = arith.mulf %520, %521 : vector<1x32xf32>
    %523 = arith.mulf %518, %518 : vector<16x32xf32>
    %cst_205 = arith.constant dense<0.000000e+00> : vector<32xf32>
    %524 = vector.multi_reduction <add>, %523, %cst_205 [0] : vector<16x32xf32> to vector<32xf32>
    %525 = vector.shape_cast %524 : vector<32xf32> to vector<1x32xf32>
    %cst_206 = arith.constant 6.250000e-02 : f32
    %526 = vector.broadcast %cst_206 : f32 to vector<1x32xf32>
    %527 = arith.mulf %525, %526 : vector<1x32xf32>
    %528 = arith.mulf %522, %522 : vector<1x32xf32>
    %529 = arith.subf %527, %528 : vector<1x32xf32>
    %530 = vector.broadcast %522 : vector<1x32xf32> to vector<16x32xf32>
    %531 = arith.subf %518, %530 : vector<16x32xf32>
    %cst_207 = arith.constant 9.99999974E-6 : f32
    %532 = vector.broadcast %cst_207 : f32 to vector<1x32xf32>
    %533 = arith.addf %529, %532 : vector<1x32xf32>
    %534 = math.rsqrt %533 : vector<1x32xf32>
    %535 = vector.broadcast %534 : vector<1x32xf32> to vector<16x32xf32>
    %536 = arith.mulf %531, %535 : vector<16x32xf32>
    %cst_208 = arith.constant 5.000000e-01 : f32
    %537 = vector.broadcast %cst_208 : f32 to vector<16x32xf32>
    %538 = arith.mulf %537, %536 : vector<16x32xf32>
    %539 = math.tanh %538 : vector<16x32xf32>
    %cst_209 = arith.constant 1.000000e+00 : f32
    %540 = vector.broadcast %cst_209 : f32 to vector<16x32xf32>
    %541 = arith.addf %539, %540 : vector<16x32xf32>
    %cst_210 = arith.constant 5.000000e-01 : f32
    %542 = vector.broadcast %cst_210 : f32 to vector<16x32xf32>
    %543 = arith.mulf %542, %541 : vector<16x32xf32>
    %544 = arith.subf %543, %0 : vector<16x32xf32>
    %545 = arith.mulf %544, %544 : vector<16x32xf32>
    %546 = vector.shape_cast %545 : vector<16x32xf32> to vector<1x16x32xf32>
    %cst_211 = arith.constant dense<0.000000e+00> : vector<1xf32>
    %547 = vector.multi_reduction <add>, %546, %cst_211 [1, 2] : vector<1x16x32xf32> to vector<1xf32>
    %548 = vector.shape_cast %547 : vector<1xf32> to vector<1x1x1xf32>
    %549 = vector.extract %548[0, 0, 0] : f32 from vector<1x1x1xf32>
    %c4_i32 = arith.constant 4 : i32
    %550 = vector.broadcast %c4_i32 : i32 to vector<8x128xi32>
    %551 = arith.cmpi eq, %2, %550 : vector<8x128xi32>
    %552 = vector.broadcast %549 : f32 to vector<8x128xf32>
    %553 = arith.select %551, %552, %443 : vector<8x128xi1>, vector<8x128xf32>
    %c5 = arith.constant 5 : index
    %c0_212 = arith.constant 0 : index
    %c0_213 = arith.constant 0 : index
    %554 = vector.load %arg2[%c5, %c0_212, %c0_213] : memref<10x32x64xbf16, #tpu.memory_space<vmem>>, vector<1x32x64xbf16>
    %555 = vector.shape_cast %554 : vector<1x32x64xbf16> to vector<32x64xbf16>
    %cst_214 = arith.constant dense<0.000000e+00> : vector<16x64xf32>
    %556 = tpu.matmul %1, %555, %cst_214 {dimension_numbers = #tpu.dot_dimension_numbers<[1], [0], [0], [1], [0, 0, 1, 1], [], []>} : vector<16x32xbf16>, vector<32x64xbf16>, vector<16x64xf32> -> vector<16x64xf32>
    %cst_215 = arith.constant dense<0.000000e+00> : vector<64xf32>
    %557 = vector.multi_reduction <add>, %556, %cst_215 [0] : vector<16x64xf32> to vector<64xf32>
    %558 = vector.shape_cast %557 : vector<64xf32> to vector<1x64xf32>
    %cst_216 = arith.constant 6.250000e-02 : f32
    %559 = vector.broadcast %cst_216 : f32 to vector<1x64xf32>
    %560 = arith.mulf %558, %559 : vector<1x64xf32>
    %561 = arith.mulf %556, %556 : vector<16x64xf32>
    %cst_217 = arith.constant dense<0.000000e+00> : vector<64xf32>
    %562 = vector.multi_reduction <add>, %561, %cst_217 [0] : vector<16x64xf32> to vector<64xf32>
    %563 = vector.shape_cast %562 : vector<64xf32> to vector<1x64xf32>
    %cst_218 = arith.constant 6.250000e-02 : f32
    %564 = vector.broadcast %cst_218 : f32 to vector<1x64xf32>
    %565 = arith.mulf %563, %564 : vector<1x64xf32>
    %566 = arith.mulf %560, %560 : vector<1x64xf32>
    %567 = arith.subf %565, %566 : vector<1x64xf32>
    %568 = vector.broadcast %560 : vector<1x64xf32> to vector<16x64xf32>
    %569 = arith.subf %556, %568 : vector<16x64xf32>
    %cst_219 = arith.constant 9.99999974E-6 : f32
    %570 = vector.broadcast %cst_219 : f32 to vector<1x64xf32>
    %571 = arith.addf %567, %570 : vector<1x64xf32>
    %572 = math.rsqrt %571 : vector<1x64xf32>
    %573 = vector.broadcast %572 : vector<1x64xf32> to vector<16x64xf32>
    %574 = arith.mulf %569, %573 : vector<16x64xf32>
    %cst_220 = arith.constant 0.000000e+00 : f32
    %575 = vector.broadcast %cst_220 : f32 to vector<16x64xf32>
    %576 = arith.maximumf %574, %575 : vector<16x64xf32>
    %577 = arith.truncf %576 : vector<16x64xf32> to vector<16x64xbf16>
    %c5_221 = arith.constant 5 : index
    %c0_222 = arith.constant 0 : index
    %c0_223 = arith.constant 0 : index
    %578 = vector.load %arg3[%c5_221, %c0_222, %c0_223] : memref<10x64x128xbf16, #tpu.memory_space<vmem>>, vector<1x64x128xbf16>
    %579 = vector.shape_cast %578 : vector<1x64x128xbf16> to vector<64x128xbf16>
    %cst_224 = arith.constant dense<0.000000e+00> : vector<16x128xf32>
    %580 = tpu.matmul %577, %579, %cst_224 {dimension_numbers = #tpu.dot_dimension_numbers<[1], [0], [0], [1], [0, 0, 1, 1], [], []>} : vector<16x64xbf16>, vector<64x128xbf16>, vector<16x128xf32> -> vector<16x128xf32>
    %cst_225 = arith.constant dense<0.000000e+00> : vector<128xf32>
    %581 = vector.multi_reduction <add>, %580, %cst_225 [0] : vector<16x128xf32> to vector<128xf32>
    %582 = vector.shape_cast %581 : vector<128xf32> to vector<1x128xf32>
    %cst_226 = arith.constant 6.250000e-02 : f32
    %583 = vector.broadcast %cst_226 : f32 to vector<1x128xf32>
    %584 = arith.mulf %582, %583 : vector<1x128xf32>
    %585 = arith.mulf %580, %580 : vector<16x128xf32>
    %cst_227 = arith.constant dense<0.000000e+00> : vector<128xf32>
    %586 = vector.multi_reduction <add>, %585, %cst_227 [0] : vector<16x128xf32> to vector<128xf32>
    %587 = vector.shape_cast %586 : vector<128xf32> to vector<1x128xf32>
    %cst_228 = arith.constant 6.250000e-02 : f32
    %588 = vector.broadcast %cst_228 : f32 to vector<1x128xf32>
    %589 = arith.mulf %587, %588 : vector<1x128xf32>
    %590 = arith.mulf %584, %584 : vector<1x128xf32>
    %591 = arith.subf %589, %590 : vector<1x128xf32>
    %592 = vector.broadcast %584 : vector<1x128xf32> to vector<16x128xf32>
    %593 = arith.subf %580, %592 : vector<16x128xf32>
    %cst_229 = arith.constant 9.99999974E-6 : f32
    %594 = vector.broadcast %cst_229 : f32 to vector<1x128xf32>
    %595 = arith.addf %591, %594 : vector<1x128xf32>
    %596 = math.rsqrt %595 : vector<1x128xf32>
    %597 = vector.broadcast %596 : vector<1x128xf32> to vector<16x128xf32>
    %598 = arith.mulf %593, %597 : vector<16x128xf32>
    %cst_230 = arith.constant 0.000000e+00 : f32
    %599 = vector.broadcast %cst_230 : f32 to vector<16x128xf32>
    %600 = arith.maximumf %598, %599 : vector<16x128xf32>
    %601 = arith.truncf %600 : vector<16x128xf32> to vector<16x128xbf16>
    %c5_231 = arith.constant 5 : index
    %c0_232 = arith.constant 0 : index
    %c0_233 = arith.constant 0 : index
    %602 = vector.load %arg4[%c5_231, %c0_232, %c0_233] : memref<10x128x256xbf16, #tpu.memory_space<vmem>>, vector<1x128x256xbf16>
    %603 = vector.shape_cast %602 : vector<1x128x256xbf16> to vector<128x256xbf16>
    %cst_234 = arith.constant dense<0.000000e+00> : vector<16x256xf32>
    %604 = tpu.matmul %601, %603, %cst_234 {dimension_numbers = #tpu.dot_dimension_numbers<[1], [0], [0], [1], [0, 0, 1, 1], [], []>} : vector<16x128xbf16>, vector<128x256xbf16>, vector<16x256xf32> -> vector<16x256xf32>
    %cst_235 = arith.constant dense<0.000000e+00> : vector<256xf32>
    %605 = vector.multi_reduction <add>, %604, %cst_235 [0] : vector<16x256xf32> to vector<256xf32>
    %606 = vector.shape_cast %605 : vector<256xf32> to vector<1x256xf32>
    %cst_236 = arith.constant 6.250000e-02 : f32
    %607 = vector.broadcast %cst_236 : f32 to vector<1x256xf32>
    %608 = arith.mulf %606, %607 : vector<1x256xf32>
    %609 = arith.mulf %604, %604 : vector<16x256xf32>
    %cst_237 = arith.constant dense<0.000000e+00> : vector<256xf32>
    %610 = vector.multi_reduction <add>, %609, %cst_237 [0] : vector<16x256xf32> to vector<256xf32>
    %611 = vector.shape_cast %610 : vector<256xf32> to vector<1x256xf32>
    %cst_238 = arith.constant 6.250000e-02 : f32
    %612 = vector.broadcast %cst_238 : f32 to vector<1x256xf32>
    %613 = arith.mulf %611, %612 : vector<1x256xf32>
    %614 = arith.mulf %608, %608 : vector<1x256xf32>
    %615 = arith.subf %613, %614 : vector<1x256xf32>
    %616 = vector.broadcast %608 : vector<1x256xf32> to vector<16x256xf32>
    %617 = arith.subf %604, %616 : vector<16x256xf32>
    %cst_239 = arith.constant 9.99999974E-6 : f32
    %618 = vector.broadcast %cst_239 : f32 to vector<1x256xf32>
    %619 = arith.addf %615, %618 : vector<1x256xf32>
    %620 = math.rsqrt %619 : vector<1x256xf32>
    %621 = vector.broadcast %620 : vector<1x256xf32> to vector<16x256xf32>
    %622 = arith.mulf %617, %621 : vector<16x256xf32>
    %cst_240 = arith.constant 0.000000e+00 : f32
    %623 = vector.broadcast %cst_240 : f32 to vector<16x256xf32>
    %624 = arith.maximumf %622, %623 : vector<16x256xf32>
    %625 = arith.truncf %624 : vector<16x256xf32> to vector<16x256xbf16>
    %c5_241 = arith.constant 5 : index
    %c0_242 = arith.constant 0 : index
    %c0_243 = arith.constant 0 : index
    %626 = vector.load %arg5[%c5_241, %c0_242, %c0_243] : memref<10x256x32xbf16, #tpu.memory_space<vmem>>, vector<1x256x32xbf16>
    %627 = vector.shape_cast %626 : vector<1x256x32xbf16> to vector<256x32xbf16>
    %cst_244 = arith.constant dense<0.000000e+00> : vector<16x32xf32>
    %628 = tpu.matmul %625, %627, %cst_244 {dimension_numbers = #tpu.dot_dimension_numbers<[1], [0], [0], [1], [0, 0, 1, 1], [], []>} : vector<16x256xbf16>, vector<256x32xbf16>, vector<16x32xf32> -> vector<16x32xf32>
    %cst_245 = arith.constant dense<0.000000e+00> : vector<32xf32>
    %629 = vector.multi_reduction <add>, %628, %cst_245 [0] : vector<16x32xf32> to vector<32xf32>
    %630 = vector.shape_cast %629 : vector<32xf32> to vector<1x32xf32>
    %cst_246 = arith.constant 6.250000e-02 : f32
    %631 = vector.broadcast %cst_246 : f32 to vector<1x32xf32>
    %632 = arith.mulf %630, %631 : vector<1x32xf32>
    %633 = arith.mulf %628, %628 : vector<16x32xf32>
    %cst_247 = arith.constant dense<0.000000e+00> : vector<32xf32>
    %634 = vector.multi_reduction <add>, %633, %cst_247 [0] : vector<16x32xf32> to vector<32xf32>
    %635 = vector.shape_cast %634 : vector<32xf32> to vector<1x32xf32>
    %cst_248 = arith.constant 6.250000e-02 : f32
    %636 = vector.broadcast %cst_248 : f32 to vector<1x32xf32>
    %637 = arith.mulf %635, %636 : vector<1x32xf32>
    %638 = arith.mulf %632, %632 : vector<1x32xf32>
    %639 = arith.subf %637, %638 : vector<1x32xf32>
    %640 = vector.broadcast %632 : vector<1x32xf32> to vector<16x32xf32>
    %641 = arith.subf %628, %640 : vector<16x32xf32>
    %cst_249 = arith.constant 9.99999974E-6 : f32
    %642 = vector.broadcast %cst_249 : f32 to vector<1x32xf32>
    %643 = arith.addf %639, %642 : vector<1x32xf32>
    %644 = math.rsqrt %643 : vector<1x32xf32>
    %645 = vector.broadcast %644 : vector<1x32xf32> to vector<16x32xf32>
    %646 = arith.mulf %641, %645 : vector<16x32xf32>
    %cst_250 = arith.constant 5.000000e-01 : f32
    %647 = vector.broadcast %cst_250 : f32 to vector<16x32xf32>
    %648 = arith.mulf %647, %646 : vector<16x32xf32>
    %649 = math.tanh %648 : vector<16x32xf32>
    %cst_251 = arith.constant 1.000000e+00 : f32
    %650 = vector.broadcast %cst_251 : f32 to vector<16x32xf32>
    %651 = arith.addf %649, %650 : vector<16x32xf32>
    %cst_252 = arith.constant 5.000000e-01 : f32
    %652 = vector.broadcast %cst_252 : f32 to vector<16x32xf32>
    %653 = arith.mulf %652, %651 : vector<16x32xf32>
    %654 = arith.subf %653, %0 : vector<16x32xf32>
    %655 = arith.mulf %654, %654 : vector<16x32xf32>
    %656 = vector.shape_cast %655 : vector<16x32xf32> to vector<1x16x32xf32>
    %cst_253 = arith.constant dense<0.000000e+00> : vector<1xf32>
    %657 = vector.multi_reduction <add>, %656, %cst_253 [1, 2] : vector<1x16x32xf32> to vector<1xf32>
    %658 = vector.shape_cast %657 : vector<1xf32> to vector<1x1x1xf32>
    %659 = vector.extract %658[0, 0, 0] : f32 from vector<1x1x1xf32>
    %c5_i32 = arith.constant 5 : i32
    %660 = vector.broadcast %c5_i32 : i32 to vector<8x128xi32>
    %661 = arith.cmpi eq, %2, %660 : vector<8x128xi32>
    %662 = vector.broadcast %659 : f32 to vector<8x128xf32>
    %663 = arith.select %661, %662, %553 : vector<8x128xi1>, vector<8x128xf32>
    %c6 = arith.constant 6 : index
    %c0_254 = arith.constant 0 : index
    %c0_255 = arith.constant 0 : index
    %664 = vector.load %arg2[%c6, %c0_254, %c0_255] : memref<10x32x64xbf16, #tpu.memory_space<vmem>>, vector<1x32x64xbf16>
    %665 = vector.shape_cast %664 : vector<1x32x64xbf16> to vector<32x64xbf16>
    %cst_256 = arith.constant dense<0.000000e+00> : vector<16x64xf32>
    %666 = tpu.matmul %1, %665, %cst_256 {dimension_numbers = #tpu.dot_dimension_numbers<[1], [0], [0], [1], [0, 0, 1, 1], [], []>} : vector<16x32xbf16>, vector<32x64xbf16>, vector<16x64xf32> -> vector<16x64xf32>
    %cst_257 = arith.constant dense<0.000000e+00> : vector<64xf32>
    %667 = vector.multi_reduction <add>, %666, %cst_257 [0] : vector<16x64xf32> to vector<64xf32>
    %668 = vector.shape_cast %667 : vector<64xf32> to vector<1x64xf32>
    %cst_258 = arith.constant 6.250000e-02 : f32
    %669 = vector.broadcast %cst_258 : f32 to vector<1x64xf32>
    %670 = arith.mulf %668, %669 : vector<1x64xf32>
    %671 = arith.mulf %666, %666 : vector<16x64xf32>
    %cst_259 = arith.constant dense<0.000000e+00> : vector<64xf32>
    %672 = vector.multi_reduction <add>, %671, %cst_259 [0] : vector<16x64xf32> to vector<64xf32>
    %673 = vector.shape_cast %672 : vector<64xf32> to vector<1x64xf32>
    %cst_260 = arith.constant 6.250000e-02 : f32
    %674 = vector.broadcast %cst_260 : f32 to vector<1x64xf32>
    %675 = arith.mulf %673, %674 : vector<1x64xf32>
    %676 = arith.mulf %670, %670 : vector<1x64xf32>
    %677 = arith.subf %675, %676 : vector<1x64xf32>
    %678 = vector.broadcast %670 : vector<1x64xf32> to vector<16x64xf32>
    %679 = arith.subf %666, %678 : vector<16x64xf32>
    %cst_261 = arith.constant 9.99999974E-6 : f32
    %680 = vector.broadcast %cst_261 : f32 to vector<1x64xf32>
    %681 = arith.addf %677, %680 : vector<1x64xf32>
    %682 = math.rsqrt %681 : vector<1x64xf32>
    %683 = vector.broadcast %682 : vector<1x64xf32> to vector<16x64xf32>
    %684 = arith.mulf %679, %683 : vector<16x64xf32>
    %cst_262 = arith.constant 0.000000e+00 : f32
    %685 = vector.broadcast %cst_262 : f32 to vector<16x64xf32>
    %686 = arith.maximumf %684, %685 : vector<16x64xf32>
    %687 = arith.truncf %686 : vector<16x64xf32> to vector<16x64xbf16>
    %c6_263 = arith.constant 6 : index
    %c0_264 = arith.constant 0 : index
    %c0_265 = arith.constant 0 : index
    %688 = vector.load %arg3[%c6_263, %c0_264, %c0_265] : memref<10x64x128xbf16, #tpu.memory_space<vmem>>, vector<1x64x128xbf16>
    %689 = vector.shape_cast %688 : vector<1x64x128xbf16> to vector<64x128xbf16>
    %cst_266 = arith.constant dense<0.000000e+00> : vector<16x128xf32>
    %690 = tpu.matmul %687, %689, %cst_266 {dimension_numbers = #tpu.dot_dimension_numbers<[1], [0], [0], [1], [0, 0, 1, 1], [], []>} : vector<16x64xbf16>, vector<64x128xbf16>, vector<16x128xf32> -> vector<16x128xf32>
    %cst_267 = arith.constant dense<0.000000e+00> : vector<128xf32>
    %691 = vector.multi_reduction <add>, %690, %cst_267 [0] : vector<16x128xf32> to vector<128xf32>
    %692 = vector.shape_cast %691 : vector<128xf32> to vector<1x128xf32>
    %cst_268 = arith.constant 6.250000e-02 : f32
    %693 = vector.broadcast %cst_268 : f32 to vector<1x128xf32>
    %694 = arith.mulf %692, %693 : vector<1x128xf32>
    %695 = arith.mulf %690, %690 : vector<16x128xf32>
    %cst_269 = arith.constant dense<0.000000e+00> : vector<128xf32>
    %696 = vector.multi_reduction <add>, %695, %cst_269 [0] : vector<16x128xf32> to vector<128xf32>
    %697 = vector.shape_cast %696 : vector<128xf32> to vector<1x128xf32>
    %cst_270 = arith.constant 6.250000e-02 : f32
    %698 = vector.broadcast %cst_270 : f32 to vector<1x128xf32>
    %699 = arith.mulf %697, %698 : vector<1x128xf32>
    %700 = arith.mulf %694, %694 : vector<1x128xf32>
    %701 = arith.subf %699, %700 : vector<1x128xf32>
    %702 = vector.broadcast %694 : vector<1x128xf32> to vector<16x128xf32>
    %703 = arith.subf %690, %702 : vector<16x128xf32>
    %cst_271 = arith.constant 9.99999974E-6 : f32
    %704 = vector.broadcast %cst_271 : f32 to vector<1x128xf32>
    %705 = arith.addf %701, %704 : vector<1x128xf32>
    %706 = math.rsqrt %705 : vector<1x128xf32>
    %707 = vector.broadcast %706 : vector<1x128xf32> to vector<16x128xf32>
    %708 = arith.mulf %703, %707 : vector<16x128xf32>
    %cst_272 = arith.constant 0.000000e+00 : f32
    %709 = vector.broadcast %cst_272 : f32 to vector<16x128xf32>
    %710 = arith.maximumf %708, %709 : vector<16x128xf32>
    %711 = arith.truncf %710 : vector<16x128xf32> to vector<16x128xbf16>
    %c6_273 = arith.constant 6 : index
    %c0_274 = arith.constant 0 : index
    %c0_275 = arith.constant 0 : index
    %712 = vector.load %arg4[%c6_273, %c0_274, %c0_275] : memref<10x128x256xbf16, #tpu.memory_space<vmem>>, vector<1x128x256xbf16>
    %713 = vector.shape_cast %712 : vector<1x128x256xbf16> to vector<128x256xbf16>
    %cst_276 = arith.constant dense<0.000000e+00> : vector<16x256xf32>
    %714 = tpu.matmul %711, %713, %cst_276 {dimension_numbers = #tpu.dot_dimension_numbers<[1], [0], [0], [1], [0, 0, 1, 1], [], []>} : vector<16x128xbf16>, vector<128x256xbf16>, vector<16x256xf32> -> vector<16x256xf32>
    %cst_277 = arith.constant dense<0.000000e+00> : vector<256xf32>
    %715 = vector.multi_reduction <add>, %714, %cst_277 [0] : vector<16x256xf32> to vector<256xf32>
    %716 = vector.shape_cast %715 : vector<256xf32> to vector<1x256xf32>
    %cst_278 = arith.constant 6.250000e-02 : f32
    %717 = vector.broadcast %cst_278 : f32 to vector<1x256xf32>
    %718 = arith.mulf %716, %717 : vector<1x256xf32>
    %719 = arith.mulf %714, %714 : vector<16x256xf32>
    %cst_279 = arith.constant dense<0.000000e+00> : vector<256xf32>
    %720 = vector.multi_reduction <add>, %719, %cst_279 [0] : vector<16x256xf32> to vector<256xf32>
    %721 = vector.shape_cast %720 : vector<256xf32> to vector<1x256xf32>
    %cst_280 = arith.constant 6.250000e-02 : f32
    %722 = vector.broadcast %cst_280 : f32 to vector<1x256xf32>
    %723 = arith.mulf %721, %722 : vector<1x256xf32>
    %724 = arith.mulf %718, %718 : vector<1x256xf32>
    %725 = arith.subf %723, %724 : vector<1x256xf32>
    %726 = vector.broadcast %718 : vector<1x256xf32> to vector<16x256xf32>
    %727 = arith.subf %714, %726 : vector<16x256xf32>
    %cst_281 = arith.constant 9.99999974E-6 : f32
    %728 = vector.broadcast %cst_281 : f32 to vector<1x256xf32>
    %729 = arith.addf %725, %728 : vector<1x256xf32>
    %730 = math.rsqrt %729 : vector<1x256xf32>
    %731 = vector.broadcast %730 : vector<1x256xf32> to vector<16x256xf32>
    %732 = arith.mulf %727, %731 : vector<16x256xf32>
    %cst_282 = arith.constant 0.000000e+00 : f32
    %733 = vector.broadcast %cst_282 : f32 to vector<16x256xf32>
    %734 = arith.maximumf %732, %733 : vector<16x256xf32>
    %735 = arith.truncf %734 : vector<16x256xf32> to vector<16x256xbf16>
    %c6_283 = arith.constant 6 : index
    %c0_284 = arith.constant 0 : index
    %c0_285 = arith.constant 0 : index
    %736 = vector.load %arg5[%c6_283, %c0_284, %c0_285] : memref<10x256x32xbf16, #tpu.memory_space<vmem>>, vector<1x256x32xbf16>
    %737 = vector.shape_cast %736 : vector<1x256x32xbf16> to vector<256x32xbf16>
    %cst_286 = arith.constant dense<0.000000e+00> : vector<16x32xf32>
    %738 = tpu.matmul %735, %737, %cst_286 {dimension_numbers = #tpu.dot_dimension_numbers<[1], [0], [0], [1], [0, 0, 1, 1], [], []>} : vector<16x256xbf16>, vector<256x32xbf16>, vector<16x32xf32> -> vector<16x32xf32>
    %cst_287 = arith.constant dense<0.000000e+00> : vector<32xf32>
    %739 = vector.multi_reduction <add>, %738, %cst_287 [0] : vector<16x32xf32> to vector<32xf32>
    %740 = vector.shape_cast %739 : vector<32xf32> to vector<1x32xf32>
    %cst_288 = arith.constant 6.250000e-02 : f32
    %741 = vector.broadcast %cst_288 : f32 to vector<1x32xf32>
    %742 = arith.mulf %740, %741 : vector<1x32xf32>
    %743 = arith.mulf %738, %738 : vector<16x32xf32>
    %cst_289 = arith.constant dense<0.000000e+00> : vector<32xf32>
    %744 = vector.multi_reduction <add>, %743, %cst_289 [0] : vector<16x32xf32> to vector<32xf32>
    %745 = vector.shape_cast %744 : vector<32xf32> to vector<1x32xf32>
    %cst_290 = arith.constant 6.250000e-02 : f32
    %746 = vector.broadcast %cst_290 : f32 to vector<1x32xf32>
    %747 = arith.mulf %745, %746 : vector<1x32xf32>
    %748 = arith.mulf %742, %742 : vector<1x32xf32>
    %749 = arith.subf %747, %748 : vector<1x32xf32>
    %750 = vector.broadcast %742 : vector<1x32xf32> to vector<16x32xf32>
    %751 = arith.subf %738, %750 : vector<16x32xf32>
    %cst_291 = arith.constant 9.99999974E-6 : f32
    %752 = vector.broadcast %cst_291 : f32 to vector<1x32xf32>
    %753 = arith.addf %749, %752 : vector<1x32xf32>
    %754 = math.rsqrt %753 : vector<1x32xf32>
    %755 = vector.broadcast %754 : vector<1x32xf32> to vector<16x32xf32>
    %756 = arith.mulf %751, %755 : vector<16x32xf32>
    %cst_292 = arith.constant 5.000000e-01 : f32
    %757 = vector.broadcast %cst_292 : f32 to vector<16x32xf32>
    %758 = arith.mulf %757, %756 : vector<16x32xf32>
    %759 = math.tanh %758 : vector<16x32xf32>
    %cst_293 = arith.constant 1.000000e+00 : f32
    %760 = vector.broadcast %cst_293 : f32 to vector<16x32xf32>
    %761 = arith.addf %759, %760 : vector<16x32xf32>
    %cst_294 = arith.constant 5.000000e-01 : f32
    %762 = vector.broadcast %cst_294 : f32 to vector<16x32xf32>
    %763 = arith.mulf %762, %761 : vector<16x32xf32>
    %764 = arith.subf %763, %0 : vector<16x32xf32>
    %765 = arith.mulf %764, %764 : vector<16x32xf32>
    %766 = vector.shape_cast %765 : vector<16x32xf32> to vector<1x16x32xf32>
    %cst_295 = arith.constant dense<0.000000e+00> : vector<1xf32>
    %767 = vector.multi_reduction <add>, %766, %cst_295 [1, 2] : vector<1x16x32xf32> to vector<1xf32>
    %768 = vector.shape_cast %767 : vector<1xf32> to vector<1x1x1xf32>
    %769 = vector.extract %768[0, 0, 0] : f32 from vector<1x1x1xf32>
    %c6_i32 = arith.constant 6 : i32
    %770 = vector.broadcast %c6_i32 : i32 to vector<8x128xi32>
    %771 = arith.cmpi eq, %2, %770 : vector<8x128xi32>
    %772 = vector.broadcast %769 : f32 to vector<8x128xf32>
    %773 = arith.select %771, %772, %663 : vector<8x128xi1>, vector<8x128xf32>
    %c7 = arith.constant 7 : index
    %c0_296 = arith.constant 0 : index
    %c0_297 = arith.constant 0 : index
    %774 = vector.load %arg2[%c7, %c0_296, %c0_297] : memref<10x32x64xbf16, #tpu.memory_space<vmem>>, vector<1x32x64xbf16>
    %775 = vector.shape_cast %774 : vector<1x32x64xbf16> to vector<32x64xbf16>
    %cst_298 = arith.constant dense<0.000000e+00> : vector<16x64xf32>
    %776 = tpu.matmul %1, %775, %cst_298 {dimension_numbers = #tpu.dot_dimension_numbers<[1], [0], [0], [1], [0, 0, 1, 1], [], []>} : vector<16x32xbf16>, vector<32x64xbf16>, vector<16x64xf32> -> vector<16x64xf32>
    %cst_299 = arith.constant dense<0.000000e+00> : vector<64xf32>
    %777 = vector.multi_reduction <add>, %776, %cst_299 [0] : vector<16x64xf32> to vector<64xf32>
    %778 = vector.shape_cast %777 : vector<64xf32> to vector<1x64xf32>
    %cst_300 = arith.constant 6.250000e-02 : f32
    %779 = vector.broadcast %cst_300 : f32 to vector<1x64xf32>
    %780 = arith.mulf %778, %779 : vector<1x64xf32>
    %781 = arith.mulf %776, %776 : vector<16x64xf32>
    %cst_301 = arith.constant dense<0.000000e+00> : vector<64xf32>
    %782 = vector.multi_reduction <add>, %781, %cst_301 [0] : vector<16x64xf32> to vector<64xf32>
    %783 = vector.shape_cast %782 : vector<64xf32> to vector<1x64xf32>
    %cst_302 = arith.constant 6.250000e-02 : f32
    %784 = vector.broadcast %cst_302 : f32 to vector<1x64xf32>
    %785 = arith.mulf %783, %784 : vector<1x64xf32>
    %786 = arith.mulf %780, %780 : vector<1x64xf32>
    %787 = arith.subf %785, %786 : vector<1x64xf32>
    %788 = vector.broadcast %780 : vector<1x64xf32> to vector<16x64xf32>
    %789 = arith.subf %776, %788 : vector<16x64xf32>
    %cst_303 = arith.constant 9.99999974E-6 : f32
    %790 = vector.broadcast %cst_303 : f32 to vector<1x64xf32>
    %791 = arith.addf %787, %790 : vector<1x64xf32>
    %792 = math.rsqrt %791 : vector<1x64xf32>
    %793 = vector.broadcast %792 : vector<1x64xf32> to vector<16x64xf32>
    %794 = arith.mulf %789, %793 : vector<16x64xf32>
    %cst_304 = arith.constant 0.000000e+00 : f32
    %795 = vector.broadcast %cst_304 : f32 to vector<16x64xf32>
    %796 = arith.maximumf %794, %795 : vector<16x64xf32>
    %797 = arith.truncf %796 : vector<16x64xf32> to vector<16x64xbf16>
    %c7_305 = arith.constant 7 : index
    %c0_306 = arith.constant 0 : index
    %c0_307 = arith.constant 0 : index
    %798 = vector.load %arg3[%c7_305, %c0_306, %c0_307] : memref<10x64x128xbf16, #tpu.memory_space<vmem>>, vector<1x64x128xbf16>
    %799 = vector.shape_cast %798 : vector<1x64x128xbf16> to vector<64x128xbf16>
    %cst_308 = arith.constant dense<0.000000e+00> : vector<16x128xf32>
    %800 = tpu.matmul %797, %799, %cst_308 {dimension_numbers = #tpu.dot_dimension_numbers<[1], [0], [0], [1], [0, 0, 1, 1], [], []>} : vector<16x64xbf16>, vector<64x128xbf16>, vector<16x128xf32> -> vector<16x128xf32>
    %cst_309 = arith.constant dense<0.000000e+00> : vector<128xf32>
    %801 = vector.multi_reduction <add>, %800, %cst_309 [0] : vector<16x128xf32> to vector<128xf32>
    %802 = vector.shape_cast %801 : vector<128xf32> to vector<1x128xf32>
    %cst_310 = arith.constant 6.250000e-02 : f32
    %803 = vector.broadcast %cst_310 : f32 to vector<1x128xf32>
    %804 = arith.mulf %802, %803 : vector<1x128xf32>
    %805 = arith.mulf %800, %800 : vector<16x128xf32>
    %cst_311 = arith.constant dense<0.000000e+00> : vector<128xf32>
    %806 = vector.multi_reduction <add>, %805, %cst_311 [0] : vector<16x128xf32> to vector<128xf32>
    %807 = vector.shape_cast %806 : vector<128xf32> to vector<1x128xf32>
    %cst_312 = arith.constant 6.250000e-02 : f32
    %808 = vector.broadcast %cst_312 : f32 to vector<1x128xf32>
    %809 = arith.mulf %807, %808 : vector<1x128xf32>
    %810 = arith.mulf %804, %804 : vector<1x128xf32>
    %811 = arith.subf %809, %810 : vector<1x128xf32>
    %812 = vector.broadcast %804 : vector<1x128xf32> to vector<16x128xf32>
    %813 = arith.subf %800, %812 : vector<16x128xf32>
    %cst_313 = arith.constant 9.99999974E-6 : f32
    %814 = vector.broadcast %cst_313 : f32 to vector<1x128xf32>
    %815 = arith.addf %811, %814 : vector<1x128xf32>
    %816 = math.rsqrt %815 : vector<1x128xf32>
    %817 = vector.broadcast %816 : vector<1x128xf32> to vector<16x128xf32>
    %818 = arith.mulf %813, %817 : vector<16x128xf32>
    %cst_314 = arith.constant 0.000000e+00 : f32
    %819 = vector.broadcast %cst_314 : f32 to vector<16x128xf32>
    %820 = arith.maximumf %818, %819 : vector<16x128xf32>
    %821 = arith.truncf %820 : vector<16x128xf32> to vector<16x128xbf16>
    %c7_315 = arith.constant 7 : index
    %c0_316 = arith.constant 0 : index
    %c0_317 = arith.constant 0 : index
    %822 = vector.load %arg4[%c7_315, %c0_316, %c0_317] : memref<10x128x256xbf16, #tpu.memory_space<vmem>>, vector<1x128x256xbf16>
    %823 = vector.shape_cast %822 : vector<1x128x256xbf16> to vector<128x256xbf16>
    %cst_318 = arith.constant dense<0.000000e+00> : vector<16x256xf32>
    %824 = tpu.matmul %821, %823, %cst_318 {dimension_numbers = #tpu.dot_dimension_numbers<[1], [0], [0], [1], [0, 0, 1, 1], [], []>} : vector<16x128xbf16>, vector<128x256xbf16>, vector<16x256xf32> -> vector<16x256xf32>
    %cst_319 = arith.constant dense<0.000000e+00> : vector<256xf32>
    %825 = vector.multi_reduction <add>, %824, %cst_319 [0] : vector<16x256xf32> to vector<256xf32>
    %826 = vector.shape_cast %825 : vector<256xf32> to vector<1x256xf32>
    %cst_320 = arith.constant 6.250000e-02 : f32
    %827 = vector.broadcast %cst_320 : f32 to vector<1x256xf32>
    %828 = arith.mulf %826, %827 : vector<1x256xf32>
    %829 = arith.mulf %824, %824 : vector<16x256xf32>
    %cst_321 = arith.constant dense<0.000000e+00> : vector<256xf32>
    %830 = vector.multi_reduction <add>, %829, %cst_321 [0] : vector<16x256xf32> to vector<256xf32>
    %831 = vector.shape_cast %830 : vector<256xf32> to vector<1x256xf32>
    %cst_322 = arith.constant 6.250000e-02 : f32
    %832 = vector.broadcast %cst_322 : f32 to vector<1x256xf32>
    %833 = arith.mulf %831, %832 : vector<1x256xf32>
    %834 = arith.mulf %828, %828 : vector<1x256xf32>
    %835 = arith.subf %833, %834 : vector<1x256xf32>
    %836 = vector.broadcast %828 : vector<1x256xf32> to vector<16x256xf32>
    %837 = arith.subf %824, %836 : vector<16x256xf32>
    %cst_323 = arith.constant 9.99999974E-6 : f32
    %838 = vector.broadcast %cst_323 : f32 to vector<1x256xf32>
    %839 = arith.addf %835, %838 : vector<1x256xf32>
    %840 = math.rsqrt %839 : vector<1x256xf32>
    %841 = vector.broadcast %840 : vector<1x256xf32> to vector<16x256xf32>
    %842 = arith.mulf %837, %841 : vector<16x256xf32>
    %cst_324 = arith.constant 0.000000e+00 : f32
    %843 = vector.broadcast %cst_324 : f32 to vector<16x256xf32>
    %844 = arith.maximumf %842, %843 : vector<16x256xf32>
    %845 = arith.truncf %844 : vector<16x256xf32> to vector<16x256xbf16>
    %c7_325 = arith.constant 7 : index
    %c0_326 = arith.constant 0 : index
    %c0_327 = arith.constant 0 : index
    %846 = vector.load %arg5[%c7_325, %c0_326, %c0_327] : memref<10x256x32xbf16, #tpu.memory_space<vmem>>, vector<1x256x32xbf16>
    %847 = vector.shape_cast %846 : vector<1x256x32xbf16> to vector<256x32xbf16>
    %cst_328 = arith.constant dense<0.000000e+00> : vector<16x32xf32>
    %848 = tpu.matmul %845, %847, %cst_328 {dimension_numbers = #tpu.dot_dimension_numbers<[1], [0], [0], [1], [0, 0, 1, 1], [], []>} : vector<16x256xbf16>, vector<256x32xbf16>, vector<16x32xf32> -> vector<16x32xf32>
    %cst_329 = arith.constant dense<0.000000e+00> : vector<32xf32>
    %849 = vector.multi_reduction <add>, %848, %cst_329 [0] : vector<16x32xf32> to vector<32xf32>
    %850 = vector.shape_cast %849 : vector<32xf32> to vector<1x32xf32>
    %cst_330 = arith.constant 6.250000e-02 : f32
    %851 = vector.broadcast %cst_330 : f32 to vector<1x32xf32>
    %852 = arith.mulf %850, %851 : vector<1x32xf32>
    %853 = arith.mulf %848, %848 : vector<16x32xf32>
    %cst_331 = arith.constant dense<0.000000e+00> : vector<32xf32>
    %854 = vector.multi_reduction <add>, %853, %cst_331 [0] : vector<16x32xf32> to vector<32xf32>
    %855 = vector.shape_cast %854 : vector<32xf32> to vector<1x32xf32>
    %cst_332 = arith.constant 6.250000e-02 : f32
    %856 = vector.broadcast %cst_332 : f32 to vector<1x32xf32>
    %857 = arith.mulf %855, %856 : vector<1x32xf32>
    %858 = arith.mulf %852, %852 : vector<1x32xf32>
    %859 = arith.subf %857, %858 : vector<1x32xf32>
    %860 = vector.broadcast %852 : vector<1x32xf32> to vector<16x32xf32>
    %861 = arith.subf %848, %860 : vector<16x32xf32>
    %cst_333 = arith.constant 9.99999974E-6 : f32
    %862 = vector.broadcast %cst_333 : f32 to vector<1x32xf32>
    %863 = arith.addf %859, %862 : vector<1x32xf32>
    %864 = math.rsqrt %863 : vector<1x32xf32>
    %865 = vector.broadcast %864 : vector<1x32xf32> to vector<16x32xf32>
    %866 = arith.mulf %861, %865 : vector<16x32xf32>
    %cst_334 = arith.constant 5.000000e-01 : f32
    %867 = vector.broadcast %cst_334 : f32 to vector<16x32xf32>
    %868 = arith.mulf %867, %866 : vector<16x32xf32>
    %869 = math.tanh %868 : vector<16x32xf32>
    %cst_335 = arith.constant 1.000000e+00 : f32
    %870 = vector.broadcast %cst_335 : f32 to vector<16x32xf32>
    %871 = arith.addf %869, %870 : vector<16x32xf32>
    %cst_336 = arith.constant 5.000000e-01 : f32
    %872 = vector.broadcast %cst_336 : f32 to vector<16x32xf32>
    %873 = arith.mulf %872, %871 : vector<16x32xf32>
    %874 = arith.subf %873, %0 : vector<16x32xf32>
    %875 = arith.mulf %874, %874 : vector<16x32xf32>
    %876 = vector.shape_cast %875 : vector<16x32xf32> to vector<1x16x32xf32>
    %cst_337 = arith.constant dense<0.000000e+00> : vector<1xf32>
    %877 = vector.multi_reduction <add>, %876, %cst_337 [1, 2] : vector<1x16x32xf32> to vector<1xf32>
    %878 = vector.shape_cast %877 : vector<1xf32> to vector<1x1x1xf32>
    %879 = vector.extract %878[0, 0, 0] : f32 from vector<1x1x1xf32>
    %c7_i32 = arith.constant 7 : i32
    %880 = vector.broadcast %c7_i32 : i32 to vector<8x128xi32>
    %881 = arith.cmpi eq, %2, %880 : vector<8x128xi32>
    %882 = vector.broadcast %879 : f32 to vector<8x128xf32>
    %883 = arith.select %881, %882, %773 : vector<8x128xi1>, vector<8x128xf32>
    %c8 = arith.constant 8 : index
    %c0_338 = arith.constant 0 : index
    %c0_339 = arith.constant 0 : index
    %884 = vector.load %arg2[%c8, %c0_338, %c0_339] : memref<10x32x64xbf16, #tpu.memory_space<vmem>>, vector<1x32x64xbf16>
    %885 = vector.shape_cast %884 : vector<1x32x64xbf16> to vector<32x64xbf16>
    %cst_340 = arith.constant dense<0.000000e+00> : vector<16x64xf32>
    %886 = tpu.matmul %1, %885, %cst_340 {dimension_numbers = #tpu.dot_dimension_numbers<[1], [0], [0], [1], [0, 0, 1, 1], [], []>} : vector<16x32xbf16>, vector<32x64xbf16>, vector<16x64xf32> -> vector<16x64xf32>
    %cst_341 = arith.constant dense<0.000000e+00> : vector<64xf32>
    %887 = vector.multi_reduction <add>, %886, %cst_341 [0] : vector<16x64xf32> to vector<64xf32>
    %888 = vector.shape_cast %887 : vector<64xf32> to vector<1x64xf32>
    %cst_342 = arith.constant 6.250000e-02 : f32
    %889 = vector.broadcast %cst_342 : f32 to vector<1x64xf32>
    %890 = arith.mulf %888, %889 : vector<1x64xf32>
    %891 = arith.mulf %886, %886 : vector<16x64xf32>
    %cst_343 = arith.constant dense<0.000000e+00> : vector<64xf32>
    %892 = vector.multi_reduction <add>, %891, %cst_343 [0] : vector<16x64xf32> to vector<64xf32>
    %893 = vector.shape_cast %892 : vector<64xf32> to vector<1x64xf32>
    %cst_344 = arith.constant 6.250000e-02 : f32
    %894 = vector.broadcast %cst_344 : f32 to vector<1x64xf32>
    %895 = arith.mulf %893, %894 : vector<1x64xf32>
    %896 = arith.mulf %890, %890 : vector<1x64xf32>
    %897 = arith.subf %895, %896 : vector<1x64xf32>
    %898 = vector.broadcast %890 : vector<1x64xf32> to vector<16x64xf32>
    %899 = arith.subf %886, %898 : vector<16x64xf32>
    %cst_345 = arith.constant 9.99999974E-6 : f32
    %900 = vector.broadcast %cst_345 : f32 to vector<1x64xf32>
    %901 = arith.addf %897, %900 : vector<1x64xf32>
    %902 = math.rsqrt %901 : vector<1x64xf32>
    %903 = vector.broadcast %902 : vector<1x64xf32> to vector<16x64xf32>
    %904 = arith.mulf %899, %903 : vector<16x64xf32>
    %cst_346 = arith.constant 0.000000e+00 : f32
    %905 = vector.broadcast %cst_346 : f32 to vector<16x64xf32>
    %906 = arith.maximumf %904, %905 : vector<16x64xf32>
    %907 = arith.truncf %906 : vector<16x64xf32> to vector<16x64xbf16>
    %c8_347 = arith.constant 8 : index
    %c0_348 = arith.constant 0 : index
    %c0_349 = arith.constant 0 : index
    %908 = vector.load %arg3[%c8_347, %c0_348, %c0_349] : memref<10x64x128xbf16, #tpu.memory_space<vmem>>, vector<1x64x128xbf16>
    %909 = vector.shape_cast %908 : vector<1x64x128xbf16> to vector<64x128xbf16>
    %cst_350 = arith.constant dense<0.000000e+00> : vector<16x128xf32>
    %910 = tpu.matmul %907, %909, %cst_350 {dimension_numbers = #tpu.dot_dimension_numbers<[1], [0], [0], [1], [0, 0, 1, 1], [], []>} : vector<16x64xbf16>, vector<64x128xbf16>, vector<16x128xf32> -> vector<16x128xf32>
    %cst_351 = arith.constant dense<0.000000e+00> : vector<128xf32>
    %911 = vector.multi_reduction <add>, %910, %cst_351 [0] : vector<16x128xf32> to vector<128xf32>
    %912 = vector.shape_cast %911 : vector<128xf32> to vector<1x128xf32>
    %cst_352 = arith.constant 6.250000e-02 : f32
    %913 = vector.broadcast %cst_352 : f32 to vector<1x128xf32>
    %914 = arith.mulf %912, %913 : vector<1x128xf32>
    %915 = arith.mulf %910, %910 : vector<16x128xf32>
    %cst_353 = arith.constant dense<0.000000e+00> : vector<128xf32>
    %916 = vector.multi_reduction <add>, %915, %cst_353 [0] : vector<16x128xf32> to vector<128xf32>
    %917 = vector.shape_cast %916 : vector<128xf32> to vector<1x128xf32>
    %cst_354 = arith.constant 6.250000e-02 : f32
    %918 = vector.broadcast %cst_354 : f32 to vector<1x128xf32>
    %919 = arith.mulf %917, %918 : vector<1x128xf32>
    %920 = arith.mulf %914, %914 : vector<1x128xf32>
    %921 = arith.subf %919, %920 : vector<1x128xf32>
    %922 = vector.broadcast %914 : vector<1x128xf32> to vector<16x128xf32>
    %923 = arith.subf %910, %922 : vector<16x128xf32>
    %cst_355 = arith.constant 9.99999974E-6 : f32
    %924 = vector.broadcast %cst_355 : f32 to vector<1x128xf32>
    %925 = arith.addf %921, %924 : vector<1x128xf32>
    %926 = math.rsqrt %925 : vector<1x128xf32>
    %927 = vector.broadcast %926 : vector<1x128xf32> to vector<16x128xf32>
    %928 = arith.mulf %923, %927 : vector<16x128xf32>
    %cst_356 = arith.constant 0.000000e+00 : f32
    %929 = vector.broadcast %cst_356 : f32 to vector<16x128xf32>
    %930 = arith.maximumf %928, %929 : vector<16x128xf32>
    %931 = arith.truncf %930 : vector<16x128xf32> to vector<16x128xbf16>
    %c8_357 = arith.constant 8 : index
    %c0_358 = arith.constant 0 : index
    %c0_359 = arith.constant 0 : index
    %932 = vector.load %arg4[%c8_357, %c0_358, %c0_359] : memref<10x128x256xbf16, #tpu.memory_space<vmem>>, vector<1x128x256xbf16>
    %933 = vector.shape_cast %932 : vector<1x128x256xbf16> to vector<128x256xbf16>
    %cst_360 = arith.constant dense<0.000000e+00> : vector<16x256xf32>
    %934 = tpu.matmul %931, %933, %cst_360 {dimension_numbers = #tpu.dot_dimension_numbers<[1], [0], [0], [1], [0, 0, 1, 1], [], []>} : vector<16x128xbf16>, vector<128x256xbf16>, vector<16x256xf32> -> vector<16x256xf32>
    %cst_361 = arith.constant dense<0.000000e+00> : vector<256xf32>
    %935 = vector.multi_reduction <add>, %934, %cst_361 [0] : vector<16x256xf32> to vector<256xf32>
    %936 = vector.shape_cast %935 : vector<256xf32> to vector<1x256xf32>
    %cst_362 = arith.constant 6.250000e-02 : f32
    %937 = vector.broadcast %cst_362 : f32 to vector<1x256xf32>
    %938 = arith.mulf %936, %937 : vector<1x256xf32>
    %939 = arith.mulf %934, %934 : vector<16x256xf32>
    %cst_363 = arith.constant dense<0.000000e+00> : vector<256xf32>
    %940 = vector.multi_reduction <add>, %939, %cst_363 [0] : vector<16x256xf32> to vector<256xf32>
    %941 = vector.shape_cast %940 : vector<256xf32> to vector<1x256xf32>
    %cst_364 = arith.constant 6.250000e-02 : f32
    %942 = vector.broadcast %cst_364 : f32 to vector<1x256xf32>
    %943 = arith.mulf %941, %942 : vector<1x256xf32>
    %944 = arith.mulf %938, %938 : vector<1x256xf32>
    %945 = arith.subf %943, %944 : vector<1x256xf32>
    %946 = vector.broadcast %938 : vector<1x256xf32> to vector<16x256xf32>
    %947 = arith.subf %934, %946 : vector<16x256xf32>
    %cst_365 = arith.constant 9.99999974E-6 : f32
    %948 = vector.broadcast %cst_365 : f32 to vector<1x256xf32>
    %949 = arith.addf %945, %948 : vector<1x256xf32>
    %950 = math.rsqrt %949 : vector<1x256xf32>
    %951 = vector.broadcast %950 : vector<1x256xf32> to vector<16x256xf32>
    %952 = arith.mulf %947, %951 : vector<16x256xf32>
    %cst_366 = arith.constant 0.000000e+00 : f32
    %953 = vector.broadcast %cst_366 : f32 to vector<16x256xf32>
    %954 = arith.maximumf %952, %953 : vector<16x256xf32>
    %955 = arith.truncf %954 : vector<16x256xf32> to vector<16x256xbf16>
    %c8_367 = arith.constant 8 : index
    %c0_368 = arith.constant 0 : index
    %c0_369 = arith.constant 0 : index
    %956 = vector.load %arg5[%c8_367, %c0_368, %c0_369] : memref<10x256x32xbf16, #tpu.memory_space<vmem>>, vector<1x256x32xbf16>
    %957 = vector.shape_cast %956 : vector<1x256x32xbf16> to vector<256x32xbf16>
    %cst_370 = arith.constant dense<0.000000e+00> : vector<16x32xf32>
    %958 = tpu.matmul %955, %957, %cst_370 {dimension_numbers = #tpu.dot_dimension_numbers<[1], [0], [0], [1], [0, 0, 1, 1], [], []>} : vector<16x256xbf16>, vector<256x32xbf16>, vector<16x32xf32> -> vector<16x32xf32>
    %cst_371 = arith.constant dense<0.000000e+00> : vector<32xf32>
    %959 = vector.multi_reduction <add>, %958, %cst_371 [0] : vector<16x32xf32> to vector<32xf32>
    %960 = vector.shape_cast %959 : vector<32xf32> to vector<1x32xf32>
    %cst_372 = arith.constant 6.250000e-02 : f32
    %961 = vector.broadcast %cst_372 : f32 to vector<1x32xf32>
    %962 = arith.mulf %960, %961 : vector<1x32xf32>
    %963 = arith.mulf %958, %958 : vector<16x32xf32>
    %cst_373 = arith.constant dense<0.000000e+00> : vector<32xf32>
    %964 = vector.multi_reduction <add>, %963, %cst_373 [0] : vector<16x32xf32> to vector<32xf32>
    %965 = vector.shape_cast %964 : vector<32xf32> to vector<1x32xf32>
    %cst_374 = arith.constant 6.250000e-02 : f32
    %966 = vector.broadcast %cst_374 : f32 to vector<1x32xf32>
    %967 = arith.mulf %965, %966 : vector<1x32xf32>
    %968 = arith.mulf %962, %962 : vector<1x32xf32>
    %969 = arith.subf %967, %968 : vector<1x32xf32>
    %970 = vector.broadcast %962 : vector<1x32xf32> to vector<16x32xf32>
    %971 = arith.subf %958, %970 : vector<16x32xf32>
    %cst_375 = arith.constant 9.99999974E-6 : f32
    %972 = vector.broadcast %cst_375 : f32 to vector<1x32xf32>
    %973 = arith.addf %969, %972 : vector<1x32xf32>
    %974 = math.rsqrt %973 : vector<1x32xf32>
    %975 = vector.broadcast %974 : vector<1x32xf32> to vector<16x32xf32>
    %976 = arith.mulf %971, %975 : vector<16x32xf32>
    %cst_376 = arith.constant 5.000000e-01 : f32
    %977 = vector.broadcast %cst_376 : f32 to vector<16x32xf32>
    %978 = arith.mulf %977, %976 : vector<16x32xf32>
    %979 = math.tanh %978 : vector<16x32xf32>
    %cst_377 = arith.constant 1.000000e+00 : f32
    %980 = vector.broadcast %cst_377 : f32 to vector<16x32xf32>
    %981 = arith.addf %979, %980 : vector<16x32xf32>
    %cst_378 = arith.constant 5.000000e-01 : f32
    %982 = vector.broadcast %cst_378 : f32 to vector<16x32xf32>
    %983 = arith.mulf %982, %981 : vector<16x32xf32>
    %984 = arith.subf %983, %0 : vector<16x32xf32>
    %985 = arith.mulf %984, %984 : vector<16x32xf32>
    %986 = vector.shape_cast %985 : vector<16x32xf32> to vector<1x16x32xf32>
    %cst_379 = arith.constant dense<0.000000e+00> : vector<1xf32>
    %987 = vector.multi_reduction <add>, %986, %cst_379 [1, 2] : vector<1x16x32xf32> to vector<1xf32>
    %988 = vector.shape_cast %987 : vector<1xf32> to vector<1x1x1xf32>
    %989 = vector.extract %988[0, 0, 0] : f32 from vector<1x1x1xf32>
    %c8_i32 = arith.constant 8 : i32
    %990 = vector.broadcast %c8_i32 : i32 to vector<8x128xi32>
    %991 = arith.cmpi eq, %2, %990 : vector<8x128xi32>
    %992 = vector.broadcast %989 : f32 to vector<8x128xf32>
    %993 = arith.select %991, %992, %883 : vector<8x128xi1>, vector<8x128xf32>
    %c9 = arith.constant 9 : index
    %c0_380 = arith.constant 0 : index
    %c0_381 = arith.constant 0 : index
    %994 = vector.load %arg2[%c9, %c0_380, %c0_381] : memref<10x32x64xbf16, #tpu.memory_space<vmem>>, vector<1x32x64xbf16>
    %995 = vector.shape_cast %994 : vector<1x32x64xbf16> to vector<32x64xbf16>
    %cst_382 = arith.constant dense<0.000000e+00> : vector<16x64xf32>
    %996 = tpu.matmul %1, %995, %cst_382 {dimension_numbers = #tpu.dot_dimension_numbers<[1], [0], [0], [1], [0, 0, 1, 1], [], []>} : vector<16x32xbf16>, vector<32x64xbf16>, vector<16x64xf32> -> vector<16x64xf32>
    %cst_383 = arith.constant dense<0.000000e+00> : vector<64xf32>
    %997 = vector.multi_reduction <add>, %996, %cst_383 [0] : vector<16x64xf32> to vector<64xf32>
    %998 = vector.shape_cast %997 : vector<64xf32> to vector<1x64xf32>
    %cst_384 = arith.constant 6.250000e-02 : f32
    %999 = vector.broadcast %cst_384 : f32 to vector<1x64xf32>
    %1000 = arith.mulf %998, %999 : vector<1x64xf32>
    %1001 = arith.mulf %996, %996 : vector<16x64xf32>
    %cst_385 = arith.constant dense<0.000000e+00> : vector<64xf32>
    %1002 = vector.multi_reduction <add>, %1001, %cst_385 [0] : vector<16x64xf32> to vector<64xf32>
    %1003 = vector.shape_cast %1002 : vector<64xf32> to vector<1x64xf32>
    %cst_386 = arith.constant 6.250000e-02 : f32
    %1004 = vector.broadcast %cst_386 : f32 to vector<1x64xf32>
    %1005 = arith.mulf %1003, %1004 : vector<1x64xf32>
    %1006 = arith.mulf %1000, %1000 : vector<1x64xf32>
    %1007 = arith.subf %1005, %1006 : vector<1x64xf32>
    %1008 = vector.broadcast %1000 : vector<1x64xf32> to vector<16x64xf32>
    %1009 = arith.subf %996, %1008 : vector<16x64xf32>
    %cst_387 = arith.constant 9.99999974E-6 : f32
    %1010 = vector.broadcast %cst_387 : f32 to vector<1x64xf32>
    %1011 = arith.addf %1007, %1010 : vector<1x64xf32>
    %1012 = math.rsqrt %1011 : vector<1x64xf32>
    %1013 = vector.broadcast %1012 : vector<1x64xf32> to vector<16x64xf32>
    %1014 = arith.mulf %1009, %1013 : vector<16x64xf32>
    %cst_388 = arith.constant 0.000000e+00 : f32
    %1015 = vector.broadcast %cst_388 : f32 to vector<16x64xf32>
    %1016 = arith.maximumf %1014, %1015 : vector<16x64xf32>
    %1017 = arith.truncf %1016 : vector<16x64xf32> to vector<16x64xbf16>
    %c9_389 = arith.constant 9 : index
    %c0_390 = arith.constant 0 : index
    %c0_391 = arith.constant 0 : index
    %1018 = vector.load %arg3[%c9_389, %c0_390, %c0_391] : memref<10x64x128xbf16, #tpu.memory_space<vmem>>, vector<1x64x128xbf16>
    %1019 = vector.shape_cast %1018 : vector<1x64x128xbf16> to vector<64x128xbf16>
    %cst_392 = arith.constant dense<0.000000e+00> : vector<16x128xf32>
    %1020 = tpu.matmul %1017, %1019, %cst_392 {dimension_numbers = #tpu.dot_dimension_numbers<[1], [0], [0], [1], [0, 0, 1, 1], [], []>} : vector<16x64xbf16>, vector<64x128xbf16>, vector<16x128xf32> -> vector<16x128xf32>
    %cst_393 = arith.constant dense<0.000000e+00> : vector<128xf32>
    %1021 = vector.multi_reduction <add>, %1020, %cst_393 [0] : vector<16x128xf32> to vector<128xf32>
    %1022 = vector.shape_cast %1021 : vector<128xf32> to vector<1x128xf32>
    %cst_394 = arith.constant 6.250000e-02 : f32
    %1023 = vector.broadcast %cst_394 : f32 to vector<1x128xf32>
    %1024 = arith.mulf %1022, %1023 : vector<1x128xf32>
    %1025 = arith.mulf %1020, %1020 : vector<16x128xf32>
    %cst_395 = arith.constant dense<0.000000e+00> : vector<128xf32>
    %1026 = vector.multi_reduction <add>, %1025, %cst_395 [0] : vector<16x128xf32> to vector<128xf32>
    %1027 = vector.shape_cast %1026 : vector<128xf32> to vector<1x128xf32>
    %cst_396 = arith.constant 6.250000e-02 : f32
    %1028 = vector.broadcast %cst_396 : f32 to vector<1x128xf32>
    %1029 = arith.mulf %1027, %1028 : vector<1x128xf32>
    %1030 = arith.mulf %1024, %1024 : vector<1x128xf32>
    %1031 = arith.subf %1029, %1030 : vector<1x128xf32>
    %1032 = vector.broadcast %1024 : vector<1x128xf32> to vector<16x128xf32>
    %1033 = arith.subf %1020, %1032 : vector<16x128xf32>
    %cst_397 = arith.constant 9.99999974E-6 : f32
    %1034 = vector.broadcast %cst_397 : f32 to vector<1x128xf32>
    %1035 = arith.addf %1031, %1034 : vector<1x128xf32>
    %1036 = math.rsqrt %1035 : vector<1x128xf32>
    %1037 = vector.broadcast %1036 : vector<1x128xf32> to vector<16x128xf32>
    %1038 = arith.mulf %1033, %1037 : vector<16x128xf32>
    %cst_398 = arith.constant 0.000000e+00 : f32
    %1039 = vector.broadcast %cst_398 : f32 to vector<16x128xf32>
    %1040 = arith.maximumf %1038, %1039 : vector<16x128xf32>
    %1041 = arith.truncf %1040 : vector<16x128xf32> to vector<16x128xbf16>
    %c9_399 = arith.constant 9 : index
    %c0_400 = arith.constant 0 : index
    %c0_401 = arith.constant 0 : index
    %1042 = vector.load %arg4[%c9_399, %c0_400, %c0_401] : memref<10x128x256xbf16, #tpu.memory_space<vmem>>, vector<1x128x256xbf16>
    %1043 = vector.shape_cast %1042 : vector<1x128x256xbf16> to vector<128x256xbf16>
    %cst_402 = arith.constant dense<0.000000e+00> : vector<16x256xf32>
    %1044 = tpu.matmul %1041, %1043, %cst_402 {dimension_numbers = #tpu.dot_dimension_numbers<[1], [0], [0], [1], [0, 0, 1, 1], [], []>} : vector<16x128xbf16>, vector<128x256xbf16>, vector<16x256xf32> -> vector<16x256xf32>
    %cst_403 = arith.constant dense<0.000000e+00> : vector<256xf32>
    %1045 = vector.multi_reduction <add>, %1044, %cst_403 [0] : vector<16x256xf32> to vector<256xf32>
    %1046 = vector.shape_cast %1045 : vector<256xf32> to vector<1x256xf32>
    %cst_404 = arith.constant 6.250000e-02 : f32
    %1047 = vector.broadcast %cst_404 : f32 to vector<1x256xf32>
    %1048 = arith.mulf %1046, %1047 : vector<1x256xf32>
    %1049 = arith.mulf %1044, %1044 : vector<16x256xf32>
    %cst_405 = arith.constant dense<0.000000e+00> : vector<256xf32>
    %1050 = vector.multi_reduction <add>, %1049, %cst_405 [0] : vector<16x256xf32> to vector<256xf32>
    %1051 = vector.shape_cast %1050 : vector<256xf32> to vector<1x256xf32>
    %cst_406 = arith.constant 6.250000e-02 : f32
    %1052 = vector.broadcast %cst_406 : f32 to vector<1x256xf32>
    %1053 = arith.mulf %1051, %1052 : vector<1x256xf32>
    %1054 = arith.mulf %1048, %1048 : vector<1x256xf32>
    %1055 = arith.subf %1053, %1054 : vector<1x256xf32>
    %1056 = vector.broadcast %1048 : vector<1x256xf32> to vector<16x256xf32>
    %1057 = arith.subf %1044, %1056 : vector<16x256xf32>
    %cst_407 = arith.constant 9.99999974E-6 : f32
    %1058 = vector.broadcast %cst_407 : f32 to vector<1x256xf32>
    %1059 = arith.addf %1055, %1058 : vector<1x256xf32>
    %1060 = math.rsqrt %1059 : vector<1x256xf32>
    %1061 = vector.broadcast %1060 : vector<1x256xf32> to vector<16x256xf32>
    %1062 = arith.mulf %1057, %1061 : vector<16x256xf32>
    %cst_408 = arith.constant 0.000000e+00 : f32
    %1063 = vector.broadcast %cst_408 : f32 to vector<16x256xf32>
    %1064 = arith.maximumf %1062, %1063 : vector<16x256xf32>
    %1065 = arith.truncf %1064 : vector<16x256xf32> to vector<16x256xbf16>
    %c9_409 = arith.constant 9 : index
    %c0_410 = arith.constant 0 : index
    %c0_411 = arith.constant 0 : index
    %1066 = vector.load %arg5[%c9_409, %c0_410, %c0_411] : memref<10x256x32xbf16, #tpu.memory_space<vmem>>, vector<1x256x32xbf16>
    %1067 = vector.shape_cast %1066 : vector<1x256x32xbf16> to vector<256x32xbf16>
    %cst_412 = arith.constant dense<0.000000e+00> : vector<16x32xf32>
    %1068 = tpu.matmul %1065, %1067, %cst_412 {dimension_numbers = #tpu.dot_dimension_numbers<[1], [0], [0], [1], [0, 0, 1, 1], [], []>} : vector<16x256xbf16>, vector<256x32xbf16>, vector<16x32xf32> -> vector<16x32xf32>
    %cst_413 = arith.constant dense<0.000000e+00> : vector<32xf32>
    %1069 = vector.multi_reduction <add>, %1068, %cst_413 [0] : vector<16x32xf32> to vector<32xf32>
    %1070 = vector.shape_cast %1069 : vector<32xf32> to vector<1x32xf32>
    %cst_414 = arith.constant 6.250000e-02 : f32
    %1071 = vector.broadcast %cst_414 : f32 to vector<1x32xf32>
    %1072 = arith.mulf %1070, %1071 : vector<1x32xf32>
    %1073 = arith.mulf %1068, %1068 : vector<16x32xf32>
    %cst_415 = arith.constant dense<0.000000e+00> : vector<32xf32>
    %1074 = vector.multi_reduction <add>, %1073, %cst_415 [0] : vector<16x32xf32> to vector<32xf32>
    %1075 = vector.shape_cast %1074 : vector<32xf32> to vector<1x32xf32>
    %cst_416 = arith.constant 6.250000e-02 : f32
    %1076 = vector.broadcast %cst_416 : f32 to vector<1x32xf32>
    %1077 = arith.mulf %1075, %1076 : vector<1x32xf32>
    %1078 = arith.mulf %1072, %1072 : vector<1x32xf32>
    %1079 = arith.subf %1077, %1078 : vector<1x32xf32>
    %1080 = vector.broadcast %1072 : vector<1x32xf32> to vector<16x32xf32>
    %1081 = arith.subf %1068, %1080 : vector<16x32xf32>
    %cst_417 = arith.constant 9.99999974E-6 : f32
    %1082 = vector.broadcast %cst_417 : f32 to vector<1x32xf32>
    %1083 = arith.addf %1079, %1082 : vector<1x32xf32>
    %1084 = math.rsqrt %1083 : vector<1x32xf32>
    %1085 = vector.broadcast %1084 : vector<1x32xf32> to vector<16x32xf32>
    %1086 = arith.mulf %1081, %1085 : vector<16x32xf32>
    %cst_418 = arith.constant 5.000000e-01 : f32
    %1087 = vector.broadcast %cst_418 : f32 to vector<16x32xf32>
    %1088 = arith.mulf %1087, %1086 : vector<16x32xf32>
    %1089 = math.tanh %1088 : vector<16x32xf32>
    %cst_419 = arith.constant 1.000000e+00 : f32
    %1090 = vector.broadcast %cst_419 : f32 to vector<16x32xf32>
    %1091 = arith.addf %1089, %1090 : vector<16x32xf32>
    %cst_420 = arith.constant 5.000000e-01 : f32
    %1092 = vector.broadcast %cst_420 : f32 to vector<16x32xf32>
    %1093 = arith.mulf %1092, %1091 : vector<16x32xf32>
    %1094 = arith.subf %1093, %0 : vector<16x32xf32>
    %1095 = arith.mulf %1094, %1094 : vector<16x32xf32>
    %1096 = vector.shape_cast %1095 : vector<16x32xf32> to vector<1x16x32xf32>
    %cst_421 = arith.constant dense<0.000000e+00> : vector<1xf32>
    %1097 = vector.multi_reduction <add>, %1096, %cst_421 [1, 2] : vector<1x16x32xf32> to vector<1xf32>
    %1098 = vector.shape_cast %1097 : vector<1xf32> to vector<1x1x1xf32>
    %1099 = vector.extract %1098[0, 0, 0] : f32 from vector<1x1x1xf32>
    %c9_i32 = arith.constant 9 : i32
    %1100 = vector.broadcast %c9_i32 : i32 to vector<8x128xi32>
    %1101 = arith.cmpi eq, %2, %1100 : vector<8x128xi32>
    %1102 = vector.broadcast %1099 : f32 to vector<8x128xf32>
    %1103 = arith.select %1101, %1102, %993 : vector<8x128xi1>, vector<8x128xf32>
    %c0_422 = arith.constant 0 : index
    %c0_423 = arith.constant 0 : index
    %c0_424 = arith.constant 0 : index
    %1104 = vector.load %arg6[%c0_422, %c0_423, %c0_424] : memref<1x8x128xf32, #tpu.memory_space<vmem>>, vector<1x8x128xf32>
    %1105 = vector.shape_cast %1104 : vector<1x8x128xf32> to vector<8x128xf32>
    %1106 = vector.shape_cast %1103 : vector<8x128xf32> to vector<1x8x128xf32>
    tpu.vector_store %arg6[%c0_422, %c0_423, %c0_424], %1106 {strides = array<i32>} : memref<1x8x128xf32, #tpu.memory_space<vmem>>, vector<1x8x128xf32>,
    return
  }
  func.func @transform_0(%arg0: i32) -> (i32, i32) {
    %c0_i32 = arith.constant 0 : i32
    %c0_i32_0 = arith.constant 0 : i32
    %c0_i32_1 = arith.constant 0 : i32
    return %c0_i32, %c0_i32_0 : i32, i32
  }
  func.func @transform_1(%arg0: i32) -> (i32, i32, i32) {
    %c0_i32 = arith.constant 0 : i32
    %c0_i32_0 = arith.constant 0 : i32
    %c0_i32_1 = arith.constant 0 : i32
    return %arg0, %c0_i32, %c0_i32_0 : i32, i32, i32
  }
  func.func @transform_2(%arg0: i32) -> (i32, i32, i32) {
    %c0_i32 = arith.constant 0 : i32
    %c0_i32_0 = arith.constant 0 : i32
    %c0_i32_1 = arith.constant 0 : i32
    return %arg0, %c0_i32, %c0_i32_0 : i32, i32, i32
  }
  func.func @transform_3(%arg0: i32) -> (i32, i32, i32) {
    %c0_i32 = arith.constant 0 : i32
    %c0_i32_0 = arith.constant 0 : i32
    %c0_i32_1 = arith.constant 0 : i32
    return %arg0, %c0_i32, %c0_i32_0 : i32, i32, i32
  }
  func.func @transform_4(%arg0: i32) -> (i32, i32, i32) {
    %c0_i32 = arith.constant 0 : i32
    %c0_i32_0 = arith.constant 0 : i32
    %c0_i32_1 = arith.constant 0 : i32
    return %arg0, %c0_i32, %c0_i32_0 : i32, i32, i32
  }
  func.func @transform_5(%arg0: i32) -> (i32, i32, i32) {
    %c0_i32 = arith.constant 0 : i32
    %c0_i32_0 = arith.constant 0 : i32
    %c0_i32_1 = arith.constant 0 : i32
    return %arg0, %c0_i32, %c0_i32_0 : i32, i32, i32
  }
}

</mosaic_0001>

<llo_original>
// kernel: _lambda_.1
$region0: #{_lambda_.1}
  #allocation0 [shape = 'u32[]', space=smem, size = 0x4, offset = 0x4, fixed_abs, tag = 'smem constant byte address 0x4 - core index']
  #allocation1 [shape = 'u32[144,128]{1,0:T(1,128)}', space=vmem, size = 0x12000, scoped, tag = 'internal scratch']
  %s0 = inlined_call_operand.vmem [shape: f32[16,32], index: 0, kind: input, shape index: {}]
  %s1 = inlined_call_operand.vmem [shape: bf16[10,32,64], index: 1, kind: input, shape index: {}]
  %s2 = inlined_call_operand.vmem [shape: bf16[10,64,128], index: 2, kind: input, shape index: {}]
  %s3 = inlined_call_operand.vmem [shape: bf16[10,128,256], index: 3, kind: input, shape index: {}]
  %s4 = inlined_call_operand.vmem [shape: bf16[10,256,32], index: 4, kind: input, shape index: {}]
  %s5 = inlined_call_operand.vmem [shape: f32[1,8,128], index: 5, kind: output, shape index: {}]
  %s6 = sld [smem:[#allocation0]]
  $region30: #{_lambda_.1} parent=0
    _
  %s8 = ssub.s32 1, %s6
  %s9 = scalar_select 0, %s8, %s6
  // Predicated region
  $region2: #{_lambda_.1} parent=0 // pred_check
    _
  $region3: #{_lambda_.1} parent=0 // pred_check_branch
    %11 = sbr.rel (0) target = $region5
  $region4: #{_lambda_.1} parent=0 // pred_region
    _
  $region5: #{_lambda_.1} parent=0 // pred_fallthru
    _
  // Predicated region
  $region6: #{_lambda_.1} parent=0 // pred_check
    _
  $region7: #{_lambda_.1} parent=0 // pred_check_branch
    %13 = sbr.rel (0) target = $region9
  $region8: #{_lambda_.1} parent=0 // pred_region
    _
  $region9: #{_lambda_.1} parent=0 // pred_fallthru
    _
  // Predicated region
  $region10: #{_lambda_.1} parent=0 // pred_check
    _
  $region11: #{_lambda_.1} parent=0 // pred_check_branch
    %15 = sbr.rel (0) target = $region13
  $region12: #{_lambda_.1} parent=0 // pred_region
    _
  $region13: #{_lambda_.1} parent=0 // pred_fallthru
    _
  // Predicated region
  $region14: #{_lambda_.1} parent=0 // pred_check
    _
  $region15: #{_lambda_.1} parent=0 // pred_check_branch
    %17 = sbr.rel (0) target = $region17
  $region16: #{_lambda_.1} parent=0 // pred_region
    _
  $region17: #{_lambda_.1} parent=0 // pred_fallthru
    _
  // Predicated region
  $region18: #{_lambda_.1} parent=0 // pred_check
    _
  $region19: #{_lambda_.1} parent=0 // pred_check_branch
    %19 = sbr.rel (0) target = $region21
  $region20: #{_lambda_.1} parent=0 // pred_region
    _
  $region21: #{_lambda_.1} parent=0 // pred_fallthru
    _
  %v21 = vld [vmem:[%s0] sm:$0xff]
  %v22 = vld [vmem:[%s0 + $0x8] sm:$0xff]
  %v23 = vpack.c.bf16 %v22, %v21
  %v24 = vlaneseq
  %v25 = vand.u32 %v24, 127
  %v26 = vld [vmem:[%s1] sm:$0xf]
  %v27 = vld [vmem:[%s1 + $0x4] sm:$0xf]
  %v28 = vld [vmem:[%s1 + $0x8] sm:$0xf]
  %v29 = vld [vmem:[%s1 + $0xc] sm:$0xf]
  %v34 = vunpack.c.l.b16 %v26
  %v35 = vunpack.c.l.b16 %v27
  %v36 = vunpack.c.l.b16 %v28
  %v37 = vunpack.c.l.b16 %v29
  %v38 = vpack.c.b16 %v35, %v34
  %v39 = vpack.c.b16 %v37, %v36
  %vm42 = vcmask 261120
  %v44 = vsel %vm42, %v23, 0
  %46 = vmatprep.subr.bf16.mxu0 0
  %47 = vmatpush1.bf16.msra.mxu0 %v38
  %48 = vmatprep.subr.bf16.mxu0 0
  %49 = vmatpush1.bf16.msra.mxu0 %v39
  %50 = vmatprep.subr.bf16.mxu0 0
  %51 = vmatpush1.bf16.msra.mxu0 0
  %52 = vmatprep.subr.bf16.mxu0 0
  %53 = vmatpush1.bf16.msra.mxu0 0
  %54 = vmatprep.subr.bf16.mxu0 0
  %55 = vmatpush1.bf16.msra.mxu0 0
  %56 = vmatprep.subr.bf16.mxu0 0
  %57 = vmatpush1.bf16.msra.mxu0 0
  %58 = vmatprep.subr.bf16.mxu0 0
  %59 = vmatpush1.bf16.msra.mxu0 0
  %60 = vmatprep.subr.bf16.mxu0 0
  %61 = vmatpush1.bf16.msra.mxu0 0
  %62 = vmatprep.subr.bf16.mxu0 0
  %63 = vmatpush1.bf16.msra.mxu0 0
  %64 = vmatprep.subr.bf16.mxu0 0
  %65 = vmatpush1.bf16.msra.mxu0 0
  %66 = vmatprep.subr.bf16.mxu0 0
  %67 = vmatpush1.bf16.msra.mxu0 0
  %68 = vmatprep.subr.bf16.mxu0 0
  %69 = vmatpush1.bf16.msra.mxu0 0
  %70 = vmatprep.subr.bf16.mxu0 0
  %71 = vmatpush1.bf16.msra.mxu0 0
  %72 = vmatprep.subr.bf16.mxu0 0
  %73 = vmatpush1.bf16.msra.mxu0 0
  %74 = vmatprep.subr.bf16.mxu0 0
  %75 = vmatpush1.bf16.msra.mxu0 0
  %76 = vmatprep.subr.bf16.mxu0 0
  %77 = vmatpush1.bf16.msra.mxu0 0
  %78 = vmatprep.mubr.bf16.mxu0 0
  %79 = vmatmul.mubr.bf16.gmra.mrb[0].mxu0 %v44
  %v80 = vpop.f32.mrb[0].mxu0
  %v81 = vadd.f32 0.0, %v80
  %v82 = vpop.f32.mrb[0].mxu0
  %v83 = vpop.f32.mrb[0].mxu0
  %v84 = vadd.f32 0.0, %v83
  %v85 = vpop.f32.mrb[0].mxu0
  %86 = vdwg.mxu0
  %vm87 = vcmask 523264
  %v88 = vsel %vm87, %v81, 0.0
  %v89 = vsel %vm87, %v84, 0.0
  %v90 = vadd.f32 %v88, %v89
  %v91 = vrot.slane %v90, 4
  %v92 = vadd.f32 %v90, %v91
  %v93 = vrot.slane %v92, 2
  %v94 = vadd.f32 %v92, %v93
  %v95 = vrot.slane %v94, 1
  %v96 = vadd.f32 %v94, %v95
  %v97 = vmul.f32 %v96, 0.0625
  %v98 = vmul.f32 %v81, %v81
  %v99 = vmul.f32 %v84, %v84
  %v100 = vsel %vm87, %v98, 0.0
  %v101 = vsel %vm87, %v99, 0.0
  %v102 = vadd.f32 %v100, %v101
  %v103 = vrot.slane %v102, 4
  %v104 = vadd.f32 %v102, %v103
  %v105 = vrot.slane %v104, 2
  %v106 = vadd.f32 %v104, %v105
  %v107 = vrot.slane %v106, 1
  %v108 = vadd.f32 %v106, %v107
  %v109 = vmul.f32 %v108, 0.0625
  %v110 = vmul.f32 %v97, %v97
  %v111 = vsub.f32 %v109, %v110
  %v112 = vsub.f32 %v81, %v97
  %v113 = vsub.f32 %v84, %v97
  %v114 = vadd.f32 %v111, 1e-05
  %v115 = vrsqrt.pop %v114
  %v116 = vmul.f32 %v112, %v115
  %v117 = vmul.f32 %v113, %v115
  %v118 = vmax.f32 %v116, 0.0
  %v119 = vmax.f32 %v117, 0.0
  %v120 = vpack.c.bf16 %v119, %v118
  %v121 = vld [vmem:[%s2] sm:$0xf]
  %v122 = vld [vmem:[%s2 + $0x4] sm:$0xf]
  %v123 = vld [vmem:[%s2 + $0x8] sm:$0xf]
  %v124 = vld [vmem:[%s2 + $0xc] sm:$0xf]
  %v125 = vld [vmem:[%s2 + $0x10] sm:$0xf]
  %v126 = vld [vmem:[%s2 + $0x14] sm:$0xf]
  %v127 = vld [vmem:[%s2 + $0x18] sm:$0xf]
  %v128 = vld [vmem:[%s2 + $0x1c] sm:$0xf]
  %v137 = vunpack.c.l.b16 %v121
  %v138 = vunpack.c.l.b16 %v122
  %v139 = vunpack.c.l.b16 %v123
  %v140 = vunpack.c.l.b16 %v124
  %v141 = vunpack.c.l.b16 %v125
  %v142 = vunpack.c.l.b16 %v126
  %v143 = vunpack.c.l.b16 %v127
  %v144 = vunpack.c.l.b16 %v128
  %v145 = vpack.c.b16 %v138, %v137
  %v146 = vpack.c.b16 %v140, %v139
  %v147 = vpack.c.b16 %v142, %v141
  %v148 = vpack.c.b16 %v144, %v143
  %v154 = vsel %vm87, %v120, 0
  %156 = vmatprep.subr.bf16.mxu0 0
  %157 = vmatpush1.bf16.msra.mxu0 %v145
  %158 = vmatprep.subr.bf16.mxu0 0
  %159 = vmatpush1.bf16.msra.mxu0 %v146
  %160 = vmatprep.subr.bf16.mxu0 0
  %161 = vmatpush1.bf16.msra.mxu0 %v147
  %162 = vmatprep.subr.bf16.mxu0 0
  %163 = vmatpush1.bf16.msra.mxu0 %v148
  %164 = vmatprep.subr.bf16.mxu0 0
  %165 = vmatpush1.bf16.msra.mxu0 0
  %166 = vmatprep.subr.bf16.mxu0 0
  %167 = vmatpush1.bf16.msra.mxu0 0
  %168 = vmatprep.subr.bf16.mxu0 0
  %169 = vmatpush1.bf16.msra.mxu0 0
  %170 = vmatprep.subr.bf16.mxu0 0
  %171 = vmatpush1.bf16.msra.mxu0 0
  %172 = vmatprep.subr.bf16.mxu0 0
  %173 = vmatpush1.bf16.msra.mxu0 0
  %174 = vmatprep.subr.bf16.mxu0 0
  %175 = vmatpush1.bf16.msra.mxu0 0
  %176 = vmatprep.subr.bf16.mxu0 0
  %177 = vmatpush1.bf16.msra.mxu0 0
  %178 = vmatprep.subr.bf16.mxu0 0
  %179 = vmatpush1.bf16.msra.mxu0 0
  %180 = vmatprep.subr.bf16.mxu0 0
  %181 = vmatpush1.bf16.msra.mxu0 0
  %182 = vmatprep.subr.bf16.mxu0 0
  %183 = vmatpush1.bf16.msra.mxu0 0
  %184 = vmatprep.subr.bf16.mxu0 0
  %185 = vmatpush1.bf16.msra.mxu0 0
  %186 = vmatprep.subr.bf16.mxu0 0
  %187 = vmatpush1.bf16.msra.mxu0 0
  %188 = vmatprep.mubr.bf16.mxu0 0
  %189 = vmatmul.mubr.bf16.gmra.mrb[0].mxu0 %v154
  %v190 = vpop.f32.mrb[0].mxu0
  %v191 = vadd.f32 0.0, %v190
  %v192 = vpop.f32.mrb[0].mxu0
  %v193 = vpop.f32.mrb[0].mxu0
  %v194 = vadd.f32 0.0, %v193
  %v195 = vpop.f32.mrb[0].mxu0
  %196 = vdwg.mxu0
  %v197 = vadd.f32 %v191, %v194
  %v198 = vrot.slane %v197, 4
  %v199 = vadd.f32 %v197, %v198
  %v200 = vrot.slane %v199, 2
  %v201 = vadd.f32 %v199, %v200
  %v202 = vrot.slane %v201, 1
  %v203 = vadd.f32 %v201, %v202
  %v204 = vmul.f32 %v203, 0.0625
  %v205 = vmul.f32 %v191, %v191
  %v206 = vmul.f32 %v194, %v194
  %v207 = vadd.f32 %v205, %v206
  %v208 = vrot.slane %v207, 4
  %v209 = vadd.f32 %v207, %v208
  %v210 = vrot.slane %v209, 2
  %v211 = vadd.f32 %v209, %v210
  %v212 = vrot.slane %v211, 1
  %v213 = vadd.f32 %v211, %v212
  %v214 = vmul.f32 %v213, 0.0625
  %v215 = vmul.f32 %v204, %v204
  %v216 = vsub.f32 %v214, %v215
  %v217 = vsub.f32 %v191, %v204
  %v218 = vsub.f32 %v194, %v204
  %v219 = vadd.f32 %v216, 1e-05
  %v220 = vrsqrt.pop %v219
  %v221 = vmul.f32 %v217, %v220
  %v222 = vmul.f32 %v218, %v220
  %v223 = vmax.f32 %v221, 0.0
  %v224 = vmax.f32 %v222, 0.0
  %v225 = vpack.c.bf16 %v224, %v223
  %v226 = vld [vmem:[%s3] sm:$0xff]
  %v227 = vld [vmem:[%s3 + $0x8] sm:$0xff]
  %v228 = vld [vmem:[%s3 + $0x10] sm:$0xff]
  %v229 = vld [vmem:[%s3 + $0x18] sm:$0xff]
  %v230 = vld [vmem:[%s3 + $0x20] sm:$0xff]
  %v231 = vld [vmem:[%s3 + $0x28] sm:$0xff]
  %v232 = vld [vmem:[%s3 + $0x30] sm:$0xff]
  %v233 = vld [vmem:[%s3 + $0x38] sm:$0xff]
  %v234 = vld [vmem:[%s3 + $0x40] sm:$0xff]
  %v235 = vld [vmem:[%s3 + $0x48] sm:$0xff]
  %v236 = vld [vmem:[%s3 + $0x50] sm:$0xff]
  %v237 = vld [vmem:[%s3 + $0x58] sm:$0xff]
  %v238 = vld [vmem:[%s3 + $0x60] sm:$0xff]
  %v239 = vld [vmem:[%s3 + $0x68] sm:$0xff]
  %v240 = vld [vmem:[%s3 + $0x70] sm:$0xff]
  %v241 = vld [vmem:[%s3 + $0x78] sm:$0xff]
  %v258 = vunpack.c.l.b16 %v226
  %v259 = vunpack.c.h.b16 %v226
  %v260 = vunpack.c.l.b16 %v227
  %v261 = vunpack.c.h.b16 %v227
  %v262 = vunpack.c.l.b16 %v228
  %v263 = vunpack.c.h.b16 %v228
  %v264 = vunpack.c.l.b16 %v229
  %v265 = vunpack.c.h.b16 %v229
  %v266 = vunpack.c.l.b16 %v230
  %v267 = vunpack.c.h.b16 %v230
  %v268 = vunpack.c.l.b16 %v231
  %v269 = vunpack.c.h.b16 %v231
  %v270 = vunpack.c.l.b16 %v232
  %v271 = vunpack.c.h.b16 %v232
  %v272 = vunpack.c.l.b16 %v233
  %v273 = vunpack.c.h.b16 %v233
  %v274 = vunpack.c.l.b16 %v234
  %v275 = vunpack.c.h.b16 %v234
  %v276 = vunpack.c.l.b16 %v235
  %v277 = vunpack.c.h.b16 %v235
  %v278 = vunpack.c.l.b16 %v236
  %v279 = vunpack.c.h.b16 %v236
  %v280 = vunpack.c.l.b16 %v237
  %v281 = vunpack.c.h.b16 %v237
  %v282 = vunpack.c.l.b16 %v238
  %v283 = vunpack.c.h.b16 %v238
  %v284 = vunpack.c.l.b16 %v239
  %v285 = vunpack.c.h.b16 %v239
  %v286 = vunpack.c.l.b16 %v240
  %v287 = vunpack.c.h.b16 %v240
  %v288 = vunpack.c.l.b16 %v241
  %v289 = vunpack.c.h.b16 %v241
  %v290 = vpack.c.b16 %v260, %v258
  %v291 = vpack.c.b16 %v261, %v259
  %v292 = vpack.c.b16 %v264, %v262
  %v293 = vpack.c.b16 %v265, %v263
  %v294 = vpack.c.b16 %v268, %v266
  %v295 = vpack.c.b16 %v269, %v267
  %v296 = vpack.c.b16 %v272, %v270
  %v297 = vpack.c.b16 %v273, %v271
  %v298 = vpack.c.b16 %v276, %v274
  %v299 = vpack.c.b16 %v277, %v275
  %v300 = vpack.c.b16 %v280, %v278
  %v301 = vpack.c.b16 %v281, %v279
  %v302 = vpack.c.b16 %v284, %v282
  %v303 = vpack.c.b16 %v285, %v283
  %v304 = vpack.c.b16 %v288, %v286
  %v305 = vpack.c.b16 %v289, %v287
  %322 = vmatprep.subr.bf16.mxu0 %v291
  %323 = vmatpush1.bf16.msra.mxu0 %v290
  %324 = vmatprep.subr.bf16.mxu0 %v293
  %325 = vmatpush1.bf16.msra.mxu0 %v292
  %326 = vmatprep.subr.bf16.mxu0 %v295
  %327 = vmatpush1.bf16.msra.mxu0 %v294
  %328 = vmatprep.subr.bf16.mxu0 %v297
  %329 = vmatpush1.bf16.msra.mxu0 %v296
  %330 = vmatprep.subr.bf16.mxu0 %v299
  %331 = vmatpush1.bf16.msra.mxu0 %v298
  %332 = vmatprep.subr.bf16.mxu0 %v301
  %333 = vmatpush1.bf16.msra.mxu0 %v300
  %334 = vmatprep.subr.bf16.mxu0 %v303
  %335 = vmatpush1.bf16.msra.mxu0 %v302
  %336 = vmatprep.subr.bf16.mxu0 %v305
  %337 = vmatpush1.bf16.msra.mxu0 %v304
  %338 = vmatprep.subr.bf16.mxu0 0
  %339 = vmatpush1.bf16.msra.mxu0 0
  %340 = vmatprep.subr.bf16.mxu0 0
  %341 = vmatpush1.bf16.msra.mxu0 0
  %342 = vmatprep.subr.bf16.mxu0 0
  %343 = vmatpush1.bf16.msra.mxu0 0
  %344 = vmatprep.subr.bf16.mxu0 0
  %345 = vmatpush1.bf16.msra.mxu0 0
  %346 = vmatprep.subr.bf16.mxu0 0
  %347 = vmatpush1.bf16.msra.mxu0 0
  %348 = vmatprep.subr.bf16.mxu0 0
  %349 = vmatpush1.bf16.msra.mxu0 0
  %350 = vmatprep.subr.bf16.mxu0 0
  %351 = vmatpush1.bf16.msra.mxu0 0
  %352 = vmatprep.subr.bf16.mxu0 0
  %353 = vmatpush1.bf16.msra.mxu0 0
  %354 = vmatprep.mubr.bf16.mxu0 0
  %355 = vmatmul.mubr.bf16.gmra.mrb[0].mxu0 %v225
  %v356 = vpop.f32.mrb[0].mxu0
  %v357 = vadd.f32 0.0, %v356
  %v358 = vpop.f32.mrb[0].mxu0
  %v359 = vadd.f32 0.0, %v358
  %v360 = vpop.f32.mrb[0].mxu0
  %v361 = vadd.f32 0.0, %v360
  %v362 = vpop.f32.mrb[0].mxu0
  %v363 = vadd.f32 0.0, %v362
  %364 = vdwg.mxu0
  %v365 = vadd.f32 %v357, %v361
  %v366 = vrot.slane %v365, 4
  %v367 = vadd.f32 %v365, %v366
  %v368 = vrot.slane %v367, 2
  %v369 = vadd.f32 %v367, %v368
  %v370 = vrot.slane %v369, 1
  %v371 = vadd.f32 %v369, %v370
  %v372 = vadd.f32 %v359, %v363
  %v373 = vrot.slane %v372, 4
  %v374 = vadd.f32 %v372, %v373
  %v375 = vrot.slane %v374, 2
  %v376 = vadd.f32 %v374, %v375
  %v377 = vrot.slane %v376, 1
  %v378 = vadd.f32 %v376, %v377
  %v379 = vmul.f32 %v371, 0.0625
  %v380 = vmul.f32 %v378, 0.0625
  %v381 = vmul.f32 %v357, %v357
  %v382 = vmul.f32 %v359, %v359
  %v383 = vmul.f32 %v361, %v361
  %v384 = vmul.f32 %v363, %v363
  %v385 = vadd.f32 %v381, %v383
  %v386 = vrot.slane %v385, 4
  %v387 = vadd.f32 %v385, %v386
  %v388 = vrot.slane %v387, 2
  %v389 = vadd.f32 %v387, %v388
  %v390 = vrot.slane %v389, 1
  %v391 = vadd.f32 %v389, %v390
  %v392 = vadd.f32 %v382, %v384
  %v393 = vrot.slane %v392, 4
  %v394 = vadd.f32 %v392, %v393
  %v395 = vrot.slane %v394, 2
  %v396 = vadd.f32 %v394, %v395
  %v397 = vrot.slane %v396, 1
  %v398 = vadd.f32 %v396, %v397
  %v399 = vmul.f32 %v391, 0.0625
  %v400 = vmul.f32 %v398, 0.0625
  %v401 = vmul.f32 %v379, %v379
  %v402 = vmul.f32 %v380, %v380
  %v403 = vsub.f32 %v399, %v401
  %v404 = vsub.f32 %v400, %v402
  %v405 = vsub.f32 %v357, %v379
  %v406 = vsub.f32 %v359, %v380
  %v407 = vsub.f32 %v361, %v379
  %v408 = vsub.f32 %v363, %v380
  %v409 = vadd.f32 %v403, 1e-05
  %v410 = vadd.f32 %v404, 1e-05
  %v411 = vrsqrt.pop %v409
  %v412 = vrsqrt.pop %v410
  %v413 = vmul.f32 %v405, %v411
  %v414 = vmul.f32 %v406, %v412
  %v415 = vmul.f32 %v407, %v411
  %v416 = vmul.f32 %v408, %v412
  %v417 = vmax.f32 %v413, 0.0
  %v418 = vmax.f32 %v414, 0.0
  %v419 = vmax.f32 %v415, 0.0
  %v420 = vmax.f32 %v416, 0.0
  %v421 = vpack.c.bf16 %v419, %v417
  %v422 = vpack.c.bf16 %v420, %v418
  %v423 = vld [vmem:[%s4] sm:$0xf]
  %v424 = vld [vmem:[%s4 + $0x4] sm:$0xf]
  %v425 = vld [vmem:[%s4 + $0x8] sm:$0xf]
  %v426 = vld [vmem:[%s4 + $0xc] sm:$0xf]
  %v427 = vld [vmem:[%s4 + $0x10] sm:$0xf]
  %v428 = vld [vmem:[%s4 + $0x14] sm:$0xf]
  %v429 = vld [vmem:[%s4 + $0x18] sm:$0xf]
  %v430 = vld [vmem:[%s4 + $0x1c] sm:$0xf]
  %v431 = vld [vmem:[%s4 + $0x20] sm:$0xf]
  %v432 = vld [vmem:[%s4 + $0x24] sm:$0xf]
  %v433 = vld [vmem:[%s4 + $0x28] sm:$0xf]
  %v434 = vld [vmem:[%s4 + $0x2c] sm:$0xf]
  %v435 = vld [vmem:[%s4 + $0x30] sm:$0xf]
  %v436 = vld [vmem:[%s4 + $0x34] sm:$0xf]
  %v437 = vld [vmem:[%s4 + $0x38] sm:$0xf]
  %v438 = vld [vmem:[%s4 + $0x3c] sm:$0xf]
  %v439 = vld [vmem:[%s4 + $0x40] sm:$0xf]
  %v440 = vld [vmem:[%s4 + $0x44] sm:$0xf]
  %v441 = vld [vmem:[%s4 + $0x48] sm:$0xf]
  %v442 = vld [vmem:[%s4 + $0x4c] sm:$0xf]
  %v443 = vld [vmem:[%s4 + $0x50] sm:$0xf]
  %v444 = vld [vmem:[%s4 + $0x54] sm:$0xf]
  %v445 = vld [vmem:[%s4 + $0x58] sm:$0xf]
  %v446 = vld [vmem:[%s4 + $0x5c] sm:$0xf]
  %v447 = vld [vmem:[%s4 + $0x60] sm:$0xf]
  %v448 = vld [vmem:[%s4 + $0x64] sm:$0xf]
  %v449 = vld [vmem:[%s4 + $0x68] sm:$0xf]
  %v450 = vld [vmem:[%s4 + $0x6c] sm:$0xf]
  %v451 = vld [vmem:[%s4 + $0x70] sm:$0xf]
  %v452 = vld [vmem:[%s4 + $0x74] sm:$0xf]
  %v453 = vld [vmem:[%s4 + $0x78] sm:$0xf]
  %v454 = vld [vmem:[%s4 + $0x7c] sm:$0xf]
  %v487 = vunpack.c.l.b16 %v423
  %v488 = vunpack.c.l.b16 %v424
  %v489 = vunpack.c.l.b16 %v425
  %v490 = vunpack.c.l.b16 %v426
  %v491 = vunpack.c.l.b16 %v427
  %v492 = vunpack.c.l.b16 %v428
  %v493 = vunpack.c.l.b16 %v429
  %v494 = vunpack.c.l.b16 %v430
  %v495 = vunpack.c.l.b16 %v431
  %v496 = vunpack.c.l.b16 %v432
  %v497 = vunpack.c.l.b16 %v433
  %v498 = vunpack.c.l.b16 %v434
  %v499 = vunpack.c.l.b16 %v435
  %v500 = vunpack.c.l.b16 %v436
  %v501 = vunpack.c.l.b16 %v437
  %v502 = vunpack.c.l.b16 %v438
  %v503 = vunpack.c.l.b16 %v439
  %v504 = vunpack.c.l.b16 %v440
  %v505 = vunpack.c.l.b16 %v441
  %v506 = vunpack.c.l.b16 %v442
  %v507 = vunpack.c.l.b16 %v443
  %v508 = vunpack.c.l.b16 %v444
  %v509 = vunpack.c.l.b16 %v445
  %v510 = vunpack.c.l.b16 %v446
  %v511 = vunpack.c.l.b16 %v447
  %v512 = vunpack.c.l.b16 %v448
  %v513 = vunpack.c.l.b16 %v449
  %v514 = vunpack.c.l.b16 %v450
  %v515 = vunpack.c.l.b16 %v451
  %v516 = vunpack.c.l.b16 %v452
  %v517 = vunpack.c.l.b16 %v453
  %v518 = vunpack.c.l.b16 %v454
  %v519 = vpack.c.b16 %v488, %v487
  %v520 = vpack.c.b16 %v490, %v489
  %v521 = vpack.c.b16 %v492, %v491
  %v522 = vpack.c.b16 %v494, %v493
  %v523 = vpack.c.b16 %v496, %v495
  %v524 = vpack.c.b16 %v498, %v497
  %v525 = vpack.c.b16 %v500, %v499
  %v526 = vpack.c.b16 %v502, %v501
  %v527 = vpack.c.b16 %v504, %v503
  %v528 = vpack.c.b16 %v506, %v505
  %v529 = vpack.c.b16 %v508, %v507
  %v530 = vpack.c.b16 %v510, %v509
  %v531 = vpack.c.b16 %v512, %v511
  %v532 = vpack.c.b16 %v514, %v513
  %v533 = vpack.c.b16 %v516, %v515
  %v534 = vpack.c.b16 %v518, %v517
  %551 = vmatprep.subr.bf16.mxu0 0
  %552 = vmatpush1.bf16.msra.mxu0 %v519
  %553 = vmatprep.subr.bf16.mxu0 0
  %554 = vmatpush1.bf16.msra.mxu0 %v520
  %555 = vmatprep.subr.bf16.mxu0 0
  %556 = vmatpush1.bf16.msra.mxu0 %v521
  %557 = vmatprep.subr.bf16.mxu0 0
  %558 = vmatpush1.bf16.msra.mxu0 %v522
  %559 = vmatprep.subr.bf16.mxu0 0
  %560 = vmatpush1.bf16.msra.mxu0 %v523
  %561 = vmatprep.subr.bf16.mxu0 0
  %562 = vmatpush1.bf16.msra.mxu0 %v524
  %563 = vmatprep.subr.bf16.mxu0 0
  %564 = vmatpush1.bf16.msra.mxu0 %v525
  %565 = vmatprep.subr.bf16.mxu0 0
  %566 = vmatpush1.bf16.msra.mxu0 %v526
  %567 = vmatprep.subr.bf16.mxu0 0
  %568 = vmatpush1.bf16.msra.mxu0 %v527
  %569 = vmatprep.subr.bf16.mxu0 0
  %570 = vmatpush1.bf16.msra.mxu0 %v528
  %571 = vmatprep.subr.bf16.mxu0 0
  %572 = vmatpush1.bf16.msra.mxu0 %v529
  %573 = vmatprep.subr.bf16.mxu0 0
  %574 = vmatpush1.bf16.msra.mxu0 %v530
  %575 = vmatprep.subr.bf16.mxu0 0
  %576 = vmatpush1.bf16.msra.mxu0 %v531
  %577 = vmatprep.subr.bf16.mxu0 0
  %578 = vmatpush1.bf16.msra.mxu0 %v532
  %579 = vmatprep.subr.bf16.mxu0 0
  %580 = vmatpush1.bf16.msra.mxu0 %v533
  %581 = vmatprep.subr.bf16.mxu0 0
  %582 = vmatpush1.bf16.msra.mxu0 %v534
  %583 = vmatprep.mubr.bf16.mxu0 %v422
  %584 = vmatmul.mubr.bf16.gmra.mrb[0].mxu0 %v421
  %v585 = vpop.f32.mrb[0].mxu0
  %v586 = vadd.f32 0.0, %v585
  %v587 = vpop.f32.mrb[0].mxu0
  %v588 = vpop.f32.mrb[0].mxu0
  %v589 = vadd.f32 0.0, %v588
  %v590 = vpop.f32.mrb[0].mxu0
  %591 = vdwg.mxu0
  %v592 = vsel %vm42, %v586, 0.0
  %v593 = vsel %vm42, %v589, 0.0
  %v594 = vadd.f32 %v592, %v593
  %v595 = vrot.slane %v594, 4
  %v596 = vadd.f32 %v594, %v595
  %v597 = vrot.slane %v596, 2
  %v598 = vadd.f32 %v596, %v597
  %v599 = vrot.slane %v598, 1
  %v600 = vadd.f32 %v598, %v599
  %v601 = vmul.f32 %v600, 0.0625
  %v602 = vmul.f32 %v586, %v586
  %v603 = vmul.f32 %v589, %v589
  %v604 = vsel %vm42, %v602, 0.0
  %v605 = vsel %vm42, %v603, 0.0
  %v606 = vadd.f32 %v604, %v605
  %v607 = vrot.slane %v606, 4
  %v608 = vadd.f32 %v606, %v607
  %v609 = vrot.slane %v608, 2
  %v610 = vadd.f32 %v608, %v609
  %v611 = vrot.slane %v610, 1
  %v612 = vadd.f32 %v610, %v611
  %v613 = vmul.f32 %v612, 0.0625
  %v614 = vmul.f32 %v601, %v601
  %v615 = vsub.f32 %v613, %v614
  %v616 = vsub.f32 %v586, %v601
  %v617 = vsub.f32 %v589, %v601
  %v618 = vadd.f32 %v615, 1e-05
  %v619 = vrsqrt.pop %v618
  %v620 = vmul.f32 %v616, %v619
  %v621 = vmul.f32 %v617, %v619
  %v622 = vmul.f32 %v620, 0.5
  %v623 = vmul.f32 %v621, 0.5
  %v624 = vtanh.pop %v622
  %v625 = vtanh.pop %v623
  %v626 = vadd.f32 %v624, 1.0
  %v627 = vadd.f32 %v625, 1.0
  %v628 = vmul.f32 %v626, 0.5
  %v629 = vmul.f32 %v627, 0.5
  %v630 = vsub.f32 %v628, %v21
  %v631 = vsub.f32 %v629, %v22
  %v632 = vmul.f32 %v630, %v630
  %v633 = vmul.f32 %v631, %v631
  %v634 = vsel %vm42, %v632, 0.0
  %v635 = vsel %vm42, %v633, 0.0
  %v636 = vadd.f32 %v634, %v635
  %637 = vadd.xlane.f32.xlu0 %v636
  %v638 = vpop.xlane.xlu0 %637
  %v639 = vrot.slane %v638, 4
  %v640 = vadd.f32 %v638, %v639
  %v641 = vrot.slane %v640, 2
  %v642 = vadd.f32 %v640, %v641
  %v643 = vrot.slane %v642, 1
  %v644 = vadd.f32 %v642, %v643
  %s645 = vtos %v644
  %vm646 = vcmp.eq.s32.totalorder %v25, 0
  %v647 = vstv %s645
  %v648 = vsel %vm646, %v647, 0.0
  %s649 = scalar_lea.vmem %s1, 16
  %v650 = vld [vmem:[%s649] sm:$0xf]
  %v651 = vld [vmem:[%s649 + $0x4] sm:$0xf]
  %v652 = vld [vmem:[%s649 + $0x8] sm:$0xf]
  %v653 = vld [vmem:[%s649 + $0xc] sm:$0xf]
  %v658 = vunpack.c.l.b16 %v650
  %v659 = vunpack.c.l.b16 %v651
  %v660 = vunpack.c.l.b16 %v652
  %v661 = vunpack.c.l.b16 %v653
  %v662 = vpack.c.b16 %v659, %v658
  %v663 = vpack.c.b16 %v661, %v660
  %666 = vmatprep.subr.bf16.mxu0 0
  %667 = vmatpush1.bf16.msra.mxu0 %v662
  %668 = vmatprep.subr.bf16.mxu0 0
  %669 = vmatpush1.bf16.msra.mxu0 %v663
  %670 = vmatprep.subr.bf16.mxu0 0
  %671 = vmatpush1.bf16.msra.mxu0 0
  %672 = vmatprep.subr.bf16.mxu0 0
  %673 = vmatpush1.bf16.msra.mxu0 0
  %674 = vmatprep.subr.bf16.mxu0 0
  %675 = vmatpush1.bf16.msra.mxu0 0
  %676 = vmatprep.subr.bf16.mxu0 0
  %677 = vmatpush1.bf16.msra.mxu0 0
  %678 = vmatprep.subr.bf16.mxu0 0
  %679 = vmatpush1.bf16.msra.mxu0 0
  %680 = vmatprep.subr.bf16.mxu0 0
  %681 = vmatpush1.bf16.msra.mxu0 0
  %682 = vmatprep.subr.bf16.mxu0 0
  %683 = vmatpush1.bf16.msra.mxu0 0
  %684 = vmatprep.subr.bf16.mxu0 0
  %685 = vmatpush1.bf16.msra.mxu0 0
  %686 = vmatprep.subr.bf16.mxu0 0
  %687 = vmatpush1.bf16.msra.mxu0 0
  %688 = vmatprep.subr.bf16.mxu0 0
  %689 = vmatpush1.bf16.msra.mxu0 0
  %690 = vmatprep.subr.bf16.mxu0 0
  %691 = vmatpush1.bf16.msra.mxu0 0
  %692 = vmatprep.subr.bf16.mxu0 0
  %693 = vmatpush1.bf16.msra.mxu0 0
  %694 = vmatprep.subr.bf16.mxu0 0
  %695 = vmatpush1.bf16.msra.mxu0 0
  %696 = vmatprep.subr.bf16.mxu0 0
  %697 = vmatpush1.bf16.msra.mxu0 0
  %698 = vmatprep.mubr.bf16.mxu0 0
  %699 = vmatmul.mubr.bf16.gmra.mrb[0].mxu0 %v44
  %v700 = vpop.f32.mrb[0].mxu0
  %v701 = vadd.f32 0.0, %v700
  %v702 = vpop.f32.mrb[0].mxu0
  %v703 = vpop.f32.mrb[0].mxu0
  %v704 = vadd.f32 0.0, %v703
  %v705 = vpop.f32.mrb[0].mxu0
  %706 = vdwg.mxu0
  %v707 = vsel %vm87, %v701, 0.0
  %v708 = vsel %vm87, %v704, 0.0
  %v709 = vadd.f32 %v707, %v708
  %v710 = vrot.slane %v709, 4
  %v711 = vadd.f32 %v709, %v710
  %v712 = vrot.slane %v711, 2
  %v713 = vadd.f32 %v711, %v712
  %v714 = vrot.slane %v713, 1
  %v715 = vadd.f32 %v713, %v714
  %v716 = vmul.f32 %v715, 0.0625
  %v717 = vmul.f32 %v701, %v701
  %v718 = vmul.f32 %v704, %v704
  %v719 = vsel %vm87, %v717, 0.0
  %v720 = vsel %vm87, %v718, 0.0
  %v721 = vadd.f32 %v719, %v720
  %v722 = vrot.slane %v721, 4
  %v723 = vadd.f32 %v721, %v722
  %v724 = vrot.slane %v723, 2
  %v725 = vadd.f32 %v723, %v724
  %v726 = vrot.slane %v725, 1
  %v727 = vadd.f32 %v725, %v726
  %v728 = vmul.f32 %v727, 0.0625
  %v729 = vmul.f32 %v716, %v716
  %v730 = vsub.f32 %v728, %v729
  %v731 = vsub.f32 %v701, %v716
  %v732 = vsub.f32 %v704, %v716
  %v733 = vadd.f32 %v730, 1e-05
  %v734 = vrsqrt.pop %v733
  %v735 = vmul.f32 %v731, %v734
  %v736 = vmul.f32 %v732, %v734
  %v737 = vmax.f32 %v735, 0.0
  %v738 = vmax.f32 %v736, 0.0
  %v739 = vpack.c.bf16 %v738, %v737
  %s740 = scalar_lea.vmem %s2, 32
  %v741 = vld [vmem:[%s740] sm:$0xf]
  %v742 = vld [vmem:[%s740 + $0x4] sm:$0xf]
  %v743 = vld [vmem:[%s740 + $0x8] sm:$0xf]
  %v744 = vld [vmem:[%s740 + $0xc] sm:$0xf]
  %v745 = vld [vmem:[%s740 + $0x10] sm:$0xf]
  %v746 = vld [vmem:[%s740 + $0x14] sm:$0xf]
  %v747 = vld [vmem:[%s740 + $0x18] sm:$0xf]
  %v748 = vld [vmem:[%s740 + $0x1c] sm:$0xf]
  %v757 = vunpack.c.l.b16 %v741
  %v758 = vunpack.c.l.b16 %v742
  %v759 = vunpack.c.l.b16 %v743
  %v760 = vunpack.c.l.b16 %v744
  %v761 = vunpack.c.l.b16 %v745
  %v762 = vunpack.c.l.b16 %v746
  %v763 = vunpack.c.l.b16 %v747
  %v764 = vunpack.c.l.b16 %v748
  %v765 = vpack.c.b16 %v758, %v757
  %v766 = vpack.c.b16 %v760, %v759
  %v767 = vpack.c.b16 %v762, %v761
  %v768 = vpack.c.b16 %v764, %v763
  %v774 = vsel %vm87, %v739, 0
  %776 = vmatprep.subr.bf16.mxu0 0
  %777 = vmatpush1.bf16.msra.mxu0 %v765
  %778 = vmatprep.subr.bf16.mxu0 0
  %779 = vmatpush1.bf16.msra.mxu0 %v766
  %780 = vmatprep.subr.bf16.mxu0 0
  %781 = vmatpush1.bf16.msra.mxu0 %v767
  %782 = vmatprep.subr.bf16.mxu0 0
  %783 = vmatpush1.bf16.msra.mxu0 %v768
  %784 = vmatprep.subr.bf16.mxu0 0
  %785 = vmatpush1.bf16.msra.mxu0 0
  %786 = vmatprep.subr.bf16.mxu0 0
  %787 = vmatpush1.bf16.msra.mxu0 0
  %788 = vmatprep.subr.bf16.mxu0 0
  %789 = vmatpush1.bf16.msra.mxu0 0
  %790 = vmatprep.subr.bf16.mxu0 0
  %791 = vmatpush1.bf16.msra.mxu0 0
  %792 = vmatprep.subr.bf16.mxu0 0
  %793 = vmatpush1.bf16.msra.mxu0 0
  %794 = vmatprep.subr.bf16.mxu0 0
  %795 = vmatpush1.bf16.msra.mxu0 0
  %796 = vmatprep.subr.bf16.mxu0 0
  %797 = vmatpush1.bf16.msra.mxu0 0
  %798 = vmatprep.subr.bf16.mxu0 0
  %799 = vmatpush1.bf16.msra.mxu0 0
  %800 = vmatprep.subr.bf16.mxu0 0
  %801 = vmatpush1.bf16.msra.mxu0 0
  %802 = vmatprep.subr.bf16.mxu0 0
  %803 = vmatpush1.bf16.msra.mxu0 0
  %804 = vmatprep.subr.bf16.mxu0 0
  %805 = vmatpush1.bf16.msra.mxu0 0
  %806 = vmatprep.subr.bf16.mxu0 0
  %807 = vmatpush1.bf16.msra.mxu0 0
  %808 = vmatprep.mubr.bf16.mxu0 0
  %809 = vmatmul.mubr.bf16.gmra.mrb[0].mxu0 %v774
  %v810 = vpop.f32.mrb[0].mxu0
  %v811 = vadd.f32 0.0, %v810
  %v812 = vpop.f32.mrb[0].mxu0
  %v813 = vpop.f32.mrb[0].mxu0
  %v814 = vadd.f32 0.0, %v813
  %v815 = vpop.f32.mrb[0].mxu0
  %816 = vdwg.mxu0
  %v817 = vadd.f32 %v811, %v814
  %v818 = vrot.slane %v817, 4
  %v819 = vadd.f32 %v817, %v818
  %v820 = vrot.slane %v819, 2
  %v821 = vadd.f32 %v819, %v820
  %v822 = vrot.slane %v821, 1
  %v823 = vadd.f32 %v821, %v822
  %v824 = vmul.f32 %v823, 0.0625
  %v825 = vmul.f32 %v811, %v811
  %v826 = vmul.f32 %v814, %v814
  %v827 = vadd.f32 %v825, %v826
  %v828 = vrot.slane %v827, 4
  %v829 = vadd.f32 %v827, %v828
  %v830 = vrot.slane %v829, 2
  %v831 = vadd.f32 %v829, %v830
  %v832 = vrot.slane %v831, 1
  %v833 = vadd.f32 %v831, %v832
  %v834 = vmul.f32 %v833, 0.0625
  %v835 = vmul.f32 %v824, %v824
  %v836 = vsub.f32 %v834, %v835
  %v837 = vsub.f32 %v811, %v824
  %v838 = vsub.f32 %v814, %v824
  %v839 = vadd.f32 %v836, 1e-05
  %v840 = vrsqrt.pop %v839
  %v841 = vmul.f32 %v837, %v840
  %v842 = vmul.f32 %v838, %v840
  %v843 = vmax.f32 %v841, 0.0
  %v844 = vmax.f32 %v842, 0.0
  %v845 = vpack.c.bf16 %v844, %v843
  %s846 = scalar_lea.vmem %s3, 128
  %v847 = vld [vmem:[%s846] sm:$0xff]
  %v848 = vld [vmem:[%s846 + $0x8] sm:$0xff]
  %v849 = vld [vmem:[%s846 + $0x10] sm:$0xff]
  %v850 = vld [vmem:[%s846 + $0x18] sm:$0xff]
  %v851 = vld [vmem:[%s846 + $0x20] sm:$0xff]
  %v852 = vld [vmem:[%s846 + $0x28] sm:$0xff]
  %v853 = vld [vmem:[%s846 + $0x30] sm:$0xff]
  %v854 = vld [vmem:[%s846 + $0x38] sm:$0xff]
  %v855 = vld [vmem:[%s846 + $0x40] sm:$0xff]
  %v856 = vld [vmem:[%s846 + $0x48] sm:$0xff]
  %v857 = vld [vmem:[%s846 + $0x50] sm:$0xff]
  %v858 = vld [vmem:[%s846 + $0x58] sm:$0xff]
  %v859 = vld [vmem:[%s846 + $0x60] sm:$0xff]
  %v860 = vld [vmem:[%s846 + $0x68] sm:$0xff]
  %v861 = vld [vmem:[%s846 + $0x70] sm:$0xff]
  %v862 = vld [vmem:[%s846 + $0x78] sm:$0xff]
  %v879 = vunpack.c.l.b16 %v847
  %v880 = vunpack.c.h.b16 %v847
  %v881 = vunpack.c.l.b16 %v848
  %v882 = vunpack.c.h.b16 %v848
  %v883 = vunpack.c.l.b16 %v849
  %v884 = vunpack.c.h.b16 %v849
  %v885 = vunpack.c.l.b16 %v850
  %v886 = vunpack.c.h.b16 %v850
  %v887 = vunpack.c.l.b16 %v851
  %v888 = vunpack.c.h.b16 %v851
  %v889 = vunpack.c.l.b16 %v852
  %v890 = vunpack.c.h.b16 %v852
  %v891 = vunpack.c.l.b16 %v853
  %v892 = vunpack.c.h.b16 %v853
  %v893 = vunpack.c.l.b16 %v854
  %v894 = vunpack.c.h.b16 %v854
  %v895 = vunpack.c.l.b16 %v855
  %v896 = vunpack.c.h.b16 %v855
  %v897 = vunpack.c.l.b16 %v856
  %v898 = vunpack.c.h.b16 %v856
  %v899 = vunpack.c.l.b16 %v857
  %v900 = vunpack.c.h.b16 %v857
  %v901 = vunpack.c.l.b16 %v858
  %v902 = vunpack.c.h.b16 %v858
  %v903 = vunpack.c.l.b16 %v859
  %v904 = vunpack.c.h.b16 %v859
  %v905 = vunpack.c.l.b16 %v860
  %v906 = vunpack.c.h.b16 %v860
  %v907 = vunpack.c.l.b16 %v861
  %v908 = vunpack.c.h.b16 %v861
  %v909 = vunpack.c.l.b16 %v862
  %v910 = vunpack.c.h.b16 %v862
  %v911 = vpack.c.b16 %v881, %v879
  %v912 = vpack.c.b16 %v882, %v880
  %v913 = vpack.c.b16 %v885, %v883
  %v914 = vpack.c.b16 %v886, %v884
  %v915 = vpack.c.b16 %v889, %v887
  %v916 = vpack.c.b16 %v890, %v888
  %v917 = vpack.c.b16 %v893, %v891
  %v918 = vpack.c.b16 %v894, %v892
  %v919 = vpack.c.b16 %v897, %v895
  %v920 = vpack.c.b16 %v898, %v896
  %v921 = vpack.c.b16 %v901, %v899
  %v922 = vpack.c.b16 %v902, %v900
  %v923 = vpack.c.b16 %v905, %v903
  %v924 = vpack.c.b16 %v906, %v904
  %v925 = vpack.c.b16 %v909, %v907
  %v926 = vpack.c.b16 %v910, %v908
  %943 = vmatprep.subr.bf16.mxu0 %v912
  %944 = vmatpush1.bf16.msra.mxu0 %v911
  %945 = vmatprep.subr.bf16.mxu0 %v914
  %946 = vmatpush1.bf16.msra.mxu0 %v913
  %947 = vmatprep.subr.bf16.mxu0 %v916
  %948 = vmatpush1.bf16.msra.mxu0 %v915
  %949 = vmatprep.subr.bf16.mxu0 %v918
  %950 = vmatpush1.bf16.msra.mxu0 %v917
  %951 = vmatprep.subr.bf16.mxu0 %v920
  %952 = vmatpush1.bf16.msra.mxu0 %v919
  %953 = vmatprep.subr.bf16.mxu0 %v922
  %954 = vmatpush1.bf16.msra.mxu0 %v921
  %955 = vmatprep.subr.bf16.mxu0 %v924
  %956 = vmatpush1.bf16.msra.mxu0 %v923
  %957 = vmatprep.subr.bf16.mxu0 %v926
  %958 = vmatpush1.bf16.msra.mxu0 %v925
  %959 = vmatprep.subr.bf16.mxu0 0
  %960 = vmatpush1.bf16.msra.mxu0 0
  %961 = vmatprep.subr.bf16.mxu0 0
  %962 = vmatpush1.bf16.msra.mxu0 0
  %963 = vmatprep.subr.bf16.mxu0 0
  %964 = vmatpush1.bf16.msra.mxu0 0
  %965 = vmatprep.subr.bf16.mxu0 0
  %966 = vmatpush1.bf16.msra.mxu0 0
  %967 = vmatprep.subr.bf16.mxu0 0
  %968 = vmatpush1.bf16.msra.mxu0 0
  %969 = vmatprep.subr.bf16.mxu0 0
  %970 = vmatpush1.bf16.msra.mxu0 0
  %971 = vmatprep.subr.bf16.mxu0 0
  %972 = vmatpush1.bf16.msra.mxu0 0
  %973 = vmatprep.subr.bf16.mxu0 0
  %974 = vmatpush1.bf16.msra.mxu0 0
  %975 = vmatprep.mubr.bf16.mxu0 0
  %976 = vmatmul.mubr.bf16.gmra.mrb[0].mxu0 %v845
  %v977 = vpop.f32.mrb[0].mxu0
  %v978 = vadd.f32 0.0, %v977
  %v979 = vpop.f32.mrb[0].mxu0
  %v980 = vadd.f32 0.0, %v979
  %v981 = vpop.f32.mrb[0].mxu0
  %v982 = vadd.f32 0.0, %v981
  %v983 = vpop.f32.mrb[0].mxu0
  %v984 = vadd.f32 0.0, %v983
  %985 = vdwg.mxu0
  %v986 = vadd.f32 %v978, %v982
  %v987 = vrot.slane %v986, 4
  %v988 = vadd.f32 %v986, %v987
  %v989 = vrot.slane %v988, 2
  %v990 = vadd.f32 %v988, %v989
  %v991 = vrot.slane %v990, 1
  %v992 = vadd.f32 %v990, %v991
  %v993 = vadd.f32 %v980, %v984
  %v994 = vrot.slane %v993, 4
  %v995 = vadd.f32 %v993, %v994
  %v996 = vrot.slane %v995, 2
  %v997 = vadd.f32 %v995, %v996
  %v998 = vrot.slane %v997, 1
  %v999 = vadd.f32 %v997, %v998
  %v1000 = vmul.f32 %v992, 0.0625
  %v1001 = vmul.f32 %v999, 0.0625
  %v1002 = vmul.f32 %v978, %v978
  %v1003 = vmul.f32 %v980, %v980
  %v1004 = vmul.f32 %v982, %v982
  %v1005 = vmul.f32 %v984, %v984
  %v1006 = vadd.f32 %v1002, %v1004
  %v1007 = vrot.slane %v1006, 4
  %v1008 = vadd.f32 %v1006, %v1007
  %v1009 = vrot.slane %v1008, 2
  %v1010 = vadd.f32 %v1008, %v1009
  %v1011 = vrot.slane %v1010, 1
  %v1012 = vadd.f32 %v1010, %v1011
  %v1013 = vadd.f32 %v1003, %v1005
  %v1014 = vrot.slane %v1013, 4
  %v1015 = vadd.f32 %v1013, %v1014
  %v1016 = vrot.slane %v1015, 2
  %v1017 = vadd.f32 %v1015, %v1016
  %v1018 = vrot.slane %v1017, 1
  %v1019 = vadd.f32 %v1017, %v1018
  %v1020 = vmul.f32 %v1012, 0.0625
  %v1021 = vmul.f32 %v1019, 0.0625
  %v1022 = vmul.f32 %v1000, %v1000
  %v1023 = vmul.f32 %v1001, %v1001
  %v1024 = vsub.f32 %v1020, %v1022
  %v1025 = vsub.f32 %v1021, %v1023
  %v1026 = vsub.f32 %v978, %v1000
  %v1027 = vsub.f32 %v980, %v1001
  %v1028 = vsub.f32 %v982, %v1000
  %v1029 = vsub.f32 %v984, %v1001
  %v1030 = vadd.f32 %v1024, 1e-05
  %v1031 = vadd.f32 %v1025, 1e-05
  %v1032 = vrsqrt.pop %v1030
  %v1033 = vrsqrt.pop %v1031
  %v1034 = vmul.f32 %v1026, %v1032
  %v1035 = vmul.f32 %v1027, %v1033
  %v1036 = vmul.f32 %v1028, %v1032
  %v1037 = vmul.f32 %v1029, %v1033
  %v1038 = vmax.f32 %v1034, 0.0
  %v1039 = vmax.f32 %v1035, 0.0
  %v1040 = vmax.f32 %v1036, 0.0
  %v1041 = vmax.f32 %v1037, 0.0
  %v1042 = vpack.c.bf16 %v1040, %v1038
  %v1043 = vpack.c.bf16 %v1041, %v1039
  %s1044 = scalar_lea.vmem %s4, 128
  %v1045 = vld [vmem:[%s1044] sm:$0xf]
  %v1046 = vld [vmem:[%s1044 + $0x4] sm:$0xf]
  %v1047 = vld [vmem:[%s1044 + $0x8] sm:$0xf]
  %v1048 = vld [vmem:[%s1044 + $0xc] sm:$0xf]
  %v1049 = vld [vmem:[%s1044 + $0x10] sm:$0xf]
  %v1050 = vld [vmem:[%s1044 + $0x14] sm:$0xf]
  %v1051 = vld [vmem:[%s1044 + $0x18] sm:$0xf]
  %v1052 = vld [vmem:[%s1044 + $0x1c] sm:$0xf]
  %v1053 = vld [vmem:[%s1044 + $0x20] sm:$0xf]
  %v1054 = vld [vmem:[%s1044 + $0x24] sm:$0xf]
  %v1055 = vld [vmem:[%s1044 + $0x28] sm:$0xf]
  %v1056 = vld [vmem:[%s1044 + $0x2c] sm:$0xf]
  %v1057 = vld [vmem:[%s1044 + $0x30] sm:$0xf]
  %v1058 = vld [vmem:[%s1044 + $0x34] sm:$0xf]
  %v1059 = vld [vmem:[%s1044 + $0x38] sm:$0xf]
  %v1060 = vld [vmem:[%s1044 + $0x3c] sm:$0xf]
  %v1061 = vld [vmem:[%s1044 + $0x40] sm:$0xf]
  %v1062 = vld [vmem:[%s1044 + $0x44] sm:$0xf]
  %v1063 = vld [vmem:[%s1044 + $0x48] sm:$0xf]
  %v1064 = vld [vmem:[%s1044 + $0x4c] sm:$0xf]
  %v1065 = vld [vmem:[%s1044 + $0x50] sm:$0xf]
  %v1066 = vld [vmem:[%s1044 + $0x54] sm:$0xf]
  %v1067 = vld [vmem:[%s1044 + $0x58] sm:$0xf]
  %v1068 = vld [vmem:[%s1044 + $0x5c] sm:$0xf]
  %v1069 = vld [vmem:[%s1044 + $0x60] sm:$0xf]
  %v1070 = vld [vmem:[%s1044 + $0x64] sm:$0xf]
  %v1071 = vld [vmem:[%s1044 + $0x68] sm:$0xf]
  %v1072 = vld [vmem:[%s1044 + $0x6c] sm:$0xf]
  %v1073 = vld [vmem:[%s1044 + $0x70] sm:$0xf]
  %v1074 = vld [vmem:[%s1044 + $0x74] sm:$0xf]
  %v1075 = vld [vmem:[%s1044 + $0x78] sm:$0xf]
  %v1076 = vld [vmem:[%s1044 + $0x7c] sm:$0xf]
  %v1109 = vunpack.c.l.b16 %v1045
  %v1110 = vunpack.c.l.b16 %v1046
  %v1111 = vunpack.c.l.b16 %v1047
  %v1112 = vunpack.c.l.b16 %v1048
  %v1113 = vunpack.c.l.b16 %v1049
  %v1114 = vunpack.c.l.b16 %v1050
  %v1115 = vunpack.c.l.b16 %v1051
  %v1116 = vunpack.c.l.b16 %v1052
  %v1117 = vunpack.c.l.b16 %v1053
  %v1118 = vunpack.c.l.b16 %v1054
  %v1119 = vunpack.c.l.b16 %v1055
  %v1120 = vunpack.c.l.b16 %v1056
  %v1121 = vunpack.c.l.b16 %v1057
  %v1122 = vunpack.c.l.b16 %v1058
  %v1123 = vunpack.c.l.b16 %v1059
  %v1124 = vunpack.c.l.b16 %v1060
  %v1125 = vunpack.c.l.b16 %v1061
  %v1126 = vunpack.c.l.b16 %v1062
  %v1127 = vunpack.c.l.b16 %v1063
  %v1128 = vunpack.c.l.b16 %v1064
  %v1129 = vunpack.c.l.b16 %v1065
  %v1130 = vunpack.c.l.b16 %v1066
  %v1131 = vunpack.c.l.b16 %v1067
  %v1132 = vunpack.c.l.b16 %v1068
  %v1133 = vunpack.c.l.b16 %v1069
  %v1134 = vunpack.c.l.b16 %v1070
  %v1135 = vunpack.c.l.b16 %v1071
  %v1136 = vunpack.c.l.b16 %v1072
  %v1137 = vunpack.c.l.b16 %v1073
  %v1138 = vunpack.c.l.b16 %v1074
  %v1139 = vunpack.c.l.b16 %v1075
  %v1140 = vunpack.c.l.b16 %v1076
  %v1141 = vpack.c.b16 %v1110, %v1109
  %v1142 = vpack.c.b16 %v1112, %v1111
  %v1143 = vpack.c.b16 %v1114, %v1113
  %v1144 = vpack.c.b16 %v1116, %v1115
  %v1145 = vpack.c.b16 %v1118, %v1117
  %v1146 = vpack.c.b16 %v1120, %v1119
  %v1147 = vpack.c.b16 %v1122, %v1121
  %v1148 = vpack.c.b16 %v1124, %v1123
  %v1149 = vpack.c.b16 %v1126, %v1125
  %v1150 = vpack.c.b16 %v1128, %v1127
  %v1151 = vpack.c.b16 %v1130, %v1129
  %v1152 = vpack.c.b16 %v1132, %v1131
  %v1153 = vpack.c.b16 %v1134, %v1133
  %v1154 = vpack.c.b16 %v1136, %v1135
  %v1155 = vpack.c.b16 %v1138, %v1137
  %v1156 = vpack.c.b16 %v1140, %v1139
  %1173 = vmatprep.subr.bf16.mxu0 0
  %1174 = vmatpush1.bf16.msra.mxu0 %v1141
  %1175 = vmatprep.subr.bf16.mxu0 0
  %1176 = vmatpush1.bf16.msra.mxu0 %v1142
  %1177 = vmatprep.subr.bf16.mxu0 0
  %1178 = vmatpush1.bf16.msra.mxu0 %v1143
  %1179 = vmatprep.subr.bf16.mxu0 0
  %1180 = vmatpush1.bf16.msra.mxu0 %v1144
  %1181 = vmatprep.subr.bf16.mxu0 0
  %1182 = vmatpush1.bf16.msra.mxu0 %v1145
  %1183 = vmatprep.subr.bf16.mxu0 0
  %1184 = vmatpush1.bf16.msra.mxu0 %v1146
  %1185 = vmatprep.subr.bf16.mxu0 0
  %1186 = vmatpush1.bf16.msra.mxu0 %v1147
  %1187 = vmatprep.subr.bf16.mxu0 0
  %1188 = vmatpush1.bf16.msra.mxu0 %v1148
  %1189 = vmatprep.subr.bf16.mxu0 0
  %1190 = vmatpush1.bf16.msra.mxu0 %v1149
  %1191 = vmatprep.subr.bf16.mxu0 0
  %1192 = vmatpush1.bf16.msra.mxu0 %v1150
  %1193 = vmatprep.subr.bf16.mxu0 0
  %1194 = vmatpush1.bf16.msra.mxu0 %v1151
  %1195 = vmatprep.subr.bf16.mxu0 0
  %1196 = vmatpush1.bf16.msra.mxu0 %v1152
  %1197 = vmatprep.subr.bf16.mxu0 0
  %1198 = vmatpush1.bf16.msra.mxu0 %v1153
  %1199 = vmatprep.subr.bf16.mxu0 0
  %1200 = vmatpush1.bf16.msra.mxu0 %v1154
  %1201 = vmatprep.subr.bf16.mxu0 0
  %1202 = vmatpush1.bf16.msra.mxu0 %v1155
  %1203 = vmatprep.subr.bf16.mxu0 0
  %1204 = vmatpush1.bf16.msra.mxu0 %v1156
  %1205 = vmatprep.mubr.bf16.mxu0 %v1043
  %1206 = vmatmul.mubr.bf16.gmra.mrb[0].mxu0 %v1042
  %v1207 = vpop.f32.mrb[0].mxu0
  %v1208 = vadd.f32 0.0, %v1207
  %v1209 = vpop.f32.mrb[0].mxu0
  %v1210 = vpop.f32.mrb[0].mxu0
  %v1211 = vadd.f32 0.0, %v1210
  %v1212 = vpop.f32.mrb[0].mxu0
  %1213 = vdwg.mxu0
  %v1214 = vsel %vm42, %v1208, 0.0
  %v1215 = vsel %vm42, %v1211, 0.0
  %v1216 = vadd.f32 %v1214, %v1215
  %v1217 = vrot.slane %v1216, 4
  %v1218 = vadd.f32 %v1216, %v1217
  %v1219 = vrot.slane %v1218, 2
  %v1220 = vadd.f32 %v1218, %v1219
  %v1221 = vrot.slane %v1220, 1
  %v1222 = vadd.f32 %v1220, %v1221
  %v1223 = vmul.f32 %v1222, 0.0625
  %v1224 = vmul.f32 %v1208, %v1208
  %v1225 = vmul.f32 %v1211, %v1211
  %v1226 = vsel %vm42, %v1224, 0.0
  %v1227 = vsel %vm42, %v1225, 0.0
  %v1228 = vadd.f32 %v1226, %v1227
  %v1229 = vrot.slane %v1228, 4
  %v1230 = vadd.f32 %v1228, %v1229
  %v1231 = vrot.slane %v1230, 2
  %v1232 = vadd.f32 %v1230, %v1231
  %v1233 = vrot.slane %v1232, 1
  %v1234 = vadd.f32 %v1232, %v1233
  %v1235 = vmul.f32 %v1234, 0.0625
  %v1236 = vmul.f32 %v1223, %v1223
  %v1237 = vsub.f32 %v1235, %v1236
  %v1238 = vsub.f32 %v1208, %v1223
  %v1239 = vsub.f32 %v1211, %v1223
  %v1240 = vadd.f32 %v1237, 1e-05
  %v1241 = vrsqrt.pop %v1240
  %v1242 = vmul.f32 %v1238, %v1241
  %v1243 = vmul.f32 %v1239, %v1241
  %v1244 = vmul.f32 %v1242, 0.5
  %v1245 = vmul.f32 %v1243, 0.5
  %v1246 = vtanh.pop %v1244
  %v1247 = vtanh.pop %v1245
  %v1248 = vadd.f32 %v1246, 1.0
  %v1249 = vadd.f32 %v1247, 1.0
  %v1250 = vmul.f32 %v1248, 0.5
  %v1251 = vmul.f32 %v1249, 0.5
  %v1252 = vsub.f32 %v1250, %v21
  %v1253 = vsub.f32 %v1251, %v22
  %v1254 = vmul.f32 %v1252, %v1252
  %v1255 = vmul.f32 %v1253, %v1253
  %v1256 = vsel %vm42, %v1254, 0.0
  %v1257 = vsel %vm42, %v1255, 0.0
  %v1258 = vadd.f32 %v1256, %v1257
  %1259 = vadd.xlane.f32.xlu0 %v1258
  %v1260 = vpop.xlane.xlu0 %1259
  %v1261 = vrot.slane %v1260, 4
  %v1262 = vadd.f32 %v1260, %v1261
  %v1263 = vrot.slane %v1262, 2
  %v1264 = vadd.f32 %v1262, %v1263
  %v1265 = vrot.slane %v1264, 1
  %v1266 = vadd.f32 %v1264, %v1265
  %s1267 = vtos %v1266
  %vm1268 = vcmp.eq.s32.totalorder %v25, 1
  %v1269 = vstv %s1267
  %v1270 = vsel %vm1268, %v1269, %v648
  %s1271 = scalar_lea.vmem %s1, 32
  %v1272 = vld [vmem:[%s1271] sm:$0xf]
  %v1273 = vld [vmem:[%s1271 + $0x4] sm:$0xf]
  %v1274 = vld [vmem:[%s1271 + $0x8] sm:$0xf]
  %v1275 = vld [vmem:[%s1271 + $0xc] sm:$0xf]
  %v1280 = vunpack.c.l.b16 %v1272
  %v1281 = vunpack.c.l.b16 %v1273
  %v1282 = vunpack.c.l.b16 %v1274
  %v1283 = vunpack.c.l.b16 %v1275
  %v1284 = vpack.c.b16 %v1281, %v1280
  %v1285 = vpack.c.b16 %v1283, %v1282
  %1288 = vmatprep.subr.bf16.mxu0 0
  %1289 = vmatpush1.bf16.msra.mxu0 %v1284
  %1290 = vmatprep.subr.bf16.mxu0 0
  %1291 = vmatpush1.bf16.msra.mxu0 %v1285
  %1292 = vmatprep.subr.bf16.mxu0 0
  %1293 = vmatpush1.bf16.msra.mxu0 0
  %1294 = vmatprep.subr.bf16.mxu0 0
  %1295 = vmatpush1.bf16.msra.mxu0 0
  %1296 = vmatprep.subr.bf16.mxu0 0
  %1297 = vmatpush1.bf16.msra.mxu0 0
  %1298 = vmatprep.subr.bf16.mxu0 0
  %1299 = vmatpush1.bf16.msra.mxu0 0
  %1300 = vmatprep.subr.bf16.mxu0 0
  %1301 = vmatpush1.bf16.msra.mxu0 0
  %1302 = vmatprep.subr.bf16.mxu0 0
  %1303 = vmatpush1.bf16.msra.mxu0 0
  %1304 = vmatprep.subr.bf16.mxu0 0
  %1305 = vmatpush1.bf16.msra.mxu0 0
  %1306 = vmatprep.subr.bf16.mxu0 0
  %1307 = vmatpush1.bf16.msra.mxu0 0
  %1308 = vmatprep.subr.bf16.mxu0 0
  %1309 = vmatpush1.bf16.msra.mxu0 0
  %1310 = vmatprep.subr.bf16.mxu0 0
  %1311 = vmatpush1.bf16.msra.mxu0 0
  %1312 = vmatprep.subr.bf16.mxu0 0
  %1313 = vmatpush1.bf16.msra.mxu0 0
  %1314 = vmatprep.subr.bf16.mxu0 0
  %1315 = vmatpush1.bf16.msra.mxu0 0
  %1316 = vmatprep.subr.bf16.mxu0 0
  %1317 = vmatpush1.bf16.msra.mxu0 0
  %1318 = vmatprep.subr.bf16.mxu0 0
  %1319 = vmatpush1.bf16.msra.mxu0 0
  %1320 = vmatprep.mubr.bf16.mxu0 0
  %1321 = vmatmul.mubr.bf16.gmra.mrb[0].mxu0 %v44
  %v1322 = vpop.f32.mrb[0].mxu0
  %v1323 = vadd.f32 0.0, %v1322
  %v1324 = vpop.f32.mrb[0].mxu0
  %v1325 = vpop.f32.mrb[0].mxu0
  %v1326 = vadd.f32 0.0, %v1325
  %v1327 = vpop.f32.mrb[0].mxu0
  %1328 = vdwg.mxu0
  %v1329 = vsel %vm87, %v1323, 0.0
  %v1330 = vsel %vm87, %v1326, 0.0
  %v1331 = vadd.f32 %v1329, %v1330
  %v1332 = vrot.slane %v1331, 4
  %v1333 = vadd.f32 %v1331, %v1332
  %v1334 = vrot.slane %v1333, 2
  %v1335 = vadd.f32 %v1333, %v1334
  %v1336 = vrot.slane %v1335, 1
  %v1337 = vadd.f32 %v1335, %v1336
  %v1338 = vmul.f32 %v1337, 0.0625
  %v1339 = vmul.f32 %v1323, %v1323
  %v1340 = vmul.f32 %v1326, %v1326
  %v1341 = vsel %vm87, %v1339, 0.0
  %v1342 = vsel %vm87, %v1340, 0.0
  %v1343 = vadd.f32 %v1341, %v1342
  %v1344 = vrot.slane %v1343, 4
  %v1345 = vadd.f32 %v1343, %v1344
  %v1346 = vrot.slane %v1345, 2
  %v1347 = vadd.f32 %v1345, %v1346
  %v1348 = vrot.slane %v1347, 1
  %v1349 = vadd.f32 %v1347, %v1348
  %v1350 = vmul.f32 %v1349, 0.0625
  %v1351 = vmul.f32 %v1338, %v1338
  %v1352 = vsub.f32 %v1350, %v1351
  %v1353 = vsub.f32 %v1323, %v1338
  %v1354 = vsub.f32 %v1326, %v1338
  %v1355 = vadd.f32 %v1352, 1e-05
  %v1356 = vrsqrt.pop %v1355
  %v1357 = vmul.f32 %v1353, %v1356
  %v1358 = vmul.f32 %v1354, %v1356
  %v1359 = vmax.f32 %v1357, 0.0
  %v1360 = vmax.f32 %v1358, 0.0
  %v1361 = vpack.c.bf16 %v1360, %v1359
  %s1362 = scalar_lea.vmem %s2, 64
  %v1363 = vld [vmem:[%s1362] sm:$0xf]
  %v1364 = vld [vmem:[%s1362 + $0x4] sm:$0xf]
  %v1365 = vld [vmem:[%s1362 + $0x8] sm:$0xf]
  %v1366 = vld [vmem:[%s1362 + $0xc] sm:$0xf]
  %v1367 = vld [vmem:[%s1362 + $0x10] sm:$0xf]
  %v1368 = vld [vmem:[%s1362 + $0x14] sm:$0xf]
  %v1369 = vld [vmem:[%s1362 + $0x18] sm:$0xf]
  %v1370 = vld [vmem:[%s1362 + $0x1c] sm:$0xf]
  %v1379 = vunpack.c.l.b16 %v1363
  %v1380 = vunpack.c.l.b16 %v1364
  %v1381 = vunpack.c.l.b16 %v1365
  %v1382 = vunpack.c.l.b16 %v1366
  %v1383 = vunpack.c.l.b16 %v1367
  %v1384 = vunpack.c.l.b16 %v1368
  %v1385 = vunpack.c.l.b16 %v1369
  %v1386 = vunpack.c.l.b16 %v1370
  %v1387 = vpack.c.b16 %v1380, %v1379
  %v1388 = vpack.c.b16 %v1382, %v1381
  %v1389 = vpack.c.b16 %v1384, %v1383
  %v1390 = vpack.c.b16 %v1386, %v1385
  %v1396 = vsel %vm87, %v1361, 0
  %1398 = vmatprep.subr.bf16.mxu0 0
  %1399 = vmatpush1.bf16.msra.mxu0 %v1387
  %1400 = vmatprep.subr.bf16.mxu0 0
  %1401 = vmatpush1.bf16.msra.mxu0 %v1388
  %1402 = vmatprep.subr.bf16.mxu0 0
  %1403 = vmatpush1.bf16.msra.mxu0 %v1389
  %1404 = vmatprep.subr.bf16.mxu0 0
  %1405 = vmatpush1.bf16.msra.mxu0 %v1390
  %1406 = vmatprep.subr.bf16.mxu0 0
  %1407 = vmatpush1.bf16.msra.mxu0 0
  %1408 = vmatprep.subr.bf16.mxu0 0
  %1409 = vmatpush1.bf16.msra.mxu0 0
  %1410 = vmatprep.subr.bf16.mxu0 0
  %1411 = vmatpush1.bf16.msra.mxu0 0
  %1412 = vmatprep.subr.bf16.mxu0 0
  %1413 = vmatpush1.bf16.msra.mxu0 0
  %1414 = vmatprep.subr.bf16.mxu0 0
  %1415 = vmatpush1.bf16.msra.mxu0 0
  %1416 = vmatprep.subr.bf16.mxu0 0
  %1417 = vmatpush1.bf16.msra.mxu0 0
  %1418 = vmatprep.subr.bf16.mxu0 0
  %1419 = vmatpush1.bf16.msra.mxu0 0
  %1420 = vmatprep.subr.bf16.mxu0 0
  %1421 = vmatpush1.bf16.msra.mxu0 0
  %1422 = vmatprep.subr.bf16.mxu0 0
  %1423 = vmatpush1.bf16.msra.mxu0 0
  %1424 = vmatprep.subr.bf16.mxu0 0
  %1425 = vmatpush1.bf16.msra.mxu0 0
  %1426 = vmatprep.subr.bf16.mxu0 0
  %1427 = vmatpush1.bf16.msra.mxu0 0
  %1428 = vmatprep.subr.bf16.mxu0 0
  %1429 = vmatpush1.bf16.msra.mxu0 0
  %1430 = vmatprep.mubr.bf16.mxu0 0
  %1431 = vmatmul.mubr.bf16.gmra.mrb[0].mxu0 %v1396
  %v1432 = vpop.f32.mrb[0].mxu0
  %v1433 = vadd.f32 0.0, %v1432
  %v1434 = vpop.f32.mrb[0].mxu0
  %v1435 = vpop.f32.mrb[0].mxu0
  %v1436 = vadd.f32 0.0, %v1435
  %v1437 = vpop.f32.mrb[0].mxu0
  %1438 = vdwg.mxu0
  %v1439 = vadd.f32 %v1433, %v1436
  %v1440 = vrot.slane %v1439, 4
  %v1441 = vadd.f32 %v1439, %v1440
  %v1442 = vrot.slane %v1441, 2
  %v1443 = vadd.f32 %v1441, %v1442
  %v1444 = vrot.slane %v1443, 1
  %v1445 = vadd.f32 %v1443, %v1444
  %v1446 = vmul.f32 %v1445, 0.0625
  %v1447 = vmul.f32 %v1433, %v1433
  %v1448 = vmul.f32 %v1436, %v1436
  %v1449 = vadd.f32 %v1447, %v1448
  %v1450 = vrot.slane %v1449, 4
  %v1451 = vadd.f32 %v1449, %v1450
  %v1452 = vrot.slane %v1451, 2
  %v1453 = vadd.f32 %v1451, %v1452
  %v1454 = vrot.slane %v1453, 1
  %v1455 = vadd.f32 %v1453, %v1454
  %v1456 = vmul.f32 %v1455, 0.0625
  %v1457 = vmul.f32 %v1446, %v1446
  %v1458 = vsub.f32 %v1456, %v1457
  %v1459 = vsub.f32 %v1433, %v1446
  %v1460 = vsub.f32 %v1436, %v1446
  %v1461 = vadd.f32 %v1458, 1e-05
  %v1462 = vrsqrt.pop %v1461
  %v1463 = vmul.f32 %v1459, %v1462
  %v1464 = vmul.f32 %v1460, %v1462
  %v1465 = vmax.f32 %v1463, 0.0
  %v1466 = vmax.f32 %v1464, 0.0
  %v1467 = vpack.c.bf16 %v1466, %v1465
  %s1468 = scalar_lea.vmem %s3, 256
  %v1469 = vld [vmem:[%s1468] sm:$0xff]
  %v1470 = vld [vmem:[%s1468 + $0x8] sm:$0xff]
  %v1471 = vld [vmem:[%s1468 + $0x10] sm:$0xff]
  %v1472 = vld [vmem:[%s1468 + $0x18] sm:$0xff]
  %v1473 = vld [vmem:[%s1468 + $0x20] sm:$0xff]
  %v1474 = vld [vmem:[%s1468 + $0x28] sm:$0xff]
  %v1475 = vld [vmem:[%s1468 + $0x30] sm:$0xff]
  %v1476 = vld [vmem:[%s1468 + $0x38] sm:$0xff]
  %v1477 = vld [vmem:[%s1468 + $0x40] sm:$0xff]
  %v1478 = vld [vmem:[%s1468 + $0x48] sm:$0xff]
  %v1479 = vld [vmem:[%s1468 + $0x50] sm:$0xff]
  %v1480 = vld [vmem:[%s1468 + $0x58] sm:$0xff]
  %v1481 = vld [vmem:[%s1468 + $0x60] sm:$0xff]
  %v1482 = vld [vmem:[%s1468 + $0x68] sm:$0xff]
  %v1483 = vld [vmem:[%s1468 + $0x70] sm:$0xff]
  %v1484 = vld [vmem:[%s1468 + $0x78] sm:$0xff]
  %v1501 = vunpack.c.l.b16 %v1469
  %v1502 = vunpack.c.h.b16 %v1469
  %v1503 = vunpack.c.l.b16 %v1470
  %v1504 = vunpack.c.h.b16 %v1470
  %v1505 = vunpack.c.l.b16 %v1471
  %v1506 = vunpack.c.h.b16 %v1471
  %v1507 = vunpack.c.l.b16 %v1472
  %v1508 = vunpack.c.h.b16 %v1472
  %v1509 = vunpack.c.l.b16 %v1473
  %v1510 = vunpack.c.h.b16 %v1473
  %v1511 = vunpack.c.l.b16 %v1474
  %v1512 = vunpack.c.h.b16 %v1474
  %v1513 = vunpack.c.l.b16 %v1475
  %v1514 = vunpack.c.h.b16 %v1475
  %v1515 = vunpack.c.l.b16 %v1476
  %v1516 = vunpack.c.h.b16 %v1476
  %v1517 = vunpack.c.l.b16 %v1477
  %v1518 = vunpack.c.h.b16 %v1477
  %v1519 = vunpack.c.l.b16 %v1478
  %v1520 = vunpack.c.h.b16 %v1478
  %v1521 = vunpack.c.l.b16 %v1479
  %v1522 = vunpack.c.h.b16 %v1479
  %v1523 = vunpack.c.l.b16 %v1480
  %v1524 = vunpack.c.h.b16 %v1480
  %v1525 = vunpack.c.l.b16 %v1481
  %v1526 = vunpack.c.h.b16 %v1481
  %v1527 = vunpack.c.l.b16 %v1482
  %v1528 = vunpack.c.h.b16 %v1482
  %v1529 = vunpack.c.l.b16 %v1483
  %v1530 = vunpack.c.h.b16 %v1483
  %v1531 = vunpack.c.l.b16 %v1484
  %v1532 = vunpack.c.h.b16 %v1484
  %v1533 = vpack.c.b16 %v1503, %v1501
  %v1534 = vpack.c.b16 %v1504, %v1502
  %v1535 = vpack.c.b16 %v1507, %v1505
  %v1536 = vpack.c.b16 %v1508, %v1506
  %v1537 = vpack.c.b16 %v1511, %v1509
  %v1538 = vpack.c.b16 %v1512, %v1510
  %v1539 = vpack.c.b16 %v1515, %v1513
  %v1540 = vpack.c.b16 %v1516, %v1514
  %v1541 = vpack.c.b16 %v1519, %v1517
  %v1542 = vpack.c.b16 %v1520, %v1518
  %v1543 = vpack.c.b16 %v1523, %v1521
  %v1544 = vpack.c.b16 %v1524, %v1522
  %v1545 = vpack.c.b16 %v1527, %v1525
  %v1546 = vpack.c.b16 %v1528, %v1526
  %v1547 = vpack.c.b16 %v1531, %v1529
  %v1548 = vpack.c.b16 %v1532, %v1530
  %1565 = vmatprep.subr.bf16.mxu0 %v1534
  %1566 = vmatpush1.bf16.msra.mxu0 %v1533
  %1567 = vmatprep.subr.bf16.mxu0 %v1536
  %1568 = vmatpush1.bf16.msra.mxu0 %v1535
  %1569 = vmatprep.subr.bf16.mxu0 %v1538
  %1570 = vmatpush1.bf16.msra.mxu0 %v1537
  %1571 = vmatprep.subr.bf16.mxu0 %v1540
  %1572 = vmatpush1.bf16.msra.mxu0 %v1539
  %1573 = vmatprep.subr.bf16.mxu0 %v1542
  %1574 = vmatpush1.bf16.msra.mxu0 %v1541
  %1575 = vmatprep.subr.bf16.mxu0 %v1544
  %1576 = vmatpush1.bf16.msra.mxu0 %v1543
  %1577 = vmatprep.subr.bf16.mxu0 %v1546
  %1578 = vmatpush1.bf16.msra.mxu0 %v1545
  %1579 = vmatprep.subr.bf16.mxu0 %v1548
  %1580 = vmatpush1.bf16.msra.mxu0 %v1547
  %1581 = vmatprep.subr.bf16.mxu0 0
  %1582 = vmatpush1.bf16.msra.mxu0 0
  %1583 = vmatprep.subr.bf16.mxu0 0
  %1584 = vmatpush1.bf16.msra.mxu0 0
  %1585 = vmatprep.subr.bf16.mxu0 0
  %1586 = vmatpush1.bf16.msra.mxu0 0
  %1587 = vmatprep.subr.bf16.mxu0 0
  %1588 = vmatpush1.bf16.msra.mxu0 0
  %1589 = vmatprep.subr.bf16.mxu0 0
  %1590 = vmatpush1.bf16.msra.mxu0 0
  %1591 = vmatprep.subr.bf16.mxu0 0
  %1592 = vmatpush1.bf16.msra.mxu0 0
  %1593 = vmatprep.subr.bf16.mxu0 0
  %1594 = vmatpush1.bf16.msra.mxu0 0
  %1595 = vmatprep.subr.bf16.mxu0 0
  %1596 = vmatpush1.bf16.msra.mxu0 0
  %1597 = vmatprep.mubr.bf16.mxu0 0
  %1598 = vmatmul.mubr.bf16.gmra.mrb[0].mxu0 %v1467
  %v1599 = vpop.f32.mrb[0].mxu0
  %v1600 = vadd.f32 0.0, %v1599
  %v1601 = vpop.f32.mrb[0].mxu0
  %v1602 = vadd.f32 0.0, %v1601
  %v1603 = vpop.f32.mrb[0].mxu0
  %v1604 = vadd.f32 0.0, %v1603
  %v1605 = vpop.f32.mrb[0].mxu0
  %v1606 = vadd.f32 0.0, %v1605
  %1607 = vdwg.mxu0
  %v1608 = vadd.f32 %v1600, %v1604
  %v1609 = vrot.slane %v1608, 4
  %v1610 = vadd.f32 %v1608, %v1609
  %v1611 = vrot.slane %v1610, 2
  %v1612 = vadd.f32 %v1610, %v1611
  %v1613 = vrot.slane %v1612, 1
  %v1614 = vadd.f32 %v1612, %v1613
  %v1615 = vadd.f32 %v1602, %v1606
  %v1616 = vrot.slane %v1615, 4
  %v1617 = vadd.f32 %v1615, %v1616
  %v1618 = vrot.slane %v1617, 2
  %v1619 = vadd.f32 %v1617, %v1618
  %v1620 = vrot.slane %v1619, 1
  %v1621 = vadd.f32 %v1619, %v1620
  %v1622 = vmul.f32 %v1614, 0.0625
  %v1623 = vmul.f32 %v1621, 0.0625
  %v1624 = vmul.f32 %v1600, %v1600
  %v1625 = vmul.f32 %v1602, %v1602
  %v1626 = vmul.f32 %v1604, %v1604
  %v1627 = vmul.f32 %v1606, %v1606
  %v1628 = vadd.f32 %v1624, %v1626
  %v1629 = vrot.slane %v1628, 4
  %v1630 = vadd.f32 %v1628, %v1629
  %v1631 = vrot.slane %v1630, 2
  %v1632 = vadd.f32 %v1630, %v1631
  %v1633 = vrot.slane %v1632, 1
  %v1634 = vadd.f32 %v1632, %v1633
  %v1635 = vadd.f32 %v1625, %v1627
  %v1636 = vrot.slane %v1635, 4
  %v1637 = vadd.f32 %v1635, %v1636
  %v1638 = vrot.slane %v1637, 2
  %v1639 = vadd.f32 %v1637, %v1638
  %v1640 = vrot.slane %v1639, 1
  %v1641 = vadd.f32 %v1639, %v1640
  %v1642 = vmul.f32 %v1634, 0.0625
  %v1643 = vmul.f32 %v1641, 0.0625
  %v1644 = vmul.f32 %v1622, %v1622
  %v1645 = vmul.f32 %v1623, %v1623
  %v1646 = vsub.f32 %v1642, %v1644
  %v1647 = vsub.f32 %v1643, %v1645
  %v1648 = vsub.f32 %v1600, %v1622
  %v1649 = vsub.f32 %v1602, %v1623
  %v1650 = vsub.f32 %v1604, %v1622
  %v1651 = vsub.f32 %v1606, %v1623
  %v1652 = vadd.f32 %v1646, 1e-05
  %v1653 = vadd.f32 %v1647, 1e-05
  %v1654 = vrsqrt.pop %v1652
  %v1655 = vrsqrt.pop %v1653
  %v1656 = vmul.f32 %v1648, %v1654
  %v1657 = vmul.f32 %v1649, %v1655
  %v1658 = vmul.f32 %v1650, %v1654
  %v1659 = vmul.f32 %v1651, %v1655
  %v1660 = vmax.f32 %v1656, 0.0
  %v1661 = vmax.f32 %v1657, 0.0
  %v1662 = vmax.f32 %v1658, 0.0
  %v1663 = vmax.f32 %v1659, 0.0
  %v1664 = vpack.c.bf16 %v1662, %v1660
  %v1665 = vpack.c.bf16 %v1663, %v1661
  %s1666 = scalar_lea.vmem %s4, 256
  %v1667 = vld [vmem:[%s1666] sm:$0xf]
  %v1668 = vld [vmem:[%s1666 + $0x4] sm:$0xf]
  %v1669 = vld [vmem:[%s1666 + $0x8] sm:$0xf]
  %v1670 = vld [vmem:[%s1666 + $0xc] sm:$0xf]
  %v1671 = vld [vmem:[%s1666 + $0x10] sm:$0xf]
  %v1672 = vld [vmem:[%s1666 + $0x14] sm:$0xf]
  %v1673 = vld [vmem:[%s1666 + $0x18] sm:$0xf]
  %v1674 = vld [vmem:[%s1666 + $0x1c] sm:$0xf]
  %v1675 = vld [vmem:[%s1666 + $0x20] sm:$0xf]
  %v1676 = vld [vmem:[%s1666 + $0x24] sm:$0xf]
  %v1677 = vld [vmem:[%s1666 + $0x28] sm:$0xf]
  %v1678 = vld [vmem:[%s1666 + $0x2c] sm:$0xf]
  %v1679 = vld [vmem:[%s1666 + $0x30] sm:$0xf]
  %v1680 = vld [vmem:[%s1666 + $0x34] sm:$0xf]
  %v1681 = vld [vmem:[%s1666 + $0x38] sm:$0xf]
  %v1682 = vld [vmem:[%s1666 + $0x3c] sm:$0xf]
  %v1683 = vld [vmem:[%s1666 + $0x40] sm:$0xf]
  %v1684 = vld [vmem:[%s1666 + $0x44] sm:$0xf]
  %v1685 = vld [vmem:[%s1666 + $0x48] sm:$0xf]
  %v1686 = vld [vmem:[%s1666 + $0x4c] sm:$0xf]
  %v1687 = vld [vmem:[%s1666 + $0x50] sm:$0xf]
  %v1688 = vld [vmem:[%s1666 + $0x54] sm:$0xf]
  %v1689 = vld [vmem:[%s1666 + $0x58] sm:$0xf]
  %v1690 = vld [vmem:[%s1666 + $0x5c] sm:$0xf]
  %v1691 = vld [vmem:[%s1666 + $0x60] sm:$0xf]
  %v1692 = vld [vmem:[%s1666 + $0x64] sm:$0xf]
  %v1693 = vld [vmem:[%s1666 + $0x68] sm:$0xf]
  %v1694 = vld [vmem:[%s1666 + $0x6c] sm:$0xf]
  %v1695 = vld [vmem:[%s1666 + $0x70] sm:$0xf]
  %v1696 = vld [vmem:[%s1666 + $0x74] sm:$0xf]
  %v1697 = vld [vmem:[%s1666 + $0x78] sm:$0xf]
  %v1698 = vld [vmem:[%s1666 + $0x7c] sm:$0xf]
  %v1731 = vunpack.c.l.b16 %v1667
  %v1732 = vunpack.c.l.b16 %v1668
  %v1733 = vunpack.c.l.b16 %v1669
  %v1734 = vunpack.c.l.b16 %v1670
  %v1735 = vunpack.c.l.b16 %v1671
  %v1736 = vunpack.c.l.b16 %v1672
  %v1737 = vunpack.c.l.b16 %v1673
  %v1738 = vunpack.c.l.b16 %v1674
  %v1739 = vunpack.c.l.b16 %v1675
  %v1740 = vunpack.c.l.b16 %v1676
  %v1741 = vunpack.c.l.b16 %v1677
  %v1742 = vunpack.c.l.b16 %v1678
  %v1743 = vunpack.c.l.b16 %v1679
  %v1744 = vunpack.c.l.b16 %v1680
  %v1745 = vunpack.c.l.b16 %v1681
  %v1746 = vunpack.c.l.b16 %v1682
  %v1747 = vunpack.c.l.b16 %v1683
  %v1748 = vunpack.c.l.b16 %v1684
  %v1749 = vunpack.c.l.b16 %v1685
  %v1750 = vunpack.c.l.b16 %v1686
  %v1751 = vunpack.c.l.b16 %v1687
  %v1752 = vunpack.c.l.b16 %v1688
  %v1753 = vunpack.c.l.b16 %v1689
  %v1754 = vunpack.c.l.b16 %v1690
  %v1755 = vunpack.c.l.b16 %v1691
  %v1756 = vunpack.c.l.b16 %v1692
  %v1757 = vunpack.c.l.b16 %v1693
  %v1758 = vunpack.c.l.b16 %v1694
  %v1759 = vunpack.c.l.b16 %v1695
  %v1760 = vunpack.c.l.b16 %v1696
  %v1761 = vunpack.c.l.b16 %v1697
  %v1762 = vunpack.c.l.b16 %v1698
  %v1763 = vpack.c.b16 %v1732, %v1731
  %v1764 = vpack.c.b16 %v1734, %v1733
  %v1765 = vpack.c.b16 %v1736, %v1735
  %v1766 = vpack.c.b16 %v1738, %v1737
  %v1767 = vpack.c.b16 %v1740, %v1739
  %v1768 = vpack.c.b16 %v1742, %v1741
  %v1769 = vpack.c.b16 %v1744, %v1743
  %v1770 = vpack.c.b16 %v1746, %v1745
  %v1771 = vpack.c.b16 %v1748, %v1747
  %v1772 = vpack.c.b16 %v1750, %v1749
  %v1773 = vpack.c.b16 %v1752, %v1751
  %v1774 = vpack.c.b16 %v1754, %v1753
  %v1775 = vpack.c.b16 %v1756, %v1755
  %v1776 = vpack.c.b16 %v1758, %v1757
  %v1777 = vpack.c.b16 %v1760, %v1759
  %v1778 = vpack.c.b16 %v1762, %v1761
  %1795 = vmatprep.subr.bf16.mxu0 0
  %1796 = vmatpush1.bf16.msra.mxu0 %v1763
  %1797 = vmatprep.subr.bf16.mxu0 0
  %1798 = vmatpush1.bf16.msra.mxu0 %v1764
  %1799 = vmatprep.subr.bf16.mxu0 0
  %1800 = vmatpush1.bf16.msra.mxu0 %v1765
  %1801 = vmatprep.subr.bf16.mxu0 0
  %1802 = vmatpush1.bf16.msra.mxu0 %v1766
  %1803 = vmatprep.subr.bf16.mxu0 0
  %1804 = vmatpush1.bf16.msra.mxu0 %v1767
  %1805 = vmatprep.subr.bf16.mxu0 0
  %1806 = vmatpush1.bf16.msra.mxu0 %v1768
  %1807 = vmatprep.subr.bf16.mxu0 0
  %1808 = vmatpush1.bf16.msra.mxu0 %v1769
  %1809 = vmatprep.subr.bf16.mxu0 0
  %1810 = vmatpush1.bf16.msra.mxu0 %v1770
  %1811 = vmatprep.subr.bf16.mxu0 0
  %1812 = vmatpush1.bf16.msra.mxu0 %v1771
  %1813 = vmatprep.subr.bf16.mxu0 0
  %1814 = vmatpush1.bf16.msra.mxu0 %v1772
  %1815 = vmatprep.subr.bf16.mxu0 0
  %1816 = vmatpush1.bf16.msra.mxu0 %v1773
  %1817 = vmatprep.subr.bf16.mxu0 0
  %1818 = vmatpush1.bf16.msra.mxu0 %v1774
  %1819 = vmatprep.subr.bf16.mxu0 0
  %1820 = vmatpush1.bf16.msra.mxu0 %v1775
  %1821 = vmatprep.subr.bf16.mxu0 0
  %1822 = vmatpush1.bf16.msra.mxu0 %v1776
  %1823 = vmatprep.subr.bf16.mxu0 0
  %1824 = vmatpush1.bf16.msra.mxu0 %v1777
  %1825 = vmatprep.subr.bf16.mxu0 0
  %1826 = vmatpush1.bf16.msra.mxu0 %v1778
  %1827 = vmatprep.mubr.bf16.mxu0 %v1665
  %1828 = vmatmul.mubr.bf16.gmra.mrb[0].mxu0 %v1664
  %v1829 = vpop.f32.mrb[0].mxu0
  %v1830 = vadd.f32 0.0, %v1829
  %v1831 = vpop.f32.mrb[0].mxu0
  %v1832 = vpop.f32.mrb[0].mxu0
  %v1833 = vadd.f32 0.0, %v1832
  %v1834 = vpop.f32.mrb[0].mxu0
  %1835 = vdwg.mxu0
  %v1836 = vsel %vm42, %v1830, 0.0
  %v1837 = vsel %vm42, %v1833, 0.0
  %v1838 = vadd.f32 %v1836, %v1837
  %v1839 = vrot.slane %v1838, 4
  %v1840 = vadd.f32 %v1838, %v1839
  %v1841 = vrot.slane %v1840, 2
  %v1842 = vadd.f32 %v1840, %v1841
  %v1843 = vrot.slane %v1842, 1
  %v1844 = vadd.f32 %v1842, %v1843
  %v1845 = vmul.f32 %v1844, 0.0625
  %v1846 = vmul.f32 %v1830, %v1830
  %v1847 = vmul.f32 %v1833, %v1833
  %v1848 = vsel %vm42, %v1846, 0.0
  %v1849 = vsel %vm42, %v1847, 0.0
  %v1850 = vadd.f32 %v1848, %v1849
  %v1851 = vrot.slane %v1850, 4
  %v1852 = vadd.f32 %v1850, %v1851
  %v1853 = vrot.slane %v1852, 2
  %v1854 = vadd.f32 %v1852, %v1853
  %v1855 = vrot.slane %v1854, 1
  %v1856 = vadd.f32 %v1854, %v1855
  %v1857 = vmul.f32 %v1856, 0.0625
  %v1858 = vmul.f32 %v1845, %v1845
  %v1859 = vsub.f32 %v1857, %v1858
  %v1860 = vsub.f32 %v1830, %v1845
  %v1861 = vsub.f32 %v1833, %v1845
  %v1862 = vadd.f32 %v1859, 1e-05
  %v1863 = vrsqrt.pop %v1862
  %v1864 = vmul.f32 %v1860, %v1863
  %v1865 = vmul.f32 %v1861, %v1863
  %v1866 = vmul.f32 %v1864, 0.5
  %v1867 = vmul.f32 %v1865, 0.5
  %v1868 = vtanh.pop %v1866
  %v1869 = vtanh.pop %v1867
  %v1870 = vadd.f32 %v1868, 1.0
  %v1871 = vadd.f32 %v1869, 1.0
  %v1872 = vmul.f32 %v1870, 0.5
  %v1873 = vmul.f32 %v1871, 0.5
  %v1874 = vsub.f32 %v1872, %v21
  %v1875 = vsub.f32 %v1873, %v22
  %v1876 = vmul.f32 %v1874, %v1874
  %v1877 = vmul.f32 %v1875, %v1875
  %v1878 = vsel %vm42, %v1876, 0.0
  %v1879 = vsel %vm42, %v1877, 0.0
  %v1880 = vadd.f32 %v1878, %v1879
  %1881 = vadd.xlane.f32.xlu0 %v1880
  %v1882 = vpop.xlane.xlu0 %1881
  %v1883 = vrot.slane %v1882, 4
  %v1884 = vadd.f32 %v1882, %v1883
  %v1885 = vrot.slane %v1884, 2
  %v1886 = vadd.f32 %v1884, %v1885
  %v1887 = vrot.slane %v1886, 1
  %v1888 = vadd.f32 %v1886, %v1887
  %s1889 = vtos %v1888
  %vm1890 = vcmp.eq.s32.totalorder %v25, 2
  %v1891 = vstv %s1889
  %v1892 = vsel %vm1890, %v1891, %v1270
  %s1893 = scalar_lea.vmem %s1, 48
  %v1894 = vld [vmem:[%s1893] sm:$0xf]
  %v1895 = vld [vmem:[%s1893 + $0x4] sm:$0xf]
  %v1896 = vld [vmem:[%s1893 + $0x8] sm:$0xf]
  %v1897 = vld [vmem:[%s1893 + $0xc] sm:$0xf]
  %v1902 = vunpack.c.l.b16 %v1894
  %v1903 = vunpack.c.l.b16 %v1895
  %v1904 = vunpack.c.l.b16 %v1896
  %v1905 = vunpack.c.l.b16 %v1897
  %v1906 = vpack.c.b16 %v1903, %v1902
  %v1907 = vpack.c.b16 %v1905, %v1904
  %1910 = vmatprep.subr.bf16.mxu0 0
  %1911 = vmatpush1.bf16.msra.mxu0 %v1906
  %1912 = vmatprep.subr.bf16.mxu0 0
  %1913 = vmatpush1.bf16.msra.mxu0 %v1907
  %1914 = vmatprep.subr.bf16.mxu0 0
  %1915 = vmatpush1.bf16.msra.mxu0 0
  %1916 = vmatprep.subr.bf16.mxu0 0
  %1917 = vmatpush1.bf16.msra.mxu0 0
  %1918 = vmatprep.subr.bf16.mxu0 0
  %1919 = vmatpush1.bf16.msra.mxu0 0
  %1920 = vmatprep.subr.bf16.mxu0 0
  %1921 = vmatpush1.bf16.msra.mxu0 0
  %1922 = vmatprep.subr.bf16.mxu0 0
  %1923 = vmatpush1.bf16.msra.mxu0 0
  %1924 = vmatprep.subr.bf16.mxu0 0
  %1925 = vmatpush1.bf16.msra.mxu0 0
  %1926 = vmatprep.subr.bf16.mxu0 0
  %1927 = vmatpush1.bf16.msra.mxu0 0
  %1928 = vmatprep.subr.bf16.mxu0 0
  %1929 = vmatpush1.bf16.msra.mxu0 0
  %1930 = vmatprep.subr.bf16.mxu0 0
  %1931 = vmatpush1.bf16.msra.mxu0 0
  %1932 = vmatprep.subr.bf16.mxu0 0
  %1933 = vmatpush1.bf16.msra.mxu0 0
  %1934 = vmatprep.subr.bf16.mxu0 0
  %1935 = vmatpush1.bf16.msra.mxu0 0
  %1936 = vmatprep.subr.bf16.mxu0 0
  %1937 = vmatpush1.bf16.msra.mxu0 0
  %1938 = vmatprep.subr.bf16.mxu0 0
  %1939 = vmatpush1.bf16.msra.mxu0 0
  %1940 = vmatprep.subr.bf16.mxu0 0
  %1941 = vmatpush1.bf16.msra.mxu0 0
  %1942 = vmatprep.mubr.bf16.mxu0 0
  %1943 = vmatmul.mubr.bf16.gmra.mrb[0].mxu0 %v44
  %v1944 = vpop.f32.mrb[0].mxu0
  %v1945 = vadd.f32 0.0, %v1944
  %v1946 = vpop.f32.mrb[0].mxu0
  %v1947 = vpop.f32.mrb[0].mxu0
  %v1948 = vadd.f32 0.0, %v1947
  %v1949 = vpop.f32.mrb[0].mxu0
  %1950 = vdwg.mxu0
  %v1951 = vsel %vm87, %v1945, 0.0
  %v1952 = vsel %vm87, %v1948, 0.0
  %v1953 = vadd.f32 %v1951, %v1952
  %v1954 = vrot.slane %v1953, 4
  %v1955 = vadd.f32 %v1953, %v1954
  %v1956 = vrot.slane %v1955, 2
  %v1957 = vadd.f32 %v1955, %v1956
  %v1958 = vrot.slane %v1957, 1
  %v1959 = vadd.f32 %v1957, %v1958
  %v1960 = vmul.f32 %v1959, 0.0625
  %v1961 = vmul.f32 %v1945, %v1945
  %v1962 = vmul.f32 %v1948, %v1948
  %v1963 = vsel %vm87, %v1961, 0.0
  %v1964 = vsel %vm87, %v1962, 0.0
  %v1965 = vadd.f32 %v1963, %v1964
  %v1966 = vrot.slane %v1965, 4
  %v1967 = vadd.f32 %v1965, %v1966
  %v1968 = vrot.slane %v1967, 2
  %v1969 = vadd.f32 %v1967, %v1968
  %v1970 = vrot.slane %v1969, 1
  %v1971 = vadd.f32 %v1969, %v1970
  %v1972 = vmul.f32 %v1971, 0.0625
  %v1973 = vmul.f32 %v1960, %v1960
  %v1974 = vsub.f32 %v1972, %v1973
  %v1975 = vsub.f32 %v1945, %v1960
  %v1976 = vsub.f32 %v1948, %v1960
  %v1977 = vadd.f32 %v1974, 1e-05
  %v1978 = vrsqrt.pop %v1977
  %v1979 = vmul.f32 %v1975, %v1978
  %v1980 = vmul.f32 %v1976, %v1978
  %v1981 = vmax.f32 %v1979, 0.0
  %v1982 = vmax.f32 %v1980, 0.0
  %v1983 = vpack.c.bf16 %v1982, %v1981
  %s1984 = scalar_lea.vmem %s2, 96
  %v1985 = vld [vmem:[%s1984] sm:$0xf]
  %v1986 = vld [vmem:[%s1984 + $0x4] sm:$0xf]
  %v1987 = vld [vmem:[%s1984 + $0x8] sm:$0xf]
  %v1988 = vld [vmem:[%s1984 + $0xc] sm:$0xf]
  %v1989 = vld [vmem:[%s1984 + $0x10] sm:$0xf]
  %v1990 = vld [vmem:[%s1984 + $0x14] sm:$0xf]
  %v1991 = vld [vmem:[%s1984 + $0x18] sm:$0xf]
  %v1992 = vld [vmem:[%s1984 + $0x1c] sm:$0xf]
  %v2001 = vunpack.c.l.b16 %v1985
  %v2002 = vunpack.c.l.b16 %v1986
  %v2003 = vunpack.c.l.b16 %v1987
  %v2004 = vunpack.c.l.b16 %v1988
  %v2005 = vunpack.c.l.b16 %v1989
  %v2006 = vunpack.c.l.b16 %v1990
  %v2007 = vunpack.c.l.b16 %v1991
  %v2008 = vunpack.c.l.b16 %v1992
  %v2009 = vpack.c.b16 %v2002, %v2001
  %v2010 = vpack.c.b16 %v2004, %v2003
  %v2011 = vpack.c.b16 %v2006, %v2005
  %v2012 = vpack.c.b16 %v2008, %v2007
  %v2018 = vsel %vm87, %v1983, 0
  %2020 = vmatprep.subr.bf16.mxu0 0
  %2021 = vmatpush1.bf16.msra.mxu0 %v2009
  %2022 = vmatprep.subr.bf16.mxu0 0
  %2023 = vmatpush1.bf16.msra.mxu0 %v2010
  %2024 = vmatprep.subr.bf16.mxu0 0
  %2025 = vmatpush1.bf16.msra.mxu0 %v2011
  %2026 = vmatprep.subr.bf16.mxu0 0
  %2027 = vmatpush1.bf16.msra.mxu0 %v2012
  %2028 = vmatprep.subr.bf16.mxu0 0
  %2029 = vmatpush1.bf16.msra.mxu0 0
  %2030 = vmatprep.subr.bf16.mxu0 0
  %2031 = vmatpush1.bf16.msra.mxu0 0
  %2032 = vmatprep.subr.bf16.mxu0 0
  %2033 = vmatpush1.bf16.msra.mxu0 0
  %2034 = vmatprep.subr.bf16.mxu0 0
  %2035 = vmatpush1.bf16.msra.mxu0 0
  %2036 = vmatprep.subr.bf16.mxu0 0
  %2037 = vmatpush1.bf16.msra.mxu0 0
  %2038 = vmatprep.subr.bf16.mxu0 0
  %2039 = vmatpush1.bf16.msra.mxu0 0
  %2040 = vmatprep.subr.bf16.mxu0 0
  %2041 = vmatpush1.bf16.msra.mxu0 0
  %2042 = vmatprep.subr.bf16.mxu0 0
  %2043 = vmatpush1.bf16.msra.mxu0 0
  %2044 = vmatprep.subr.bf16.mxu0 0
  %2045 = vmatpush1.bf16.msra.mxu0 0
  %2046 = vmatprep.subr.bf16.mxu0 0
  %2047 = vmatpush1.bf16.msra.mxu0 0
  %2048 = vmatprep.subr.bf16.mxu0 0
  %2049 = vmatpush1.bf16.msra.mxu0 0
  %2050 = vmatprep.subr.bf16.mxu0 0
  %2051 = vmatpush1.bf16.msra.mxu0 0
  %2052 = vmatprep.mubr.bf16.mxu0 0
  %2053 = vmatmul.mubr.bf16.gmra.mrb[0].mxu0 %v2018
  %v2054 = vpop.f32.mrb[0].mxu0
  %v2055 = vadd.f32 0.0, %v2054
  %v2056 = vpop.f32.mrb[0].mxu0
  %v2057 = vpop.f32.mrb[0].mxu0
  %v2058 = vadd.f32 0.0, %v2057
  %v2059 = vpop.f32.mrb[0].mxu0
  %2060 = vdwg.mxu0
  %v2061 = vadd.f32 %v2055, %v2058
  %v2062 = vrot.slane %v2061, 4
  %v2063 = vadd.f32 %v2061, %v2062
  %v2064 = vrot.slane %v2063, 2
  %v2065 = vadd.f32 %v2063, %v2064
  %v2066 = vrot.slane %v2065, 1
  %v2067 = vadd.f32 %v2065, %v2066
  %v2068 = vmul.f32 %v2067, 0.0625
  %v2069 = vmul.f32 %v2055, %v2055
  %v2070 = vmul.f32 %v2058, %v2058
  %v2071 = vadd.f32 %v2069, %v2070
  %v2072 = vrot.slane %v2071, 4
  %v2073 = vadd.f32 %v2071, %v2072
  %v2074 = vrot.slane %v2073, 2
  %v2075 = vadd.f32 %v2073, %v2074
  %v2076 = vrot.slane %v2075, 1
  %v2077 = vadd.f32 %v2075, %v2076
  %v2078 = vmul.f32 %v2077, 0.0625
  %v2079 = vmul.f32 %v2068, %v2068
  %v2080 = vsub.f32 %v2078, %v2079
  %v2081 = vsub.f32 %v2055, %v2068
  %v2082 = vsub.f32 %v2058, %v2068
  %v2083 = vadd.f32 %v2080, 1e-05
  %v2084 = vrsqrt.pop %v2083
  %v2085 = vmul.f32 %v2081, %v2084
  %v2086 = vmul.f32 %v2082, %v2084
  %v2087 = vmax.f32 %v2085, 0.0
  %v2088 = vmax.f32 %v2086, 0.0
  %v2089 = vpack.c.bf16 %v2088, %v2087
  %s2090 = scalar_lea.vmem %s3, 384
  %v2091 = vld [vmem:[%s2090] sm:$0xff]
  %v2092 = vld [vmem:[%s2090 + $0x8] sm:$0xff]
  %v2093 = vld [vmem:[%s2090 + $0x10] sm:$0xff]
  %v2094 = vld [vmem:[%s2090 + $0x18] sm:$0xff]
  %v2095 = vld [vmem:[%s2090 + $0x20] sm:$0xff]
  %v2096 = vld [vmem:[%s2090 + $0x28] sm:$0xff]
  %v2097 = vld [vmem:[%s2090 + $0x30] sm:$0xff]
  %v2098 = vld [vmem:[%s2090 + $0x38] sm:$0xff]
  %v2099 = vld [vmem:[%s2090 + $0x40] sm:$0xff]
  %v2100 = vld [vmem:[%s2090 + $0x48] sm:$0xff]
  %v2101 = vld [vmem:[%s2090 + $0x50] sm:$0xff]
  %v2102 = vld [vmem:[%s2090 + $0x58] sm:$0xff]
  %v2103 = vld [vmem:[%s2090 + $0x60] sm:$0xff]
  %v2104 = vld [vmem:[%s2090 + $0x68] sm:$0xff]
  %v2105 = vld [vmem:[%s2090 + $0x70] sm:$0xff]
  %v2106 = vld [vmem:[%s2090 + $0x78] sm:$0xff]
  %v2123 = vunpack.c.l.b16 %v2091
  %v2124 = vunpack.c.h.b16 %v2091
  %v2125 = vunpack.c.l.b16 %v2092
  %v2126 = vunpack.c.h.b16 %v2092
  %v2127 = vunpack.c.l.b16 %v2093
  %v2128 = vunpack.c.h.b16 %v2093
  %v2129 = vunpack.c.l.b16 %v2094
  %v2130 = vunpack.c.h.b16 %v2094
  %v2131 = vunpack.c.l.b16 %v2095
  %v2132 = vunpack.c.h.b16 %v2095
  %v2133 = vunpack.c.l.b16 %v2096
  %v2134 = vunpack.c.h.b16 %v2096
  %v2135 = vunpack.c.l.b16 %v2097
  %v2136 = vunpack.c.h.b16 %v2097
  %v2137 = vunpack.c.l.b16 %v2098
  %v2138 = vunpack.c.h.b16 %v2098
  %v2139 = vunpack.c.l.b16 %v2099
  %v2140 = vunpack.c.h.b16 %v2099
  %v2141 = vunpack.c.l.b16 %v2100
  %v2142 = vunpack.c.h.b16 %v2100
  %v2143 = vunpack.c.l.b16 %v2101
  %v2144 = vunpack.c.h.b16 %v2101
  %v2145 = vunpack.c.l.b16 %v2102
  %v2146 = vunpack.c.h.b16 %v2102
  %v2147 = vunpack.c.l.b16 %v2103
  %v2148 = vunpack.c.h.b16 %v2103
  %v2149 = vunpack.c.l.b16 %v2104
  %v2150 = vunpack.c.h.b16 %v2104
  %v2151 = vunpack.c.l.b16 %v2105
  %v2152 = vunpack.c.h.b16 %v2105
  %v2153 = vunpack.c.l.b16 %v2106
  %v2154 = vunpack.c.h.b16 %v2106
  %v2155 = vpack.c.b16 %v2125, %v2123
  %v2156 = vpack.c.b16 %v2126, %v2124
  %v2157 = vpack.c.b16 %v2129, %v2127
  %v2158 = vpack.c.b16 %v2130, %v2128
  %v2159 = vpack.c.b16 %v2133, %v2131
  %v2160 = vpack.c.b16 %v2134, %v2132
  %v2161 = vpack.c.b16 %v2137, %v2135
  %v2162 = vpack.c.b16 %v2138, %v2136
  %v2163 = vpack.c.b16 %v2141, %v2139
  %v2164 = vpack.c.b16 %v2142, %v2140
  %v2165 = vpack.c.b16 %v2145, %v2143
  %v2166 = vpack.c.b16 %v2146, %v2144
  %v2167 = vpack.c.b16 %v2149, %v2147
  %v2168 = vpack.c.b16 %v2150, %v2148
  %v2169 = vpack.c.b16 %v2153, %v2151
  %v2170 = vpack.c.b16 %v2154, %v2152
  %2187 = vmatprep.subr.bf16.mxu0 %v2156
  %2188 = vmatpush1.bf16.msra.mxu0 %v2155
  %2189 = vmatprep.subr.bf16.mxu0 %v2158
  %2190 = vmatpush1.bf16.msra.mxu0 %v2157
  %2191 = vmatprep.subr.bf16.mxu0 %v2160
  %2192 = vmatpush1.bf16.msra.mxu0 %v2159
  %2193 = vmatprep.subr.bf16.mxu0 %v2162
  %2194 = vmatpush1.bf16.msra.mxu0 %v2161
  %2195 = vmatprep.subr.bf16.mxu0 %v2164
  %2196 = vmatpush1.bf16.msra.mxu0 %v2163
  %2197 = vmatprep.subr.bf16.mxu0 %v2166
  %2198 = vmatpush1.bf16.msra.mxu0 %v2165
  %2199 = vmatprep.subr.bf16.mxu0 %v2168
  %2200 = vmatpush1.bf16.msra.mxu0 %v2167
  %2201 = vmatprep.subr.bf16.mxu0 %v2170
  %2202 = vmatpush1.bf16.msra.mxu0 %v2169
  %2203 = vmatprep.subr.bf16.mxu0 0
  %2204 = vmatpush1.bf16.msra.mxu0 0
  %2205 = vmatprep.subr.bf16.mxu0 0
  %2206 = vmatpush1.bf16.msra.mxu0 0
  %2207 = vmatprep.subr.bf16.mxu0 0
  %2208 = vmatpush1.bf16.msra.mxu0 0
  %2209 = vmatprep.subr.bf16.mxu0 0
  %2210 = vmatpush1.bf16.msra.mxu0 0
  %2211 = vmatprep.subr.bf16.mxu0 0
  %2212 = vmatpush1.bf16.msra.mxu0 0
  %2213 = vmatprep.subr.bf16.mxu0 0
  %2214 = vmatpush1.bf16.msra.mxu0 0
  %2215 = vmatprep.subr.bf16.mxu0 0
  %2216 = vmatpush1.bf16.msra.mxu0 0
  %2217 = vmatprep.subr.bf16.mxu0 0
  %2218 = vmatpush1.bf16.msra.mxu0 0
  %2219 = vmatprep.mubr.bf16.mxu0 0
  %2220 = vmatmul.mubr.bf16.gmra.mrb[0].mxu0 %v2089
  %v2221 = vpop.f32.mrb[0].mxu0
  %v2222 = vadd.f32 0.0, %v2221
  %v2223 = vpop.f32.mrb[0].mxu0
  %v2224 = vadd.f32 0.0, %v2223
  %v2225 = vpop.f32.mrb[0].mxu0
  %v2226 = vadd.f32 0.0, %v2225
  %v2227 = vpop.f32.mrb[0].mxu0
  %v2228 = vadd.f32 0.0, %v2227
  %2229 = vdwg.mxu0
  %v2230 = vadd.f32 %v2222, %v2226
  %v2231 = vrot.slane %v2230, 4
  %v2232 = vadd.f32 %v2230, %v2231
  %v2233 = vrot.slane %v2232, 2
  %v2234 = vadd.f32 %v2232, %v2233
  %v2235 = vrot.slane %v2234, 1
  %v2236 = vadd.f32 %v2234, %v2235
  %v2237 = vadd.f32 %v2224, %v2228
  %v2238 = vrot.slane %v2237, 4
  %v2239 = vadd.f32 %v2237, %v2238
  %v2240 = vrot.slane %v2239, 2
  %v2241 = vadd.f32 %v2239, %v2240
  %v2242 = vrot.slane %v2241, 1
  %v2243 = vadd.f32 %v2241, %v2242
  %v2244 = vmul.f32 %v2236, 0.0625
  %v2245 = vmul.f32 %v2243, 0.0625
  %v2246 = vmul.f32 %v2222, %v2222
  %v2247 = vmul.f32 %v2224, %v2224
  %v2248 = vmul.f32 %v2226, %v2226
  %v2249 = vmul.f32 %v2228, %v2228
  %v2250 = vadd.f32 %v2246, %v2248
  %v2251 = vrot.slane %v2250, 4
  %v2252 = vadd.f32 %v2250, %v2251
  %v2253 = vrot.slane %v2252, 2
  %v2254 = vadd.f32 %v2252, %v2253
  %v2255 = vrot.slane %v2254, 1
  %v2256 = vadd.f32 %v2254, %v2255
  %v2257 = vadd.f32 %v2247, %v2249
  %v2258 = vrot.slane %v2257, 4
  %v2259 = vadd.f32 %v2257, %v2258
  %v2260 = vrot.slane %v2259, 2
  %v2261 = vadd.f32 %v2259, %v2260
  %v2262 = vrot.slane %v2261, 1
  %v2263 = vadd.f32 %v2261, %v2262
  %v2264 = vmul.f32 %v2256, 0.0625
  %v2265 = vmul.f32 %v2263, 0.0625
  %v2266 = vmul.f32 %v2244, %v2244
  %v2267 = vmul.f32 %v2245, %v2245
  %v2268 = vsub.f32 %v2264, %v2266
  %v2269 = vsub.f32 %v2265, %v2267
  %v2270 = vsub.f32 %v2222, %v2244
  %v2271 = vsub.f32 %v2224, %v2245
  %v2272 = vsub.f32 %v2226, %v2244
  %v2273 = vsub.f32 %v2228, %v2245
  %v2274 = vadd.f32 %v2268, 1e-05
  %v2275 = vadd.f32 %v2269, 1e-05
  %v2276 = vrsqrt.pop %v2274
  %v2277 = vrsqrt.pop %v2275
  %v2278 = vmul.f32 %v2270, %v2276
  %v2279 = vmul.f32 %v2271, %v2277
  %v2280 = vmul.f32 %v2272, %v2276
  %v2281 = vmul.f32 %v2273, %v2277
  %v2282 = vmax.f32 %v2278, 0.0
  %v2283 = vmax.f32 %v2279, 0.0
  %v2284 = vmax.f32 %v2280, 0.0
  %v2285 = vmax.f32 %v2281, 0.0
  %v2286 = vpack.c.bf16 %v2284, %v2282
  %v2287 = vpack.c.bf16 %v2285, %v2283
  %s2288 = scalar_lea.vmem %s4, 384
  %v2289 = vld [vmem:[%s2288] sm:$0xf]
  %v2290 = vld [vmem:[%s2288 + $0x4] sm:$0xf]
  %v2291 = vld [vmem:[%s2288 + $0x8] sm:$0xf]
  %v2292 = vld [vmem:[%s2288 + $0xc] sm:$0xf]
  %v2293 = vld [vmem:[%s2288 + $0x10] sm:$0xf]
  %v2294 = vld [vmem:[%s2288 + $0x14] sm:$0xf]
  %v2295 = vld [vmem:[%s2288 + $0x18] sm:$0xf]
  %v2296 = vld [vmem:[%s2288 + $0x1c] sm:$0xf]
  %v2297 = vld [vmem:[%s2288 + $0x20] sm:$0xf]
  %v2298 = vld [vmem:[%s2288 + $0x24] sm:$0xf]
  %v2299 = vld [vmem:[%s2288 + $0x28] sm:$0xf]
  %v2300 = vld [vmem:[%s2288 + $0x2c] sm:$0xf]
  %v2301 = vld [vmem:[%s2288 + $0x30] sm:$0xf]
  %v2302 = vld [vmem:[%s2288 + $0x34] sm:$0xf]
  %v2303 = vld [vmem:[%s2288 + $0x38] sm:$0xf]
  %v2304 = vld [vmem:[%s2288 + $0x3c] sm:$0xf]
  %v2305 = vld [vmem:[%s2288 + $0x40] sm:$0xf]
  %v2306 = vld [vmem:[%s2288 + $0x44] sm:$0xf]
  %v2307 = vld [vmem:[%s2288 + $0x48] sm:$0xf]
  %v2308 = vld [vmem:[%s2288 + $0x4c] sm:$0xf]
  %v2309 = vld [vmem:[%s2288 + $0x50] sm:$0xf]
  %v2310 = vld [vmem:[%s2288 + $0x54] sm:$0xf]
  %v2311 = vld [vmem:[%s2288 + $0x58] sm:$0xf]
  %v2312 = vld [vmem:[%s2288 + $0x5c] sm:$0xf]
  %v2313 = vld [vmem:[%s2288 + $0x60] sm:$0xf]
  %v2314 = vld [vmem:[%s2288 + $0x64] sm:$0xf]
  %v2315 = vld [vmem:[%s2288 + $0x68] sm:$0xf]
  %v2316 = vld [vmem:[%s2288 + $0x6c] sm:$0xf]
  %v2317 = vld [vmem:[%s2288 + $0x70] sm:$0xf]
  %v2318 = vld [vmem:[%s2288 + $0x74] sm:$0xf]
  %v2319 = vld [vmem:[%s2288 + $0x78] sm:$0xf]
  %v2320 = vld [vmem:[%s2288 + $0x7c] sm:$0xf]
  %v2353 = vunpack.c.l.b16 %v2289
  %v2354 = vunpack.c.l.b16 %v2290
  %v2355 = vunpack.c.l.b16 %v2291
  %v2356 = vunpack.c.l.b16 %v2292
  %v2357 = vunpack.c.l.b16 %v2293
  %v2358 = vunpack.c.l.b16 %v2294
  %v2359 = vunpack.c.l.b16 %v2295
  %v2360 = vunpack.c.l.b16 %v2296
  %v2361 = vunpack.c.l.b16 %v2297
  %v2362 = vunpack.c.l.b16 %v2298
  %v2363 = vunpack.c.l.b16 %v2299
  %v2364 = vunpack.c.l.b16 %v2300
  %v2365 = vunpack.c.l.b16 %v2301
  %v2366 = vunpack.c.l.b16 %v2302
  %v2367 = vunpack.c.l.b16 %v2303
  %v2368 = vunpack.c.l.b16 %v2304
  %v2369 = vunpack.c.l.b16 %v2305
  %v2370 = vunpack.c.l.b16 %v2306
  %v2371 = vunpack.c.l.b16 %v2307
  %v2372 = vunpack.c.l.b16 %v2308
  %v2373 = vunpack.c.l.b16 %v2309
  %v2374 = vunpack.c.l.b16 %v2310
  %v2375 = vunpack.c.l.b16 %v2311
  %v2376 = vunpack.c.l.b16 %v2312
  %v2377 = vunpack.c.l.b16 %v2313
  %v2378 = vunpack.c.l.b16 %v2314
  %v2379 = vunpack.c.l.b16 %v2315
  %v2380 = vunpack.c.l.b16 %v2316
  %v2381 = vunpack.c.l.b16 %v2317
  %v2382 = vunpack.c.l.b16 %v2318
  %v2383 = vunpack.c.l.b16 %v2319
  %v2384 = vunpack.c.l.b16 %v2320
  %v2385 = vpack.c.b16 %v2354, %v2353
  %v2386 = vpack.c.b16 %v2356, %v2355
  %v2387 = vpack.c.b16 %v2358, %v2357
  %v2388 = vpack.c.b16 %v2360, %v2359
  %v2389 = vpack.c.b16 %v2362, %v2361
  %v2390 = vpack.c.b16 %v2364, %v2363
  %v2391 = vpack.c.b16 %v2366, %v2365
  %v2392 = vpack.c.b16 %v2368, %v2367
  %v2393 = vpack.c.b16 %v2370, %v2369
  %v2394 = vpack.c.b16 %v2372, %v2371
  %v2395 = vpack.c.b16 %v2374, %v2373
  %v2396 = vpack.c.b16 %v2376, %v2375
  %v2397 = vpack.c.b16 %v2378, %v2377
  %v2398 = vpack.c.b16 %v2380, %v2379
  %v2399 = vpack.c.b16 %v2382, %v2381
  %v2400 = vpack.c.b16 %v2384, %v2383
  %2417 = vmatprep.subr.bf16.mxu0 0
  %2418 = vmatpush1.bf16.msra.mxu0 %v2385
  %2419 = vmatprep.subr.bf16.mxu0 0
  %2420 = vmatpush1.bf16.msra.mxu0 %v2386
  %2421 = vmatprep.subr.bf16.mxu0 0
  %2422 = vmatpush1.bf16.msra.mxu0 %v2387
  %2423 = vmatprep.subr.bf16.mxu0 0
  %2424 = vmatpush1.bf16.msra.mxu0 %v2388
  %2425 = vmatprep.subr.bf16.mxu0 0
  %2426 = vmatpush1.bf16.msra.mxu0 %v2389
  %2427 = vmatprep.subr.bf16.mxu0 0
  %2428 = vmatpush1.bf16.msra.mxu0 %v2390
  %2429 = vmatprep.subr.bf16.mxu0 0
  %2430 = vmatpush1.bf16.msra.mxu0 %v2391
  %2431 = vmatprep.subr.bf16.mxu0 0
  %2432 = vmatpush1.bf16.msra.mxu0 %v2392
  %2433 = vmatprep.subr.bf16.mxu0 0
  %2434 = vmatpush1.bf16.msra.mxu0 %v2393
  %2435 = vmatprep.subr.bf16.mxu0 0
  %2436 = vmatpush1.bf16.msra.mxu0 %v2394
  %2437 = vmatprep.subr.bf16.mxu0 0
  %2438 = vmatpush1.bf16.msra.mxu0 %v2395
  %2439 = vmatprep.subr.bf16.mxu0 0
  %2440 = vmatpush1.bf16.msra.mxu0 %v2396
  %2441 = vmatprep.subr.bf16.mxu0 0
  %2442 = vmatpush1.bf16.msra.mxu0 %v2397
  %2443 = vmatprep.subr.bf16.mxu0 0
  %2444 = vmatpush1.bf16.msra.mxu0 %v2398
  %2445 = vmatprep.subr.bf16.mxu0 0
  %2446 = vmatpush1.bf16.msra.mxu0 %v2399
  %2447 = vmatprep.subr.bf16.mxu0 0
  %2448 = vmatpush1.bf16.msra.mxu0 %v2400
  %2449 = vmatprep.mubr.bf16.mxu0 %v2287
  %2450 = vmatmul.mubr.bf16.gmra.mrb[0].mxu0 %v2286
  %v2451 = vpop.f32.mrb[0].mxu0
  %v2452 = vadd.f32 0.0, %v2451
  %v2453 = vpop.f32.mrb[0].mxu0
  %v2454 = vpop.f32.mrb[0].mxu0
  %v2455 = vadd.f32 0.0, %v2454
  %v2456 = vpop.f32.mrb[0].mxu0
  %2457 = vdwg.mxu0
  %v2458 = vsel %vm42, %v2452, 0.0
  %v2459 = vsel %vm42, %v2455, 0.0
  %v2460 = vadd.f32 %v2458, %v2459
  %v2461 = vrot.slane %v2460, 4
  %v2462 = vadd.f32 %v2460, %v2461
  %v2463 = vrot.slane %v2462, 2
  %v2464 = vadd.f32 %v2462, %v2463
  %v2465 = vrot.slane %v2464, 1
  %v2466 = vadd.f32 %v2464, %v2465
  %v2467 = vmul.f32 %v2466, 0.0625
  %v2468 = vmul.f32 %v2452, %v2452
  %v2469 = vmul.f32 %v2455, %v2455
  %v2470 = vsel %vm42, %v2468, 0.0
  %v2471 = vsel %vm42, %v2469, 0.0
  %v2472 = vadd.f32 %v2470, %v2471
  %v2473 = vrot.slane %v2472, 4
  %v2474 = vadd.f32 %v2472, %v2473
  %v2475 = vrot.slane %v2474, 2
  %v2476 = vadd.f32 %v2474, %v2475
  %v2477 = vrot.slane %v2476, 1
  %v2478 = vadd.f32 %v2476, %v2477
  %v2479 = vmul.f32 %v2478, 0.0625
  %v2480 = vmul.f32 %v2467, %v2467
  %v2481 = vsub.f32 %v2479, %v2480
  %v2482 = vsub.f32 %v2452, %v2467
  %v2483 = vsub.f32 %v2455, %v2467
  %v2484 = vadd.f32 %v2481, 1e-05
  %v2485 = vrsqrt.pop %v2484
  %v2486 = vmul.f32 %v2482, %v2485
  %v2487 = vmul.f32 %v2483, %v2485
  %v2488 = vmul.f32 %v2486, 0.5
  %v2489 = vmul.f32 %v2487, 0.5
  %v2490 = vtanh.pop %v2488
  %v2491 = vtanh.pop %v2489
  %v2492 = vadd.f32 %v2490, 1.0
  %v2493 = vadd.f32 %v2491, 1.0
  %v2494 = vmul.f32 %v2492, 0.5
  %v2495 = vmul.f32 %v2493, 0.5
  %v2496 = vsub.f32 %v2494, %v21
  %v2497 = vsub.f32 %v2495, %v22
  %v2498 = vmul.f32 %v2496, %v2496
  %v2499 = vmul.f32 %v2497, %v2497
  %v2500 = vsel %vm42, %v2498, 0.0
  %v2501 = vsel %vm42, %v2499, 0.0
  %v2502 = vadd.f32 %v2500, %v2501
  %2503 = vadd.xlane.f32.xlu0 %v2502
  %v2504 = vpop.xlane.xlu0 %2503
  %v2505 = vrot.slane %v2504, 4
  %v2506 = vadd.f32 %v2504, %v2505
  %v2507 = vrot.slane %v2506, 2
  %v2508 = vadd.f32 %v2506, %v2507
  %v2509 = vrot.slane %v2508, 1
  %v2510 = vadd.f32 %v2508, %v2509
  %s2511 = vtos %v2510
  %vm2512 = vcmp.eq.s32.totalorder %v25, 3
  %v2513 = vstv %s2511
  %v2514 = vsel %vm2512, %v2513, %v1892
  %s2515 = scalar_lea.vmem %s1, 64
  %v2516 = vld [vmem:[%s2515] sm:$0xf]
  %v2517 = vld [vmem:[%s2515 + $0x4] sm:$0xf]
  %v2518 = vld [vmem:[%s2515 + $0x8] sm:$0xf]
  %v2519 = vld [vmem:[%s2515 + $0xc] sm:$0xf]
  %v2524 = vunpack.c.l.b16 %v2516
  %v2525 = vunpack.c.l.b16 %v2517
  %v2526 = vunpack.c.l.b16 %v2518
  %v2527 = vunpack.c.l.b16 %v2519
  %v2528 = vpack.c.b16 %v2525, %v2524
  %v2529 = vpack.c.b16 %v2527, %v2526
  %2532 = vmatprep.subr.bf16.mxu0 0
  %2533 = vmatpush1.bf16.msra.mxu0 %v2528
  %2534 = vmatprep.subr.bf16.mxu0 0
  %2535 = vmatpush1.bf16.msra.mxu0 %v2529
  %2536 = vmatprep.subr.bf16.mxu0 0
  %2537 = vmatpush1.bf16.msra.mxu0 0
  %2538 = vmatprep.subr.bf16.mxu0 0
  %2539 = vmatpush1.bf16.msra.mxu0 0
  %2540 = vmatprep.subr.bf16.mxu0 0
  %2541 = vmatpush1.bf16.msra.mxu0 0
  %2542 = vmatprep.subr.bf16.mxu0 0
  %2543 = vmatpush1.bf16.msra.mxu0 0
  %2544 = vmatprep.subr.bf16.mxu0 0
  %2545 = vmatpush1.bf16.msra.mxu0 0
  %2546 = vmatprep.subr.bf16.mxu0 0
  %2547 = vmatpush1.bf16.msra.mxu0 0
  %2548 = vmatprep.subr.bf16.mxu0 0
  %2549 = vmatpush1.bf16.msra.mxu0 0
  %2550 = vmatprep.subr.bf16.mxu0 0
  %2551 = vmatpush1.bf16.msra.mxu0 0
  %2552 = vmatprep.subr.bf16.mxu0 0
  %2553 = vmatpush1.bf16.msra.mxu0 0
  %2554 = vmatprep.subr.bf16.mxu0 0
  %2555 = vmatpush1.bf16.msra.mxu0 0
  %2556 = vmatprep.subr.bf16.mxu0 0
  %2557 = vmatpush1.bf16.msra.mxu0 0
  %2558 = vmatprep.subr.bf16.mxu0 0
  %2559 = vmatpush1.bf16.msra.mxu0 0
  %2560 = vmatprep.subr.bf16.mxu0 0
  %2561 = vmatpush1.bf16.msra.mxu0 0
  %2562 = vmatprep.subr.bf16.mxu0 0
  %2563 = vmatpush1.bf16.msra.mxu0 0
  %2564 = vmatprep.mubr.bf16.mxu0 0
  %2565 = vmatmul.mubr.bf16.gmra.mrb[0].mxu0 %v44
  %v2566 = vpop.f32.mrb[0].mxu0
  %v2567 = vadd.f32 0.0, %v2566
  %v2568 = vpop.f32.mrb[0].mxu0
  %v2569 = vpop.f32.mrb[0].mxu0
  %v2570 = vadd.f32 0.0, %v2569
  %v2571 = vpop.f32.mrb[0].mxu0
  %2572 = vdwg.mxu0
  %v2573 = vsel %vm87, %v2567, 0.0
  %v2574 = vsel %vm87, %v2570, 0.0
  %v2575 = vadd.f32 %v2573, %v2574
  %v2576 = vrot.slane %v2575, 4
  %v2577 = vadd.f32 %v2575, %v2576
  %v2578 = vrot.slane %v2577, 2
  %v2579 = vadd.f32 %v2577, %v2578
  %v2580 = vrot.slane %v2579, 1
  %v2581 = vadd.f32 %v2579, %v2580
  %v2582 = vmul.f32 %v2581, 0.0625
  %v2583 = vmul.f32 %v2567, %v2567
  %v2584 = vmul.f32 %v2570, %v2570
  %v2585 = vsel %vm87, %v2583, 0.0
  %v2586 = vsel %vm87, %v2584, 0.0
  %v2587 = vadd.f32 %v2585, %v2586
  %v2588 = vrot.slane %v2587, 4
  %v2589 = vadd.f32 %v2587, %v2588
  %v2590 = vrot.slane %v2589, 2
  %v2591 = vadd.f32 %v2589, %v2590
  %v2592 = vrot.slane %v2591, 1
  %v2593 = vadd.f32 %v2591, %v2592
  %v2594 = vmul.f32 %v2593, 0.0625
  %v2595 = vmul.f32 %v2582, %v2582
  %v2596 = vsub.f32 %v2594, %v2595
  %v2597 = vsub.f32 %v2567, %v2582
  %v2598 = vsub.f32 %v2570, %v2582
  %v2599 = vadd.f32 %v2596, 1e-05
  %v2600 = vrsqrt.pop %v2599
  %v2601 = vmul.f32 %v2597, %v2600
  %v2602 = vmul.f32 %v2598, %v2600
  %v2603 = vmax.f32 %v2601, 0.0
  %v2604 = vmax.f32 %v2602, 0.0
  %v2605 = vpack.c.bf16 %v2604, %v2603
  %s2606 = scalar_lea.vmem %s2, 128
  %v2607 = vld [vmem:[%s2606] sm:$0xf]
  %v2608 = vld [vmem:[%s2606 + $0x4] sm:$0xf]
  %v2609 = vld [vmem:[%s2606 + $0x8] sm:$0xf]
  %v2610 = vld [vmem:[%s2606 + $0xc] sm:$0xf]
  %v2611 = vld [vmem:[%s2606 + $0x10] sm:$0xf]
  %v2612 = vld [vmem:[%s2606 + $0x14] sm:$0xf]
  %v2613 = vld [vmem:[%s2606 + $0x18] sm:$0xf]
  %v2614 = vld [vmem:[%s2606 + $0x1c] sm:$0xf]
  %v2623 = vunpack.c.l.b16 %v2607
  %v2624 = vunpack.c.l.b16 %v2608
  %v2625 = vunpack.c.l.b16 %v2609
  %v2626 = vunpack.c.l.b16 %v2610
  %v2627 = vunpack.c.l.b16 %v2611
  %v2628 = vunpack.c.l.b16 %v2612
  %v2629 = vunpack.c.l.b16 %v2613
  %v2630 = vunpack.c.l.b16 %v2614
  %v2631 = vpack.c.b16 %v2624, %v2623
  %v2632 = vpack.c.b16 %v2626, %v2625
  %v2633 = vpack.c.b16 %v2628, %v2627
  %v2634 = vpack.c.b16 %v2630, %v2629
  %v2640 = vsel %vm87, %v2605, 0
  %2642 = vmatprep.subr.bf16.mxu0 0
  %2643 = vmatpush1.bf16.msra.mxu0 %v2631
  %2644 = vmatprep.subr.bf16.mxu0 0
  %2645 = vmatpush1.bf16.msra.mxu0 %v2632
  %2646 = vmatprep.subr.bf16.mxu0 0
  %2647 = vmatpush1.bf16.msra.mxu0 %v2633
  %2648 = vmatprep.subr.bf16.mxu0 0
  %2649 = vmatpush1.bf16.msra.mxu0 %v2634
  %2650 = vmatprep.subr.bf16.mxu0 0
  %2651 = vmatpush1.bf16.msra.mxu0 0
  %2652 = vmatprep.subr.bf16.mxu0 0
  %2653 = vmatpush1.bf16.msra.mxu0 0
  %2654 = vmatprep.subr.bf16.mxu0 0
  %2655 = vmatpush1.bf16.msra.mxu0 0
  %2656 = vmatprep.subr.bf16.mxu0 0
  %2657 = vmatpush1.bf16.msra.mxu0 0
  %2658 = vmatprep.subr.bf16.mxu0 0
  %2659 = vmatpush1.bf16.msra.mxu0 0
  %2660 = vmatprep.subr.bf16.mxu0 0
  %2661 = vmatpush1.bf16.msra.mxu0 0
  %2662 = vmatprep.subr.bf16.mxu0 0
  %2663 = vmatpush1.bf16.msra.mxu0 0
  %2664 = vmatprep.subr.bf16.mxu0 0
  %2665 = vmatpush1.bf16.msra.mxu0 0
  %2666 = vmatprep.subr.bf16.mxu0 0
  %2667 = vmatpush1.bf16.msra.mxu0 0
  %2668 = vmatprep.subr.bf16.mxu0 0
  %2669 = vmatpush1.bf16.msra.mxu0 0
  %2670 = vmatprep.subr.bf16.mxu0 0
  %2671 = vmatpush1.bf16.msra.mxu0 0
  %2672 = vmatprep.subr.bf16.mxu0 0
  %2673 = vmatpush1.bf16.msra.mxu0 0
  %2674 = vmatprep.mubr.bf16.mxu0 0
  %2675 = vmatmul.mubr.bf16.gmra.mrb[0].mxu0 %v2640
  %v2676 = vpop.f32.mrb[0].mxu0
  %v2677 = vadd.f32 0.0, %v2676
  %v2678 = vpop.f32.mrb[0].mxu0
  %v2679 = vpop.f32.mrb[0].mxu0
  %v2680 = vadd.f32 0.0, %v2679
  %v2681 = vpop.f32.mrb[0].mxu0
  %2682 = vdwg.mxu0
  %v2683 = vadd.f32 %v2677, %v2680
  %v2684 = vrot.slane %v2683, 4
  %v2685 = vadd.f32 %v2683, %v2684
  %v2686 = vrot.slane %v2685, 2
  %v2687 = vadd.f32 %v2685, %v2686
  %v2688 = vrot.slane %v2687, 1
  %v2689 = vadd.f32 %v2687, %v2688
  %v2690 = vmul.f32 %v2689, 0.0625
  %v2691 = vmul.f32 %v2677, %v2677
  %v2692 = vmul.f32 %v2680, %v2680
  %v2693 = vadd.f32 %v2691, %v2692
  %v2694 = vrot.slane %v2693, 4
  %v2695 = vadd.f32 %v2693, %v2694
  %v2696 = vrot.slane %v2695, 2
  %v2697 = vadd.f32 %v2695, %v2696
  %v2698 = vrot.slane %v2697, 1
  %v2699 = vadd.f32 %v2697, %v2698
  %v2700 = vmul.f32 %v2699, 0.0625
  %v2701 = vmul.f32 %v2690, %v2690
  %v2702 = vsub.f32 %v2700, %v2701
  %v2703 = vsub.f32 %v2677, %v2690
  %v2704 = vsub.f32 %v2680, %v2690
  %v2705 = vadd.f32 %v2702, 1e-05
  %v2706 = vrsqrt.pop %v2705
  %v2707 = vmul.f32 %v2703, %v2706
  %v2708 = vmul.f32 %v2704, %v2706
  %v2709 = vmax.f32 %v2707, 0.0
  %v2710 = vmax.f32 %v2708, 0.0
  %v2711 = vpack.c.bf16 %v2710, %v2709
  %s2712 = scalar_lea.vmem %s3, 512
  %v2713 = vld [vmem:[%s2712] sm:$0xff]
  %v2714 = vld [vmem:[%s2712 + $0x8] sm:$0xff]
  %v2715 = vld [vmem:[%s2712 + $0x10] sm:$0xff]
  %v2716 = vld [vmem:[%s2712 + $0x18] sm:$0xff]
  %v2717 = vld [vmem:[%s2712 + $0x20] sm:$0xff]
  %v2718 = vld [vmem:[%s2712 + $0x28] sm:$0xff]
  %v2719 = vld [vmem:[%s2712 + $0x30] sm:$0xff]
  %v2720 = vld [vmem:[%s2712 + $0x38] sm:$0xff]
  %v2721 = vld [vmem:[%s2712 + $0x40] sm:$0xff]
  %v2722 = vld [vmem:[%s2712 + $0x48] sm:$0xff]
  %v2723 = vld [vmem:[%s2712 + $0x50] sm:$0xff]
  %v2724 = vld [vmem:[%s2712 + $0x58] sm:$0xff]
  %v2725 = vld [vmem:[%s2712 + $0x60] sm:$0xff]
  %v2726 = vld [vmem:[%s2712 + $0x68] sm:$0xff]
  %v2727 = vld [vmem:[%s2712 + $0x70] sm:$0xff]
  %v2728 = vld [vmem:[%s2712 + $0x78] sm:$0xff]
  %v2745 = vunpack.c.l.b16 %v2713
  %v2746 = vunpack.c.h.b16 %v2713
  %v2747 = vunpack.c.l.b16 %v2714
  %v2748 = vunpack.c.h.b16 %v2714
  %v2749 = vunpack.c.l.b16 %v2715
  %v2750 = vunpack.c.h.b16 %v2715
  %v2751 = vunpack.c.l.b16 %v2716
  %v2752 = vunpack.c.h.b16 %v2716
  %v2753 = vunpack.c.l.b16 %v2717
  %v2754 = vunpack.c.h.b16 %v2717
  %v2755 = vunpack.c.l.b16 %v2718
  %v2756 = vunpack.c.h.b16 %v2718
  %v2757 = vunpack.c.l.b16 %v2719
  %v2758 = vunpack.c.h.b16 %v2719
  %v2759 = vunpack.c.l.b16 %v2720
  %v2760 = vunpack.c.h.b16 %v2720
  %v2761 = vunpack.c.l.b16 %v2721
  %v2762 = vunpack.c.h.b16 %v2721
  %v2763 = vunpack.c.l.b16 %v2722
  %v2764 = vunpack.c.h.b16 %v2722
  %v2765 = vunpack.c.l.b16 %v2723
  %v2766 = vunpack.c.h.b16 %v2723
  %v2767 = vunpack.c.l.b16 %v2724
  %v2768 = vunpack.c.h.b16 %v2724
  %v2769 = vunpack.c.l.b16 %v2725
  %v2770 = vunpack.c.h.b16 %v2725
  %v2771 = vunpack.c.l.b16 %v2726
  %v2772 = vunpack.c.h.b16 %v2726
  %v2773 = vunpack.c.l.b16 %v2727
  %v2774 = vunpack.c.h.b16 %v2727
  %v2775 = vunpack.c.l.b16 %v2728
  %v2776 = vunpack.c.h.b16 %v2728
  %v2777 = vpack.c.b16 %v2747, %v2745
  %v2778 = vpack.c.b16 %v2748, %v2746
  %v2779 = vpack.c.b16 %v2751, %v2749
  %v2780 = vpack.c.b16 %v2752, %v2750
  %v2781 = vpack.c.b16 %v2755, %v2753
  %v2782 = vpack.c.b16 %v2756, %v2754
  %v2783 = vpack.c.b16 %v2759, %v2757
  %v2784 = vpack.c.b16 %v2760, %v2758
  %v2785 = vpack.c.b16 %v2763, %v2761
  %v2786 = vpack.c.b16 %v2764, %v2762
  %v2787 = vpack.c.b16 %v2767, %v2765
  %v2788 = vpack.c.b16 %v2768, %v2766
  %v2789 = vpack.c.b16 %v2771, %v2769
  %v2790 = vpack.c.b16 %v2772, %v2770
  %v2791 = vpack.c.b16 %v2775, %v2773
  %v2792 = vpack.c.b16 %v2776, %v2774
  %2809 = vmatprep.subr.bf16.mxu0 %v2778
  %2810 = vmatpush1.bf16.msra.mxu0 %v2777
  %2811 = vmatprep.subr.bf16.mxu0 %v2780
  %2812 = vmatpush1.bf16.msra.mxu0 %v2779
  %2813 = vmatprep.subr.bf16.mxu0 %v2782
  %2814 = vmatpush1.bf16.msra.mxu0 %v2781
  %2815 = vmatprep.subr.bf16.mxu0 %v2784
  %2816 = vmatpush1.bf16.msra.mxu0 %v2783
  %2817 = vmatprep.subr.bf16.mxu0 %v2786
  %2818 = vmatpush1.bf16.msra.mxu0 %v2785
  %2819 = vmatprep.subr.bf16.mxu0 %v2788
  %2820 = vmatpush1.bf16.msra.mxu0 %v2787
  %2821 = vmatprep.subr.bf16.mxu0 %v2790
  %2822 = vmatpush1.bf16.msra.mxu0 %v2789
  %2823 = vmatprep.subr.bf16.mxu0 %v2792
  %2824 = vmatpush1.bf16.msra.mxu0 %v2791
  %2825 = vmatprep.subr.bf16.mxu0 0
  %2826 = vmatpush1.bf16.msra.mxu0 0
  %2827 = vmatprep.subr.bf16.mxu0 0
  %2828 = vmatpush1.bf16.msra.mxu0 0
  %2829 = vmatprep.subr.bf16.mxu0 0
  %2830 = vmatpush1.bf16.msra.mxu0 0
  %2831 = vmatprep.subr.bf16.mxu0 0
  %2832 = vmatpush1.bf16.msra.mxu0 0
  %2833 = vmatprep.subr.bf16.mxu0 0
  %2834 = vmatpush1.bf16.msra.mxu0 0
  %2835 = vmatprep.subr.bf16.mxu0 0
  %2836 = vmatpush1.bf16.msra.mxu0 0
  %2837 = vmatprep.subr.bf16.mxu0 0
  %2838 = vmatpush1.bf16.msra.mxu0 0
  %2839 = vmatprep.subr.bf16.mxu0 0
  %2840 = vmatpush1.bf16.msra.mxu0 0
  %2841 = vmatprep.mubr.bf16.mxu0 0
  %2842 = vmatmul.mubr.bf16.gmra.mrb[0].mxu0 %v2711
  %v2843 = vpop.f32.mrb[0].mxu0
  %v2844 = vadd.f32 0.0, %v2843
  %v2845 = vpop.f32.mrb[0].mxu0
  %v2846 = vadd.f32 0.0, %v2845
  %v2847 = vpop.f32.mrb[0].mxu0
  %v2848 = vadd.f32 0.0, %v2847
  %v2849 = vpop.f32.mrb[0].mxu0
  %v2850 = vadd.f32 0.0, %v2849
  %2851 = vdwg.mxu0
  %v2852 = vadd.f32 %v2844, %v2848
  %v2853 = vrot.slane %v2852, 4
  %v2854 = vadd.f32 %v2852, %v2853
  %v2855 = vrot.slane %v2854, 2
  %v2856 = vadd.f32 %v2854, %v2855
  %v2857 = vrot.slane %v2856, 1
  %v2858 = vadd.f32 %v2856, %v2857
  %v2859 = vadd.f32 %v2846, %v2850
  %v2860 = vrot.slane %v2859, 4
  %v2861 = vadd.f32 %v2859, %v2860
  %v2862 = vrot.slane %v2861, 2
  %v2863 = vadd.f32 %v2861, %v2862
  %v2864 = vrot.slane %v2863, 1
  %v2865 = vadd.f32 %v2863, %v2864
  %v2866 = vmul.f32 %v2858, 0.0625
  %v2867 = vmul.f32 %v2865, 0.0625
  %v2868 = vmul.f32 %v2844, %v2844
  %v2869 = vmul.f32 %v2846, %v2846
  %v2870 = vmul.f32 %v2848, %v2848
  %v2871 = vmul.f32 %v2850, %v2850
  %v2872 = vadd.f32 %v2868, %v2870
  %v2873 = vrot.slane %v2872, 4
  %v2874 = vadd.f32 %v2872, %v2873
  %v2875 = vrot.slane %v2874, 2
  %v2876 = vadd.f32 %v2874, %v2875
  %v2877 = vrot.slane %v2876, 1
  %v2878 = vadd.f32 %v2876, %v2877
  %v2879 = vadd.f32 %v2869, %v2871
  %v2880 = vrot.slane %v2879, 4
  %v2881 = vadd.f32 %v2879, %v2880
  %v2882 = vrot.slane %v2881, 2
  %v2883 = vadd.f32 %v2881, %v2882
  %v2884 = vrot.slane %v2883, 1
  %v2885 = vadd.f32 %v2883, %v2884
  %v2886 = vmul.f32 %v2878, 0.0625
  %v2887 = vmul.f32 %v2885, 0.0625
  %v2888 = vmul.f32 %v2866, %v2866
  %v2889 = vmul.f32 %v2867, %v2867
  %v2890 = vsub.f32 %v2886, %v2888
  %v2891 = vsub.f32 %v2887, %v2889
  %v2892 = vsub.f32 %v2844, %v2866
  %v2893 = vsub.f32 %v2846, %v2867
  %v2894 = vsub.f32 %v2848, %v2866
  %v2895 = vsub.f32 %v2850, %v2867
  %v2896 = vadd.f32 %v2890, 1e-05
  %v2897 = vadd.f32 %v2891, 1e-05
  %v2898 = vrsqrt.pop %v2896
  %v2899 = vrsqrt.pop %v2897
  %v2900 = vmul.f32 %v2892, %v2898
  %v2901 = vmul.f32 %v2893, %v2899
  %v2902 = vmul.f32 %v2894, %v2898
  %v2903 = vmul.f32 %v2895, %v2899
  %v2904 = vmax.f32 %v2900, 0.0
  %v2905 = vmax.f32 %v2901, 0.0
  %v2906 = vmax.f32 %v2902, 0.0
  %v2907 = vmax.f32 %v2903, 0.0
  %v2908 = vpack.c.bf16 %v2906, %v2904
  %v2909 = vpack.c.bf16 %v2907, %v2905
  %s2910 = scalar_lea.vmem %s4, 512
  %v2911 = vld [vmem:[%s2910] sm:$0xf]
  %v2912 = vld [vmem:[%s2910 + $0x4] sm:$0xf]
  %v2913 = vld [vmem:[%s2910 + $0x8] sm:$0xf]
  %v2914 = vld [vmem:[%s2910 + $0xc] sm:$0xf]
  %v2915 = vld [vmem:[%s2910 + $0x10] sm:$0xf]
  %v2916 = vld [vmem:[%s2910 + $0x14] sm:$0xf]
  %v2917 = vld [vmem:[%s2910 + $0x18] sm:$0xf]
  %v2918 = vld [vmem:[%s2910 + $0x1c] sm:$0xf]
  %v2919 = vld [vmem:[%s2910 + $0x20] sm:$0xf]
  %v2920 = vld [vmem:[%s2910 + $0x24] sm:$0xf]
  %v2921 = vld [vmem:[%s2910 + $0x28] sm:$0xf]
  %v2922 = vld [vmem:[%s2910 + $0x2c] sm:$0xf]
  %v2923 = vld [vmem:[%s2910 + $0x30] sm:$0xf]
  %v2924 = vld [vmem:[%s2910 + $0x34] sm:$0xf]
  %v2925 = vld [vmem:[%s2910 + $0x38] sm:$0xf]
  %v2926 = vld [vmem:[%s2910 + $0x3c] sm:$0xf]
  %v2927 = vld [vmem:[%s2910 + $0x40] sm:$0xf]
  %v2928 = vld [vmem:[%s2910 + $0x44] sm:$0xf]
  %v2929 = vld [vmem:[%s2910 + $0x48] sm:$0xf]
  %v2930 = vld [vmem:[%s2910 + $0x4c] sm:$0xf]
  %v2931 = vld [vmem:[%s2910 + $0x50] sm:$0xf]
  %v2932 = vld [vmem:[%s2910 + $0x54] sm:$0xf]
  %v2933 = vld [vmem:[%s2910 + $0x58] sm:$0xf]
  %v2934 = vld [vmem:[%s2910 + $0x5c] sm:$0xf]
  %v2935 = vld [vmem:[%s2910 + $0x60] sm:$0xf]
  %v2936 = vld [vmem:[%s2910 + $0x64] sm:$0xf]
  %v2937 = vld [vmem:[%s2910 + $0x68] sm:$0xf]
  %v2938 = vld [vmem:[%s2910 + $0x6c] sm:$0xf]
  %v2939 = vld [vmem:[%s2910 + $0x70] sm:$0xf]
  %v2940 = vld [vmem:[%s2910 + $0x74] sm:$0xf]
  %v2941 = vld [vmem:[%s2910 + $0x78] sm:$0xf]
  %v2942 = vld [vmem:[%s2910 + $0x7c] sm:$0xf]
  %v2975 = vunpack.c.l.b16 %v2911
  %v2976 = vunpack.c.l.b16 %v2912
  %v2977 = vunpack.c.l.b16 %v2913
  %v2978 = vunpack.c.l.b16 %v2914
  %v2979 = vunpack.c.l.b16 %v2915
  %v2980 = vunpack.c.l.b16 %v2916
  %v2981 = vunpack.c.l.b16 %v2917
  %v2982 = vunpack.c.l.b16 %v2918
  %v2983 = vunpack.c.l.b16 %v2919
  %v2984 = vunpack.c.l.b16 %v2920
  %v2985 = vunpack.c.l.b16 %v2921
  %v2986 = vunpack.c.l.b16 %v2922
  %v2987 = vunpack.c.l.b16 %v2923
  %v2988 = vunpack.c.l.b16 %v2924
  %v2989 = vunpack.c.l.b16 %v2925
  %v2990 = vunpack.c.l.b16 %v2926
  %v2991 = vunpack.c.l.b16 %v2927
  %v2992 = vunpack.c.l.b16 %v2928
  %v2993 = vunpack.c.l.b16 %v2929
  %v2994 = vunpack.c.l.b16 %v2930
  %v2995 = vunpack.c.l.b16 %v2931
  %v2996 = vunpack.c.l.b16 %v2932
  %v2997 = vunpack.c.l.b16 %v2933
  %v2998 = vunpack.c.l.b16 %v2934
  %v2999 = vunpack.c.l.b16 %v2935
  %v3000 = vunpack.c.l.b16 %v2936
  %v3001 = vunpack.c.l.b16 %v2937
  %v3002 = vunpack.c.l.b16 %v2938
  %v3003 = vunpack.c.l.b16 %v2939
  %v3004 = vunpack.c.l.b16 %v2940
  %v3005 = vunpack.c.l.b16 %v2941
  %v3006 = vunpack.c.l.b16 %v2942
  %v3007 = vpack.c.b16 %v2976, %v2975
  %v3008 = vpack.c.b16 %v2978, %v2977
  %v3009 = vpack.c.b16 %v2980, %v2979
  %v3010 = vpack.c.b16 %v2982, %v2981
  %v3011 = vpack.c.b16 %v2984, %v2983
  %v3012 = vpack.c.b16 %v2986, %v2985
  %v3013 = vpack.c.b16 %v2988, %v2987
  %v3014 = vpack.c.b16 %v2990, %v2989
  %v3015 = vpack.c.b16 %v2992, %v2991
  %v3016 = vpack.c.b16 %v2994, %v2993
  %v3017 = vpack.c.b16 %v2996, %v2995
  %v3018 = vpack.c.b16 %v2998, %v2997
  %v3019 = vpack.c.b16 %v3000, %v2999
  %v3020 = vpack.c.b16 %v3002, %v3001
  %v3021 = vpack.c.b16 %v3004, %v3003
  %v3022 = vpack.c.b16 %v3006, %v3005
  %3039 = vmatprep.subr.bf16.mxu0 0
  %3040 = vmatpush1.bf16.msra.mxu0 %v3007
  %3041 = vmatprep.subr.bf16.mxu0 0
  %3042 = vmatpush1.bf16.msra.mxu0 %v3008
  %3043 = vmatprep.subr.bf16.mxu0 0
  %3044 = vmatpush1.bf16.msra.mxu0 %v3009
  %3045 = vmatprep.subr.bf16.mxu0 0
  %3046 = vmatpush1.bf16.msra.mxu0 %v3010
  %3047 = vmatprep.subr.bf16.mxu0 0
  %3048 = vmatpush1.bf16.msra.mxu0 %v3011
  %3049 = vmatprep.subr.bf16.mxu0 0
  %3050 = vmatpush1.bf16.msra.mxu0 %v3012
  %3051 = vmatprep.subr.bf16.mxu0 0
  %3052 = vmatpush1.bf16.msra.mxu0 %v3013
  %3053 = vmatprep.subr.bf16.mxu0 0
  %3054 = vmatpush1.bf16.msra.mxu0 %v3014
  %3055 = vmatprep.subr.bf16.mxu0 0
  %3056 = vmatpush1.bf16.msra.mxu0 %v3015
  %3057 = vmatprep.subr.bf16.mxu0 0
  %3058 = vmatpush1.bf16.msra.mxu0 %v3016
  %3059 = vmatprep.subr.bf16.mxu0 0
  %3060 = vmatpush1.bf16.msra.mxu0 %v3017
  %3061 = vmatprep.subr.bf16.mxu0 0
  %3062 = vmatpush1.bf16.msra.mxu0 %v3018
  %3063 = vmatprep.subr.bf16.mxu0 0
  %3064 = vmatpush1.bf16.msra.mxu0 %v3019
  %3065 = vmatprep.subr.bf16.mxu0 0
  %3066 = vmatpush1.bf16.msra.mxu0 %v3020
  %3067 = vmatprep.subr.bf16.mxu0 0
  %3068 = vmatpush1.bf16.msra.mxu0 %v3021
  %3069 = vmatprep.subr.bf16.mxu0 0
  %3070 = vmatpush1.bf16.msra.mxu0 %v3022
  %3071 = vmatprep.mubr.bf16.mxu0 %v2909
  %3072 = vmatmul.mubr.bf16.gmra.mrb[0].mxu0 %v2908
  %v3073 = vpop.f32.mrb[0].mxu0
  %v3074 = vadd.f32 0.0, %v3073
  %v3075 = vpop.f32.mrb[0].mxu0
  %v3076 = vpop.f32.mrb[0].mxu0
  %v3077 = vadd.f32 0.0, %v3076
  %v3078 = vpop.f32.mrb[0].mxu0
  %3079 = vdwg.mxu0
  %v3080 = vsel %vm42, %v3074, 0.0
  %v3081 = vsel %vm42, %v3077, 0.0
  %v3082 = vadd.f32 %v3080, %v3081
  %v3083 = vrot.slane %v3082, 4
  %v3084 = vadd.f32 %v3082, %v3083
  %v3085 = vrot.slane %v3084, 2
  %v3086 = vadd.f32 %v3084, %v3085
  %v3087 = vrot.slane %v3086, 1
  %v3088 = vadd.f32 %v3086, %v3087
  %v3089 = vmul.f32 %v3088, 0.0625
  %v3090 = vmul.f32 %v3074, %v3074
  %v3091 = vmul.f32 %v3077, %v3077
  %v3092 = vsel %vm42, %v3090, 0.0
  %v3093 = vsel %vm42, %v3091, 0.0
  %v3094 = vadd.f32 %v3092, %v3093
  %v3095 = vrot.slane %v3094, 4
  %v3096 = vadd.f32 %v3094, %v3095
  %v3097 = vrot.slane %v3096, 2
  %v3098 = vadd.f32 %v3096, %v3097
  %v3099 = vrot.slane %v3098, 1
  %v3100 = vadd.f32 %v3098, %v3099
  %v3101 = vmul.f32 %v3100, 0.0625
  %v3102 = vmul.f32 %v3089, %v3089
  %v3103 = vsub.f32 %v3101, %v3102
  %v3104 = vsub.f32 %v3074, %v3089
  %v3105 = vsub.f32 %v3077, %v3089
  %v3106 = vadd.f32 %v3103, 1e-05
  %v3107 = vrsqrt.pop %v3106
  %v3108 = vmul.f32 %v3104, %v3107
  %v3109 = vmul.f32 %v3105, %v3107
  %v3110 = vmul.f32 %v3108, 0.5
  %v3111 = vmul.f32 %v3109, 0.5
  %v3112 = vtanh.pop %v3110
  %v3113 = vtanh.pop %v3111
  %v3114 = vadd.f32 %v3112, 1.0
  %v3115 = vadd.f32 %v3113, 1.0
  %v3116 = vmul.f32 %v3114, 0.5
  %v3117 = vmul.f32 %v3115, 0.5
  %v3118 = vsub.f32 %v3116, %v21
  %v3119 = vsub.f32 %v3117, %v22
  %v3120 = vmul.f32 %v3118, %v3118
  %v3121 = vmul.f32 %v3119, %v3119
  %v3122 = vsel %vm42, %v3120, 0.0
  %v3123 = vsel %vm42, %v3121, 0.0
  %v3124 = vadd.f32 %v3122, %v3123
  %3125 = vadd.xlane.f32.xlu0 %v3124
  %v3126 = vpop.xlane.xlu0 %3125
  %v3127 = vrot.slane %v3126, 4
  %v3128 = vadd.f32 %v3126, %v3127
  %v3129 = vrot.slane %v3128, 2
  %v3130 = vadd.f32 %v3128, %v3129
  %v3131 = vrot.slane %v3130, 1
  %v3132 = vadd.f32 %v3130, %v3131
  %s3133 = vtos %v3132
  %vm3134 = vcmp.eq.s32.totalorder %v25, 4
  %v3135 = vstv %s3133
  %v3136 = vsel %vm3134, %v3135, %v2514
  %s3137 = scalar_lea.vmem %s1, 80
  %v3138 = vld [vmem:[%s3137] sm:$0xf]
  %v3139 = vld [vmem:[%s3137 + $0x4] sm:$0xf]
  %v3140 = vld [vmem:[%s3137 + $0x8] sm:$0xf]
  %v3141 = vld [vmem:[%s3137 + $0xc] sm:$0xf]
  %v3146 = vunpack.c.l.b16 %v3138
  %v3147 = vunpack.c.l.b16 %v3139
  %v3148 = vunpack.c.l.b16 %v3140
  %v3149 = vunpack.c.l.b16 %v3141
  %v3150 = vpack.c.b16 %v3147, %v3146
  %v3151 = vpack.c.b16 %v3149, %v3148
  %3154 = vmatprep.subr.bf16.mxu0 0
  %3155 = vmatpush1.bf16.msra.mxu0 %v3150
  %3156 = vmatprep.subr.bf16.mxu0 0
  %3157 = vmatpush1.bf16.msra.mxu0 %v3151
  %3158 = vmatprep.subr.bf16.mxu0 0
  %3159 = vmatpush1.bf16.msra.mxu0 0
  %3160 = vmatprep.subr.bf16.mxu0 0
  %3161 = vmatpush1.bf16.msra.mxu0 0
  %3162 = vmatprep.subr.bf16.mxu0 0
  %3163 = vmatpush1.bf16.msra.mxu0 0
  %3164 = vmatprep.subr.bf16.mxu0 0
  %3165 = vmatpush1.bf16.msra.mxu0 0
  %3166 = vmatprep.subr.bf16.mxu0 0
  %3167 = vmatpush1.bf16.msra.mxu0 0
  %3168 = vmatprep.subr.bf16.mxu0 0
  %3169 = vmatpush1.bf16.msra.mxu0 0
  %3170 = vmatprep.subr.bf16.mxu0 0
  %3171 = vmatpush1.bf16.msra.mxu0 0
  %3172 = vmatprep.subr.bf16.mxu0 0
  %3173 = vmatpush1.bf16.msra.mxu0 0
  %3174 = vmatprep.subr.bf16.mxu0 0
  %3175 = vmatpush1.bf16.msra.mxu0 0
  %3176 = vmatprep.subr.bf16.mxu0 0
  %3177 = vmatpush1.bf16.msra.mxu0 0
  %3178 = vmatprep.subr.bf16.mxu0 0
  %3179 = vmatpush1.bf16.msra.mxu0 0
  %3180 = vmatprep.subr.bf16.mxu0 0
  %3181 = vmatpush1.bf16.msra.mxu0 0
  %3182 = vmatprep.subr.bf16.mxu0 0
  %3183 = vmatpush1.bf16.msra.mxu0 0
  %3184 = vmatprep.subr.bf16.mxu0 0
  %3185 = vmatpush1.bf16.msra.mxu0 0
  %3186 = vmatprep.mubr.bf16.mxu0 0
  %3187 = vmatmul.mubr.bf16.gmra.mrb[0].mxu0 %v44
  %v3188 = vpop.f32.mrb[0].mxu0
  %v3189 = vadd.f32 0.0, %v3188
  %v3190 = vpop.f32.mrb[0].mxu0
  %v3191 = vpop.f32.mrb[0].mxu0
  %v3192 = vadd.f32 0.0, %v3191
  %v3193 = vpop.f32.mrb[0].mxu0
  %3194 = vdwg.mxu0
  %v3195 = vsel %vm87, %v3189, 0.0
  %v3196 = vsel %vm87, %v3192, 0.0
  %v3197 = vadd.f32 %v3195, %v3196
  %v3198 = vrot.slane %v3197, 4
  %v3199 = vadd.f32 %v3197, %v3198
  %v3200 = vrot.slane %v3199, 2
  %v3201 = vadd.f32 %v3199, %v3200
  %v3202 = vrot.slane %v3201, 1
  %v3203 = vadd.f32 %v3201, %v3202
  %v3204 = vmul.f32 %v3203, 0.0625
  %v3205 = vmul.f32 %v3189, %v3189
  %v3206 = vmul.f32 %v3192, %v3192
  %v3207 = vsel %vm87, %v3205, 0.0
  %v3208 = vsel %vm87, %v3206, 0.0
  %v3209 = vadd.f32 %v3207, %v3208
  %v3210 = vrot.slane %v3209, 4
  %v3211 = vadd.f32 %v3209, %v3210
  %v3212 = vrot.slane %v3211, 2
  %v3213 = vadd.f32 %v3211, %v3212
  %v3214 = vrot.slane %v3213, 1
  %v3215 = vadd.f32 %v3213, %v3214
  %v3216 = vmul.f32 %v3215, 0.0625
  %v3217 = vmul.f32 %v3204, %v3204
  %v3218 = vsub.f32 %v3216, %v3217
  %v3219 = vsub.f32 %v3189, %v3204
  %v3220 = vsub.f32 %v3192, %v3204
  %v3221 = vadd.f32 %v3218, 1e-05
  %v3222 = vrsqrt.pop %v3221
  %v3223 = vmul.f32 %v3219, %v3222
  %v3224 = vmul.f32 %v3220, %v3222
  %v3225 = vmax.f32 %v3223, 0.0
  %v3226 = vmax.f32 %v3224, 0.0
  %v3227 = vpack.c.bf16 %v3226, %v3225
  %s3228 = scalar_lea.vmem %s2, 160
  %v3229 = vld [vmem:[%s3228] sm:$0xf]
  %v3230 = vld [vmem:[%s3228 + $0x4] sm:$0xf]
  %v3231 = vld [vmem:[%s3228 + $0x8] sm:$0xf]
  %v3232 = vld [vmem:[%s3228 + $0xc] sm:$0xf]
  %v3233 = vld [vmem:[%s3228 + $0x10] sm:$0xf]
  %v3234 = vld [vmem:[%s3228 + $0x14] sm:$0xf]
  %v3235 = vld [vmem:[%s3228 + $0x18] sm:$0xf]
  %v3236 = vld [vmem:[%s3228 + $0x1c] sm:$0xf]
  %v3245 = vunpack.c.l.b16 %v3229
  %v3246 = vunpack.c.l.b16 %v3230
  %v3247 = vunpack.c.l.b16 %v3231
  %v3248 = vunpack.c.l.b16 %v3232
  %v3249 = vunpack.c.l.b16 %v3233
  %v3250 = vunpack.c.l.b16 %v3234
  %v3251 = vunpack.c.l.b16 %v3235
  %v3252 = vunpack.c.l.b16 %v3236
  %v3253 = vpack.c.b16 %v3246, %v3245
  %v3254 = vpack.c.b16 %v3248, %v3247
  %v3255 = vpack.c.b16 %v3250, %v3249
  %v3256 = vpack.c.b16 %v3252, %v3251
  %v3262 = vsel %vm87, %v3227, 0
  %3264 = vmatprep.subr.bf16.mxu0 0
  %3265 = vmatpush1.bf16.msra.mxu0 %v3253
  %3266 = vmatprep.subr.bf16.mxu0 0
  %3267 = vmatpush1.bf16.msra.mxu0 %v3254
  %3268 = vmatprep.subr.bf16.mxu0 0
  %3269 = vmatpush1.bf16.msra.mxu0 %v3255
  %3270 = vmatprep.subr.bf16.mxu0 0
  %3271 = vmatpush1.bf16.msra.mxu0 %v3256
  %3272 = vmatprep.subr.bf16.mxu0 0
  %3273 = vmatpush1.bf16.msra.mxu0 0
  %3274 = vmatprep.subr.bf16.mxu0 0
  %3275 = vmatpush1.bf16.msra.mxu0 0
  %3276 = vmatprep.subr.bf16.mxu0 0
  %3277 = vmatpush1.bf16.msra.mxu0 0
  %3278 = vmatprep.subr.bf16.mxu0 0
  %3279 = vmatpush1.bf16.msra.mxu0 0
  %3280 = vmatprep.subr.bf16.mxu0 0
  %3281 = vmatpush1.bf16.msra.mxu0 0
  %3282 = vmatprep.subr.bf16.mxu0 0
  %3283 = vmatpush1.bf16.msra.mxu0 0
  %3284 = vmatprep.subr.bf16.mxu0 0
  %3285 = vmatpush1.bf16.msra.mxu0 0
  %3286 = vmatprep.subr.bf16.mxu0 0
  %3287 = vmatpush1.bf16.msra.mxu0 0
  %3288 = vmatprep.subr.bf16.mxu0 0
  %3289 = vmatpush1.bf16.msra.mxu0 0
  %3290 = vmatprep.subr.bf16.mxu0 0
  %3291 = vmatpush1.bf16.msra.mxu0 0
  %3292 = vmatprep.subr.bf16.mxu0 0
  %3293 = vmatpush1.bf16.msra.mxu0 0
  %3294 = vmatprep.subr.bf16.mxu0 0
  %3295 = vmatpush1.bf16.msra.mxu0 0
  %3296 = vmatprep.mubr.bf16.mxu0 0
  %3297 = vmatmul.mubr.bf16.gmra.mrb[0].mxu0 %v3262
  %v3298 = vpop.f32.mrb[0].mxu0
  %v3299 = vadd.f32 0.0, %v3298
  %v3300 = vpop.f32.mrb[0].mxu0
  %v3301 = vpop.f32.mrb[0].mxu0
  %v3302 = vadd.f32 0.0, %v3301
  %v3303 = vpop.f32.mrb[0].mxu0
  %3304 = vdwg.mxu0
  %v3305 = vadd.f32 %v3299, %v3302
  %v3306 = vrot.slane %v3305, 4
  %v3307 = vadd.f32 %v3305, %v3306
  %v3308 = vrot.slane %v3307, 2
  %v3309 = vadd.f32 %v3307, %v3308
  %v3310 = vrot.slane %v3309, 1
  %v3311 = vadd.f32 %v3309, %v3310
  %v3312 = vmul.f32 %v3311, 0.0625
  %v3313 = vmul.f32 %v3299, %v3299
  %v3314 = vmul.f32 %v3302, %v3302
  %v3315 = vadd.f32 %v3313, %v3314
  %v3316 = vrot.slane %v3315, 4
  %v3317 = vadd.f32 %v3315, %v3316
  %v3318 = vrot.slane %v3317, 2
  %v3319 = vadd.f32 %v3317, %v3318
  %v3320 = vrot.slane %v3319, 1
  %v3321 = vadd.f32 %v3319, %v3320
  %v3322 = vmul.f32 %v3321, 0.0625
  %v3323 = vmul.f32 %v3312, %v3312
  %v3324 = vsub.f32 %v3322, %v3323
  %v3325 = vsub.f32 %v3299, %v3312
  %v3326 = vsub.f32 %v3302, %v3312
  %v3327 = vadd.f32 %v3324, 1e-05
  %v3328 = vrsqrt.pop %v3327
  %v3329 = vmul.f32 %v3325, %v3328
  %v3330 = vmul.f32 %v3326, %v3328
  %v3331 = vmax.f32 %v3329, 0.0
  %v3332 = vmax.f32 %v3330, 0.0
  %v3333 = vpack.c.bf16 %v3332, %v3331
  %s3334 = scalar_lea.vmem %s3, 640
  %v3335 = vld [vmem:[%s3334] sm:$0xff]
  %v3336 = vld [vmem:[%s3334 + $0x8] sm:$0xff]
  %v3337 = vld [vmem:[%s3334 + $0x10] sm:$0xff]
  %v3338 = vld [vmem:[%s3334 + $0x18] sm:$0xff]
  %v3339 = vld [vmem:[%s3334 + $0x20] sm:$0xff]
  %v3340 = vld [vmem:[%s3334 + $0x28] sm:$0xff]
  %v3341 = vld [vmem:[%s3334 + $0x30] sm:$0xff]
  %v3342 = vld [vmem:[%s3334 + $0x38] sm:$0xff]
  %v3343 = vld [vmem:[%s3334 + $0x40] sm:$0xff]
  %v3344 = vld [vmem:[%s3334 + $0x48] sm:$0xff]
  %v3345 = vld [vmem:[%s3334 + $0x50] sm:$0xff]
  %v3346 = vld [vmem:[%s3334 + $0x58] sm:$0xff]
  %v3347 = vld [vmem:[%s3334 + $0x60] sm:$0xff]
  %v3348 = vld [vmem:[%s3334 + $0x68] sm:$0xff]
  %v3349 = vld [vmem:[%s3334 + $0x70] sm:$0xff]
  %v3350 = vld [vmem:[%s3334 + $0x78] sm:$0xff]
  %v3367 = vunpack.c.l.b16 %v3335
  %v3368 = vunpack.c.h.b16 %v3335
  %v3369 = vunpack.c.l.b16 %v3336
  %v3370 = vunpack.c.h.b16 %v3336
  %v3371 = vunpack.c.l.b16 %v3337
  %v3372 = vunpack.c.h.b16 %v3337
  %v3373 = vunpack.c.l.b16 %v3338
  %v3374 = vunpack.c.h.b16 %v3338
  %v3375 = vunpack.c.l.b16 %v3339
  %v3376 = vunpack.c.h.b16 %v3339
  %v3377 = vunpack.c.l.b16 %v3340
  %v3378 = vunpack.c.h.b16 %v3340
  %v3379 = vunpack.c.l.b16 %v3341
  %v3380 = vunpack.c.h.b16 %v3341
  %v3381 = vunpack.c.l.b16 %v3342
  %v3382 = vunpack.c.h.b16 %v3342
  %v3383 = vunpack.c.l.b16 %v3343
  %v3384 = vunpack.c.h.b16 %v3343
  %v3385 = vunpack.c.l.b16 %v3344
  %v3386 = vunpack.c.h.b16 %v3344
  %v3387 = vunpack.c.l.b16 %v3345
  %v3388 = vunpack.c.h.b16 %v3345
  %v3389 = vunpack.c.l.b16 %v3346
  %v3390 = vunpack.c.h.b16 %v3346
  %v3391 = vunpack.c.l.b16 %v3347
  %v3392 = vunpack.c.h.b16 %v3347
  %v3393 = vunpack.c.l.b16 %v3348
  %v3394 = vunpack.c.h.b16 %v3348
  %v3395 = vunpack.c.l.b16 %v3349
  %v3396 = vunpack.c.h.b16 %v3349
  %v3397 = vunpack.c.l.b16 %v3350
  %v3398 = vunpack.c.h.b16 %v3350
  %v3399 = vpack.c.b16 %v3369, %v3367
  %v3400 = vpack.c.b16 %v3370, %v3368
  %v3401 = vpack.c.b16 %v3373, %v3371
  %v3402 = vpack.c.b16 %v3374, %v3372
  %v3403 = vpack.c.b16 %v3377, %v3375
  %v3404 = vpack.c.b16 %v3378, %v3376
  %v3405 = vpack.c.b16 %v3381, %v3379
  %v3406 = vpack.c.b16 %v3382, %v3380
  %v3407 = vpack.c.b16 %v3385, %v3383
  %v3408 = vpack.c.b16 %v3386, %v3384
  %v3409 = vpack.c.b16 %v3389, %v3387
  %v3410 = vpack.c.b16 %v3390, %v3388
  %v3411 = vpack.c.b16 %v3393, %v3391
  %v3412 = vpack.c.b16 %v3394, %v3392
  %v3413 = vpack.c.b16 %v3397, %v3395
  %v3414 = vpack.c.b16 %v3398, %v3396
  %3431 = vmatprep.subr.bf16.mxu0 %v3400
  %3432 = vmatpush1.bf16.msra.mxu0 %v3399
  %3433 = vmatprep.subr.bf16.mxu0 %v3402
  %3434 = vmatpush1.bf16.msra.mxu0 %v3401
  %3435 = vmatprep.subr.bf16.mxu0 %v3404
  %3436 = vmatpush1.bf16.msra.mxu0 %v3403
  %3437 = vmatprep.subr.bf16.mxu0 %v3406
  %3438 = vmatpush1.bf16.msra.mxu0 %v3405
  %3439 = vmatprep.subr.bf16.mxu0 %v3408
  %3440 = vmatpush1.bf16.msra.mxu0 %v3407
  %3441 = vmatprep.subr.bf16.mxu0 %v3410
  %3442 = vmatpush1.bf16.msra.mxu0 %v3409
  %3443 = vmatprep.subr.bf16.mxu0 %v3412
  %3444 = vmatpush1.bf16.msra.mxu0 %v3411
  %3445 = vmatprep.subr.bf16.mxu0 %v3414
  %3446 = vmatpush1.bf16.msra.mxu0 %v3413
  %3447 = vmatprep.subr.bf16.mxu0 0
  %3448 = vmatpush1.bf16.msra.mxu0 0
  %3449 = vmatprep.subr.bf16.mxu0 0
  %3450 = vmatpush1.bf16.msra.mxu0 0
  %3451 = vmatprep.subr.bf16.mxu0 0
  %3452 = vmatpush1.bf16.msra.mxu0 0
  %3453 = vmatprep.subr.bf16.mxu0 0
  %3454 = vmatpush1.bf16.msra.mxu0 0
  %3455 = vmatprep.subr.bf16.mxu0 0
  %3456 = vmatpush1.bf16.msra.mxu0 0
  %3457 = vmatprep.subr.bf16.mxu0 0
  %3458 = vmatpush1.bf16.msra.mxu0 0
  %3459 = vmatprep.subr.bf16.mxu0 0
  %3460 = vmatpush1.bf16.msra.mxu0 0
  %3461 = vmatprep.subr.bf16.mxu0 0
  %3462 = vmatpush1.bf16.msra.mxu0 0
  %3463 = vmatprep.mubr.bf16.mxu0 0
  %3464 = vmatmul.mubr.bf16.gmra.mrb[0].mxu0 %v3333
  %v3465 = vpop.f32.mrb[0].mxu0
  %v3466 = vadd.f32 0.0, %v3465
  %v3467 = vpop.f32.mrb[0].mxu0
  %v3468 = vadd.f32 0.0, %v3467
  %v3469 = vpop.f32.mrb[0].mxu0
  %v3470 = vadd.f32 0.0, %v3469
  %v3471 = vpop.f32.mrb[0].mxu0
  %v3472 = vadd.f32 0.0, %v3471
  %3473 = vdwg.mxu0
  %v3474 = vadd.f32 %v3466, %v3470
  %v3475 = vrot.slane %v3474, 4
  %v3476 = vadd.f32 %v3474, %v3475
  %v3477 = vrot.slane %v3476, 2
  %v3478 = vadd.f32 %v3476, %v3477
  %v3479 = vrot.slane %v3478, 1
  %v3480 = vadd.f32 %v3478, %v3479
  %v3481 = vadd.f32 %v3468, %v3472
  %v3482 = vrot.slane %v3481, 4
  %v3483 = vadd.f32 %v3481, %v3482
  %v3484 = vrot.slane %v3483, 2
  %v3485 = vadd.f32 %v3483, %v3484
  %v3486 = vrot.slane %v3485, 1
  %v3487 = vadd.f32 %v3485, %v3486
  %v3488 = vmul.f32 %v3480, 0.0625
  %v3489 = vmul.f32 %v3487, 0.0625
  %v3490 = vmul.f32 %v3466, %v3466
  %v3491 = vmul.f32 %v3468, %v3468
  %v3492 = vmul.f32 %v3470, %v3470
  %v3493 = vmul.f32 %v3472, %v3472
  %v3494 = vadd.f32 %v3490, %v3492
  %v3495 = vrot.slane %v3494, 4
  %v3496 = vadd.f32 %v3494, %v3495
  %v3497 = vrot.slane %v3496, 2
  %v3498 = vadd.f32 %v3496, %v3497
  %v3499 = vrot.slane %v3498, 1
  %v3500 = vadd.f32 %v3498, %v3499
  %v3501 = vadd.f32 %v3491, %v3493
  %v3502 = vrot.slane %v3501, 4
  %v3503 = vadd.f32 %v3501, %v3502
  %v3504 = vrot.slane %v3503, 2
  %v3505 = vadd.f32 %v3503, %v3504
  %v3506 = vrot.slane %v3505, 1
  %v3507 = vadd.f32 %v3505, %v3506
  %v3508 = vmul.f32 %v3500, 0.0625
  %v3509 = vmul.f32 %v3507, 0.0625
  %v3510 = vmul.f32 %v3488, %v3488
  %v3511 = vmul.f32 %v3489, %v3489
  %v3512 = vsub.f32 %v3508, %v3510
  %v3513 = vsub.f32 %v3509, %v3511
  %v3514 = vsub.f32 %v3466, %v3488
  %v3515 = vsub.f32 %v3468, %v3489
  %v3516 = vsub.f32 %v3470, %v3488
  %v3517 = vsub.f32 %v3472, %v3489
  %v3518 = vadd.f32 %v3512, 1e-05
  %v3519 = vadd.f32 %v3513, 1e-05
  %v3520 = vrsqrt.pop %v3518
  %v3521 = vrsqrt.pop %v3519
  %v3522 = vmul.f32 %v3514, %v3520
  %v3523 = vmul.f32 %v3515, %v3521
  %v3524 = vmul.f32 %v3516, %v3520
  %v3525 = vmul.f32 %v3517, %v3521
  %v3526 = vmax.f32 %v3522, 0.0
  %v3527 = vmax.f32 %v3523, 0.0
  %v3528 = vmax.f32 %v3524, 0.0
  %v3529 = vmax.f32 %v3525, 0.0
  %v3530 = vpack.c.bf16 %v3528, %v3526
  %v3531 = vpack.c.bf16 %v3529, %v3527
  %s3532 = scalar_lea.vmem %s4, 640
  %v3533 = vld [vmem:[%s3532] sm:$0xf]
  %v3534 = vld [vmem:[%s3532 + $0x4] sm:$0xf]
  %v3535 = vld [vmem:[%s3532 + $0x8] sm:$0xf]
  %v3536 = vld [vmem:[%s3532 + $0xc] sm:$0xf]
  %v3537 = vld [vmem:[%s3532 + $0x10] sm:$0xf]
  %v3538 = vld [vmem:[%s3532 + $0x14] sm:$0xf]
  %v3539 = vld [vmem:[%s3532 + $0x18] sm:$0xf]
  %v3540 = vld [vmem:[%s3532 + $0x1c] sm:$0xf]
  %v3541 = vld [vmem:[%s3532 + $0x20] sm:$0xf]
  %v3542 = vld [vmem:[%s3532 + $0x24] sm:$0xf]
  %v3543 = vld [vmem:[%s3532 + $0x28] sm:$0xf]
  %v3544 = vld [vmem:[%s3532 + $0x2c] sm:$0xf]
  %v3545 = vld [vmem:[%s3532 + $0x30] sm:$0xf]
  %v3546 = vld [vmem:[%s3532 + $0x34] sm:$0xf]
  %v3547 = vld [vmem:[%s3532 + $0x38] sm:$0xf]
  %v3548 = vld [vmem:[%s3532 + $0x3c] sm:$0xf]
  %v3549 = vld [vmem:[%s3532 + $0x40] sm:$0xf]
  %v3550 = vld [vmem:[%s3532 + $0x44] sm:$0xf]
  %v3551 = vld [vmem:[%s3532 + $0x48] sm:$0xf]
  %v3552 = vld [vmem:[%s3532 + $0x4c] sm:$0xf]
  %v3553 = vld [vmem:[%s3532 + $0x50] sm:$0xf]
  %v3554 = vld [vmem:[%s3532 + $0x54] sm:$0xf]
  %v3555 = vld [vmem:[%s3532 + $0x58] sm:$0xf]
  %v3556 = vld [vmem:[%s3532 + $0x5c] sm:$0xf]
  %v3557 = vld [vmem:[%s3532 + $0x60] sm:$0xf]
  %v3558 = vld [vmem:[%s3532 + $0x64] sm:$0xf]
  %v3559 = vld [vmem:[%s3532 + $0x68] sm:$0xf]
  %v3560 = vld [vmem:[%s3532 + $0x6c] sm:$0xf]
  %v3561 = vld [vmem:[%s3532 + $0x70] sm:$0xf]
  %v3562 = vld [vmem:[%s3532 + $0x74] sm:$0xf]
  %v3563 = vld [vmem:[%s3532 + $0x78] sm:$0xf]
  %v3564 = vld [vmem:[%s3532 + $0x7c] sm:$0xf]
  %v3597 = vunpack.c.l.b16 %v3533
  %v3598 = vunpack.c.l.b16 %v3534
  %v3599 = vunpack.c.l.b16 %v3535
  %v3600 = vunpack.c.l.b16 %v3536
  %v3601 = vunpack.c.l.b16 %v3537
  %v3602 = vunpack.c.l.b16 %v3538
  %v3603 = vunpack.c.l.b16 %v3539
  %v3604 = vunpack.c.l.b16 %v3540
  %v3605 = vunpack.c.l.b16 %v3541
  %v3606 = vunpack.c.l.b16 %v3542
  %v3607 = vunpack.c.l.b16 %v3543
  %v3608 = vunpack.c.l.b16 %v3544
  %v3609 = vunpack.c.l.b16 %v3545
  %v3610 = vunpack.c.l.b16 %v3546
  %v3611 = vunpack.c.l.b16 %v3547
  %v3612 = vunpack.c.l.b16 %v3548
  %v3613 = vunpack.c.l.b16 %v3549
  %v3614 = vunpack.c.l.b16 %v3550
  %v3615 = vunpack.c.l.b16 %v3551
  %v3616 = vunpack.c.l.b16 %v3552
  %v3617 = vunpack.c.l.b16 %v3553
  %v3618 = vunpack.c.l.b16 %v3554
  %v3619 = vunpack.c.l.b16 %v3555
  %v3620 = vunpack.c.l.b16 %v3556
  %v3621 = vunpack.c.l.b16 %v3557
  %v3622 = vunpack.c.l.b16 %v3558
  %v3623 = vunpack.c.l.b16 %v3559
  %v3624 = vunpack.c.l.b16 %v3560
  %v3625 = vunpack.c.l.b16 %v3561
  %v3626 = vunpack.c.l.b16 %v3562
  %v3627 = vunpack.c.l.b16 %v3563
  %v3628 = vunpack.c.l.b16 %v3564
  %v3629 = vpack.c.b16 %v3598, %v3597
  %v3630 = vpack.c.b16 %v3600, %v3599
  %v3631 = vpack.c.b16 %v3602, %v3601
  %v3632 = vpack.c.b16 %v3604, %v3603
  %v3633 = vpack.c.b16 %v3606, %v3605
  %v3634 = vpack.c.b16 %v3608, %v3607
  %v3635 = vpack.c.b16 %v3610, %v3609
  %v3636 = vpack.c.b16 %v3612, %v3611
  %v3637 = vpack.c.b16 %v3614, %v3613
  %v3638 = vpack.c.b16 %v3616, %v3615
  %v3639 = vpack.c.b16 %v3618, %v3617
  %v3640 = vpack.c.b16 %v3620, %v3619
  %v3641 = vpack.c.b16 %v3622, %v3621
  %v3642 = vpack.c.b16 %v3624, %v3623
  %v3643 = vpack.c.b16 %v3626, %v3625
  %v3644 = vpack.c.b16 %v3628, %v3627
  %3661 = vmatprep.subr.bf16.mxu0 0
  %3662 = vmatpush1.bf16.msra.mxu0 %v3629
  %3663 = vmatprep.subr.bf16.mxu0 0
  %3664 = vmatpush1.bf16.msra.mxu0 %v3630
  %3665 = vmatprep.subr.bf16.mxu0 0
  %3666 = vmatpush1.bf16.msra.mxu0 %v3631
  %3667 = vmatprep.subr.bf16.mxu0 0
  %3668 = vmatpush1.bf16.msra.mxu0 %v3632
  %3669 = vmatprep.subr.bf16.mxu0 0
  %3670 = vmatpush1.bf16.msra.mxu0 %v3633
  %3671 = vmatprep.subr.bf16.mxu0 0
  %3672 = vmatpush1.bf16.msra.mxu0 %v3634
  %3673 = vmatprep.subr.bf16.mxu0 0
  %3674 = vmatpush1.bf16.msra.mxu0 %v3635
  %3675 = vmatprep.subr.bf16.mxu0 0
  %3676 = vmatpush1.bf16.msra.mxu0 %v3636
  %3677 = vmatprep.subr.bf16.mxu0 0
  %3678 = vmatpush1.bf16.msra.mxu0 %v3637
  %3679 = vmatprep.subr.bf16.mxu0 0
  %3680 = vmatpush1.bf16.msra.mxu0 %v3638
  %3681 = vmatprep.subr.bf16.mxu0 0
  %3682 = vmatpush1.bf16.msra.mxu0 %v3639
  %3683 = vmatprep.subr.bf16.mxu0 0
  %3684 = vmatpush1.bf16.msra.mxu0 %v3640
  %3685 = vmatprep.subr.bf16.mxu0 0
  %3686 = vmatpush1.bf16.msra.mxu0 %v3641
  %3687 = vmatprep.subr.bf16.mxu0 0
  %3688 = vmatpush1.bf16.msra.mxu0 %v3642
  %3689 = vmatprep.subr.bf16.mxu0 0
  %3690 = vmatpush1.bf16.msra.mxu0 %v3643
  %3691 = vmatprep.subr.bf16.mxu0 0
  %3692 = vmatpush1.bf16.msra.mxu0 %v3644
  %3693 = vmatprep.mubr.bf16.mxu0 %v3531
  %3694 = vmatmul.mubr.bf16.gmra.mrb[0].mxu0 %v3530
  %v3695 = vpop.f32.mrb[0].mxu0
  %v3696 = vadd.f32 0.0, %v3695
  %v3697 = vpop.f32.mrb[0].mxu0
  %v3698 = vpop.f32.mrb[0].mxu0
  %v3699 = vadd.f32 0.0, %v3698
  %v3700 = vpop.f32.mrb[0].mxu0
  %3701 = vdwg.mxu0
  %v3702 = vsel %vm42, %v3696, 0.0
  %v3703 = vsel %vm42, %v3699, 0.0
  %v3704 = vadd.f32 %v3702, %v3703
  %v3705 = vrot.slane %v3704, 4
  %v3706 = vadd.f32 %v3704, %v3705
  %v3707 = vrot.slane %v3706, 2
  %v3708 = vadd.f32 %v3706, %v3707
  %v3709 = vrot.slane %v3708, 1
  %v3710 = vadd.f32 %v3708, %v3709
  %v3711 = vmul.f32 %v3710, 0.0625
  %v3712 = vmul.f32 %v3696, %v3696
  %v3713 = vmul.f32 %v3699, %v3699
  %v3714 = vsel %vm42, %v3712, 0.0
  %v3715 = vsel %vm42, %v3713, 0.0
  %v3716 = vadd.f32 %v3714, %v3715
  %v3717 = vrot.slane %v3716, 4
  %v3718 = vadd.f32 %v3716, %v3717
  %v3719 = vrot.slane %v3718, 2
  %v3720 = vadd.f32 %v3718, %v3719
  %v3721 = vrot.slane %v3720, 1
  %v3722 = vadd.f32 %v3720, %v3721
  %v3723 = vmul.f32 %v3722, 0.0625
  %v3724 = vmul.f32 %v3711, %v3711
  %v3725 = vsub.f32 %v3723, %v3724
  %v3726 = vsub.f32 %v3696, %v3711
  %v3727 = vsub.f32 %v3699, %v3711
  %v3728 = vadd.f32 %v3725, 1e-05
  %v3729 = vrsqrt.pop %v3728
  %v3730 = vmul.f32 %v3726, %v3729
  %v3731 = vmul.f32 %v3727, %v3729
  %v3732 = vmul.f32 %v3730, 0.5
  %v3733 = vmul.f32 %v3731, 0.5
  %v3734 = vtanh.pop %v3732
  %v3735 = vtanh.pop %v3733
  %v3736 = vadd.f32 %v3734, 1.0
  %v3737 = vadd.f32 %v3735, 1.0
  %v3738 = vmul.f32 %v3736, 0.5
  %v3739 = vmul.f32 %v3737, 0.5
  %v3740 = vsub.f32 %v3738, %v21
  %v3741 = vsub.f32 %v3739, %v22
  %v3742 = vmul.f32 %v3740, %v3740
  %v3743 = vmul.f32 %v3741, %v3741
  %v3744 = vsel %vm42, %v3742, 0.0
  %v3745 = vsel %vm42, %v3743, 0.0
  %v3746 = vadd.f32 %v3744, %v3745
  %3747 = vadd.xlane.f32.xlu0 %v3746
  %v3748 = vpop.xlane.xlu0 %3747
  %v3749 = vrot.slane %v3748, 4
  %v3750 = vadd.f32 %v3748, %v3749
  %v3751 = vrot.slane %v3750, 2
  %v3752 = vadd.f32 %v3750, %v3751
  %v3753 = vrot.slane %v3752, 1
  %v3754 = vadd.f32 %v3752, %v3753
  %s3755 = vtos %v3754
  %vm3756 = vcmp.eq.s32.totalorder %v25, 5
  %v3757 = vstv %s3755
  %v3758 = vsel %vm3756, %v3757, %v3136
  %s3759 = scalar_lea.vmem %s1, 96
  %v3760 = vld [vmem:[%s3759] sm:$0xf]
  %v3761 = vld [vmem:[%s3759 + $0x4] sm:$0xf]
  %v3762 = vld [vmem:[%s3759 + $0x8] sm:$0xf]
  %v3763 = vld [vmem:[%s3759 + $0xc] sm:$0xf]
  %v3768 = vunpack.c.l.b16 %v3760
  %v3769 = vunpack.c.l.b16 %v3761
  %v3770 = vunpack.c.l.b16 %v3762
  %v3771 = vunpack.c.l.b16 %v3763
  %v3772 = vpack.c.b16 %v3769, %v3768
  %v3773 = vpack.c.b16 %v3771, %v3770
  %3776 = vmatprep.subr.bf16.mxu0 0
  %3777 = vmatpush1.bf16.msra.mxu0 %v3772
  %3778 = vmatprep.subr.bf16.mxu0 0
  %3779 = vmatpush1.bf16.msra.mxu0 %v3773
  %3780 = vmatprep.subr.bf16.mxu0 0
  %3781 = vmatpush1.bf16.msra.mxu0 0
  %3782 = vmatprep.subr.bf16.mxu0 0
  %3783 = vmatpush1.bf16.msra.mxu0 0
  %3784 = vmatprep.subr.bf16.mxu0 0
  %3785 = vmatpush1.bf16.msra.mxu0 0
  %3786 = vmatprep.subr.bf16.mxu0 0
  %3787 = vmatpush1.bf16.msra.mxu0 0
  %3788 = vmatprep.subr.bf16.mxu0 0
  %3789 = vmatpush1.bf16.msra.mxu0 0
  %3790 = vmatprep.subr.bf16.mxu0 0
  %3791 = vmatpush1.bf16.msra.mxu0 0
  %3792 = vmatprep.subr.bf16.mxu0 0
  %3793 = vmatpush1.bf16.msra.mxu0 0
  %3794 = vmatprep.subr.bf16.mxu0 0
  %3795 = vmatpush1.bf16.msra.mxu0 0
  %3796 = vmatprep.subr.bf16.mxu0 0
  %3797 = vmatpush1.bf16.msra.mxu0 0
  %3798 = vmatprep.subr.bf16.mxu0 0
  %3799 = vmatpush1.bf16.msra.mxu0 0
  %3800 = vmatprep.subr.bf16.mxu0 0
  %3801 = vmatpush1.bf16.msra.mxu0 0
  %3802 = vmatprep.subr.bf16.mxu0 0
  %3803 = vmatpush1.bf16.msra.mxu0 0
  %3804 = vmatprep.subr.bf16.mxu0 0
  %3805 = vmatpush1.bf16.msra.mxu0 0
  %3806 = vmatprep.subr.bf16.mxu0 0
  %3807 = vmatpush1.bf16.msra.mxu0 0
  %3808 = vmatprep.mubr.bf16.mxu0 0
  %3809 = vmatmul.mubr.bf16.gmra.mrb[0].mxu0 %v44
  %v3810 = vpop.f32.mrb[0].mxu0
  %v3811 = vadd.f32 0.0, %v3810
  %v3812 = vpop.f32.mrb[0].mxu0
  %v3813 = vpop.f32.mrb[0].mxu0
  %v3814 = vadd.f32 0.0, %v3813
  %v3815 = vpop.f32.mrb[0].mxu0
  %3816 = vdwg.mxu0
  %v3817 = vsel %vm87, %v3811, 0.0
  %v3818 = vsel %vm87, %v3814, 0.0
  %v3819 = vadd.f32 %v3817, %v3818
  %v3820 = vrot.slane %v3819, 4
  %v3821 = vadd.f32 %v3819, %v3820
  %v3822 = vrot.slane %v3821, 2
  %v3823 = vadd.f32 %v3821, %v3822
  %v3824 = vrot.slane %v3823, 1
  %v3825 = vadd.f32 %v3823, %v3824
  %v3826 = vmul.f32 %v3825, 0.0625
  %v3827 = vmul.f32 %v3811, %v3811
  %v3828 = vmul.f32 %v3814, %v3814
  %v3829 = vsel %vm87, %v3827, 0.0
  %v3830 = vsel %vm87, %v3828, 0.0
  %v3831 = vadd.f32 %v3829, %v3830
  %v3832 = vrot.slane %v3831, 4
  %v3833 = vadd.f32 %v3831, %v3832
  %v3834 = vrot.slane %v3833, 2
  %v3835 = vadd.f32 %v3833, %v3834
  %v3836 = vrot.slane %v3835, 1
  %v3837 = vadd.f32 %v3835, %v3836
  %v3838 = vmul.f32 %v3837, 0.0625
  %v3839 = vmul.f32 %v3826, %v3826
  %v3840 = vsub.f32 %v3838, %v3839
  %v3841 = vsub.f32 %v3811, %v3826
  %v3842 = vsub.f32 %v3814, %v3826
  %v3843 = vadd.f32 %v3840, 1e-05
  %v3844 = vrsqrt.pop %v3843
  %v3845 = vmul.f32 %v3841, %v3844
  %v3846 = vmul.f32 %v3842, %v3844
  %v3847 = vmax.f32 %v3845, 0.0
  %v3848 = vmax.f32 %v3846, 0.0
  %v3849 = vpack.c.bf16 %v3848, %v3847
  %s3850 = scalar_lea.vmem %s2, 192
  %v3851 = vld [vmem:[%s3850] sm:$0xf]
  %v3852 = vld [vmem:[%s3850 + $0x4] sm:$0xf]
  %v3853 = vld [vmem:[%s3850 + $0x8] sm:$0xf]
  %v3854 = vld [vmem:[%s3850 + $0xc] sm:$0xf]
  %v3855 = vld [vmem:[%s3850 + $0x10] sm:$0xf]
  %v3856 = vld [vmem:[%s3850 + $0x14] sm:$0xf]
  %v3857 = vld [vmem:[%s3850 + $0x18] sm:$0xf]
  %v3858 = vld [vmem:[%s3850 + $0x1c] sm:$0xf]
  %v3867 = vunpack.c.l.b16 %v3851
  %v3868 = vunpack.c.l.b16 %v3852
  %v3869 = vunpack.c.l.b16 %v3853
  %v3870 = vunpack.c.l.b16 %v3854
  %v3871 = vunpack.c.l.b16 %v3855
  %v3872 = vunpack.c.l.b16 %v3856
  %v3873 = vunpack.c.l.b16 %v3857
  %v3874 = vunpack.c.l.b16 %v3858
  %v3875 = vpack.c.b16 %v3868, %v3867
  %v3876 = vpack.c.b16 %v3870, %v3869
  %v3877 = vpack.c.b16 %v3872, %v3871
  %v3878 = vpack.c.b16 %v3874, %v3873
  %v3884 = vsel %vm87, %v3849, 0
  %3886 = vmatprep.subr.bf16.mxu0 0
  %3887 = vmatpush1.bf16.msra.mxu0 %v3875
  %3888 = vmatprep.subr.bf16.mxu0 0
  %3889 = vmatpush1.bf16.msra.mxu0 %v3876
  %3890 = vmatprep.subr.bf16.mxu0 0
  %3891 = vmatpush1.bf16.msra.mxu0 %v3877
  %3892 = vmatprep.subr.bf16.mxu0 0
  %3893 = vmatpush1.bf16.msra.mxu0 %v3878
  %3894 = vmatprep.subr.bf16.mxu0 0
  %3895 = vmatpush1.bf16.msra.mxu0 0
  %3896 = vmatprep.subr.bf16.mxu0 0
  %3897 = vmatpush1.bf16.msra.mxu0 0
  %3898 = vmatprep.subr.bf16.mxu0 0
  %3899 = vmatpush1.bf16.msra.mxu0 0
  %3900 = vmatprep.subr.bf16.mxu0 0
  %3901 = vmatpush1.bf16.msra.mxu0 0
  %3902 = vmatprep.subr.bf16.mxu0 0
  %3903 = vmatpush1.bf16.msra.mxu0 0
  %3904 = vmatprep.subr.bf16.mxu0 0
  %3905 = vmatpush1.bf16.msra.mxu0 0
  %3906 = vmatprep.subr.bf16.mxu0 0
  %3907 = vmatpush1.bf16.msra.mxu0 0
  %3908 = vmatprep.subr.bf16.mxu0 0
  %3909 = vmatpush1.bf16.msra.mxu0 0
  %3910 = vmatprep.subr.bf16.mxu0 0
  %3911 = vmatpush1.bf16.msra.mxu0 0
  %3912 = vmatprep.subr.bf16.mxu0 0
  %3913 = vmatpush1.bf16.msra.mxu0 0
  %3914 = vmatprep.subr.bf16.mxu0 0
  %3915 = vmatpush1.bf16.msra.mxu0 0
  %3916 = vmatprep.subr.bf16.mxu0 0
  %3917 = vmatpush1.bf16.msra.mxu0 0
  %3918 = vmatprep.mubr.bf16.mxu0 0
  %3919 = vmatmul.mubr.bf16.gmra.mrb[0].mxu0 %v3884
  %v3920 = vpop.f32.mrb[0].mxu0
  %v3921 = vadd.f32 0.0, %v3920
  %v3922 = vpop.f32.mrb[0].mxu0
  %v3923 = vpop.f32.mrb[0].mxu0
  %v3924 = vadd.f32 0.0, %v3923
  %v3925 = vpop.f32.mrb[0].mxu0
  %3926 = vdwg.mxu0
  %v3927 = vadd.f32 %v3921, %v3924
  %v3928 = vrot.slane %v3927, 4
  %v3929 = vadd.f32 %v3927, %v3928
  %v3930 = vrot.slane %v3929, 2
  %v3931 = vadd.f32 %v3929, %v3930
  %v3932 = vrot.slane %v3931, 1
  %v3933 = vadd.f32 %v3931, %v3932
  %v3934 = vmul.f32 %v3933, 0.0625
  %v3935 = vmul.f32 %v3921, %v3921
  %v3936 = vmul.f32 %v3924, %v3924
  %v3937 = vadd.f32 %v3935, %v3936
  %v3938 = vrot.slane %v3937, 4
  %v3939 = vadd.f32 %v3937, %v3938
  %v3940 = vrot.slane %v3939, 2
  %v3941 = vadd.f32 %v3939, %v3940
  %v3942 = vrot.slane %v3941, 1
  %v3943 = vadd.f32 %v3941, %v3942
  %v3944 = vmul.f32 %v3943, 0.0625
  %v3945 = vmul.f32 %v3934, %v3934
  %v3946 = vsub.f32 %v3944, %v3945
  %v3947 = vsub.f32 %v3921, %v3934
  %v3948 = vsub.f32 %v3924, %v3934
  %v3949 = vadd.f32 %v3946, 1e-05
  %v3950 = vrsqrt.pop %v3949
  %v3951 = vmul.f32 %v3947, %v3950
  %v3952 = vmul.f32 %v3948, %v3950
  %v3953 = vmax.f32 %v3951, 0.0
  %v3954 = vmax.f32 %v3952, 0.0
  %v3955 = vpack.c.bf16 %v3954, %v3953
  %s3956 = scalar_lea.vmem %s3, 768
  %v3957 = vld [vmem:[%s3956] sm:$0xff]
  %v3958 = vld [vmem:[%s3956 + $0x8] sm:$0xff]
  %v3959 = vld [vmem:[%s3956 + $0x10] sm:$0xff]
  %v3960 = vld [vmem:[%s3956 + $0x18] sm:$0xff]
  %v3961 = vld [vmem:[%s3956 + $0x20] sm:$0xff]
  %v3962 = vld [vmem:[%s3956 + $0x28] sm:$0xff]
  %v3963 = vld [vmem:[%s3956 + $0x30] sm:$0xff]
  %v3964 = vld [vmem:[%s3956 + $0x38] sm:$0xff]
  %v3965 = vld [vmem:[%s3956 + $0x40] sm:$0xff]
  %v3966 = vld [vmem:[%s3956 + $0x48] sm:$0xff]
  %v3967 = vld [vmem:[%s3956 + $0x50] sm:$0xff]
  %v3968 = vld [vmem:[%s3956 + $0x58] sm:$0xff]
  %v3969 = vld [vmem:[%s3956 + $0x60] sm:$0xff]
  %v3970 = vld [vmem:[%s3956 + $0x68] sm:$0xff]
  %v3971 = vld [vmem:[%s3956 + $0x70] sm:$0xff]
  %v3972 = vld [vmem:[%s3956 + $0x78] sm:$0xff]
  %v3989 = vunpack.c.l.b16 %v3957
  %v3990 = vunpack.c.h.b16 %v3957
  %v3991 = vunpack.c.l.b16 %v3958
  %v3992 = vunpack.c.h.b16 %v3958
  %v3993 = vunpack.c.l.b16 %v3959
  %v3994 = vunpack.c.h.b16 %v3959
  %v3995 = vunpack.c.l.b16 %v3960
  %v3996 = vunpack.c.h.b16 %v3960
  %v3997 = vunpack.c.l.b16 %v3961
  %v3998 = vunpack.c.h.b16 %v3961
  %v3999 = vunpack.c.l.b16 %v3962
  %v4000 = vunpack.c.h.b16 %v3962
  %v4001 = vunpack.c.l.b16 %v3963
  %v4002 = vunpack.c.h.b16 %v3963
  %v4003 = vunpack.c.l.b16 %v3964
  %v4004 = vunpack.c.h.b16 %v3964
  %v4005 = vunpack.c.l.b16 %v3965
  %v4006 = vunpack.c.h.b16 %v3965
  %v4007 = vunpack.c.l.b16 %v3966
  %v4008 = vunpack.c.h.b16 %v3966
  %v4009 = vunpack.c.l.b16 %v3967
  %v4010 = vunpack.c.h.b16 %v3967
  %v4011 = vunpack.c.l.b16 %v3968
  %v4012 = vunpack.c.h.b16 %v3968
  %v4013 = vunpack.c.l.b16 %v3969
  %v4014 = vunpack.c.h.b16 %v3969
  %v4015 = vunpack.c.l.b16 %v3970
  %v4016 = vunpack.c.h.b16 %v3970
  %v4017 = vunpack.c.l.b16 %v3971
  %v4018 = vunpack.c.h.b16 %v3971
  %v4019 = vunpack.c.l.b16 %v3972
  %v4020 = vunpack.c.h.b16 %v3972
  %v4021 = vpack.c.b16 %v3991, %v3989
  %v4022 = vpack.c.b16 %v3992, %v3990
  %v4023 = vpack.c.b16 %v3995, %v3993
  %v4024 = vpack.c.b16 %v3996, %v3994
  %v4025 = vpack.c.b16 %v3999, %v3997
  %v4026 = vpack.c.b16 %v4000, %v3998
  %v4027 = vpack.c.b16 %v4003, %v4001
  %v4028 = vpack.c.b16 %v4004, %v4002
  %v4029 = vpack.c.b16 %v4007, %v4005
  %v4030 = vpack.c.b16 %v4008, %v4006
  %v4031 = vpack.c.b16 %v4011, %v4009
  %v4032 = vpack.c.b16 %v4012, %v4010
  %v4033 = vpack.c.b16 %v4015, %v4013
  %v4034 = vpack.c.b16 %v4016, %v4014
  %v4035 = vpack.c.b16 %v4019, %v4017
  %v4036 = vpack.c.b16 %v4020, %v4018
  %4053 = vmatprep.subr.bf16.mxu0 %v4022
  %4054 = vmatpush1.bf16.msra.mxu0 %v4021
  %4055 = vmatprep.subr.bf16.mxu0 %v4024
  %4056 = vmatpush1.bf16.msra.mxu0 %v4023
  %4057 = vmatprep.subr.bf16.mxu0 %v4026
  %4058 = vmatpush1.bf16.msra.mxu0 %v4025
  %4059 = vmatprep.subr.bf16.mxu0 %v4028
  %4060 = vmatpush1.bf16.msra.mxu0 %v4027
  %4061 = vmatprep.subr.bf16.mxu0 %v4030
  %4062 = vmatpush1.bf16.msra.mxu0 %v4029
  %4063 = vmatprep.subr.bf16.mxu0 %v4032
  %4064 = vmatpush1.bf16.msra.mxu0 %v4031
  %4065 = vmatprep.subr.bf16.mxu0 %v4034
  %4066 = vmatpush1.bf16.msra.mxu0 %v4033
  %4067 = vmatprep.subr.bf16.mxu0 %v4036
  %4068 = vmatpush1.bf16.msra.mxu0 %v4035
  %4069 = vmatprep.subr.bf16.mxu0 0
  %4070 = vmatpush1.bf16.msra.mxu0 0
  %4071 = vmatprep.subr.bf16.mxu0 0
  %4072 = vmatpush1.bf16.msra.mxu0 0
  %4073 = vmatprep.subr.bf16.mxu0 0
  %4074 = vmatpush1.bf16.msra.mxu0 0
  %4075 = vmatprep.subr.bf16.mxu0 0
  %4076 = vmatpush1.bf16.msra.mxu0 0
  %4077 = vmatprep.subr.bf16.mxu0 0
  %4078 = vmatpush1.bf16.msra.mxu0 0
  %4079 = vmatprep.subr.bf16.mxu0 0
  %4080 = vmatpush1.bf16.msra.mxu0 0
  %4081 = vmatprep.subr.bf16.mxu0 0
  %4082 = vmatpush1.bf16.msra.mxu0 0
  %4083 = vmatprep.subr.bf16.mxu0 0
  %4084 = vmatpush1.bf16.msra.mxu0 0
  %4085 = vmatprep.mubr.bf16.mxu0 0
  %4086 = vmatmul.mubr.bf16.gmra.mrb[0].mxu0 %v3955
  %v4087 = vpop.f32.mrb[0].mxu0
  %v4088 = vadd.f32 0.0, %v4087
  %v4089 = vpop.f32.mrb[0].mxu0
  %v4090 = vadd.f32 0.0, %v4089
  %v4091 = vpop.f32.mrb[0].mxu0
  %v4092 = vadd.f32 0.0, %v4091
  %v4093 = vpop.f32.mrb[0].mxu0
  %v4094 = vadd.f32 0.0, %v4093
  %4095 = vdwg.mxu0
  %v4096 = vadd.f32 %v4088, %v4092
  %v4097 = vrot.slane %v4096, 4
  %v4098 = vadd.f32 %v4096, %v4097
  %v4099 = vrot.slane %v4098, 2
  %v4100 = vadd.f32 %v4098, %v4099
  %v4101 = vrot.slane %v4100, 1
  %v4102 = vadd.f32 %v4100, %v4101
  %v4103 = vadd.f32 %v4090, %v4094
  %v4104 = vrot.slane %v4103, 4
  %v4105 = vadd.f32 %v4103, %v4104
  %v4106 = vrot.slane %v4105, 2
  %v4107 = vadd.f32 %v4105, %v4106
  %v4108 = vrot.slane %v4107, 1
  %v4109 = vadd.f32 %v4107, %v4108
  %v4110 = vmul.f32 %v4102, 0.0625
  %v4111 = vmul.f32 %v4109, 0.0625
  %v4112 = vmul.f32 %v4088, %v4088
  %v4113 = vmul.f32 %v4090, %v4090
  %v4114 = vmul.f32 %v4092, %v4092
  %v4115 = vmul.f32 %v4094, %v4094
  %v4116 = vadd.f32 %v4112, %v4114
  %v4117 = vrot.slane %v4116, 4
  %v4118 = vadd.f32 %v4116, %v4117
  %v4119 = vrot.slane %v4118, 2
  %v4120 = vadd.f32 %v4118, %v4119
  %v4121 = vrot.slane %v4120, 1
  %v4122 = vadd.f32 %v4120, %v4121
  %v4123 = vadd.f32 %v4113, %v4115
  %v4124 = vrot.slane %v4123, 4
  %v4125 = vadd.f32 %v4123, %v4124
  %v4126 = vrot.slane %v4125, 2
  %v4127 = vadd.f32 %v4125, %v4126
  %v4128 = vrot.slane %v4127, 1
  %v4129 = vadd.f32 %v4127, %v4128
  %v4130 = vmul.f32 %v4122, 0.0625
  %v4131 = vmul.f32 %v4129, 0.0625
  %v4132 = vmul.f32 %v4110, %v4110
  %v4133 = vmul.f32 %v4111, %v4111
  %v4134 = vsub.f32 %v4130, %v4132
  %v4135 = vsub.f32 %v4131, %v4133
  %v4136 = vsub.f32 %v4088, %v4110
  %v4137 = vsub.f32 %v4090, %v4111
  %v4138 = vsub.f32 %v4092, %v4110
  %v4139 = vsub.f32 %v4094, %v4111
  %v4140 = vadd.f32 %v4134, 1e-05
  %v4141 = vadd.f32 %v4135, 1e-05
  %v4142 = vrsqrt.pop %v4140
  %v4143 = vrsqrt.pop %v4141
  %v4144 = vmul.f32 %v4136, %v4142
  %v4145 = vmul.f32 %v4137, %v4143
  %v4146 = vmul.f32 %v4138, %v4142
  %v4147 = vmul.f32 %v4139, %v4143
  %v4148 = vmax.f32 %v4144, 0.0
  %v4149 = vmax.f32 %v4145, 0.0
  %v4150 = vmax.f32 %v4146, 0.0
  %v4151 = vmax.f32 %v4147, 0.0
  %v4152 = vpack.c.bf16 %v4150, %v4148
  %v4153 = vpack.c.bf16 %v4151, %v4149
  %s4154 = scalar_lea.vmem %s4, 768
  %v4155 = vld [vmem:[%s4154] sm:$0xf]
  %v4156 = vld [vmem:[%s4154 + $0x4] sm:$0xf]
  %v4157 = vld [vmem:[%s4154 + $0x8] sm:$0xf]
  %v4158 = vld [vmem:[%s4154 + $0xc] sm:$0xf]
  %v4159 = vld [vmem:[%s4154 + $0x10] sm:$0xf]
  %v4160 = vld [vmem:[%s4154 + $0x14] sm:$0xf]
  %v4161 = vld [vmem:[%s4154 + $0x18] sm:$0xf]
  %v4162 = vld [vmem:[%s4154 + $0x1c] sm:$0xf]
  %v4163 = vld [vmem:[%s4154 + $0x20] sm:$0xf]
  %v4164 = vld [vmem:[%s4154 + $0x24] sm:$0xf]
  %v4165 = vld [vmem:[%s4154 + $0x28] sm:$0xf]
  %v4166 = vld [vmem:[%s4154 + $0x2c] sm:$0xf]
  %v4167 = vld [vmem:[%s4154 + $0x30] sm:$0xf]
  %v4168 = vld [vmem:[%s4154 + $0x34] sm:$0xf]
  %v4169 = vld [vmem:[%s4154 + $0x38] sm:$0xf]
  %v4170 = vld [vmem:[%s4154 + $0x3c] sm:$0xf]
  %v4171 = vld [vmem:[%s4154 + $0x40] sm:$0xf]
  %v4172 = vld [vmem:[%s4154 + $0x44] sm:$0xf]
  %v4173 = vld [vmem:[%s4154 + $0x48] sm:$0xf]
  %v4174 = vld [vmem:[%s4154 + $0x4c] sm:$0xf]
  %v4175 = vld [vmem:[%s4154 + $0x50] sm:$0xf]
  %v4176 = vld [vmem:[%s4154 + $0x54] sm:$0xf]
  %v4177 = vld [vmem:[%s4154 + $0x58] sm:$0xf]
  %v4178 = vld [vmem:[%s4154 + $0x5c] sm:$0xf]
  %v4179 = vld [vmem:[%s4154 + $0x60] sm:$0xf]
  %v4180 = vld [vmem:[%s4154 + $0x64] sm:$0xf]
  %v4181 = vld [vmem:[%s4154 + $0x68] sm:$0xf]
  %v4182 = vld [vmem:[%s4154 + $0x6c] sm:$0xf]
  %v4183 = vld [vmem:[%s4154 + $0x70] sm:$0xf]
  %v4184 = vld [vmem:[%s4154 + $0x74] sm:$0xf]
  %v4185 = vld [vmem:[%s4154 + $0x78] sm:$0xf]
  %v4186 = vld [vmem:[%s4154 + $0x7c] sm:$0xf]
  %v4219 = vunpack.c.l.b16 %v4155
  %v4220 = vunpack.c.l.b16 %v4156
  %v4221 = vunpack.c.l.b16 %v4157
  %v4222 = vunpack.c.l.b16 %v4158
  %v4223 = vunpack.c.l.b16 %v4159
  %v4224 = vunpack.c.l.b16 %v4160
  %v4225 = vunpack.c.l.b16 %v4161
  %v4226 = vunpack.c.l.b16 %v4162
  %v4227 = vunpack.c.l.b16 %v4163
  %v4228 = vunpack.c.l.b16 %v4164
  %v4229 = vunpack.c.l.b16 %v4165
  %v4230 = vunpack.c.l.b16 %v4166
  %v4231 = vunpack.c.l.b16 %v4167
  %v4232 = vunpack.c.l.b16 %v4168
  %v4233 = vunpack.c.l.b16 %v4169
  %v4234 = vunpack.c.l.b16 %v4170
  %v4235 = vunpack.c.l.b16 %v4171
  %v4236 = vunpack.c.l.b16 %v4172
  %v4237 = vunpack.c.l.b16 %v4173
  %v4238 = vunpack.c.l.b16 %v4174
  %v4239 = vunpack.c.l.b16 %v4175
  %v4240 = vunpack.c.l.b16 %v4176
  %v4241 = vunpack.c.l.b16 %v4177
  %v4242 = vunpack.c.l.b16 %v4178
  %v4243 = vunpack.c.l.b16 %v4179
  %v4244 = vunpack.c.l.b16 %v4180
  %v4245 = vunpack.c.l.b16 %v4181
  %v4246 = vunpack.c.l.b16 %v4182
  %v4247 = vunpack.c.l.b16 %v4183
  %v4248 = vunpack.c.l.b16 %v4184
  %v4249 = vunpack.c.l.b16 %v4185
  %v4250 = vunpack.c.l.b16 %v4186
  %v4251 = vpack.c.b16 %v4220, %v4219
  %v4252 = vpack.c.b16 %v4222, %v4221
  %v4253 = vpack.c.b16 %v4224, %v4223
  %v4254 = vpack.c.b16 %v4226, %v4225
  %v4255 = vpack.c.b16 %v4228, %v4227
  %v4256 = vpack.c.b16 %v4230, %v4229
  %v4257 = vpack.c.b16 %v4232, %v4231
  %v4258 = vpack.c.b16 %v4234, %v4233
  %v4259 = vpack.c.b16 %v4236, %v4235
  %v4260 = vpack.c.b16 %v4238, %v4237
  %v4261 = vpack.c.b16 %v4240, %v4239
  %v4262 = vpack.c.b16 %v4242, %v4241
  %v4263 = vpack.c.b16 %v4244, %v4243
  %v4264 = vpack.c.b16 %v4246, %v4245
  %v4265 = vpack.c.b16 %v4248, %v4247
  %v4266 = vpack.c.b16 %v4250, %v4249
  %4283 = vmatprep.subr.bf16.mxu0 0
  %4284 = vmatpush1.bf16.msra.mxu0 %v4251
  %4285 = vmatprep.subr.bf16.mxu0 0
  %4286 = vmatpush1.bf16.msra.mxu0 %v4252
  %4287 = vmatprep.subr.bf16.mxu0 0
  %4288 = vmatpush1.bf16.msra.mxu0 %v4253
  %4289 = vmatprep.subr.bf16.mxu0 0
  %4290 = vmatpush1.bf16.msra.mxu0 %v4254
  %4291 = vmatprep.subr.bf16.mxu0 0
  %4292 = vmatpush1.bf16.msra.mxu0 %v4255
  %4293 = vmatprep.subr.bf16.mxu0 0
  %4294 = vmatpush1.bf16.msra.mxu0 %v4256
  %4295 = vmatprep.subr.bf16.mxu0 0
  %4296 = vmatpush1.bf16.msra.mxu0 %v4257
  %4297 = vmatprep.subr.bf16.mxu0 0
  %4298 = vmatpush1.bf16.msra.mxu0 %v4258
  %4299 = vmatprep.subr.bf16.mxu0 0
  %4300 = vmatpush1.bf16.msra.mxu0 %v4259
  %4301 = vmatprep.subr.bf16.mxu0 0
  %4302 = vmatpush1.bf16.msra.mxu0 %v4260
  %4303 = vmatprep.subr.bf16.mxu0 0
  %4304 = vmatpush1.bf16.msra.mxu0 %v4261
  %4305 = vmatprep.subr.bf16.mxu0 0
  %4306 = vmatpush1.bf16.msra.mxu0 %v4262
  %4307 = vmatprep.subr.bf16.mxu0 0
  %4308 = vmatpush1.bf16.msra.mxu0 %v4263
  %4309 = vmatprep.subr.bf16.mxu0 0
  %4310 = vmatpush1.bf16.msra.mxu0 %v4264
  %4311 = vmatprep.subr.bf16.mxu0 0
  %4312 = vmatpush1.bf16.msra.mxu0 %v4265
  %4313 = vmatprep.subr.bf16.mxu0 0
  %4314 = vmatpush1.bf16.msra.mxu0 %v4266
  %4315 = vmatprep.mubr.bf16.mxu0 %v4153
  %4316 = vmatmul.mubr.bf16.gmra.mrb[0].mxu0 %v4152
  %v4317 = vpop.f32.mrb[0].mxu0
  %v4318 = vadd.f32 0.0, %v4317
  %v4319 = vpop.f32.mrb[0].mxu0
  %v4320 = vpop.f32.mrb[0].mxu0
  %v4321 = vadd.f32 0.0, %v4320
  %v4322 = vpop.f32.mrb[0].mxu0
  %4323 = vdwg.mxu0
  %v4324 = vsel %vm42, %v4318, 0.0
  %v4325 = vsel %vm42, %v4321, 0.0
  %v4326 = vadd.f32 %v4324, %v4325
  %v4327 = vrot.slane %v4326, 4
  %v4328 = vadd.f32 %v4326, %v4327
  %v4329 = vrot.slane %v4328, 2
  %v4330 = vadd.f32 %v4328, %v4329
  %v4331 = vrot.slane %v4330, 1
  %v4332 = vadd.f32 %v4330, %v4331
  %v4333 = vmul.f32 %v4332, 0.0625
  %v4334 = vmul.f32 %v4318, %v4318
  %v4335 = vmul.f32 %v4321, %v4321
  %v4336 = vsel %vm42, %v4334, 0.0
  %v4337 = vsel %vm42, %v4335, 0.0
  %v4338 = vadd.f32 %v4336, %v4337
  %v4339 = vrot.slane %v4338, 4
  %v4340 = vadd.f32 %v4338, %v4339
  %v4341 = vrot.slane %v4340, 2
  %v4342 = vadd.f32 %v4340, %v4341
  %v4343 = vrot.slane %v4342, 1
  %v4344 = vadd.f32 %v4342, %v4343
  %v4345 = vmul.f32 %v4344, 0.0625
  %v4346 = vmul.f32 %v4333, %v4333
  %v4347 = vsub.f32 %v4345, %v4346
  %v4348 = vsub.f32 %v4318, %v4333
  %v4349 = vsub.f32 %v4321, %v4333
  %v4350 = vadd.f32 %v4347, 1e-05
  %v4351 = vrsqrt.pop %v4350
  %v4352 = vmul.f32 %v4348, %v4351
  %v4353 = vmul.f32 %v4349, %v4351
  %v4354 = vmul.f32 %v4352, 0.5
  %v4355 = vmul.f32 %v4353, 0.5
  %v4356 = vtanh.pop %v4354
  %v4357 = vtanh.pop %v4355
  %v4358 = vadd.f32 %v4356, 1.0
  %v4359 = vadd.f32 %v4357, 1.0
  %v4360 = vmul.f32 %v4358, 0.5
  %v4361 = vmul.f32 %v4359, 0.5
  %v4362 = vsub.f32 %v4360, %v21
  %v4363 = vsub.f32 %v4361, %v22
  %v4364 = vmul.f32 %v4362, %v4362
  %v4365 = vmul.f32 %v4363, %v4363
  %v4366 = vsel %vm42, %v4364, 0.0
  %v4367 = vsel %vm42, %v4365, 0.0
  %v4368 = vadd.f32 %v4366, %v4367
  %4369 = vadd.xlane.f32.xlu0 %v4368
  %v4370 = vpop.xlane.xlu0 %4369
  %v4371 = vrot.slane %v4370, 4
  %v4372 = vadd.f32 %v4370, %v4371
  %v4373 = vrot.slane %v4372, 2
  %v4374 = vadd.f32 %v4372, %v4373
  %v4375 = vrot.slane %v4374, 1
  %v4376 = vadd.f32 %v4374, %v4375
  %s4377 = vtos %v4376
  %vm4378 = vcmp.eq.s32.totalorder %v25, 6
  %v4379 = vstv %s4377
  %v4380 = vsel %vm4378, %v4379, %v3758
  %s4381 = scalar_lea.vmem %s1, 112
  %v4382 = vld [vmem:[%s4381] sm:$0xf]
  %v4383 = vld [vmem:[%s4381 + $0x4] sm:$0xf]
  %v4384 = vld [vmem:[%s4381 + $0x8] sm:$0xf]
  %v4385 = vld [vmem:[%s4381 + $0xc] sm:$0xf]
  %v4390 = vunpack.c.l.b16 %v4382
  %v4391 = vunpack.c.l.b16 %v4383
  %v4392 = vunpack.c.l.b16 %v4384
  %v4393 = vunpack.c.l.b16 %v4385
  %v4394 = vpack.c.b16 %v4391, %v4390
  %v4395 = vpack.c.b16 %v4393, %v4392
  %4398 = vmatprep.subr.bf16.mxu0 0
  %4399 = vmatpush1.bf16.msra.mxu0 %v4394
  %4400 = vmatprep.subr.bf16.mxu0 0
  %4401 = vmatpush1.bf16.msra.mxu0 %v4395
  %4402 = vmatprep.subr.bf16.mxu0 0
  %4403 = vmatpush1.bf16.msra.mxu0 0
  %4404 = vmatprep.subr.bf16.mxu0 0
  %4405 = vmatpush1.bf16.msra.mxu0 0
  %4406 = vmatprep.subr.bf16.mxu0 0
  %4407 = vmatpush1.bf16.msra.mxu0 0
  %4408 = vmatprep.subr.bf16.mxu0 0
  %4409 = vmatpush1.bf16.msra.mxu0 0
  %4410 = vmatprep.subr.bf16.mxu0 0
  %4411 = vmatpush1.bf16.msra.mxu0 0
  %4412 = vmatprep.subr.bf16.mxu0 0
  %4413 = vmatpush1.bf16.msra.mxu0 0
  %4414 = vmatprep.subr.bf16.mxu0 0
  %4415 = vmatpush1.bf16.msra.mxu0 0
  %4416 = vmatprep.subr.bf16.mxu0 0
  %4417 = vmatpush1.bf16.msra.mxu0 0
  %4418 = vmatprep.subr.bf16.mxu0 0
  %4419 = vmatpush1.bf16.msra.mxu0 0
  %4420 = vmatprep.subr.bf16.mxu0 0
  %4421 = vmatpush1.bf16.msra.mxu0 0
  %4422 = vmatprep.subr.bf16.mxu0 0
  %4423 = vmatpush1.bf16.msra.mxu0 0
  %4424 = vmatprep.subr.bf16.mxu0 0
  %4425 = vmatpush1.bf16.msra.mxu0 0
  %4426 = vmatprep.subr.bf16.mxu0 0
  %4427 = vmatpush1.bf16.msra.mxu0 0
  %4428 = vmatprep.subr.bf16.mxu0 0
  %4429 = vmatpush1.bf16.msra.mxu0 0
  %4430 = vmatprep.mubr.bf16.mxu0 0
  %4431 = vmatmul.mubr.bf16.gmra.mrb[0].mxu0 %v44
  %v4432 = vpop.f32.mrb[0].mxu0
  %v4433 = vadd.f32 0.0, %v4432
  %v4434 = vpop.f32.mrb[0].mxu0
  %v4435 = vpop.f32.mrb[0].mxu0
  %v4436 = vadd.f32 0.0, %v4435
  %v4437 = vpop.f32.mrb[0].mxu0
  %4438 = vdwg.mxu0
  %v4439 = vsel %vm87, %v4433, 0.0
  %v4440 = vsel %vm87, %v4436, 0.0
  %v4441 = vadd.f32 %v4439, %v4440
  %v4442 = vrot.slane %v4441, 4
  %v4443 = vadd.f32 %v4441, %v4442
  %v4444 = vrot.slane %v4443, 2
  %v4445 = vadd.f32 %v4443, %v4444
  %v4446 = vrot.slane %v4445, 1
  %v4447 = vadd.f32 %v4445, %v4446
  %v4448 = vmul.f32 %v4447, 0.0625
  %v4449 = vmul.f32 %v4433, %v4433
  %v4450 = vmul.f32 %v4436, %v4436
  %v4451 = vsel %vm87, %v4449, 0.0
  %v4452 = vsel %vm87, %v4450, 0.0
  %v4453 = vadd.f32 %v4451, %v4452
  %v4454 = vrot.slane %v4453, 4
  %v4455 = vadd.f32 %v4453, %v4454
  %v4456 = vrot.slane %v4455, 2
  %v4457 = vadd.f32 %v4455, %v4456
  %v4458 = vrot.slane %v4457, 1
  %v4459 = vadd.f32 %v4457, %v4458
  %v4460 = vmul.f32 %v4459, 0.0625
  %v4461 = vmul.f32 %v4448, %v4448
  %v4462 = vsub.f32 %v4460, %v4461
  %v4463 = vsub.f32 %v4433, %v4448
  %v4464 = vsub.f32 %v4436, %v4448
  %v4465 = vadd.f32 %v4462, 1e-05
  %v4466 = vrsqrt.pop %v4465
  %v4467 = vmul.f32 %v4463, %v4466
  %v4468 = vmul.f32 %v4464, %v4466
  %v4469 = vmax.f32 %v4467, 0.0
  %v4470 = vmax.f32 %v4468, 0.0
  %v4471 = vpack.c.bf16 %v4470, %v4469
  %s4472 = scalar_lea.vmem %s2, 224
  %v4473 = vld [vmem:[%s4472] sm:$0xf]
  %v4474 = vld [vmem:[%s4472 + $0x4] sm:$0xf]
  %v4475 = vld [vmem:[%s4472 + $0x8] sm:$0xf]
  %v4476 = vld [vmem:[%s4472 + $0xc] sm:$0xf]
  %v4477 = vld [vmem:[%s4472 + $0x10] sm:$0xf]
  %v4478 = vld [vmem:[%s4472 + $0x14] sm:$0xf]
  %v4479 = vld [vmem:[%s4472 + $0x18] sm:$0xf]
  %v4480 = vld [vmem:[%s4472 + $0x1c] sm:$0xf]
  %v4489 = vunpack.c.l.b16 %v4473
  %v4490 = vunpack.c.l.b16 %v4474
  %v4491 = vunpack.c.l.b16 %v4475
  %v4492 = vunpack.c.l.b16 %v4476
  %v4493 = vunpack.c.l.b16 %v4477
  %v4494 = vunpack.c.l.b16 %v4478
  %v4495 = vunpack.c.l.b16 %v4479
  %v4496 = vunpack.c.l.b16 %v4480
  %v4497 = vpack.c.b16 %v4490, %v4489
  %v4498 = vpack.c.b16 %v4492, %v4491
  %v4499 = vpack.c.b16 %v4494, %v4493
  %v4500 = vpack.c.b16 %v4496, %v4495
  %v4506 = vsel %vm87, %v4471, 0
  %4508 = vmatprep.subr.bf16.mxu0 0
  %4509 = vmatpush1.bf16.msra.mxu0 %v4497
  %4510 = vmatprep.subr.bf16.mxu0 0
  %4511 = vmatpush1.bf16.msra.mxu0 %v4498
  %4512 = vmatprep.subr.bf16.mxu0 0
  %4513 = vmatpush1.bf16.msra.mxu0 %v4499
  %4514 = vmatprep.subr.bf16.mxu0 0
  %4515 = vmatpush1.bf16.msra.mxu0 %v4500
  %4516 = vmatprep.subr.bf16.mxu0 0
  %4517 = vmatpush1.bf16.msra.mxu0 0
  %4518 = vmatprep.subr.bf16.mxu0 0
  %4519 = vmatpush1.bf16.msra.mxu0 0
  %4520 = vmatprep.subr.bf16.mxu0 0
  %4521 = vmatpush1.bf16.msra.mxu0 0
  %4522 = vmatprep.subr.bf16.mxu0 0
  %4523 = vmatpush1.bf16.msra.mxu0 0
  %4524 = vmatprep.subr.bf16.mxu0 0
  %4525 = vmatpush1.bf16.msra.mxu0 0
  %4526 = vmatprep.subr.bf16.mxu0 0
  %4527 = vmatpush1.bf16.msra.mxu0 0
  %4528 = vmatprep.subr.bf16.mxu0 0
  %4529 = vmatpush1.bf16.msra.mxu0 0
  %4530 = vmatprep.subr.bf16.mxu0 0
  %4531 = vmatpush1.bf16.msra.mxu0 0
  %4532 = vmatprep.subr.bf16.mxu0 0
  %4533 = vmatpush1.bf16.msra.mxu0 0
  %4534 = vmatprep.subr.bf16.mxu0 0
  %4535 = vmatpush1.bf16.msra.mxu0 0
  %4536 = vmatprep.subr.bf16.mxu0 0
  %4537 = vmatpush1.bf16.msra.mxu0 0
  %4538 = vmatprep.subr.bf16.mxu0 0
  %4539 = vmatpush1.bf16.msra.mxu0 0
  %4540 = vmatprep.mubr.bf16.mxu0 0
  %4541 = vmatmul.mubr.bf16.gmra.mrb[0].mxu0 %v4506
  %v4542 = vpop.f32.mrb[0].mxu0
  %v4543 = vadd.f32 0.0, %v4542
  %v4544 = vpop.f32.mrb[0].mxu0
  %v4545 = vpop.f32.mrb[0].mxu0
  %v4546 = vadd.f32 0.0, %v4545
  %v4547 = vpop.f32.mrb[0].mxu0
  %4548 = vdwg.mxu0
  %v4549 = vadd.f32 %v4543, %v4546
  %v4550 = vrot.slane %v4549, 4
  %v4551 = vadd.f32 %v4549, %v4550
  %v4552 = vrot.slane %v4551, 2
  %v4553 = vadd.f32 %v4551, %v4552
  %v4554 = vrot.slane %v4553, 1
  %v4555 = vadd.f32 %v4553, %v4554
  %v4556 = vmul.f32 %v4555, 0.0625
  %v4557 = vmul.f32 %v4543, %v4543
  %v4558 = vmul.f32 %v4546, %v4546
  %v4559 = vadd.f32 %v4557, %v4558
  %v4560 = vrot.slane %v4559, 4
  %v4561 = vadd.f32 %v4559, %v4560
  %v4562 = vrot.slane %v4561, 2
  %v4563 = vadd.f32 %v4561, %v4562
  %v4564 = vrot.slane %v4563, 1
  %v4565 = vadd.f32 %v4563, %v4564
  %v4566 = vmul.f32 %v4565, 0.0625
  %v4567 = vmul.f32 %v4556, %v4556
  %v4568 = vsub.f32 %v4566, %v4567
  %v4569 = vsub.f32 %v4543, %v4556
  %v4570 = vsub.f32 %v4546, %v4556
  %v4571 = vadd.f32 %v4568, 1e-05
  %v4572 = vrsqrt.pop %v4571
  %v4573 = vmul.f32 %v4569, %v4572
  %v4574 = vmul.f32 %v4570, %v4572
  %v4575 = vmax.f32 %v4573, 0.0
  %v4576 = vmax.f32 %v4574, 0.0
  %v4577 = vpack.c.bf16 %v4576, %v4575
  %s4578 = scalar_lea.vmem %s3, 896
  %v4579 = vld [vmem:[%s4578] sm:$0xff]
  %v4580 = vld [vmem:[%s4578 + $0x8] sm:$0xff]
  %v4581 = vld [vmem:[%s4578 + $0x10] sm:$0xff]
  %v4582 = vld [vmem:[%s4578 + $0x18] sm:$0xff]
  %v4583 = vld [vmem:[%s4578 + $0x20] sm:$0xff]
  %v4584 = vld [vmem:[%s4578 + $0x28] sm:$0xff]
  %v4585 = vld [vmem:[%s4578 + $0x30] sm:$0xff]
  %v4586 = vld [vmem:[%s4578 + $0x38] sm:$0xff]
  %v4587 = vld [vmem:[%s4578 + $0x40] sm:$0xff]
  %v4588 = vld [vmem:[%s4578 + $0x48] sm:$0xff]
  %v4589 = vld [vmem:[%s4578 + $0x50] sm:$0xff]
  %v4590 = vld [vmem:[%s4578 + $0x58] sm:$0xff]
  %v4591 = vld [vmem:[%s4578 + $0x60] sm:$0xff]
  %v4592 = vld [vmem:[%s4578 + $0x68] sm:$0xff]
  %v4593 = vld [vmem:[%s4578 + $0x70] sm:$0xff]
  %v4594 = vld [vmem:[%s4578 + $0x78] sm:$0xff]
  %v4611 = vunpack.c.l.b16 %v4579
  %v4612 = vunpack.c.h.b16 %v4579
  %v4613 = vunpack.c.l.b16 %v4580
  %v4614 = vunpack.c.h.b16 %v4580
  %v4615 = vunpack.c.l.b16 %v4581
  %v4616 = vunpack.c.h.b16 %v4581
  %v4617 = vunpack.c.l.b16 %v4582
  %v4618 = vunpack.c.h.b16 %v4582
  %v4619 = vunpack.c.l.b16 %v4583
  %v4620 = vunpack.c.h.b16 %v4583
  %v4621 = vunpack.c.l.b16 %v4584
  %v4622 = vunpack.c.h.b16 %v4584
  %v4623 = vunpack.c.l.b16 %v4585
  %v4624 = vunpack.c.h.b16 %v4585
  %v4625 = vunpack.c.l.b16 %v4586
  %v4626 = vunpack.c.h.b16 %v4586
  %v4627 = vunpack.c.l.b16 %v4587
  %v4628 = vunpack.c.h.b16 %v4587
  %v4629 = vunpack.c.l.b16 %v4588
  %v4630 = vunpack.c.h.b16 %v4588
  %v4631 = vunpack.c.l.b16 %v4589
  %v4632 = vunpack.c.h.b16 %v4589
  %v4633 = vunpack.c.l.b16 %v4590
  %v4634 = vunpack.c.h.b16 %v4590
  %v4635 = vunpack.c.l.b16 %v4591
  %v4636 = vunpack.c.h.b16 %v4591
  %v4637 = vunpack.c.l.b16 %v4592
  %v4638 = vunpack.c.h.b16 %v4592
  %v4639 = vunpack.c.l.b16 %v4593
  %v4640 = vunpack.c.h.b16 %v4593
  %v4641 = vunpack.c.l.b16 %v4594
  %v4642 = vunpack.c.h.b16 %v4594
  %v4643 = vpack.c.b16 %v4613, %v4611
  %v4644 = vpack.c.b16 %v4614, %v4612
  %v4645 = vpack.c.b16 %v4617, %v4615
  %v4646 = vpack.c.b16 %v4618, %v4616
  %v4647 = vpack.c.b16 %v4621, %v4619
  %v4648 = vpack.c.b16 %v4622, %v4620
  %v4649 = vpack.c.b16 %v4625, %v4623
  %v4650 = vpack.c.b16 %v4626, %v4624
  %v4651 = vpack.c.b16 %v4629, %v4627
  %v4652 = vpack.c.b16 %v4630, %v4628
  %v4653 = vpack.c.b16 %v4633, %v4631
  %v4654 = vpack.c.b16 %v4634, %v4632
  %v4655 = vpack.c.b16 %v4637, %v4635
  %v4656 = vpack.c.b16 %v4638, %v4636
  %v4657 = vpack.c.b16 %v4641, %v4639
  %v4658 = vpack.c.b16 %v4642, %v4640
  %4675 = vmatprep.subr.bf16.mxu0 %v4644
  %4676 = vmatpush1.bf16.msra.mxu0 %v4643
  %4677 = vmatprep.subr.bf16.mxu0 %v4646
  %4678 = vmatpush1.bf16.msra.mxu0 %v4645
  %4679 = vmatprep.subr.bf16.mxu0 %v4648
  %4680 = vmatpush1.bf16.msra.mxu0 %v4647
  %4681 = vmatprep.subr.bf16.mxu0 %v4650
  %4682 = vmatpush1.bf16.msra.mxu0 %v4649
  %4683 = vmatprep.subr.bf16.mxu0 %v4652
  %4684 = vmatpush1.bf16.msra.mxu0 %v4651
  %4685 = vmatprep.subr.bf16.mxu0 %v4654
  %4686 = vmatpush1.bf16.msra.mxu0 %v4653
  %4687 = vmatprep.subr.bf16.mxu0 %v4656
  %4688 = vmatpush1.bf16.msra.mxu0 %v4655
  %4689 = vmatprep.subr.bf16.mxu0 %v4658
  %4690 = vmatpush1.bf16.msra.mxu0 %v4657
  %4691 = vmatprep.subr.bf16.mxu0 0
  %4692 = vmatpush1.bf16.msra.mxu0 0
  %4693 = vmatprep.subr.bf16.mxu0 0
  %4694 = vmatpush1.bf16.msra.mxu0 0
  %4695 = vmatprep.subr.bf16.mxu0 0
  %4696 = vmatpush1.bf16.msra.mxu0 0
  %4697 = vmatprep.subr.bf16.mxu0 0
  %4698 = vmatpush1.bf16.msra.mxu0 0
  %4699 = vmatprep.subr.bf16.mxu0 0
  %4700 = vmatpush1.bf16.msra.mxu0 0
  %4701 = vmatprep.subr.bf16.mxu0 0
  %4702 = vmatpush1.bf16.msra.mxu0 0
  %4703 = vmatprep.subr.bf16.mxu0 0
  %4704 = vmatpush1.bf16.msra.mxu0 0
  %4705 = vmatprep.subr.bf16.mxu0 0
  %4706 = vmatpush1.bf16.msra.mxu0 0
  %4707 = vmatprep.mubr.bf16.mxu0 0
  %4708 = vmatmul.mubr.bf16.gmra.mrb[0].mxu0 %v4577
  %v4709 = vpop.f32.mrb[0].mxu0
  %v4710 = vadd.f32 0.0, %v4709
  %v4711 = vpop.f32.mrb[0].mxu0
  %v4712 = vadd.f32 0.0, %v4711
  %v4713 = vpop.f32.mrb[0].mxu0
  %v4714 = vadd.f32 0.0, %v4713
  %v4715 = vpop.f32.mrb[0].mxu0
  %v4716 = vadd.f32 0.0, %v4715
  %4717 = vdwg.mxu0
  %v4718 = vadd.f32 %v4710, %v4714
  %v4719 = vrot.slane %v4718, 4
  %v4720 = vadd.f32 %v4718, %v4719
  %v4721 = vrot.slane %v4720, 2
  %v4722 = vadd.f32 %v4720, %v4721
  %v4723 = vrot.slane %v4722, 1
  %v4724 = vadd.f32 %v4722, %v4723
  %v4725 = vadd.f32 %v4712, %v4716
  %v4726 = vrot.slane %v4725, 4
  %v4727 = vadd.f32 %v4725, %v4726
  %v4728 = vrot.slane %v4727, 2
  %v4729 = vadd.f32 %v4727, %v4728
  %v4730 = vrot.slane %v4729, 1
  %v4731 = vadd.f32 %v4729, %v4730
  %v4732 = vmul.f32 %v4724, 0.0625
  %v4733 = vmul.f32 %v4731, 0.0625
  %v4734 = vmul.f32 %v4710, %v4710
  %v4735 = vmul.f32 %v4712, %v4712
  %v4736 = vmul.f32 %v4714, %v4714
  %v4737 = vmul.f32 %v4716, %v4716
  %v4738 = vadd.f32 %v4734, %v4736
  %v4739 = vrot.slane %v4738, 4
  %v4740 = vadd.f32 %v4738, %v4739
  %v4741 = vrot.slane %v4740, 2
  %v4742 = vadd.f32 %v4740, %v4741
  %v4743 = vrot.slane %v4742, 1
  %v4744 = vadd.f32 %v4742, %v4743
  %v4745 = vadd.f32 %v4735, %v4737
  %v4746 = vrot.slane %v4745, 4
  %v4747 = vadd.f32 %v4745, %v4746
  %v4748 = vrot.slane %v4747, 2
  %v4749 = vadd.f32 %v4747, %v4748
  %v4750 = vrot.slane %v4749, 1
  %v4751 = vadd.f32 %v4749, %v4750
  %v4752 = vmul.f32 %v4744, 0.0625
  %v4753 = vmul.f32 %v4751, 0.0625
  %v4754 = vmul.f32 %v4732, %v4732
  %v4755 = vmul.f32 %v4733, %v4733
  %v4756 = vsub.f32 %v4752, %v4754
  %v4757 = vsub.f32 %v4753, %v4755
  %v4758 = vsub.f32 %v4710, %v4732
  %v4759 = vsub.f32 %v4712, %v4733
  %v4760 = vsub.f32 %v4714, %v4732
  %v4761 = vsub.f32 %v4716, %v4733
  %v4762 = vadd.f32 %v4756, 1e-05
  %v4763 = vadd.f32 %v4757, 1e-05
  %v4764 = vrsqrt.pop %v4762
  %v4765 = vrsqrt.pop %v4763
  %v4766 = vmul.f32 %v4758, %v4764
  %v4767 = vmul.f32 %v4759, %v4765
  %v4768 = vmul.f32 %v4760, %v4764
  %v4769 = vmul.f32 %v4761, %v4765
  %v4770 = vmax.f32 %v4766, 0.0
  %v4771 = vmax.f32 %v4767, 0.0
  %v4772 = vmax.f32 %v4768, 0.0
  %v4773 = vmax.f32 %v4769, 0.0
  %v4774 = vpack.c.bf16 %v4772, %v4770
  %v4775 = vpack.c.bf16 %v4773, %v4771
  %s4776 = scalar_lea.vmem %s4, 896
  %v4777 = vld [vmem:[%s4776] sm:$0xf]
  %v4778 = vld [vmem:[%s4776 + $0x4] sm:$0xf]
  %v4779 = vld [vmem:[%s4776 + $0x8] sm:$0xf]
  %v4780 = vld [vmem:[%s4776 + $0xc] sm:$0xf]
  %v4781 = vld [vmem:[%s4776 + $0x10] sm:$0xf]
  %v4782 = vld [vmem:[%s4776 + $0x14] sm:$0xf]
  %v4783 = vld [vmem:[%s4776 + $0x18] sm:$0xf]
  %v4784 = vld [vmem:[%s4776 + $0x1c] sm:$0xf]
  %v4785 = vld [vmem:[%s4776 + $0x20] sm:$0xf]
  %v4786 = vld [vmem:[%s4776 + $0x24] sm:$0xf]
  %v4787 = vld [vmem:[%s4776 + $0x28] sm:$0xf]
  %v4788 = vld [vmem:[%s4776 + $0x2c] sm:$0xf]
  %v4789 = vld [vmem:[%s4776 + $0x30] sm:$0xf]
  %v4790 = vld [vmem:[%s4776 + $0x34] sm:$0xf]
  %v4791 = vld [vmem:[%s4776 + $0x38] sm:$0xf]
  %v4792 = vld [vmem:[%s4776 + $0x3c] sm:$0xf]
  %v4793 = vld [vmem:[%s4776 + $0x40] sm:$0xf]
  %v4794 = vld [vmem:[%s4776 + $0x44] sm:$0xf]
  %v4795 = vld [vmem:[%s4776 + $0x48] sm:$0xf]
  %v4796 = vld [vmem:[%s4776 + $0x4c] sm:$0xf]
  %v4797 = vld [vmem:[%s4776 + $0x50] sm:$0xf]
  %v4798 = vld [vmem:[%s4776 + $0x54] sm:$0xf]
  %v4799 = vld [vmem:[%s4776 + $0x58] sm:$0xf]
  %v4800 = vld [vmem:[%s4776 + $0x5c] sm:$0xf]
  %v4801 = vld [vmem:[%s4776 + $0x60] sm:$0xf]
  %v4802 = vld [vmem:[%s4776 + $0x64] sm:$0xf]
  %v4803 = vld [vmem:[%s4776 + $0x68] sm:$0xf]
  %v4804 = vld [vmem:[%s4776 + $0x6c] sm:$0xf]
  %v4805 = vld [vmem:[%s4776 + $0x70] sm:$0xf]
  %v4806 = vld [vmem:[%s4776 + $0x74] sm:$0xf]
  %v4807 = vld [vmem:[%s4776 + $0x78] sm:$0xf]
  %v4808 = vld [vmem:[%s4776 + $0x7c] sm:$0xf]
  %v4841 = vunpack.c.l.b16 %v4777
  %v4842 = vunpack.c.l.b16 %v4778
  %v4843 = vunpack.c.l.b16 %v4779
  %v4844 = vunpack.c.l.b16 %v4780
  %v4845 = vunpack.c.l.b16 %v4781
  %v4846 = vunpack.c.l.b16 %v4782
  %v4847 = vunpack.c.l.b16 %v4783
  %v4848 = vunpack.c.l.b16 %v4784
  %v4849 = vunpack.c.l.b16 %v4785
  %v4850 = vunpack.c.l.b16 %v4786
  %v4851 = vunpack.c.l.b16 %v4787
  %v4852 = vunpack.c.l.b16 %v4788
  %v4853 = vunpack.c.l.b16 %v4789
  %v4854 = vunpack.c.l.b16 %v4790
  %v4855 = vunpack.c.l.b16 %v4791
  %v4856 = vunpack.c.l.b16 %v4792
  %v4857 = vunpack.c.l.b16 %v4793
  %v4858 = vunpack.c.l.b16 %v4794
  %v4859 = vunpack.c.l.b16 %v4795
  %v4860 = vunpack.c.l.b16 %v4796
  %v4861 = vunpack.c.l.b16 %v4797
  %v4862 = vunpack.c.l.b16 %v4798
  %v4863 = vunpack.c.l.b16 %v4799
  %v4864 = vunpack.c.l.b16 %v4800
  %v4865 = vunpack.c.l.b16 %v4801
  %v4866 = vunpack.c.l.b16 %v4802
  %v4867 = vunpack.c.l.b16 %v4803
  %v4868 = vunpack.c.l.b16 %v4804
  %v4869 = vunpack.c.l.b16 %v4805
  %v4870 = vunpack.c.l.b16 %v4806
  %v4871 = vunpack.c.l.b16 %v4807
  %v4872 = vunpack.c.l.b16 %v4808
  %v4873 = vpack.c.b16 %v4842, %v4841
  %v4874 = vpack.c.b16 %v4844, %v4843
  %v4875 = vpack.c.b16 %v4846, %v4845
  %v4876 = vpack.c.b16 %v4848, %v4847
  %v4877 = vpack.c.b16 %v4850, %v4849
  %v4878 = vpack.c.b16 %v4852, %v4851
  %v4879 = vpack.c.b16 %v4854, %v4853
  %v4880 = vpack.c.b16 %v4856, %v4855
  %v4881 = vpack.c.b16 %v4858, %v4857
  %v4882 = vpack.c.b16 %v4860, %v4859
  %v4883 = vpack.c.b16 %v4862, %v4861
  %v4884 = vpack.c.b16 %v4864, %v4863
  %v4885 = vpack.c.b16 %v4866, %v4865
  %v4886 = vpack.c.b16 %v4868, %v4867
  %v4887 = vpack.c.b16 %v4870, %v4869
  %v4888 = vpack.c.b16 %v4872, %v4871
  %4905 = vmatprep.subr.bf16.mxu0 0
  %4906 = vmatpush1.bf16.msra.mxu0 %v4873
  %4907 = vmatprep.subr.bf16.mxu0 0
  %4908 = vmatpush1.bf16.msra.mxu0 %v4874
  %4909 = vmatprep.subr.bf16.mxu0 0
  %4910 = vmatpush1.bf16.msra.mxu0 %v4875
  %4911 = vmatprep.subr.bf16.mxu0 0
  %4912 = vmatpush1.bf16.msra.mxu0 %v4876
  %4913 = vmatprep.subr.bf16.mxu0 0
  %4914 = vmatpush1.bf16.msra.mxu0 %v4877
  %4915 = vmatprep.subr.bf16.mxu0 0
  %4916 = vmatpush1.bf16.msra.mxu0 %v4878
  %4917 = vmatprep.subr.bf16.mxu0 0
  %4918 = vmatpush1.bf16.msra.mxu0 %v4879
  %4919 = vmatprep.subr.bf16.mxu0 0
  %4920 = vmatpush1.bf16.msra.mxu0 %v4880
  %4921 = vmatprep.subr.bf16.mxu0 0
  %4922 = vmatpush1.bf16.msra.mxu0 %v4881
  %4923 = vmatprep.subr.bf16.mxu0 0
  %4924 = vmatpush1.bf16.msra.mxu0 %v4882
  %4925 = vmatprep.subr.bf16.mxu0 0
  %4926 = vmatpush1.bf16.msra.mxu0 %v4883
  %4927 = vmatprep.subr.bf16.mxu0 0
  %4928 = vmatpush1.bf16.msra.mxu0 %v4884
  %4929 = vmatprep.subr.bf16.mxu0 0
  %4930 = vmatpush1.bf16.msra.mxu0 %v4885
  %4931 = vmatprep.subr.bf16.mxu0 0
  %4932 = vmatpush1.bf16.msra.mxu0 %v4886
  %4933 = vmatprep.subr.bf16.mxu0 0
  %4934 = vmatpush1.bf16.msra.mxu0 %v4887
  %4935 = vmatprep.subr.bf16.mxu0 0
  %4936 = vmatpush1.bf16.msra.mxu0 %v4888
  %4937 = vmatprep.mubr.bf16.mxu0 %v4775
  %4938 = vmatmul.mubr.bf16.gmra.mrb[0].mxu0 %v4774
  %v4939 = vpop.f32.mrb[0].mxu0
  %v4940 = vadd.f32 0.0, %v4939
  %v4941 = vpop.f32.mrb[0].mxu0
  %v4942 = vpop.f32.mrb[0].mxu0
  %v4943 = vadd.f32 0.0, %v4942
  %v4944 = vpop.f32.mrb[0].mxu0
  %4945 = vdwg.mxu0
  %v4946 = vsel %vm42, %v4940, 0.0
  %v4947 = vsel %vm42, %v4943, 0.0
  %v4948 = vadd.f32 %v4946, %v4947
  %v4949 = vrot.slane %v4948, 4
  %v4950 = vadd.f32 %v4948, %v4949
  %v4951 = vrot.slane %v4950, 2
  %v4952 = vadd.f32 %v4950, %v4951
  %v4953 = vrot.slane %v4952, 1
  %v4954 = vadd.f32 %v4952, %v4953
  %v4955 = vmul.f32 %v4954, 0.0625
  %v4956 = vmul.f32 %v4940, %v4940
  %v4957 = vmul.f32 %v4943, %v4943
  %v4958 = vsel %vm42, %v4956, 0.0
  %v4959 = vsel %vm42, %v4957, 0.0
  %v4960 = vadd.f32 %v4958, %v4959
  %v4961 = vrot.slane %v4960, 4
  %v4962 = vadd.f32 %v4960, %v4961
  %v4963 = vrot.slane %v4962, 2
  %v4964 = vadd.f32 %v4962, %v4963
  %v4965 = vrot.slane %v4964, 1
  %v4966 = vadd.f32 %v4964, %v4965
  %v4967 = vmul.f32 %v4966, 0.0625
  %v4968 = vmul.f32 %v4955, %v4955
  %v4969 = vsub.f32 %v4967, %v4968
  %v4970 = vsub.f32 %v4940, %v4955
  %v4971 = vsub.f32 %v4943, %v4955
  %v4972 = vadd.f32 %v4969, 1e-05
  %v4973 = vrsqrt.pop %v4972
  %v4974 = vmul.f32 %v4970, %v4973
  %v4975 = vmul.f32 %v4971, %v4973
  %v4976 = vmul.f32 %v4974, 0.5
  %v4977 = vmul.f32 %v4975, 0.5
  %v4978 = vtanh.pop %v4976
  %v4979 = vtanh.pop %v4977
  %v4980 = vadd.f32 %v4978, 1.0
  %v4981 = vadd.f32 %v4979, 1.0
  %v4982 = vmul.f32 %v4980, 0.5
  %v4983 = vmul.f32 %v4981, 0.5
  %v4984 = vsub.f32 %v4982, %v21
  %v4985 = vsub.f32 %v4983, %v22
  %v4986 = vmul.f32 %v4984, %v4984
  %v4987 = vmul.f32 %v4985, %v4985
  %v4988 = vsel %vm42, %v4986, 0.0
  %v4989 = vsel %vm42, %v4987, 0.0
  %v4990 = vadd.f32 %v4988, %v4989
  %4991 = vadd.xlane.f32.xlu0 %v4990
  %v4992 = vpop.xlane.xlu0 %4991
  %v4993 = vrot.slane %v4992, 4
  %v4994 = vadd.f32 %v4992, %v4993
  %v4995 = vrot.slane %v4994, 2
  %v4996 = vadd.f32 %v4994, %v4995
  %v4997 = vrot.slane %v4996, 1
  %v4998 = vadd.f32 %v4996, %v4997
  %s4999 = vtos %v4998
  %vm5000 = vcmp.eq.s32.totalorder %v25, 7
  %v5001 = vstv %s4999
  %v5002 = vsel %vm5000, %v5001, %v4380
  %s5003 = scalar_lea.vmem %s1, 128
  %v5004 = vld [vmem:[%s5003] sm:$0xf]
  %v5005 = vld [vmem:[%s5003 + $0x4] sm:$0xf]
  %v5006 = vld [vmem:[%s5003 + $0x8] sm:$0xf]
  %v5007 = vld [vmem:[%s5003 + $0xc] sm:$0xf]
  %v5012 = vunpack.c.l.b16 %v5004
  %v5013 = vunpack.c.l.b16 %v5005
  %v5014 = vunpack.c.l.b16 %v5006
  %v5015 = vunpack.c.l.b16 %v5007
  %v5016 = vpack.c.b16 %v5013, %v5012
  %v5017 = vpack.c.b16 %v5015, %v5014
  %5020 = vmatprep.subr.bf16.mxu0 0
  %5021 = vmatpush1.bf16.msra.mxu0 %v5016
  %5022 = vmatprep.subr.bf16.mxu0 0
  %5023 = vmatpush1.bf16.msra.mxu0 %v5017
  %5024 = vmatprep.subr.bf16.mxu0 0
  %5025 = vmatpush1.bf16.msra.mxu0 0
  %5026 = vmatprep.subr.bf16.mxu0 0
  %5027 = vmatpush1.bf16.msra.mxu0 0
  %5028 = vmatprep.subr.bf16.mxu0 0
  %5029 = vmatpush1.bf16.msra.mxu0 0
  %5030 = vmatprep.subr.bf16.mxu0 0
  %5031 = vmatpush1.bf16.msra.mxu0 0
  %5032 = vmatprep.subr.bf16.mxu0 0
  %5033 = vmatpush1.bf16.msra.mxu0 0
  %5034 = vmatprep.subr.bf16.mxu0 0
  %5035 = vmatpush1.bf16.msra.mxu0 0
  %5036 = vmatprep.subr.bf16.mxu0 0
  %5037 = vmatpush1.bf16.msra.mxu0 0
  %5038 = vmatprep.subr.bf16.mxu0 0
  %5039 = vmatpush1.bf16.msra.mxu0 0
  %5040 = vmatprep.subr.bf16.mxu0 0
  %5041 = vmatpush1.bf16.msra.mxu0 0
  %5042 = vmatprep.subr.bf16.mxu0 0
  %5043 = vmatpush1.bf16.msra.mxu0 0
  %5044 = vmatprep.subr.bf16.mxu0 0
  %5045 = vmatpush1.bf16.msra.mxu0 0
  %5046 = vmatprep.subr.bf16.mxu0 0
  %5047 = vmatpush1.bf16.msra.mxu0 0
  %5048 = vmatprep.subr.bf16.mxu0 0
  %5049 = vmatpush1.bf16.msra.mxu0 0
  %5050 = vmatprep.subr.bf16.mxu0 0
  %5051 = vmatpush1.bf16.msra.mxu0 0
  %5052 = vmatprep.mubr.bf16.mxu0 0
  %5053 = vmatmul.mubr.bf16.gmra.mrb[0].mxu0 %v44
  %v5054 = vpop.f32.mrb[0].mxu0
  %v5055 = vadd.f32 0.0, %v5054
  %v5056 = vpop.f32.mrb[0].mxu0
  %v5057 = vpop.f32.mrb[0].mxu0
  %v5058 = vadd.f32 0.0, %v5057
  %v5059 = vpop.f32.mrb[0].mxu0
  %5060 = vdwg.mxu0
  %v5061 = vsel %vm87, %v5055, 0.0
  %v5062 = vsel %vm87, %v5058, 0.0
  %v5063 = vadd.f32 %v5061, %v5062
  %v5064 = vrot.slane %v5063, 4
  %v5065 = vadd.f32 %v5063, %v5064
  %v5066 = vrot.slane %v5065, 2
  %v5067 = vadd.f32 %v5065, %v5066
  %v5068 = vrot.slane %v5067, 1
  %v5069 = vadd.f32 %v5067, %v5068
  %v5070 = vmul.f32 %v5069, 0.0625
  %v5071 = vmul.f32 %v5055, %v5055
  %v5072 = vmul.f32 %v5058, %v5058
  %v5073 = vsel %vm87, %v5071, 0.0
  %v5074 = vsel %vm87, %v5072, 0.0
  %v5075 = vadd.f32 %v5073, %v5074
  %v5076 = vrot.slane %v5075, 4
  %v5077 = vadd.f32 %v5075, %v5076
  %v5078 = vrot.slane %v5077, 2
  %v5079 = vadd.f32 %v5077, %v5078
  %v5080 = vrot.slane %v5079, 1
  %v5081 = vadd.f32 %v5079, %v5080
  %v5082 = vmul.f32 %v5081, 0.0625
  %v5083 = vmul.f32 %v5070, %v5070
  %v5084 = vsub.f32 %v5082, %v5083
  %v5085 = vsub.f32 %v5055, %v5070
  %v5086 = vsub.f32 %v5058, %v5070
  %v5087 = vadd.f32 %v5084, 1e-05
  %v5088 = vrsqrt.pop %v5087
  %v5089 = vmul.f32 %v5085, %v5088
  %v5090 = vmul.f32 %v5086, %v5088
  %v5091 = vmax.f32 %v5089, 0.0
  %v5092 = vmax.f32 %v5090, 0.0
  %v5093 = vpack.c.bf16 %v5092, %v5091
  %s5094 = scalar_lea.vmem %s2, 256
  %v5095 = vld [vmem:[%s5094] sm:$0xf]
  %v5096 = vld [vmem:[%s5094 + $0x4] sm:$0xf]
  %v5097 = vld [vmem:[%s5094 + $0x8] sm:$0xf]
  %v5098 = vld [vmem:[%s5094 + $0xc] sm:$0xf]
  %v5099 = vld [vmem:[%s5094 + $0x10] sm:$0xf]
  %v5100 = vld [vmem:[%s5094 + $0x14] sm:$0xf]
  %v5101 = vld [vmem:[%s5094 + $0x18] sm:$0xf]
  %v5102 = vld [vmem:[%s5094 + $0x1c] sm:$0xf]
  %v5111 = vunpack.c.l.b16 %v5095
  %v5112 = vunpack.c.l.b16 %v5096
  %v5113 = vunpack.c.l.b16 %v5097
  %v5114 = vunpack.c.l.b16 %v5098
  %v5115 = vunpack.c.l.b16 %v5099
  %v5116 = vunpack.c.l.b16 %v5100
  %v5117 = vunpack.c.l.b16 %v5101
  %v5118 = vunpack.c.l.b16 %v5102
  %v5119 = vpack.c.b16 %v5112, %v5111
  %v5120 = vpack.c.b16 %v5114, %v5113
  %v5121 = vpack.c.b16 %v5116, %v5115
  %v5122 = vpack.c.b16 %v5118, %v5117
  %v5128 = vsel %vm87, %v5093, 0
  %5130 = vmatprep.subr.bf16.mxu0 0
  %5131 = vmatpush1.bf16.msra.mxu0 %v5119
  %5132 = vmatprep.subr.bf16.mxu0 0
  %5133 = vmatpush1.bf16.msra.mxu0 %v5120
  %5134 = vmatprep.subr.bf16.mxu0 0
  %5135 = vmatpush1.bf16.msra.mxu0 %v5121
  %5136 = vmatprep.subr.bf16.mxu0 0
  %5137 = vmatpush1.bf16.msra.mxu0 %v5122
  %5138 = vmatprep.subr.bf16.mxu0 0
  %5139 = vmatpush1.bf16.msra.mxu0 0
  %5140 = vmatprep.subr.bf16.mxu0 0
  %5141 = vmatpush1.bf16.msra.mxu0 0
  %5142 = vmatprep.subr.bf16.mxu0 0
  %5143 = vmatpush1.bf16.msra.mxu0 0
  %5144 = vmatprep.subr.bf16.mxu0 0
  %5145 = vmatpush1.bf16.msra.mxu0 0
  %5146 = vmatprep.subr.bf16.mxu0 0
  %5147 = vmatpush1.bf16.msra.mxu0 0
  %5148 = vmatprep.subr.bf16.mxu0 0
  %5149 = vmatpush1.bf16.msra.mxu0 0
  %5150 = vmatprep.subr.bf16.mxu0 0
  %5151 = vmatpush1.bf16.msra.mxu0 0
  %5152 = vmatprep.subr.bf16.mxu0 0
  %5153 = vmatpush1.bf16.msra.mxu0 0
  %5154 = vmatprep.subr.bf16.mxu0 0
  %5155 = vmatpush1.bf16.msra.mxu0 0
  %5156 = vmatprep.subr.bf16.mxu0 0
  %5157 = vmatpush1.bf16.msra.mxu0 0
  %5158 = vmatprep.subr.bf16.mxu0 0
  %5159 = vmatpush1.bf16.msra.mxu0 0
  %5160 = vmatprep.subr.bf16.mxu0 0
  %5161 = vmatpush1.bf16.msra.mxu0 0
  %5162 = vmatprep.mubr.bf16.mxu0 0
  %5163 = vmatmul.mubr.bf16.gmra.mrb[0].mxu0 %v5128
  %v5164 = vpop.f32.mrb[0].mxu0
  %v5165 = vadd.f32 0.0, %v5164
  %v5166 = vpop.f32.mrb[0].mxu0
  %v5167 = vpop.f32.mrb[0].mxu0
  %v5168 = vadd.f32 0.0, %v5167
  %v5169 = vpop.f32.mrb[0].mxu0
  %5170 = vdwg.mxu0
  %v5171 = vadd.f32 %v5165, %v5168
  %v5172 = vrot.slane %v5171, 4
  %v5173 = vadd.f32 %v5171, %v5172
  %v5174 = vrot.slane %v5173, 2
  %v5175 = vadd.f32 %v5173, %v5174
  %v5176 = vrot.slane %v5175, 1
  %v5177 = vadd.f32 %v5175, %v5176
  %v5178 = vmul.f32 %v5177, 0.0625
  %v5179 = vmul.f32 %v5165, %v5165
  %v5180 = vmul.f32 %v5168, %v5168
  %v5181 = vadd.f32 %v5179, %v5180
  %v5182 = vrot.slane %v5181, 4
  %v5183 = vadd.f32 %v5181, %v5182
  %v5184 = vrot.slane %v5183, 2
  %v5185 = vadd.f32 %v5183, %v5184
  %v5186 = vrot.slane %v5185, 1
  %v5187 = vadd.f32 %v5185, %v5186
  %v5188 = vmul.f32 %v5187, 0.0625
  %v5189 = vmul.f32 %v5178, %v5178
  %v5190 = vsub.f32 %v5188, %v5189
  %v5191 = vsub.f32 %v5165, %v5178
  %v5192 = vsub.f32 %v5168, %v5178
  %v5193 = vadd.f32 %v5190, 1e-05
  %v5194 = vrsqrt.pop %v5193
  %v5195 = vmul.f32 %v5191, %v5194
  %v5196 = vmul.f32 %v5192, %v5194
  %v5197 = vmax.f32 %v5195, 0.0
  %v5198 = vmax.f32 %v5196, 0.0
  %v5199 = vpack.c.bf16 %v5198, %v5197
  %s5200 = scalar_lea.vmem %s3, 1024
  %v5201 = vld [vmem:[%s5200] sm:$0xff]
  %v5202 = vld [vmem:[%s5200 + $0x8] sm:$0xff]
  %v5203 = vld [vmem:[%s5200 + $0x10] sm:$0xff]
  %v5204 = vld [vmem:[%s5200 + $0x18] sm:$0xff]
  %v5205 = vld [vmem:[%s5200 + $0x20] sm:$0xff]
  %v5206 = vld [vmem:[%s5200 + $0x28] sm:$0xff]
  %v5207 = vld [vmem:[%s5200 + $0x30] sm:$0xff]
  %v5208 = vld [vmem:[%s5200 + $0x38] sm:$0xff]
  %v5209 = vld [vmem:[%s5200 + $0x40] sm:$0xff]
  %v5210 = vld [vmem:[%s5200 + $0x48] sm:$0xff]
  %v5211 = vld [vmem:[%s5200 + $0x50] sm:$0xff]
  %v5212 = vld [vmem:[%s5200 + $0x58] sm:$0xff]
  %v5213 = vld [vmem:[%s5200 + $0x60] sm:$0xff]
  %v5214 = vld [vmem:[%s5200 + $0x68] sm:$0xff]
  %v5215 = vld [vmem:[%s5200 + $0x70] sm:$0xff]
  %v5216 = vld [vmem:[%s5200 + $0x78] sm:$0xff]
  %v5233 = vunpack.c.l.b16 %v5201
  %v5234 = vunpack.c.h.b16 %v5201
  %v5235 = vunpack.c.l.b16 %v5202
  %v5236 = vunpack.c.h.b16 %v5202
  %v5237 = vunpack.c.l.b16 %v5203
  %v5238 = vunpack.c.h.b16 %v5203
  %v5239 = vunpack.c.l.b16 %v5204
  %v5240 = vunpack.c.h.b16 %v5204
  %v5241 = vunpack.c.l.b16 %v5205
  %v5242 = vunpack.c.h.b16 %v5205
  %v5243 = vunpack.c.l.b16 %v5206
  %v5244 = vunpack.c.h.b16 %v5206
  %v5245 = vunpack.c.l.b16 %v5207
  %v5246 = vunpack.c.h.b16 %v5207
  %v5247 = vunpack.c.l.b16 %v5208
  %v5248 = vunpack.c.h.b16 %v5208
  %v5249 = vunpack.c.l.b16 %v5209
  %v5250 = vunpack.c.h.b16 %v5209
  %v5251 = vunpack.c.l.b16 %v5210
  %v5252 = vunpack.c.h.b16 %v5210
  %v5253 = vunpack.c.l.b16 %v5211
  %v5254 = vunpack.c.h.b16 %v5211
  %v5255 = vunpack.c.l.b16 %v5212
  %v5256 = vunpack.c.h.b16 %v5212
  %v5257 = vunpack.c.l.b16 %v5213
  %v5258 = vunpack.c.h.b16 %v5213
  %v5259 = vunpack.c.l.b16 %v5214
  %v5260 = vunpack.c.h.b16 %v5214
  %v5261 = vunpack.c.l.b16 %v5215
  %v5262 = vunpack.c.h.b16 %v5215
  %v5263 = vunpack.c.l.b16 %v5216
  %v5264 = vunpack.c.h.b16 %v5216
  %v5265 = vpack.c.b16 %v5235, %v5233
  %v5266 = vpack.c.b16 %v5236, %v5234
  %v5267 = vpack.c.b16 %v5239, %v5237
  %v5268 = vpack.c.b16 %v5240, %v5238
  %v5269 = vpack.c.b16 %v5243, %v5241
  %v5270 = vpack.c.b16 %v5244, %v5242
  %v5271 = vpack.c.b16 %v5247, %v5245
  %v5272 = vpack.c.b16 %v5248, %v5246
  %v5273 = vpack.c.b16 %v5251, %v5249
  %v5274 = vpack.c.b16 %v5252, %v5250
  %v5275 = vpack.c.b16 %v5255, %v5253
  %v5276 = vpack.c.b16 %v5256, %v5254
  %v5277 = vpack.c.b16 %v5259, %v5257
  %v5278 = vpack.c.b16 %v5260, %v5258
  %v5279 = vpack.c.b16 %v5263, %v5261
  %v5280 = vpack.c.b16 %v5264, %v5262
  %5297 = vmatprep.subr.bf16.mxu0 %v5266
  %5298 = vmatpush1.bf16.msra.mxu0 %v5265
  %5299 = vmatprep.subr.bf16.mxu0 %v5268
  %5300 = vmatpush1.bf16.msra.mxu0 %v5267
  %5301 = vmatprep.subr.bf16.mxu0 %v5270
  %5302 = vmatpush1.bf16.msra.mxu0 %v5269
  %5303 = vmatprep.subr.bf16.mxu0 %v5272
  %5304 = vmatpush1.bf16.msra.mxu0 %v5271
  %5305 = vmatprep.subr.bf16.mxu0 %v5274
  %5306 = vmatpush1.bf16.msra.mxu0 %v5273
  %5307 = vmatprep.subr.bf16.mxu0 %v5276
  %5308 = vmatpush1.bf16.msra.mxu0 %v5275
  %5309 = vmatprep.subr.bf16.mxu0 %v5278
  %5310 = vmatpush1.bf16.msra.mxu0 %v5277
  %5311 = vmatprep.subr.bf16.mxu0 %v5280
  %5312 = vmatpush1.bf16.msra.mxu0 %v5279
  %5313 = vmatprep.subr.bf16.mxu0 0
  %5314 = vmatpush1.bf16.msra.mxu0 0
  %5315 = vmatprep.subr.bf16.mxu0 0
  %5316 = vmatpush1.bf16.msra.mxu0 0
  %5317 = vmatprep.subr.bf16.mxu0 0
  %5318 = vmatpush1.bf16.msra.mxu0 0
  %5319 = vmatprep.subr.bf16.mxu0 0
  %5320 = vmatpush1.bf16.msra.mxu0 0
  %5321 = vmatprep.subr.bf16.mxu0 0
  %5322 = vmatpush1.bf16.msra.mxu0 0
  %5323 = vmatprep.subr.bf16.mxu0 0
  %5324 = vmatpush1.bf16.msra.mxu0 0
  %5325 = vmatprep.subr.bf16.mxu0 0
  %5326 = vmatpush1.bf16.msra.mxu0 0
  %5327 = vmatprep.subr.bf16.mxu0 0
  %5328 = vmatpush1.bf16.msra.mxu0 0
  %5329 = vmatprep.mubr.bf16.mxu0 0
  %5330 = vmatmul.mubr.bf16.gmra.mrb[0].mxu0 %v5199
  %v5331 = vpop.f32.mrb[0].mxu0
  %v5332 = vadd.f32 0.0, %v5331
  %v5333 = vpop.f32.mrb[0].mxu0
  %v5334 = vadd.f32 0.0, %v5333
  %v5335 = vpop.f32.mrb[0].mxu0
  %v5336 = vadd.f32 0.0, %v5335
  %v5337 = vpop.f32.mrb[0].mxu0
  %v5338 = vadd.f32 0.0, %v5337
  %5339 = vdwg.mxu0
  %v5340 = vadd.f32 %v5332, %v5336
  %v5341 = vrot.slane %v5340, 4
  %v5342 = vadd.f32 %v5340, %v5341
  %v5343 = vrot.slane %v5342, 2
  %v5344 = vadd.f32 %v5342, %v5343
  %v5345 = vrot.slane %v5344, 1
  %v5346 = vadd.f32 %v5344, %v5345
  %v5347 = vadd.f32 %v5334, %v5338
  %v5348 = vrot.slane %v5347, 4
  %v5349 = vadd.f32 %v5347, %v5348
  %v5350 = vrot.slane %v5349, 2
  %v5351 = vadd.f32 %v5349, %v5350
  %v5352 = vrot.slane %v5351, 1
  %v5353 = vadd.f32 %v5351, %v5352
  %v5354 = vmul.f32 %v5346, 0.0625
  %v5355 = vmul.f32 %v5353, 0.0625
  %v5356 = vmul.f32 %v5332, %v5332
  %v5357 = vmul.f32 %v5334, %v5334
  %v5358 = vmul.f32 %v5336, %v5336
  %v5359 = vmul.f32 %v5338, %v5338
  %v5360 = vadd.f32 %v5356, %v5358
  %v5361 = vrot.slane %v5360, 4
  %v5362 = vadd.f32 %v5360, %v5361
  %v5363 = vrot.slane %v5362, 2
  %v5364 = vadd.f32 %v5362, %v5363
  %v5365 = vrot.slane %v5364, 1
  %v5366 = vadd.f32 %v5364, %v5365
  %v5367 = vadd.f32 %v5357, %v5359
  %v5368 = vrot.slane %v5367, 4
  %v5369 = vadd.f32 %v5367, %v5368
  %v5370 = vrot.slane %v5369, 2
  %v5371 = vadd.f32 %v5369, %v5370
  %v5372 = vrot.slane %v5371, 1
  %v5373 = vadd.f32 %v5371, %v5372
  %v5374 = vmul.f32 %v5366, 0.0625
  %v5375 = vmul.f32 %v5373, 0.0625
  %v5376 = vmul.f32 %v5354, %v5354
  %v5377 = vmul.f32 %v5355, %v5355
  %v5378 = vsub.f32 %v5374, %v5376
  %v5379 = vsub.f32 %v5375, %v5377
  %v5380 = vsub.f32 %v5332, %v5354
  %v5381 = vsub.f32 %v5334, %v5355
  %v5382 = vsub.f32 %v5336, %v5354
  %v5383 = vsub.f32 %v5338, %v5355
  %v5384 = vadd.f32 %v5378, 1e-05
  %v5385 = vadd.f32 %v5379, 1e-05
  %v5386 = vrsqrt.pop %v5384
  %v5387 = vrsqrt.pop %v5385
  %v5388 = vmul.f32 %v5380, %v5386
  %v5389 = vmul.f32 %v5381, %v5387
  %v5390 = vmul.f32 %v5382, %v5386
  %v5391 = vmul.f32 %v5383, %v5387
  %v5392 = vmax.f32 %v5388, 0.0
  %v5393 = vmax.f32 %v5389, 0.0
  %v5394 = vmax.f32 %v5390, 0.0
  %v5395 = vmax.f32 %v5391, 0.0
  %v5396 = vpack.c.bf16 %v5394, %v5392
  %v5397 = vpack.c.bf16 %v5395, %v5393
  %s5398 = scalar_lea.vmem %s4, 1024
  %v5399 = vld [vmem:[%s5398] sm:$0xf]
  %v5400 = vld [vmem:[%s5398 + $0x4] sm:$0xf]
  %v5401 = vld [vmem:[%s5398 + $0x8] sm:$0xf]
  %v5402 = vld [vmem:[%s5398 + $0xc] sm:$0xf]
  %v5403 = vld [vmem:[%s5398 + $0x10] sm:$0xf]
  %v5404 = vld [vmem:[%s5398 + $0x14] sm:$0xf]
  %v5405 = vld [vmem:[%s5398 + $0x18] sm:$0xf]
  %v5406 = vld [vmem:[%s5398 + $0x1c] sm:$0xf]
  %v5407 = vld [vmem:[%s5398 + $0x20] sm:$0xf]
  %v5408 = vld [vmem:[%s5398 + $0x24] sm:$0xf]
  %v5409 = vld [vmem:[%s5398 + $0x28] sm:$0xf]
  %v5410 = vld [vmem:[%s5398 + $0x2c] sm:$0xf]
  %v5411 = vld [vmem:[%s5398 + $0x30] sm:$0xf]
  %v5412 = vld [vmem:[%s5398 + $0x34] sm:$0xf]
  %v5413 = vld [vmem:[%s5398 + $0x38] sm:$0xf]
  %v5414 = vld [vmem:[%s5398 + $0x3c] sm:$0xf]
  %v5415 = vld [vmem:[%s5398 + $0x40] sm:$0xf]
  %v5416 = vld [vmem:[%s5398 + $0x44] sm:$0xf]
  %v5417 = vld [vmem:[%s5398 + $0x48] sm:$0xf]
  %v5418 = vld [vmem:[%s5398 + $0x4c] sm:$0xf]
  %v5419 = vld [vmem:[%s5398 + $0x50] sm:$0xf]
  %v5420 = vld [vmem:[%s5398 + $0x54] sm:$0xf]
  %v5421 = vld [vmem:[%s5398 + $0x58] sm:$0xf]
  %v5422 = vld [vmem:[%s5398 + $0x5c] sm:$0xf]
  %v5423 = vld [vmem:[%s5398 + $0x60] sm:$0xf]
  %v5424 = vld [vmem:[%s5398 + $0x64] sm:$0xf]
  %v5425 = vld [vmem:[%s5398 + $0x68] sm:$0xf]
  %v5426 = vld [vmem:[%s5398 + $0x6c] sm:$0xf]
  %v5427 = vld [vmem:[%s5398 + $0x70] sm:$0xf]
  %v5428 = vld [vmem:[%s5398 + $0x74] sm:$0xf]
  %v5429 = vld [vmem:[%s5398 + $0x78] sm:$0xf]
  %v5430 = vld [vmem:[%s5398 + $0x7c] sm:$0xf]
  %v5463 = vunpack.c.l.b16 %v5399
  %v5464 = vunpack.c.l.b16 %v5400
  %v5465 = vunpack.c.l.b16 %v5401
  %v5466 = vunpack.c.l.b16 %v5402
  %v5467 = vunpack.c.l.b16 %v5403
  %v5468 = vunpack.c.l.b16 %v5404
  %v5469 = vunpack.c.l.b16 %v5405
  %v5470 = vunpack.c.l.b16 %v5406
  %v5471 = vunpack.c.l.b16 %v5407
  %v5472 = vunpack.c.l.b16 %v5408
  %v5473 = vunpack.c.l.b16 %v5409
  %v5474 = vunpack.c.l.b16 %v5410
  %v5475 = vunpack.c.l.b16 %v5411
  %v5476 = vunpack.c.l.b16 %v5412
  %v5477 = vunpack.c.l.b16 %v5413
  %v5478 = vunpack.c.l.b16 %v5414
  %v5479 = vunpack.c.l.b16 %v5415
  %v5480 = vunpack.c.l.b16 %v5416
  %v5481 = vunpack.c.l.b16 %v5417
  %v5482 = vunpack.c.l.b16 %v5418
  %v5483 = vunpack.c.l.b16 %v5419
  %v5484 = vunpack.c.l.b16 %v5420
  %v5485 = vunpack.c.l.b16 %v5421
  %v5486 = vunpack.c.l.b16 %v5422
  %v5487 = vunpack.c.l.b16 %v5423
  %v5488 = vunpack.c.l.b16 %v5424
  %v5489 = vunpack.c.l.b16 %v5425
  %v5490 = vunpack.c.l.b16 %v5426
  %v5491 = vunpack.c.l.b16 %v5427
  %v5492 = vunpack.c.l.b16 %v5428
  %v5493 = vunpack.c.l.b16 %v5429
  %v5494 = vunpack.c.l.b16 %v5430
  %v5495 = vpack.c.b16 %v5464, %v5463
  %v5496 = vpack.c.b16 %v5466, %v5465
  %v5497 = vpack.c.b16 %v5468, %v5467
  %v5498 = vpack.c.b16 %v5470, %v5469
  %v5499 = vpack.c.b16 %v5472, %v5471
  %v5500 = vpack.c.b16 %v5474, %v5473
  %v5501 = vpack.c.b16 %v5476, %v5475
  %v5502 = vpack.c.b16 %v5478, %v5477
  %v5503 = vpack.c.b16 %v5480, %v5479
  %v5504 = vpack.c.b16 %v5482, %v5481
  %v5505 = vpack.c.b16 %v5484, %v5483
  %v5506 = vpack.c.b16 %v5486, %v5485
  %v5507 = vpack.c.b16 %v5488, %v5487
  %v5508 = vpack.c.b16 %v5490, %v5489
  %v5509 = vpack.c.b16 %v5492, %v5491
  %v5510 = vpack.c.b16 %v5494, %v5493
  %5527 = vmatprep.subr.bf16.mxu0 0
  %5528 = vmatpush1.bf16.msra.mxu0 %v5495
  %5529 = vmatprep.subr.bf16.mxu0 0
  %5530 = vmatpush1.bf16.msra.mxu0 %v5496
  %5531 = vmatprep.subr.bf16.mxu0 0
  %5532 = vmatpush1.bf16.msra.mxu0 %v5497
  %5533 = vmatprep.subr.bf16.mxu0 0
  %5534 = vmatpush1.bf16.msra.mxu0 %v5498
  %5535 = vmatprep.subr.bf16.mxu0 0
  %5536 = vmatpush1.bf16.msra.mxu0 %v5499
  %5537 = vmatprep.subr.bf16.mxu0 0
  %5538 = vmatpush1.bf16.msra.mxu0 %v5500
  %5539 = vmatprep.subr.bf16.mxu0 0
  %5540 = vmatpush1.bf16.msra.mxu0 %v5501
  %5541 = vmatprep.subr.bf16.mxu0 0
  %5542 = vmatpush1.bf16.msra.mxu0 %v5502
  %5543 = vmatprep.subr.bf16.mxu0 0
  %5544 = vmatpush1.bf16.msra.mxu0 %v5503
  %5545 = vmatprep.subr.bf16.mxu0 0
  %5546 = vmatpush1.bf16.msra.mxu0 %v5504
  %5547 = vmatprep.subr.bf16.mxu0 0
  %5548 = vmatpush1.bf16.msra.mxu0 %v5505
  %5549 = vmatprep.subr.bf16.mxu0 0
  %5550 = vmatpush1.bf16.msra.mxu0 %v5506
  %5551 = vmatprep.subr.bf16.mxu0 0
  %5552 = vmatpush1.bf16.msra.mxu0 %v5507
  %5553 = vmatprep.subr.bf16.mxu0 0
  %5554 = vmatpush1.bf16.msra.mxu0 %v5508
  %5555 = vmatprep.subr.bf16.mxu0 0
  %5556 = vmatpush1.bf16.msra.mxu0 %v5509
  %5557 = vmatprep.subr.bf16.mxu0 0
  %5558 = vmatpush1.bf16.msra.mxu0 %v5510
  %5559 = vmatprep.mubr.bf16.mxu0 %v5397
  %5560 = vmatmul.mubr.bf16.gmra.mrb[0].mxu0 %v5396
  %v5561 = vpop.f32.mrb[0].mxu0
  %v5562 = vadd.f32 0.0, %v5561
  %v5563 = vpop.f32.mrb[0].mxu0
  %v5564 = vpop.f32.mrb[0].mxu0
  %v5565 = vadd.f32 0.0, %v5564
  %v5566 = vpop.f32.mrb[0].mxu0
  %5567 = vdwg.mxu0
  %v5568 = vsel %vm42, %v5562, 0.0
  %v5569 = vsel %vm42, %v5565, 0.0
  %v5570 = vadd.f32 %v5568, %v5569
  %v5571 = vrot.slane %v5570, 4
  %v5572 = vadd.f32 %v5570, %v5571
  %v5573 = vrot.slane %v5572, 2
  %v5574 = vadd.f32 %v5572, %v5573
  %v5575 = vrot.slane %v5574, 1
  %v5576 = vadd.f32 %v5574, %v5575
  %v5577 = vmul.f32 %v5576, 0.0625
  %v5578 = vmul.f32 %v5562, %v5562
  %v5579 = vmul.f32 %v5565, %v5565
  %v5580 = vsel %vm42, %v5578, 0.0
  %v5581 = vsel %vm42, %v5579, 0.0
  %v5582 = vadd.f32 %v5580, %v5581
  %v5583 = vrot.slane %v5582, 4
  %v5584 = vadd.f32 %v5582, %v5583
  %v5585 = vrot.slane %v5584, 2
  %v5586 = vadd.f32 %v5584, %v5585
  %v5587 = vrot.slane %v5586, 1
  %v5588 = vadd.f32 %v5586, %v5587
  %v5589 = vmul.f32 %v5588, 0.0625
  %v5590 = vmul.f32 %v5577, %v5577
  %v5591 = vsub.f32 %v5589, %v5590
  %v5592 = vsub.f32 %v5562, %v5577
  %v5593 = vsub.f32 %v5565, %v5577
  %v5594 = vadd.f32 %v5591, 1e-05
  %v5595 = vrsqrt.pop %v5594
  %v5596 = vmul.f32 %v5592, %v5595
  %v5597 = vmul.f32 %v5593, %v5595
  %v5598 = vmul.f32 %v5596, 0.5
  %v5599 = vmul.f32 %v5597, 0.5
  %v5600 = vtanh.pop %v5598
  %v5601 = vtanh.pop %v5599
  %v5602 = vadd.f32 %v5600, 1.0
  %v5603 = vadd.f32 %v5601, 1.0
  %v5604 = vmul.f32 %v5602, 0.5
  %v5605 = vmul.f32 %v5603, 0.5
  %v5606 = vsub.f32 %v5604, %v21
  %v5607 = vsub.f32 %v5605, %v22
  %v5608 = vmul.f32 %v5606, %v5606
  %v5609 = vmul.f32 %v5607, %v5607
  %v5610 = vsel %vm42, %v5608, 0.0
  %v5611 = vsel %vm42, %v5609, 0.0
  %v5612 = vadd.f32 %v5610, %v5611
  %5613 = vadd.xlane.f32.xlu0 %v5612
  %v5614 = vpop.xlane.xlu0 %5613
  %v5615 = vrot.slane %v5614, 4
  %v5616 = vadd.f32 %v5614, %v5615
  %v5617 = vrot.slane %v5616, 2
  %v5618 = vadd.f32 %v5616, %v5617
  %v5619 = vrot.slane %v5618, 1
  %v5620 = vadd.f32 %v5618, %v5619
  %s5621 = vtos %v5620
  %vm5622 = vcmp.eq.s32.totalorder %v25, 8
  %v5623 = vstv %s5621
  %v5624 = vsel %vm5622, %v5623, %v5002
  %s5625 = scalar_lea.vmem %s1, 144
  %v5626 = vld [vmem:[%s5625] sm:$0xf]
  %v5627 = vld [vmem:[%s5625 + $0x4] sm:$0xf]
  %v5628 = vld [vmem:[%s5625 + $0x8] sm:$0xf]
  %v5629 = vld [vmem:[%s5625 + $0xc] sm:$0xf]
  %v5634 = vunpack.c.l.b16 %v5626
  %v5635 = vunpack.c.l.b16 %v5627
  %v5636 = vunpack.c.l.b16 %v5628
  %v5637 = vunpack.c.l.b16 %v5629
  %v5638 = vpack.c.b16 %v5635, %v5634
  %v5639 = vpack.c.b16 %v5637, %v5636
  %5642 = vmatprep.subr.bf16.mxu0 0
  %5643 = vmatpush1.bf16.msra.mxu0 %v5638
  %5644 = vmatprep.subr.bf16.mxu0 0
  %5645 = vmatpush1.bf16.msra.mxu0 %v5639
  %5646 = vmatprep.subr.bf16.mxu0 0
  %5647 = vmatpush1.bf16.msra.mxu0 0
  %5648 = vmatprep.subr.bf16.mxu0 0
  %5649 = vmatpush1.bf16.msra.mxu0 0
  %5650 = vmatprep.subr.bf16.mxu0 0
  %5651 = vmatpush1.bf16.msra.mxu0 0
  %5652 = vmatprep.subr.bf16.mxu0 0
  %5653 = vmatpush1.bf16.msra.mxu0 0
  %5654 = vmatprep.subr.bf16.mxu0 0
  %5655 = vmatpush1.bf16.msra.mxu0 0
  %5656 = vmatprep.subr.bf16.mxu0 0
  %5657 = vmatpush1.bf16.msra.mxu0 0
  %5658 = vmatprep.subr.bf16.mxu0 0
  %5659 = vmatpush1.bf16.msra.mxu0 0
  %5660 = vmatprep.subr.bf16.mxu0 0
  %5661 = vmatpush1.bf16.msra.mxu0 0
  %5662 = vmatprep.subr.bf16.mxu0 0
  %5663 = vmatpush1.bf16.msra.mxu0 0
  %5664 = vmatprep.subr.bf16.mxu0 0
  %5665 = vmatpush1.bf16.msra.mxu0 0
  %5666 = vmatprep.subr.bf16.mxu0 0
  %5667 = vmatpush1.bf16.msra.mxu0 0
  %5668 = vmatprep.subr.bf16.mxu0 0
  %5669 = vmatpush1.bf16.msra.mxu0 0
  %5670 = vmatprep.subr.bf16.mxu0 0
  %5671 = vmatpush1.bf16.msra.mxu0 0
  %5672 = vmatprep.subr.bf16.mxu0 0
  %5673 = vmatpush1.bf16.msra.mxu0 0
  %5674 = vmatprep.mubr.bf16.mxu0 0
  %5675 = vmatmul.mubr.bf16.gmra.mrb[0].mxu0 %v44
  %v5676 = vpop.f32.mrb[0].mxu0
  %v5677 = vadd.f32 0.0, %v5676
  %v5678 = vpop.f32.mrb[0].mxu0
  %v5679 = vpop.f32.mrb[0].mxu0
  %v5680 = vadd.f32 0.0, %v5679
  %v5681 = vpop.f32.mrb[0].mxu0
  %5682 = vdwg.mxu0
  %v5683 = vsel %vm87, %v5677, 0.0
  %v5684 = vsel %vm87, %v5680, 0.0
  %v5685 = vadd.f32 %v5683, %v5684
  %v5686 = vrot.slane %v5685, 4
  %v5687 = vadd.f32 %v5685, %v5686
  %v5688 = vrot.slane %v5687, 2
  %v5689 = vadd.f32 %v5687, %v5688
  %v5690 = vrot.slane %v5689, 1
  %v5691 = vadd.f32 %v5689, %v5690
  %v5692 = vmul.f32 %v5691, 0.0625
  %v5693 = vmul.f32 %v5677, %v5677
  %v5694 = vmul.f32 %v5680, %v5680
  %v5695 = vsel %vm87, %v5693, 0.0
  %v5696 = vsel %vm87, %v5694, 0.0
  %v5697 = vadd.f32 %v5695, %v5696
  %v5698 = vrot.slane %v5697, 4
  %v5699 = vadd.f32 %v5697, %v5698
  %v5700 = vrot.slane %v5699, 2
  %v5701 = vadd.f32 %v5699, %v5700
  %v5702 = vrot.slane %v5701, 1
  %v5703 = vadd.f32 %v5701, %v5702
  %v5704 = vmul.f32 %v5703, 0.0625
  %v5705 = vmul.f32 %v5692, %v5692
  %v5706 = vsub.f32 %v5704, %v5705
  %v5707 = vsub.f32 %v5677, %v5692
  %v5708 = vsub.f32 %v5680, %v5692
  %v5709 = vadd.f32 %v5706, 1e-05
  %v5710 = vrsqrt.pop %v5709
  %v5711 = vmul.f32 %v5707, %v5710
  %v5712 = vmul.f32 %v5708, %v5710
  %v5713 = vmax.f32 %v5711, 0.0
  %v5714 = vmax.f32 %v5712, 0.0
  %v5715 = vpack.c.bf16 %v5714, %v5713
  %s5716 = scalar_lea.vmem %s2, 288
  %v5717 = vld [vmem:[%s5716] sm:$0xf]
  %v5718 = vld [vmem:[%s5716 + $0x4] sm:$0xf]
  %v5719 = vld [vmem:[%s5716 + $0x8] sm:$0xf]
  %v5720 = vld [vmem:[%s5716 + $0xc] sm:$0xf]
  %v5721 = vld [vmem:[%s5716 + $0x10] sm:$0xf]
  %v5722 = vld [vmem:[%s5716 + $0x14] sm:$0xf]
  %v5723 = vld [vmem:[%s5716 + $0x18] sm:$0xf]
  %v5724 = vld [vmem:[%s5716 + $0x1c] sm:$0xf]
  %v5733 = vunpack.c.l.b16 %v5717
  %v5734 = vunpack.c.l.b16 %v5718
  %v5735 = vunpack.c.l.b16 %v5719
  %v5736 = vunpack.c.l.b16 %v5720
  %v5737 = vunpack.c.l.b16 %v5721
  %v5738 = vunpack.c.l.b16 %v5722
  %v5739 = vunpack.c.l.b16 %v5723
  %v5740 = vunpack.c.l.b16 %v5724
  %v5741 = vpack.c.b16 %v5734, %v5733
  %v5742 = vpack.c.b16 %v5736, %v5735
  %v5743 = vpack.c.b16 %v5738, %v5737
  %v5744 = vpack.c.b16 %v5740, %v5739
  %v5750 = vsel %vm87, %v5715, 0
  %5752 = vmatprep.subr.bf16.mxu0 0
  %5753 = vmatpush1.bf16.msra.mxu0 %v5741
  %5754 = vmatprep.subr.bf16.mxu0 0
  %5755 = vmatpush1.bf16.msra.mxu0 %v5742
  %5756 = vmatprep.subr.bf16.mxu0 0
  %5757 = vmatpush1.bf16.msra.mxu0 %v5743
  %5758 = vmatprep.subr.bf16.mxu0 0
  %5759 = vmatpush1.bf16.msra.mxu0 %v5744
  %5760 = vmatprep.subr.bf16.mxu0 0
  %5761 = vmatpush1.bf16.msra.mxu0 0
  %5762 = vmatprep.subr.bf16.mxu0 0
  %5763 = vmatpush1.bf16.msra.mxu0 0
  %5764 = vmatprep.subr.bf16.mxu0 0
  %5765 = vmatpush1.bf16.msra.mxu0 0
  %5766 = vmatprep.subr.bf16.mxu0 0
  %5767 = vmatpush1.bf16.msra.mxu0 0
  %5768 = vmatprep.subr.bf16.mxu0 0
  %5769 = vmatpush1.bf16.msra.mxu0 0
  %5770 = vmatprep.subr.bf16.mxu0 0
  %5771 = vmatpush1.bf16.msra.mxu0 0
  %5772 = vmatprep.subr.bf16.mxu0 0
  %5773 = vmatpush1.bf16.msra.mxu0 0
  %5774 = vmatprep.subr.bf16.mxu0 0
  %5775 = vmatpush1.bf16.msra.mxu0 0
  %5776 = vmatprep.subr.bf16.mxu0 0
  %5777 = vmatpush1.bf16.msra.mxu0 0
  %5778 = vmatprep.subr.bf16.mxu0 0
  %5779 = vmatpush1.bf16.msra.mxu0 0
  %5780 = vmatprep.subr.bf16.mxu0 0
  %5781 = vmatpush1.bf16.msra.mxu0 0
  %5782 = vmatprep.subr.bf16.mxu0 0
  %5783 = vmatpush1.bf16.msra.mxu0 0
  %5784 = vmatprep.mubr.bf16.mxu0 0
  %5785 = vmatmul.mubr.bf16.gmra.mrb[0].mxu0 %v5750
  %v5786 = vpop.f32.mrb[0].mxu0
  %v5787 = vadd.f32 0.0, %v5786
  %v5788 = vpop.f32.mrb[0].mxu0
  %v5789 = vpop.f32.mrb[0].mxu0
  %v5790 = vadd.f32 0.0, %v5789
  %v5791 = vpop.f32.mrb[0].mxu0
  %5792 = vdwg.mxu0
  %v5793 = vadd.f32 %v5787, %v5790
  %v5794 = vrot.slane %v5793, 4
  %v5795 = vadd.f32 %v5793, %v5794
  %v5796 = vrot.slane %v5795, 2
  %v5797 = vadd.f32 %v5795, %v5796
  %v5798 = vrot.slane %v5797, 1
  %v5799 = vadd.f32 %v5797, %v5798
  %v5800 = vmul.f32 %v5799, 0.0625
  %v5801 = vmul.f32 %v5787, %v5787
  %v5802 = vmul.f32 %v5790, %v5790
  %v5803 = vadd.f32 %v5801, %v5802
  %v5804 = vrot.slane %v5803, 4
  %v5805 = vadd.f32 %v5803, %v5804
  %v5806 = vrot.slane %v5805, 2
  %v5807 = vadd.f32 %v5805, %v5806
  %v5808 = vrot.slane %v5807, 1
  %v5809 = vadd.f32 %v5807, %v5808
  %v5810 = vmul.f32 %v5809, 0.0625
  %v5811 = vmul.f32 %v5800, %v5800
  %v5812 = vsub.f32 %v5810, %v5811
  %v5813 = vsub.f32 %v5787, %v5800
  %v5814 = vsub.f32 %v5790, %v5800
  %v5815 = vadd.f32 %v5812, 1e-05
  %v5816 = vrsqrt.pop %v5815
  %v5817 = vmul.f32 %v5813, %v5816
  %v5818 = vmul.f32 %v5814, %v5816
  %v5819 = vmax.f32 %v5817, 0.0
  %v5820 = vmax.f32 %v5818, 0.0
  %v5821 = vpack.c.bf16 %v5820, %v5819
  %s5822 = scalar_lea.vmem %s3, 1152
  %v5823 = vld [vmem:[%s5822] sm:$0xff]
  %v5824 = vld [vmem:[%s5822 + $0x8] sm:$0xff]
  %v5825 = vld [vmem:[%s5822 + $0x10] sm:$0xff]
  %v5826 = vld [vmem:[%s5822 + $0x18] sm:$0xff]
  %v5827 = vld [vmem:[%s5822 + $0x20] sm:$0xff]
  %v5828 = vld [vmem:[%s5822 + $0x28] sm:$0xff]
  %v5829 = vld [vmem:[%s5822 + $0x30] sm:$0xff]
  %v5830 = vld [vmem:[%s5822 + $0x38] sm:$0xff]
  %v5831 = vld [vmem:[%s5822 + $0x40] sm:$0xff]
  %v5832 = vld [vmem:[%s5822 + $0x48] sm:$0xff]
  %v5833 = vld [vmem:[%s5822 + $0x50] sm:$0xff]
  %v5834 = vld [vmem:[%s5822 + $0x58] sm:$0xff]
  %v5835 = vld [vmem:[%s5822 + $0x60] sm:$0xff]
  %v5836 = vld [vmem:[%s5822 + $0x68] sm:$0xff]
  %v5837 = vld [vmem:[%s5822 + $0x70] sm:$0xff]
  %v5838 = vld [vmem:[%s5822 + $0x78] sm:$0xff]
  %v5855 = vunpack.c.l.b16 %v5823
  %v5856 = vunpack.c.h.b16 %v5823
  %v5857 = vunpack.c.l.b16 %v5824
  %v5858 = vunpack.c.h.b16 %v5824
  %v5859 = vunpack.c.l.b16 %v5825
  %v5860 = vunpack.c.h.b16 %v5825
  %v5861 = vunpack.c.l.b16 %v5826
  %v5862 = vunpack.c.h.b16 %v5826
  %v5863 = vunpack.c.l.b16 %v5827
  %v5864 = vunpack.c.h.b16 %v5827
  %v5865 = vunpack.c.l.b16 %v5828
  %v5866 = vunpack.c.h.b16 %v5828
  %v5867 = vunpack.c.l.b16 %v5829
  %v5868 = vunpack.c.h.b16 %v5829
  %v5869 = vunpack.c.l.b16 %v5830
  %v5870 = vunpack.c.h.b16 %v5830
  %v5871 = vunpack.c.l.b16 %v5831
  %v5872 = vunpack.c.h.b16 %v5831
  %v5873 = vunpack.c.l.b16 %v5832
  %v5874 = vunpack.c.h.b16 %v5832
  %v5875 = vunpack.c.l.b16 %v5833
  %v5876 = vunpack.c.h.b16 %v5833
  %v5877 = vunpack.c.l.b16 %v5834
  %v5878 = vunpack.c.h.b16 %v5834
  %v5879 = vunpack.c.l.b16 %v5835
  %v5880 = vunpack.c.h.b16 %v5835
  %v5881 = vunpack.c.l.b16 %v5836
  %v5882 = vunpack.c.h.b16 %v5836
  %v5883 = vunpack.c.l.b16 %v5837
  %v5884 = vunpack.c.h.b16 %v5837
  %v5885 = vunpack.c.l.b16 %v5838
  %v5886 = vunpack.c.h.b16 %v5838
  %v5887 = vpack.c.b16 %v5857, %v5855
  %v5888 = vpack.c.b16 %v5858, %v5856
  %v5889 = vpack.c.b16 %v5861, %v5859
  %v5890 = vpack.c.b16 %v5862, %v5860
  %v5891 = vpack.c.b16 %v5865, %v5863
  %v5892 = vpack.c.b16 %v5866, %v5864
  %v5893 = vpack.c.b16 %v5869, %v5867
  %v5894 = vpack.c.b16 %v5870, %v5868
  %v5895 = vpack.c.b16 %v5873, %v5871
  %v5896 = vpack.c.b16 %v5874, %v5872
  %v5897 = vpack.c.b16 %v5877, %v5875
  %v5898 = vpack.c.b16 %v5878, %v5876
  %v5899 = vpack.c.b16 %v5881, %v5879
  %v5900 = vpack.c.b16 %v5882, %v5880
  %v5901 = vpack.c.b16 %v5885, %v5883
  %v5902 = vpack.c.b16 %v5886, %v5884
  %5919 = vmatprep.subr.bf16.mxu0 %v5888
  %5920 = vmatpush1.bf16.msra.mxu0 %v5887
  %5921 = vmatprep.subr.bf16.mxu0 %v5890
  %5922 = vmatpush1.bf16.msra.mxu0 %v5889
  %5923 = vmatprep.subr.bf16.mxu0 %v5892
  %5924 = vmatpush1.bf16.msra.mxu0 %v5891
  %5925 = vmatprep.subr.bf16.mxu0 %v5894
  %5926 = vmatpush1.bf16.msra.mxu0 %v5893
  %5927 = vmatprep.subr.bf16.mxu0 %v5896
  %5928 = vmatpush1.bf16.msra.mxu0 %v5895
  %5929 = vmatprep.subr.bf16.mxu0 %v5898
  %5930 = vmatpush1.bf16.msra.mxu0 %v5897
  %5931 = vmatprep.subr.bf16.mxu0 %v5900
  %5932 = vmatpush1.bf16.msra.mxu0 %v5899
  %5933 = vmatprep.subr.bf16.mxu0 %v5902
  %5934 = vmatpush1.bf16.msra.mxu0 %v5901
  %5935 = vmatprep.subr.bf16.mxu0 0
  %5936 = vmatpush1.bf16.msra.mxu0 0
  %5937 = vmatprep.subr.bf16.mxu0 0
  %5938 = vmatpush1.bf16.msra.mxu0 0
  %5939 = vmatprep.subr.bf16.mxu0 0
  %5940 = vmatpush1.bf16.msra.mxu0 0
  %5941 = vmatprep.subr.bf16.mxu0 0
  %5942 = vmatpush1.bf16.msra.mxu0 0
  %5943 = vmatprep.subr.bf16.mxu0 0
  %5944 = vmatpush1.bf16.msra.mxu0 0
  %5945 = vmatprep.subr.bf16.mxu0 0
  %5946 = vmatpush1.bf16.msra.mxu0 0
  %5947 = vmatprep.subr.bf16.mxu0 0
  %5948 = vmatpush1.bf16.msra.mxu0 0
  %5949 = vmatprep.subr.bf16.mxu0 0
  %5950 = vmatpush1.bf16.msra.mxu0 0
  %5951 = vmatprep.mubr.bf16.mxu0 0
  %5952 = vmatmul.mubr.bf16.gmra.mrb[0].mxu0 %v5821
  %v5953 = vpop.f32.mrb[0].mxu0
  %v5954 = vadd.f32 0.0, %v5953
  %v5955 = vpop.f32.mrb[0].mxu0
  %v5956 = vadd.f32 0.0, %v5955
  %v5957 = vpop.f32.mrb[0].mxu0
  %v5958 = vadd.f32 0.0, %v5957
  %v5959 = vpop.f32.mrb[0].mxu0
  %v5960 = vadd.f32 0.0, %v5959
  %5961 = vdwg.mxu0
  %v5962 = vadd.f32 %v5954, %v5958
  %v5963 = vrot.slane %v5962, 4
  %v5964 = vadd.f32 %v5962, %v5963
  %v5965 = vrot.slane %v5964, 2
  %v5966 = vadd.f32 %v5964, %v5965
  %v5967 = vrot.slane %v5966, 1
  %v5968 = vadd.f32 %v5966, %v5967
  %v5969 = vadd.f32 %v5956, %v5960
  %v5970 = vrot.slane %v5969, 4
  %v5971 = vadd.f32 %v5969, %v5970
  %v5972 = vrot.slane %v5971, 2
  %v5973 = vadd.f32 %v5971, %v5972
  %v5974 = vrot.slane %v5973, 1
  %v5975 = vadd.f32 %v5973, %v5974
  %v5976 = vmul.f32 %v5968, 0.0625
  %v5977 = vmul.f32 %v5975, 0.0625
  %v5978 = vmul.f32 %v5954, %v5954
  %v5979 = vmul.f32 %v5956, %v5956
  %v5980 = vmul.f32 %v5958, %v5958
  %v5981 = vmul.f32 %v5960, %v5960
  %v5982 = vadd.f32 %v5978, %v5980
  %v5983 = vrot.slane %v5982, 4
  %v5984 = vadd.f32 %v5982, %v5983
  %v5985 = vrot.slane %v5984, 2
  %v5986 = vadd.f32 %v5984, %v5985
  %v5987 = vrot.slane %v5986, 1
  %v5988 = vadd.f32 %v5986, %v5987
  %v5989 = vadd.f32 %v5979, %v5981
  %v5990 = vrot.slane %v5989, 4
  %v5991 = vadd.f32 %v5989, %v5990
  %v5992 = vrot.slane %v5991, 2
  %v5993 = vadd.f32 %v5991, %v5992
  %v5994 = vrot.slane %v5993, 1
  %v5995 = vadd.f32 %v5993, %v5994
  %v5996 = vmul.f32 %v5988, 0.0625
  %v5997 = vmul.f32 %v5995, 0.0625
  %v5998 = vmul.f32 %v5976, %v5976
  %v5999 = vmul.f32 %v5977, %v5977
  %v6000 = vsub.f32 %v5996, %v5998
  %v6001 = vsub.f32 %v5997, %v5999
  %v6002 = vsub.f32 %v5954, %v5976
  %v6003 = vsub.f32 %v5956, %v5977
  %v6004 = vsub.f32 %v5958, %v5976
  %v6005 = vsub.f32 %v5960, %v5977
  %v6006 = vadd.f32 %v6000, 1e-05
  %v6007 = vadd.f32 %v6001, 1e-05
  %v6008 = vrsqrt.pop %v6006
  %v6009 = vrsqrt.pop %v6007
  %v6010 = vmul.f32 %v6002, %v6008
  %v6011 = vmul.f32 %v6003, %v6009
  %v6012 = vmul.f32 %v6004, %v6008
  %v6013 = vmul.f32 %v6005, %v6009
  %v6014 = vmax.f32 %v6010, 0.0
  %v6015 = vmax.f32 %v6011, 0.0
  %v6016 = vmax.f32 %v6012, 0.0
  %v6017 = vmax.f32 %v6013, 0.0
  %v6018 = vpack.c.bf16 %v6016, %v6014
  %v6019 = vpack.c.bf16 %v6017, %v6015
  %s6020 = scalar_lea.vmem %s4, 1152
  %v6021 = vld [vmem:[%s6020] sm:$0xf]
  %v6022 = vld [vmem:[%s6020 + $0x4] sm:$0xf]
  %v6023 = vld [vmem:[%s6020 + $0x8] sm:$0xf]
  %v6024 = vld [vmem:[%s6020 + $0xc] sm:$0xf]
  %v6025 = vld [vmem:[%s6020 + $0x10] sm:$0xf]
  %v6026 = vld [vmem:[%s6020 + $0x14] sm:$0xf]
  %v6027 = vld [vmem:[%s6020 + $0x18] sm:$0xf]
  %v6028 = vld [vmem:[%s6020 + $0x1c] sm:$0xf]
  %v6029 = vld [vmem:[%s6020 + $0x20] sm:$0xf]
  %v6030 = vld [vmem:[%s6020 + $0x24] sm:$0xf]
  %v6031 = vld [vmem:[%s6020 + $0x28] sm:$0xf]
  %v6032 = vld [vmem:[%s6020 + $0x2c] sm:$0xf]
  %v6033 = vld [vmem:[%s6020 + $0x30] sm:$0xf]
  %v6034 = vld [vmem:[%s6020 + $0x34] sm:$0xf]
  %v6035 = vld [vmem:[%s6020 + $0x38] sm:$0xf]
  %v6036 = vld [vmem:[%s6020 + $0x3c] sm:$0xf]
  %v6037 = vld [vmem:[%s6020 + $0x40] sm:$0xf]
  %v6038 = vld [vmem:[%s6020 + $0x44] sm:$0xf]
  %v6039 = vld [vmem:[%s6020 + $0x48] sm:$0xf]
  %v6040 = vld [vmem:[%s6020 + $0x4c] sm:$0xf]
  %v6041 = vld [vmem:[%s6020 + $0x50] sm:$0xf]
  %v6042 = vld [vmem:[%s6020 + $0x54] sm:$0xf]
  %v6043 = vld [vmem:[%s6020 + $0x58] sm:$0xf]
  %v6044 = vld [vmem:[%s6020 + $0x5c] sm:$0xf]
  %v6045 = vld [vmem:[%s6020 + $0x60] sm:$0xf]
  %v6046 = vld [vmem:[%s6020 + $0x64] sm:$0xf]
  %v6047 = vld [vmem:[%s6020 + $0x68] sm:$0xf]
  %v6048 = vld [vmem:[%s6020 + $0x6c] sm:$0xf]
  %v6049 = vld [vmem:[%s6020 + $0x70] sm:$0xf]
  %v6050 = vld [vmem:[%s6020 + $0x74] sm:$0xf]
  %v6051 = vld [vmem:[%s6020 + $0x78] sm:$0xf]
  %v6052 = vld [vmem:[%s6020 + $0x7c] sm:$0xf]
  %v6085 = vunpack.c.l.b16 %v6021
  %v6086 = vunpack.c.l.b16 %v6022
  %v6087 = vunpack.c.l.b16 %v6023
  %v6088 = vunpack.c.l.b16 %v6024
  %v6089 = vunpack.c.l.b16 %v6025
  %v6090 = vunpack.c.l.b16 %v6026
  %v6091 = vunpack.c.l.b16 %v6027
  %v6092 = vunpack.c.l.b16 %v6028
  %v6093 = vunpack.c.l.b16 %v6029
  %v6094 = vunpack.c.l.b16 %v6030
  %v6095 = vunpack.c.l.b16 %v6031
  %v6096 = vunpack.c.l.b16 %v6032
  %v6097 = vunpack.c.l.b16 %v6033
  %v6098 = vunpack.c.l.b16 %v6034
  %v6099 = vunpack.c.l.b16 %v6035
  %v6100 = vunpack.c.l.b16 %v6036
  %v6101 = vunpack.c.l.b16 %v6037
  %v6102 = vunpack.c.l.b16 %v6038
  %v6103 = vunpack.c.l.b16 %v6039
  %v6104 = vunpack.c.l.b16 %v6040
  %v6105 = vunpack.c.l.b16 %v6041
  %v6106 = vunpack.c.l.b16 %v6042
  %v6107 = vunpack.c.l.b16 %v6043
  %v6108 = vunpack.c.l.b16 %v6044
  %v6109 = vunpack.c.l.b16 %v6045
  %v6110 = vunpack.c.l.b16 %v6046
  %v6111 = vunpack.c.l.b16 %v6047
  %v6112 = vunpack.c.l.b16 %v6048
  %v6113 = vunpack.c.l.b16 %v6049
  %v6114 = vunpack.c.l.b16 %v6050
  %v6115 = vunpack.c.l.b16 %v6051
  %v6116 = vunpack.c.l.b16 %v6052
  %v6117 = vpack.c.b16 %v6086, %v6085
  %v6118 = vpack.c.b16 %v6088, %v6087
  %v6119 = vpack.c.b16 %v6090, %v6089
  %v6120 = vpack.c.b16 %v6092, %v6091
  %v6121 = vpack.c.b16 %v6094, %v6093
  %v6122 = vpack.c.b16 %v6096, %v6095
  %v6123 = vpack.c.b16 %v6098, %v6097
  %v6124 = vpack.c.b16 %v6100, %v6099
  %v6125 = vpack.c.b16 %v6102, %v6101
  %v6126 = vpack.c.b16 %v6104, %v6103
  %v6127 = vpack.c.b16 %v6106, %v6105
  %v6128 = vpack.c.b16 %v6108, %v6107
  %v6129 = vpack.c.b16 %v6110, %v6109
  %v6130 = vpack.c.b16 %v6112, %v6111
  %v6131 = vpack.c.b16 %v6114, %v6113
  %v6132 = vpack.c.b16 %v6116, %v6115
  %6149 = vmatprep.subr.bf16.mxu0 0
  %6150 = vmatpush1.bf16.msra.mxu0 %v6117
  %6151 = vmatprep.subr.bf16.mxu0 0
  %6152 = vmatpush1.bf16.msra.mxu0 %v6118
  %6153 = vmatprep.subr.bf16.mxu0 0
  %6154 = vmatpush1.bf16.msra.mxu0 %v6119
  %6155 = vmatprep.subr.bf16.mxu0 0
  %6156 = vmatpush1.bf16.msra.mxu0 %v6120
  %6157 = vmatprep.subr.bf16.mxu0 0
  %6158 = vmatpush1.bf16.msra.mxu0 %v6121
  %6159 = vmatprep.subr.bf16.mxu0 0
  %6160 = vmatpush1.bf16.msra.mxu0 %v6122
  %6161 = vmatprep.subr.bf16.mxu0 0
  %6162 = vmatpush1.bf16.msra.mxu0 %v6123
  %6163 = vmatprep.subr.bf16.mxu0 0
  %6164 = vmatpush1.bf16.msra.mxu0 %v6124
  %6165 = vmatprep.subr.bf16.mxu0 0
  %6166 = vmatpush1.bf16.msra.mxu0 %v6125
  %6167 = vmatprep.subr.bf16.mxu0 0
  %6168 = vmatpush1.bf16.msra.mxu0 %v6126
  %6169 = vmatprep.subr.bf16.mxu0 0
  %6170 = vmatpush1.bf16.msra.mxu0 %v6127
  %6171 = vmatprep.subr.bf16.mxu0 0
  %6172 = vmatpush1.bf16.msra.mxu0 %v6128
  %6173 = vmatprep.subr.bf16.mxu0 0
  %6174 = vmatpush1.bf16.msra.mxu0 %v6129
  %6175 = vmatprep.subr.bf16.mxu0 0
  %6176 = vmatpush1.bf16.msra.mxu0 %v6130
  %6177 = vmatprep.subr.bf16.mxu0 0
  %6178 = vmatpush1.bf16.msra.mxu0 %v6131
  %6179 = vmatprep.subr.bf16.mxu0 0
  %6180 = vmatpush1.bf16.msra.mxu0 %v6132
  %6181 = vmatprep.mubr.bf16.mxu0 %v6019
  %6182 = vmatmul.mubr.bf16.gmra.mrb[0].mxu0 %v6018
  %v6183 = vpop.f32.mrb[0].mxu0
  %v6184 = vadd.f32 0.0, %v6183
  %v6185 = vpop.f32.mrb[0].mxu0
  %v6186 = vpop.f32.mrb[0].mxu0
  %v6187 = vadd.f32 0.0, %v6186
  %v6188 = vpop.f32.mrb[0].mxu0
  %6189 = vdwg.mxu0
  %v6190 = vsel %vm42, %v6184, 0.0
  %v6191 = vsel %vm42, %v6187, 0.0
  %v6192 = vadd.f32 %v6190, %v6191
  %v6193 = vrot.slane %v6192, 4
  %v6194 = vadd.f32 %v6192, %v6193
  %v6195 = vrot.slane %v6194, 2
  %v6196 = vadd.f32 %v6194, %v6195
  %v6197 = vrot.slane %v6196, 1
  %v6198 = vadd.f32 %v6196, %v6197
  %v6199 = vmul.f32 %v6198, 0.0625
  %v6200 = vmul.f32 %v6184, %v6184
  %v6201 = vmul.f32 %v6187, %v6187
  %v6202 = vsel %vm42, %v6200, 0.0
  %v6203 = vsel %vm42, %v6201, 0.0
  %v6204 = vadd.f32 %v6202, %v6203
  %v6205 = vrot.slane %v6204, 4
  %v6206 = vadd.f32 %v6204, %v6205
  %v6207 = vrot.slane %v6206, 2
  %v6208 = vadd.f32 %v6206, %v6207
  %v6209 = vrot.slane %v6208, 1
  %v6210 = vadd.f32 %v6208, %v6209
  %v6211 = vmul.f32 %v6210, 0.0625
  %v6212 = vmul.f32 %v6199, %v6199
  %v6213 = vsub.f32 %v6211, %v6212
  %v6214 = vsub.f32 %v6184, %v6199
  %v6215 = vsub.f32 %v6187, %v6199
  %v6216 = vadd.f32 %v6213, 1e-05
  %v6217 = vrsqrt.pop %v6216
  %v6218 = vmul.f32 %v6214, %v6217
  %v6219 = vmul.f32 %v6215, %v6217
  %v6220 = vmul.f32 %v6218, 0.5
  %v6221 = vmul.f32 %v6219, 0.5
  %v6222 = vtanh.pop %v6220
  %v6223 = vtanh.pop %v6221
  %v6224 = vadd.f32 %v6222, 1.0
  %v6225 = vadd.f32 %v6223, 1.0
  %v6226 = vmul.f32 %v6224, 0.5
  %v6227 = vmul.f32 %v6225, 0.5
  %v6228 = vsub.f32 %v6226, %v21
  %v6229 = vsub.f32 %v6227, %v22
  %v6230 = vmul.f32 %v6228, %v6228
  %v6231 = vmul.f32 %v6229, %v6229
  %v6232 = vsel %vm42, %v6230, 0.0
  %v6233 = vsel %vm42, %v6231, 0.0
  %v6234 = vadd.f32 %v6232, %v6233
  %6235 = vadd.xlane.f32.xlu0 %v6234
  %v6236 = vpop.xlane.xlu0 %6235
  %v6237 = vrot.slane %v6236, 4
  %v6238 = vadd.f32 %v6236, %v6237
  %v6239 = vrot.slane %v6238, 2
  %v6240 = vadd.f32 %v6238, %v6239
  %v6241 = vrot.slane %v6240, 1
  %v6242 = vadd.f32 %v6240, %v6241
  %s6243 = vtos %v6242
  %vm6244 = vcmp.eq.s32.totalorder %v25, 9
  %v6245 = vstv %s6243
  %v6246 = vsel %vm6244, %v6245, %v5624
  %6247 = vst [vmem:[%s5] sm:$0xff] %v6246
  // Predicated region
  $region22: #{_lambda_.1} parent=0 // pred_check
    _
  $region23: #{_lambda_.1} parent=0 // pred_check_branch
    %6249 = sbr.rel (0) target = $region25
  $region24: #{_lambda_.1} parent=0 // pred_region
    _
  $region25: #{_lambda_.1} parent=0 // pred_fallthru
    _
  // Predicated region
  $region26: #{_lambda_.1} parent=0 // pred_check
    _
  $region27: #{_lambda_.1} parent=0 // pred_check_branch
    %6251 = sbr.rel (0) target = $region29
  $region28: #{_lambda_.1} parent=0 // pred_region
    _
  $region29: #{_lambda_.1} parent=0 // pred_fallthru
    _

</llo_original>
